<compile_context>
chip_gen: v7x
topology: tpu7x:2x2x1
jax: 0.10.0
libtpu: 0.0.40
codegen_flags: <defaults>
</compile_context>

<pallas_src>
import functools
from math import floor

import numpy as np
import jax
import jax.numpy as jnp
from jax.experimental import pallas as pl
from jax.experimental.pallas import tpu as pltpu


def calculate_conv2d_output_shape(height, width, kernel_size=(1, 1),
                                  stride=(1, 1), padding=(0, 0), dilation=(1, 1)):
    h = floor((height + 2 * padding[0] - dilation[0] * (kernel_size[0] - 1) - 1) / stride[0] + 1)
    w = floor((width + 2 * padding[1] - dilation[1] * (kernel_size[1] - 1) - 1) / stride[1] + 1)
    return (h, w)


def _round_up(x, m):
    return ((x + m - 1) // m) * m


# ----------------------------------------------------------------------------
# Fused kernel: conv1 -> conv2 -> (implicit flatten) -> fc1 + LeakyReLU -> fc2
# One grid step = BT images; everything stays in VMEM.
#
# Activation layout: rows = channels, lanes = flattened spatial (stride w_img).
# Lanes beyond the valid output width carry garbage that is never consumed
# (conv taps stay inside the valid window; fc1 weights are zero there).
# ----------------------------------------------------------------------------
def _critic_kernel(x_ref, w1_ref, b1_ref, w2_ref, b2_ref,
                   wf1_ref, bf1_ref, wf2_ref, bf2_ref,
                   o_ref,
                   x1s_ref, h1_ref, x2s_ref, h2_ref,
                   *, k, w_img, bt, cin_p, c1, c2, s1, s2):
    f32 = jnp.float32
    bf16 = jnp.bfloat16
    kk = k * k
    n_hidden = bf1_ref.shape[1]

    for b in range(bt):
        # ---- conv1: stack the k*k taps along rows (full-lane, sublane-aligned
        #      copies), then a single (c1, kk*cin_p) x (kk*cin_p, s1) matmul.
        for t in range(kk):
            off = (t // k) * w_img + (t % k)
            x1s_ref[t * cin_p:(t + 1) * cin_p, :] = x_ref[b, :, off:off + s1]
        a1 = jnp.dot(w1_ref[...], x1s_ref[...], preferred_element_type=f32)
        h1_ref[...] = (a1 + b1_ref[...]).astype(bf16)

        # ---- conv2: same trick on the VMEM-resident conv1 output. -----------
        for t in range(kk):
            off = (t // k) * w_img + (t % k)
            x2s_ref[t * c1:(t + 1) * c1, :] = h1_ref[:, off:off + s2]
        a2 = jnp.dot(w2_ref[...], x2s_ref[...], preferred_element_type=f32)
        h2_ref[b] = (a2 + b2_ref[...]).astype(bf16)

    # ---- fc1 (+bias) over the whole batch tile, then LeakyReLU(0.01). -------
    # The flatten permutation is folded into wf1 (zeros on padded lanes), so
    # fc1 is c2 independent (bt, s2) x (s2, n_hidden) matmuls.
    acc = jnp.zeros((bt, n_hidden), f32) + bf1_ref[...]
    for c in range(c2):
        acc = acc + jnp.dot(h2_ref[:, c, :], wf1_ref[c], preferred_element_type=f32)
    z = jnp.where(acc > 0, acc, 0.01 * acc)                     # nn.LeakyReLU default

    # ---- fc2 (lane-padded to 128): one full-lane HBM store per tile. --------
    y = jnp.dot(z.astype(bf16), wf2_ref[...], preferred_element_type=f32)
    o_ref[...] = y + bf2_ref[...]


# ----------------------------------------------------------------------------
# Parameter plumbing
# ----------------------------------------------------------------------------
def init_ppo_image_critic_params(key, img_size, images_per_input=4, kernel_size=5):
    """Deterministic synthetic parameters in PyTorch layout (like a state_dict)."""
    cin = images_per_input * 3
    c1hw = calculate_conv2d_output_shape(img_size[1], img_size[0], (kernel_size,) * 2)
    c2hw = calculate_conv2d_output_shape(c1hw[0], c1hw[1], (kernel_size,) * 2)
    flatten_size = 32 * c2hw[0] * c2hw[1]
    ks = jax.random.split(key, 8)
    s = 0.05
    return {
        "conv1_w": s * jax.random.normal(ks[0], (64, cin, kernel_size, kernel_size), jnp.float32),
        "conv1_b": s * jax.random.normal(ks[1], (64,), jnp.float32),
        "conv2_w": s * jax.random.normal(ks[2], (32, 64, kernel_size, kernel_size), jnp.float32),
        "conv2_b": s * jax.random.normal(ks[3], (32,), jnp.float32),
        "fc1_w":   s * jax.random.normal(ks[4], (64, flatten_size), jnp.float32),
        "fc1_b":   s * jax.random.normal(ks[5], (64,), jnp.float32),
        "fc2_w":   s * jax.random.normal(ks[6], (1, 64), jnp.float32),
        "fc2_b":   s * jax.random.normal(ks[7], (1,), jnp.float32),
    }


def prepare_critic_params(pt_params, img_size):
    """One-time re-layout of PyTorch parameters into kernel-friendly matrices."""
    f32, bf16 = jnp.float32, jnp.bfloat16
    c1, cin, k, _ = pt_params["conv1_w"].shape
    c2 = pt_params["conv2_w"].shape[0]
    n_hidden = pt_params["fc1_w"].shape[0]
    W, H = img_size[0], img_size[1]
    ho1, wo1 = calculate_conv2d_output_shape(H, W, (k, k))
    ho2, wo2 = calculate_conv2d_output_shape(ho1, wo1, (k, k))
    cin_p = _round_up(cin, 16)                  # pad 12 -> 16 (bf16 sublane tile)
    s2 = _round_up(ho2 * W, 128)                # conv2 output lanes (stride W)
    n_out_p = 128                               # lane-padded fc2 output

    # conv1: (c1, cin, kh, kw) -> (c1, kh, kw, cin_pad) -> (c1, k*k*cin_pad)
    w1 = jnp.transpose(pt_params["conv1_w"], (0, 2, 3, 1))
    w1 = jnp.pad(w1, ((0, 0), (0, 0), (0, 0), (0, cin_p - cin)))
    w1 = w1.reshape(c1, k * k * cin_p).astype(bf16)

    # conv2: (c2, c1, kh, kw) -> (c2, k*k*c1)
    w2 = jnp.transpose(pt_params["conv2_w"], (0, 2, 3, 1)).reshape(c2, k * k * c1)
    w2 = w2.astype(bf16)

    # fc1: PyTorch flatten index is c*(ho2*wo2) + h*wo2 + w; the kernel's conv2
    # output lane index is s = h*W + w (stride W, garbage lanes at w >= wo2).
    # Fold that permutation in and zero the weights on the garbage lanes.
    f1 = pt_params["fc1_w"].reshape(n_hidden, c2, ho2, wo2)
    f1 = jnp.transpose(f1, (1, 2, 3, 0))                        # (c2, h, w, n)
    f1 = jnp.pad(f1, ((0, 0), (0, 0), (0, W - wo2), (0, 0)))    # pad w -> W
    f1 = f1.reshape(c2, ho2 * W, n_hidden)
    wf1 = jnp.pad(f1, ((0, 0), (0, s2 - ho2 * W), (0, 0))).astype(bf16)

    # fc2 lane-padded to 128 (column 0 is the real output, rest zeros).
    wf2 = jnp.zeros((n_hidden, n_out_p), f32).at[:, 0].set(pt_params["fc2_w"][0])
    bf2 = jnp.zeros((1, n_out_p), f32).at[0, 0].set(pt_params["fc2_b"][0])

    return {
        "w1": w1, "b1": pt_params["conv1_b"].reshape(c1, 1).astype(f32),
        "w2": w2, "b2": pt_params["conv2_b"].reshape(c2, 1).astype(f32),
        "wf1": wf1, "bf1": pt_params["fc1_b"].reshape(1, n_hidden).astype(f32),
        "wf2": wf2.astype(bf16), "bf2": bf2,
    }


@functools.partial(jax.jit, static_argnames=("kernel_size", "batch_tile"))
def ppo_image_critic_forward(params, x_nchw, *, kernel_size=5, batch_tile=8):
    """x_nchw: (B, images_per_input*3, H, W) float32 -> (B, 1) value."""
    k = kernel_size
    B, cin, H, W = x_nchw.shape
    c1, kkcin_p = params["w1"].shape
    cin_p = kkcin_p // (k * k)
    c2 = params["w2"].shape[0]
    s2 = params["wf1"].shape[1]
    n_hidden = params["bf1"].shape[1]
    n_out_p = params["wf2"].shape[1]

    # Spatial lane extents (conv2 windows must stay in-bounds of conv1 output,
    # conv1 windows in-bounds of the padded input).
    s1 = _round_up(s2 + (k - 1) * (W + 1), 128)
    s_pad = _round_up(max(H * W, s1 + (k - 1) * (W + 1)), 128)

    # Batch tile: full batch if small, otherwise a multiple of 8 so the output
    # block stays (8,128)-tileable.  Large batches give grid >= 2 (both v7x TCs).
    bt = B if B <= batch_tile else max(8, (batch_tile // 8) * 8)
    b_pad = _round_up(B, bt)
    grid = b_pad // bt

    # NCHW is already channel-planar: flatten spatial, zero-pad channels and
    # spatial lanes, pad the batch, cast to bf16 ONCE here (tiny XLA ops).
    x = x_nchw.reshape(B, cin, H * W)
    x = jnp.pad(x, ((0, b_pad - B), (0, cin_p - cin), (0, s_pad - H * W)))
    x = x.astype(jnp.bfloat16)

    kernel = functools.partial(
        _critic_kernel, k=k, w_img=W, bt=bt, cin_p=cin_p,
        c1=c1, c2=c2, s1=s1, s2=s2)

    flops = b_pad * 2 * (k * k * cin_p * s1 * c1 + k * k * c1 * s2 * c2
                         + c2 * s2 * n_hidden + n_hidden * n_out_p)
    bytes_accessed = (x.size * 2 + b_pad * n_out_p * 4
                      + sum(int(np.prod(v.shape)) * v.dtype.itemsize
                            for v in params.values()))

    out = pl.pallas_call(
        kernel,
        out_shape=jax.ShapeDtypeStruct((b_pad, n_out_p), jnp.float32),
        grid=(grid,),
        in_specs=[
            pl.BlockSpec((bt, cin_p, s_pad), lambda g: (g, 0, 0)),   # x (BT images)
            pl.BlockSpec(params["w1"].shape, lambda g: (0, 0)),      # conv1 weight
            pl.BlockSpec(params["b1"].shape, lambda g: (0, 0)),      # conv1 bias
            pl.BlockSpec(params["w2"].shape, lambda g: (0, 0)),      # conv2 weight
            pl.BlockSpec(params["b2"].shape, lambda g: (0, 0)),      # conv2 bias
            pl.BlockSpec(params["wf1"].shape, lambda g: (0, 0, 0)),  # fc1 weight (permuted)
            pl.BlockSpec(params["bf1"].shape, lambda g: (0, 0)),     # fc1 bias
            pl.BlockSpec(params["wf2"].shape, lambda g: (0, 0)),     # fc2 weight (padded)
            pl.BlockSpec(params["bf2"].shape, lambda g: (0, 0)),     # fc2 bias (padded)
        ],
        out_specs=pl.BlockSpec((bt, n_out_p), lambda g: (g, 0)),
        scratch_shapes=[
            pltpu.VMEM((k * k * cin_p, s1), jnp.bfloat16),   # conv1 tap stack
            pltpu.VMEM((c1, s1), jnp.bfloat16),              # conv1 output (bf16)
            pltpu.VMEM((k * k * c1, s2), jnp.bfloat16),      # conv2 tap stack
            pltpu.VMEM((bt, c2, s2), jnp.bfloat16),          # conv2 output (whole tile)
        ],
        compiler_params=pltpu.CompilerParams(
            dimension_semantics=("parallel",),
            vmem_limit_bytes=32 * 1024 * 1024),
        cost_estimate=pl.CostEstimate(flops=flops, transcendentals=0,
                                      bytes_accessed=bytes_accessed),
    )(x, params["w1"], params["b1"], params["w2"], params["b2"],
      params["wf1"], params["bf1"], params["wf2"], params["bf2"])

    return out[:B, :1]                                         # (B, 1)


# ----------------------------------------------------------------------------
# Pure-JAX f32 reference (PyTorch semantics) for a numerical sanity check.
# ----------------------------------------------------------------------------
def reference_forward(pt_params, x_nchw):
    dn = ("NCHW", "OIHW", "NCHW")
    y = jax.lax.conv_general_dilated(x_nchw, pt_params["conv1_w"], (1, 1), "VALID",
                                     dimension_numbers=dn)
    y = y + pt_params["conv1_b"][None, :, None, None]
    y = jax.lax.conv_general_dilated(y, pt_params["conv2_w"], (1, 1), "VALID",
                                     dimension_numbers=dn)
    y = y + pt_params["conv2_b"][None, :, None, None]
    flat = y.reshape(y.shape[0], -1)
    h = flat @ pt_params["fc1_w"].T + pt_params["fc1_b"]
    h = jnp.where(h > 0, h, 0.01 * h)
    return h @ pt_params["fc2_w"].T + pt_params["fc2_b"]


if __name__ == "__main__":
    # TODO(synk): PPOImageInput's host-side deque/stacking and save/load are
    # host bookkeeping, not kernel work; the kernel starts at the NCHW tensor.
    key = jax.random.PRNGKey(0)
    img_size = (16, 16)          # (W, H) as in the module's img_size tuple
    images_per_input = 4         # -> 12 input channels
    batch = 2

    pkey, xkey = jax.random.split(key)
    pt_params = init_ppo_image_critic_params(pkey, img_size, images_per_input)
    params = prepare_critic_params(pt_params, img_size)
    x = jax.random.normal(xkey, (batch, images_per_input * 3,
                                 img_size[1], img_size[0]), jnp.float32)

    value = ppo_image_critic_forward(params, x)
    value = jax.block_until_ready(value)
    assert value.shape == (batch, 1), value.shape

    ref = jax.block_until_ready(reference_forward(pt_params, x))
    assert np.allclose(np.asarray(value), np.asarray(ref), rtol=5e-2, atol=5e-2), (
        np.asarray(value), np.asarray(ref))

    print("KERNEL_OK")
</pallas_src>

<mosaic_0001>
module attributes {stable_mosaic.version = 11 : i64} {
  func.func @_critic_kernel(%arg0: i32, %arg1: memref<2x16x384xbf16, #tpu.memory_space<vmem>>, %arg2: memref<64x400xbf16, #tpu.memory_space<vmem>>, %arg3: memref<64x1xf32, #tpu.memory_space<vmem>>, %arg4: memref<32x1600xbf16, #tpu.memory_space<vmem>>, %arg5: memref<32x1xf32, #tpu.memory_space<vmem>>, %arg6: memref<32x128x64xbf16, #tpu.memory_space<vmem>>, %arg7: memref<1x64xf32, #tpu.memory_space<vmem>>, %arg8: memref<64x128xbf16, #tpu.memory_space<vmem>>, %arg9: memref<1x128xf32, #tpu.memory_space<vmem>>, %arg10: memref<2x128xf32, #tpu.memory_space<vmem>>, %arg11: memref<400x256xbf16, #tpu.memory_space<vmem>>, %arg12: memref<64x256xbf16, #tpu.memory_space<vmem>>, %arg13: memref<1600x128xbf16, #tpu.memory_space<vmem>>, %arg14: memref<2x32x128xbf16, #tpu.memory_space<vmem>>) attributes {dimension_semantics = [#tpu.dimension_semantics<parallel>], iteration_bounds = array<i64: 1>, scalar_prefetch = 0 : i64, scratch_operands = 4 : i64, tpu.core_type = #tpu.core_type<tc>, window_params = [{transform_indices = @transform_0, window_bounds = array<i64: 2, 16, 384>}, {pipeline_mode = #tpu.pipeline_mode<synchronous>, transform_indices = @transform_1, window_bounds = array<i64: 64, 400>}, {pipeline_mode = #tpu.pipeline_mode<synchronous>, transform_indices = @transform_2, window_bounds = array<i64: 64, 1>}, {pipeline_mode = #tpu.pipeline_mode<synchronous>, transform_indices = @transform_3, window_bounds = array<i64: 32, 1600>}, {pipeline_mode = #tpu.pipeline_mode<synchronous>, transform_indices = @transform_4, window_bounds = array<i64: 32, 1>}, {pipeline_mode = #tpu.pipeline_mode<synchronous>, transform_indices = @transform_5, window_bounds = array<i64: 32, 128, 64>}, {pipeline_mode = #tpu.pipeline_mode<synchronous>, transform_indices = @transform_6, window_bounds = array<i64: 1, 64>}, {pipeline_mode = #tpu.pipeline_mode<synchronous>, transform_indices = @transform_7, window_bounds = array<i64: 64, 128>}, {pipeline_mode = #tpu.pipeline_mode<synchronous>, transform_indices = @transform_8, window_bounds = array<i64: 1, 128>}, {transform_indices = @transform_9, window_bounds = array<i64: 2, 128>}]} {
    %c0 = arith.constant 0 : index
    %c0_0 = arith.constant 0 : index
    %c0_1 = arith.constant 0 : index
    %0 = vector.load %arg1[%c0, %c0_0, %c0_1] : memref<2x16x384xbf16, #tpu.memory_space<vmem>>, vector<1x16x256xbf16>
    %1 = vector.shape_cast %0 : vector<1x16x256xbf16> to vector<16x256xbf16>
    %c0_2 = arith.constant 0 : index
    %c0_3 = arith.constant 0 : index
    %2 = vector.load %arg11[%c0_2, %c0_3] : memref<400x256xbf16, #tpu.memory_space<vmem>>, vector<16x256xbf16>
    tpu.vector_store %arg11[%c0_2, %c0_3], %1 {strides = array<i32>} : memref<400x256xbf16, #tpu.memory_space<vmem>>, vector<16x256xbf16>,
    %c0_4 = arith.constant 0 : index
    %c0_5 = arith.constant 0 : index
    %c1 = arith.constant 1 : index
    %3 = vector.load %arg1[%c0_4, %c0_5, %c1] : memref<2x16x384xbf16, #tpu.memory_space<vmem>>, vector<1x16x256xbf16>
    %4 = vector.shape_cast %3 : vector<1x16x256xbf16> to vector<16x256xbf16>
    %c16 = arith.constant 16 : index
    %c0_6 = arith.constant 0 : index
    %5 = vector.load %arg11[%c16, %c0_6] : memref<400x256xbf16, #tpu.memory_space<vmem>>, vector<16x256xbf16>
    tpu.vector_store %arg11[%c16, %c0_6], %4 {strides = array<i32>} : memref<400x256xbf16, #tpu.memory_space<vmem>>, vector<16x256xbf16>,
    %c0_7 = arith.constant 0 : index
    %c0_8 = arith.constant 0 : index
    %c2 = arith.constant 2 : index
    %6 = vector.load %arg1[%c0_7, %c0_8, %c2] : memref<2x16x384xbf16, #tpu.memory_space<vmem>>, vector<1x16x256xbf16>
    %7 = vector.shape_cast %6 : vector<1x16x256xbf16> to vector<16x256xbf16>
    %c32 = arith.constant 32 : index
    %c0_9 = arith.constant 0 : index
    %8 = vector.load %arg11[%c32, %c0_9] : memref<400x256xbf16, #tpu.memory_space<vmem>>, vector<16x256xbf16>
    tpu.vector_store %arg11[%c32, %c0_9], %7 {strides = array<i32>} : memref<400x256xbf16, #tpu.memory_space<vmem>>, vector<16x256xbf16>,
    %c0_10 = arith.constant 0 : index
    %c0_11 = arith.constant 0 : index
    %c3 = arith.constant 3 : index
    %9 = vector.load %arg1[%c0_10, %c0_11, %c3] : memref<2x16x384xbf16, #tpu.memory_space<vmem>>, vector<1x16x256xbf16>
    %10 = vector.shape_cast %9 : vector<1x16x256xbf16> to vector<16x256xbf16>
    %c48 = arith.constant 48 : index
    %c0_12 = arith.constant 0 : index
    %11 = vector.load %arg11[%c48, %c0_12] : memref<400x256xbf16, #tpu.memory_space<vmem>>, vector<16x256xbf16>
    tpu.vector_store %arg11[%c48, %c0_12], %10 {strides = array<i32>} : memref<400x256xbf16, #tpu.memory_space<vmem>>, vector<16x256xbf16>,
    %c0_13 = arith.constant 0 : index
    %c0_14 = arith.constant 0 : index
    %c4 = arith.constant 4 : index
    %12 = vector.load %arg1[%c0_13, %c0_14, %c4] : memref<2x16x384xbf16, #tpu.memory_space<vmem>>, vector<1x16x256xbf16>
    %13 = vector.shape_cast %12 : vector<1x16x256xbf16> to vector<16x256xbf16>
    %c64 = arith.constant 64 : index
    %c0_15 = arith.constant 0 : index
    %14 = vector.load %arg11[%c64, %c0_15] : memref<400x256xbf16, #tpu.memory_space<vmem>>, vector<16x256xbf16>
    tpu.vector_store %arg11[%c64, %c0_15], %13 {strides = array<i32>} : memref<400x256xbf16, #tpu.memory_space<vmem>>, vector<16x256xbf16>,
    %c0_16 = arith.constant 0 : index
    %c0_17 = arith.constant 0 : index
    %c16_18 = arith.constant 16 : index
    %15 = vector.load %arg1[%c0_16, %c0_17, %c16_18] : memref<2x16x384xbf16, #tpu.memory_space<vmem>>, vector<1x16x256xbf16>
    %16 = vector.shape_cast %15 : vector<1x16x256xbf16> to vector<16x256xbf16>
    %c80 = arith.constant 80 : index
    %c0_19 = arith.constant 0 : index
    %17 = vector.load %arg11[%c80, %c0_19] : memref<400x256xbf16, #tpu.memory_space<vmem>>, vector<16x256xbf16>
    tpu.vector_store %arg11[%c80, %c0_19], %16 {strides = array<i32>} : memref<400x256xbf16, #tpu.memory_space<vmem>>, vector<16x256xbf16>,
    %c0_20 = arith.constant 0 : index
    %c0_21 = arith.constant 0 : index
    %c17 = arith.constant 17 : index
    %18 = vector.load %arg1[%c0_20, %c0_21, %c17] : memref<2x16x384xbf16, #tpu.memory_space<vmem>>, vector<1x16x256xbf16>
    %19 = vector.shape_cast %18 : vector<1x16x256xbf16> to vector<16x256xbf16>
    %c96 = arith.constant 96 : index
    %c0_22 = arith.constant 0 : index
    %20 = vector.load %arg11[%c96, %c0_22] : memref<400x256xbf16, #tpu.memory_space<vmem>>, vector<16x256xbf16>
    tpu.vector_store %arg11[%c96, %c0_22], %19 {strides = array<i32>} : memref<400x256xbf16, #tpu.memory_space<vmem>>, vector<16x256xbf16>,
    %c0_23 = arith.constant 0 : index
    %c0_24 = arith.constant 0 : index
    %c18 = arith.constant 18 : index
    %21 = vector.load %arg1[%c0_23, %c0_24, %c18] : memref<2x16x384xbf16, #tpu.memory_space<vmem>>, vector<1x16x256xbf16>
    %22 = vector.shape_cast %21 : vector<1x16x256xbf16> to vector<16x256xbf16>
    %c112 = arith.constant 112 : index
    %c0_25 = arith.constant 0 : index
    %23 = vector.load %arg11[%c112, %c0_25] : memref<400x256xbf16, #tpu.memory_space<vmem>>, vector<16x256xbf16>
    tpu.vector_store %arg11[%c112, %c0_25], %22 {strides = array<i32>} : memref<400x256xbf16, #tpu.memory_space<vmem>>, vector<16x256xbf16>,
    %c0_26 = arith.constant 0 : index
    %c0_27 = arith.constant 0 : index
    %c19 = arith.constant 19 : index
    %24 = vector.load %arg1[%c0_26, %c0_27, %c19] : memref<2x16x384xbf16, #tpu.memory_space<vmem>>, vector<1x16x256xbf16>
    %25 = vector.shape_cast %24 : vector<1x16x256xbf16> to vector<16x256xbf16>
    %c128 = arith.constant 128 : index
    %c0_28 = arith.constant 0 : index
    %26 = vector.load %arg11[%c128, %c0_28] : memref<400x256xbf16, #tpu.memory_space<vmem>>, vector<16x256xbf16>
    tpu.vector_store %arg11[%c128, %c0_28], %25 {strides = array<i32>} : memref<400x256xbf16, #tpu.memory_space<vmem>>, vector<16x256xbf16>,
    %c0_29 = arith.constant 0 : index
    %c0_30 = arith.constant 0 : index
    %c20 = arith.constant 20 : index
    %27 = vector.load %arg1[%c0_29, %c0_30, %c20] : memref<2x16x384xbf16, #tpu.memory_space<vmem>>, vector<1x16x256xbf16>
    %28 = vector.shape_cast %27 : vector<1x16x256xbf16> to vector<16x256xbf16>
    %c144 = arith.constant 144 : index
    %c0_31 = arith.constant 0 : index
    %29 = vector.load %arg11[%c144, %c0_31] : memref<400x256xbf16, #tpu.memory_space<vmem>>, vector<16x256xbf16>
    tpu.vector_store %arg11[%c144, %c0_31], %28 {strides = array<i32>} : memref<400x256xbf16, #tpu.memory_space<vmem>>, vector<16x256xbf16>,
    %c0_32 = arith.constant 0 : index
    %c0_33 = arith.constant 0 : index
    %c32_34 = arith.constant 32 : index
    %30 = vector.load %arg1[%c0_32, %c0_33, %c32_34] : memref<2x16x384xbf16, #tpu.memory_space<vmem>>, vector<1x16x256xbf16>
    %31 = vector.shape_cast %30 : vector<1x16x256xbf16> to vector<16x256xbf16>
    %c160 = arith.constant 160 : index
    %c0_35 = arith.constant 0 : index
    %32 = vector.load %arg11[%c160, %c0_35] : memref<400x256xbf16, #tpu.memory_space<vmem>>, vector<16x256xbf16>
    tpu.vector_store %arg11[%c160, %c0_35], %31 {strides = array<i32>} : memref<400x256xbf16, #tpu.memory_space<vmem>>, vector<16x256xbf16>,
    %c0_36 = arith.constant 0 : index
    %c0_37 = arith.constant 0 : index
    %c33 = arith.constant 33 : index
    %33 = vector.load %arg1[%c0_36, %c0_37, %c33] : memref<2x16x384xbf16, #tpu.memory_space<vmem>>, vector<1x16x256xbf16>
    %34 = vector.shape_cast %33 : vector<1x16x256xbf16> to vector<16x256xbf16>
    %c176 = arith.constant 176 : index
    %c0_38 = arith.constant 0 : index
    %35 = vector.load %arg11[%c176, %c0_38] : memref<400x256xbf16, #tpu.memory_space<vmem>>, vector<16x256xbf16>
    tpu.vector_store %arg11[%c176, %c0_38], %34 {strides = array<i32>} : memref<400x256xbf16, #tpu.memory_space<vmem>>, vector<16x256xbf16>,
    %c0_39 = arith.constant 0 : index
    %c0_40 = arith.constant 0 : index
    %c34 = arith.constant 34 : index
    %36 = vector.load %arg1[%c0_39, %c0_40, %c34] : memref<2x16x384xbf16, #tpu.memory_space<vmem>>, vector<1x16x256xbf16>
    %37 = vector.shape_cast %36 : vector<1x16x256xbf16> to vector<16x256xbf16>
    %c192 = arith.constant 192 : index
    %c0_41 = arith.constant 0 : index
    %38 = vector.load %arg11[%c192, %c0_41] : memref<400x256xbf16, #tpu.memory_space<vmem>>, vector<16x256xbf16>
    tpu.vector_store %arg11[%c192, %c0_41], %37 {strides = array<i32>} : memref<400x256xbf16, #tpu.memory_space<vmem>>, vector<16x256xbf16>,
    %c0_42 = arith.constant 0 : index
    %c0_43 = arith.constant 0 : index
    %c35 = arith.constant 35 : index
    %39 = vector.load %arg1[%c0_42, %c0_43, %c35] : memref<2x16x384xbf16, #tpu.memory_space<vmem>>, vector<1x16x256xbf16>
    %40 = vector.shape_cast %39 : vector<1x16x256xbf16> to vector<16x256xbf16>
    %c208 = arith.constant 208 : index
    %c0_44 = arith.constant 0 : index
    %41 = vector.load %arg11[%c208, %c0_44] : memref<400x256xbf16, #tpu.memory_space<vmem>>, vector<16x256xbf16>
    tpu.vector_store %arg11[%c208, %c0_44], %40 {strides = array<i32>} : memref<400x256xbf16, #tpu.memory_space<vmem>>, vector<16x256xbf16>,
    %c0_45 = arith.constant 0 : index
    %c0_46 = arith.constant 0 : index
    %c36 = arith.constant 36 : index
    %42 = vector.load %arg1[%c0_45, %c0_46, %c36] : memref<2x16x384xbf16, #tpu.memory_space<vmem>>, vector<1x16x256xbf16>
    %43 = vector.shape_cast %42 : vector<1x16x256xbf16> to vector<16x256xbf16>
    %c224 = arith.constant 224 : index
    %c0_47 = arith.constant 0 : index
    %44 = vector.load %arg11[%c224, %c0_47] : memref<400x256xbf16, #tpu.memory_space<vmem>>, vector<16x256xbf16>
    tpu.vector_store %arg11[%c224, %c0_47], %43 {strides = array<i32>} : memref<400x256xbf16, #tpu.memory_space<vmem>>, vector<16x256xbf16>,
    %c0_48 = arith.constant 0 : index
    %c0_49 = arith.constant 0 : index
    %c48_50 = arith.constant 48 : index
    %45 = vector.load %arg1[%c0_48, %c0_49, %c48_50] : memref<2x16x384xbf16, #tpu.memory_space<vmem>>, vector<1x16x256xbf16>
    %46 = vector.shape_cast %45 : vector<1x16x256xbf16> to vector<16x256xbf16>
    %c240 = arith.constant 240 : index
    %c0_51 = arith.constant 0 : index
    %47 = vector.load %arg11[%c240, %c0_51] : memref<400x256xbf16, #tpu.memory_space<vmem>>, vector<16x256xbf16>
    tpu.vector_store %arg11[%c240, %c0_51], %46 {strides = array<i32>} : memref<400x256xbf16, #tpu.memory_space<vmem>>, vector<16x256xbf16>,
    %c0_52 = arith.constant 0 : index
    %c0_53 = arith.constant 0 : index
    %c49 = arith.constant 49 : index
    %48 = vector.load %arg1[%c0_52, %c0_53, %c49] : memref<2x16x384xbf16, #tpu.memory_space<vmem>>, vector<1x16x256xbf16>
    %49 = vector.shape_cast %48 : vector<1x16x256xbf16> to vector<16x256xbf16>
    %c256 = arith.constant 256 : index
    %c0_54 = arith.constant 0 : index
    %50 = vector.load %arg11[%c256, %c0_54] : memref<400x256xbf16, #tpu.memory_space<vmem>>, vector<16x256xbf16>
    tpu.vector_store %arg11[%c256, %c0_54], %49 {strides = array<i32>} : memref<400x256xbf16, #tpu.memory_space<vmem>>, vector<16x256xbf16>,
    %c0_55 = arith.constant 0 : index
    %c0_56 = arith.constant 0 : index
    %c50 = arith.constant 50 : index
    %51 = vector.load %arg1[%c0_55, %c0_56, %c50] : memref<2x16x384xbf16, #tpu.memory_space<vmem>>, vector<1x16x256xbf16>
    %52 = vector.shape_cast %51 : vector<1x16x256xbf16> to vector<16x256xbf16>
    %c272 = arith.constant 272 : index
    %c0_57 = arith.constant 0 : index
    %53 = vector.load %arg11[%c272, %c0_57] : memref<400x256xbf16, #tpu.memory_space<vmem>>, vector<16x256xbf16>
    tpu.vector_store %arg11[%c272, %c0_57], %52 {strides = array<i32>} : memref<400x256xbf16, #tpu.memory_space<vmem>>, vector<16x256xbf16>,
    %c0_58 = arith.constant 0 : index
    %c0_59 = arith.constant 0 : index
    %c51 = arith.constant 51 : index
    %54 = vector.load %arg1[%c0_58, %c0_59, %c51] : memref<2x16x384xbf16, #tpu.memory_space<vmem>>, vector<1x16x256xbf16>
    %55 = vector.shape_cast %54 : vector<1x16x256xbf16> to vector<16x256xbf16>
    %c288 = arith.constant 288 : index
    %c0_60 = arith.constant 0 : index
    %56 = vector.load %arg11[%c288, %c0_60] : memref<400x256xbf16, #tpu.memory_space<vmem>>, vector<16x256xbf16>
    tpu.vector_store %arg11[%c288, %c0_60], %55 {strides = array<i32>} : memref<400x256xbf16, #tpu.memory_space<vmem>>, vector<16x256xbf16>,
    %c0_61 = arith.constant 0 : index
    %c0_62 = arith.constant 0 : index
    %c52 = arith.constant 52 : index
    %57 = vector.load %arg1[%c0_61, %c0_62, %c52] : memref<2x16x384xbf16, #tpu.memory_space<vmem>>, vector<1x16x256xbf16>
    %58 = vector.shape_cast %57 : vector<1x16x256xbf16> to vector<16x256xbf16>
    %c304 = arith.constant 304 : index
    %c0_63 = arith.constant 0 : index
    %59 = vector.load %arg11[%c304, %c0_63] : memref<400x256xbf16, #tpu.memory_space<vmem>>, vector<16x256xbf16>
    tpu.vector_store %arg11[%c304, %c0_63], %58 {strides = array<i32>} : memref<400x256xbf16, #tpu.memory_space<vmem>>, vector<16x256xbf16>,
    %c0_64 = arith.constant 0 : index
    %c0_65 = arith.constant 0 : index
    %c64_66 = arith.constant 64 : index
    %60 = vector.load %arg1[%c0_64, %c0_65, %c64_66] : memref<2x16x384xbf16, #tpu.memory_space<vmem>>, vector<1x16x256xbf16>
    %61 = vector.shape_cast %60 : vector<1x16x256xbf16> to vector<16x256xbf16>
    %c320 = arith.constant 320 : index
    %c0_67 = arith.constant 0 : index
    %62 = vector.load %arg11[%c320, %c0_67] : memref<400x256xbf16, #tpu.memory_space<vmem>>, vector<16x256xbf16>
    tpu.vector_store %arg11[%c320, %c0_67], %61 {strides = array<i32>} : memref<400x256xbf16, #tpu.memory_space<vmem>>, vector<16x256xbf16>,
    %c0_68 = arith.constant 0 : index
    %c0_69 = arith.constant 0 : index
    %c65 = arith.constant 65 : index
    %63 = vector.load %arg1[%c0_68, %c0_69, %c65] : memref<2x16x384xbf16, #tpu.memory_space<vmem>>, vector<1x16x256xbf16>
    %64 = vector.shape_cast %63 : vector<1x16x256xbf16> to vector<16x256xbf16>
    %c336 = arith.constant 336 : index
    %c0_70 = arith.constant 0 : index
    %65 = vector.load %arg11[%c336, %c0_70] : memref<400x256xbf16, #tpu.memory_space<vmem>>, vector<16x256xbf16>
    tpu.vector_store %arg11[%c336, %c0_70], %64 {strides = array<i32>} : memref<400x256xbf16, #tpu.memory_space<vmem>>, vector<16x256xbf16>,
    %c0_71 = arith.constant 0 : index
    %c0_72 = arith.constant 0 : index
    %c66 = arith.constant 66 : index
    %66 = vector.load %arg1[%c0_71, %c0_72, %c66] : memref<2x16x384xbf16, #tpu.memory_space<vmem>>, vector<1x16x256xbf16>
    %67 = vector.shape_cast %66 : vector<1x16x256xbf16> to vector<16x256xbf16>
    %c352 = arith.constant 352 : index
    %c0_73 = arith.constant 0 : index
    %68 = vector.load %arg11[%c352, %c0_73] : memref<400x256xbf16, #tpu.memory_space<vmem>>, vector<16x256xbf16>
    tpu.vector_store %arg11[%c352, %c0_73], %67 {strides = array<i32>} : memref<400x256xbf16, #tpu.memory_space<vmem>>, vector<16x256xbf16>,
    %c0_74 = arith.constant 0 : index
    %c0_75 = arith.constant 0 : index
    %c67 = arith.constant 67 : index
    %69 = vector.load %arg1[%c0_74, %c0_75, %c67] : memref<2x16x384xbf16, #tpu.memory_space<vmem>>, vector<1x16x256xbf16>
    %70 = vector.shape_cast %69 : vector<1x16x256xbf16> to vector<16x256xbf16>
    %c368 = arith.constant 368 : index
    %c0_76 = arith.constant 0 : index
    %71 = vector.load %arg11[%c368, %c0_76] : memref<400x256xbf16, #tpu.memory_space<vmem>>, vector<16x256xbf16>
    tpu.vector_store %arg11[%c368, %c0_76], %70 {strides = array<i32>} : memref<400x256xbf16, #tpu.memory_space<vmem>>, vector<16x256xbf16>,
    %c0_77 = arith.constant 0 : index
    %c0_78 = arith.constant 0 : index
    %c68 = arith.constant 68 : index
    %72 = vector.load %arg1[%c0_77, %c0_78, %c68] : memref<2x16x384xbf16, #tpu.memory_space<vmem>>, vector<1x16x256xbf16>
    %73 = vector.shape_cast %72 : vector<1x16x256xbf16> to vector<16x256xbf16>
    %c384 = arith.constant 384 : index
    %c0_79 = arith.constant 0 : index
    %74 = vector.load %arg11[%c384, %c0_79] : memref<400x256xbf16, #tpu.memory_space<vmem>>, vector<16x256xbf16>
    tpu.vector_store %arg11[%c384, %c0_79], %73 {strides = array<i32>} : memref<400x256xbf16, #tpu.memory_space<vmem>>, vector<16x256xbf16>,
    %c0_80 = arith.constant 0 : index
    %c0_81 = arith.constant 0 : index
    %75 = vector.load %arg2[%c0_80, %c0_81] : memref<64x400xbf16, #tpu.memory_space<vmem>>, vector<64x400xbf16>
    %c0_82 = arith.constant 0 : index
    %c0_83 = arith.constant 0 : index
    %76 = vector.load %arg11[%c0_82, %c0_83] : memref<400x256xbf16, #tpu.memory_space<vmem>>, vector<400x256xbf16>
    %cst = arith.constant dense<0.000000e+00> : vector<64x256xf32>
    %77 = tpu.matmul %75, %76, %cst {dimension_numbers = #tpu.dot_dimension_numbers<[1], [0], [0], [1], [0, 0, 1, 1], [], []>} : vector<64x400xbf16>, vector<400x256xbf16>, vector<64x256xf32> -> vector<64x256xf32>
    %c0_84 = arith.constant 0 : index
    %c0_85 = arith.constant 0 : index
    %78 = vector.load %arg3[%c0_84, %c0_85] : memref<64x1xf32, #tpu.memory_space<vmem>>, vector<64x1xf32>
    %79 = vector.broadcast %78 : vector<64x1xf32> to vector<64x256xf32>
    %80 = arith.addf %77, %79 : vector<64x256xf32>
    %81 = arith.truncf %80 : vector<64x256xf32> to vector<64x256xbf16>
    %c0_86 = arith.constant 0 : index
    %c0_87 = arith.constant 0 : index
    %82 = vector.load %arg12[%c0_86, %c0_87] : memref<64x256xbf16, #tpu.memory_space<vmem>>, vector<64x256xbf16>
    tpu.vector_store %arg12[%c0_86, %c0_87], %81 {strides = array<i32>} : memref<64x256xbf16, #tpu.memory_space<vmem>>, vector<64x256xbf16>,
    %c0_88 = arith.constant 0 : index
    %c0_89 = arith.constant 0 : index
    %83 = vector.load %arg12[%c0_88, %c0_89] : memref<64x256xbf16, #tpu.memory_space<vmem>>, vector<64x128xbf16>
    %c0_90 = arith.constant 0 : index
    %c0_91 = arith.constant 0 : index
    %84 = vector.load %arg13[%c0_90, %c0_91] : memref<1600x128xbf16, #tpu.memory_space<vmem>>, vector<64x128xbf16>
    tpu.vector_store %arg13[%c0_90, %c0_91], %83 {strides = array<i32>} : memref<1600x128xbf16, #tpu.memory_space<vmem>>, vector<64x128xbf16>,
    %c0_92 = arith.constant 0 : index
    %c1_93 = arith.constant 1 : index
    %85 = vector.load %arg12[%c0_92, %c1_93] : memref<64x256xbf16, #tpu.memory_space<vmem>>, vector<64x128xbf16>
    %c64_94 = arith.constant 64 : index
    %c0_95 = arith.constant 0 : index
    %86 = vector.load %arg13[%c64_94, %c0_95] : memref<1600x128xbf16, #tpu.memory_space<vmem>>, vector<64x128xbf16>
    tpu.vector_store %arg13[%c64_94, %c0_95], %85 {strides = array<i32>} : memref<1600x128xbf16, #tpu.memory_space<vmem>>, vector<64x128xbf16>,
    %c0_96 = arith.constant 0 : index
    %c2_97 = arith.constant 2 : index
    %87 = vector.load %arg12[%c0_96, %c2_97] : memref<64x256xbf16, #tpu.memory_space<vmem>>, vector<64x128xbf16>
    %c128_98 = arith.constant 128 : index
    %c0_99 = arith.constant 0 : index
    %88 = vector.load %arg13[%c128_98, %c0_99] : memref<1600x128xbf16, #tpu.memory_space<vmem>>, vector<64x128xbf16>
    tpu.vector_store %arg13[%c128_98, %c0_99], %87 {strides = array<i32>} : memref<1600x128xbf16, #tpu.memory_space<vmem>>, vector<64x128xbf16>,
    %c0_100 = arith.constant 0 : index
    %c3_101 = arith.constant 3 : index
    %89 = vector.load %arg12[%c0_100, %c3_101] : memref<64x256xbf16, #tpu.memory_space<vmem>>, vector<64x128xbf16>
    %c192_102 = arith.constant 192 : index
    %c0_103 = arith.constant 0 : index
    %90 = vector.load %arg13[%c192_102, %c0_103] : memref<1600x128xbf16, #tpu.memory_space<vmem>>, vector<64x128xbf16>
    tpu.vector_store %arg13[%c192_102, %c0_103], %89 {strides = array<i32>} : memref<1600x128xbf16, #tpu.memory_space<vmem>>, vector<64x128xbf16>,
    %c0_104 = arith.constant 0 : index
    %c4_105 = arith.constant 4 : index
    %91 = vector.load %arg12[%c0_104, %c4_105] : memref<64x256xbf16, #tpu.memory_space<vmem>>, vector<64x128xbf16>
    %c256_106 = arith.constant 256 : index
    %c0_107 = arith.constant 0 : index
    %92 = vector.load %arg13[%c256_106, %c0_107] : memref<1600x128xbf16, #tpu.memory_space<vmem>>, vector<64x128xbf16>
    tpu.vector_store %arg13[%c256_106, %c0_107], %91 {strides = array<i32>} : memref<1600x128xbf16, #tpu.memory_space<vmem>>, vector<64x128xbf16>,
    %c0_108 = arith.constant 0 : index
    %c16_109 = arith.constant 16 : index
    %93 = vector.load %arg12[%c0_108, %c16_109] : memref<64x256xbf16, #tpu.memory_space<vmem>>, vector<64x128xbf16>
    %c320_110 = arith.constant 320 : index
    %c0_111 = arith.constant 0 : index
    %94 = vector.load %arg13[%c320_110, %c0_111] : memref<1600x128xbf16, #tpu.memory_space<vmem>>, vector<64x128xbf16>
    tpu.vector_store %arg13[%c320_110, %c0_111], %93 {strides = array<i32>} : memref<1600x128xbf16, #tpu.memory_space<vmem>>, vector<64x128xbf16>,
    %c0_112 = arith.constant 0 : index
    %c17_113 = arith.constant 17 : index
    %95 = vector.load %arg12[%c0_112, %c17_113] : memref<64x256xbf16, #tpu.memory_space<vmem>>, vector<64x128xbf16>
    %c384_114 = arith.constant 384 : index
    %c0_115 = arith.constant 0 : index
    %96 = vector.load %arg13[%c384_114, %c0_115] : memref<1600x128xbf16, #tpu.memory_space<vmem>>, vector<64x128xbf16>
    tpu.vector_store %arg13[%c384_114, %c0_115], %95 {strides = array<i32>} : memref<1600x128xbf16, #tpu.memory_space<vmem>>, vector<64x128xbf16>,
    %c0_116 = arith.constant 0 : index
    %c18_117 = arith.constant 18 : index
    %97 = vector.load %arg12[%c0_116, %c18_117] : memref<64x256xbf16, #tpu.memory_space<vmem>>, vector<64x128xbf16>
    %c448 = arith.constant 448 : index
    %c0_118 = arith.constant 0 : index
    %98 = vector.load %arg13[%c448, %c0_118] : memref<1600x128xbf16, #tpu.memory_space<vmem>>, vector<64x128xbf16>
    tpu.vector_store %arg13[%c448, %c0_118], %97 {strides = array<i32>} : memref<1600x128xbf16, #tpu.memory_space<vmem>>, vector<64x128xbf16>,
    %c0_119 = arith.constant 0 : index
    %c19_120 = arith.constant 19 : index
    %99 = vector.load %arg12[%c0_119, %c19_120] : memref<64x256xbf16, #tpu.memory_space<vmem>>, vector<64x128xbf16>
    %c512 = arith.constant 512 : index
    %c0_121 = arith.constant 0 : index
    %100 = vector.load %arg13[%c512, %c0_121] : memref<1600x128xbf16, #tpu.memory_space<vmem>>, vector<64x128xbf16>
    tpu.vector_store %arg13[%c512, %c0_121], %99 {strides = array<i32>} : memref<1600x128xbf16, #tpu.memory_space<vmem>>, vector<64x128xbf16>,
    %c0_122 = arith.constant 0 : index
    %c20_123 = arith.constant 20 : index
    %101 = vector.load %arg12[%c0_122, %c20_123] : memref<64x256xbf16, #tpu.memory_space<vmem>>, vector<64x128xbf16>
    %c576 = arith.constant 576 : index
    %c0_124 = arith.constant 0 : index
    %102 = vector.load %arg13[%c576, %c0_124] : memref<1600x128xbf16, #tpu.memory_space<vmem>>, vector<64x128xbf16>
    tpu.vector_store %arg13[%c576, %c0_124], %101 {strides = array<i32>} : memref<1600x128xbf16, #tpu.memory_space<vmem>>, vector<64x128xbf16>,
    %c0_125 = arith.constant 0 : index
    %c32_126 = arith.constant 32 : index
    %103 = vector.load %arg12[%c0_125, %c32_126] : memref<64x256xbf16, #tpu.memory_space<vmem>>, vector<64x128xbf16>
    %c640 = arith.constant 640 : index
    %c0_127 = arith.constant 0 : index
    %104 = vector.load %arg13[%c640, %c0_127] : memref<1600x128xbf16, #tpu.memory_space<vmem>>, vector<64x128xbf16>
    tpu.vector_store %arg13[%c640, %c0_127], %103 {strides = array<i32>} : memref<1600x128xbf16, #tpu.memory_space<vmem>>, vector<64x128xbf16>,
    %c0_128 = arith.constant 0 : index
    %c33_129 = arith.constant 33 : index
    %105 = vector.load %arg12[%c0_128, %c33_129] : memref<64x256xbf16, #tpu.memory_space<vmem>>, vector<64x128xbf16>
    %c704 = arith.constant 704 : index
    %c0_130 = arith.constant 0 : index
    %106 = vector.load %arg13[%c704, %c0_130] : memref<1600x128xbf16, #tpu.memory_space<vmem>>, vector<64x128xbf16>
    tpu.vector_store %arg13[%c704, %c0_130], %105 {strides = array<i32>} : memref<1600x128xbf16, #tpu.memory_space<vmem>>, vector<64x128xbf16>,
    %c0_131 = arith.constant 0 : index
    %c34_132 = arith.constant 34 : index
    %107 = vector.load %arg12[%c0_131, %c34_132] : memref<64x256xbf16, #tpu.memory_space<vmem>>, vector<64x128xbf16>
    %c768 = arith.constant 768 : index
    %c0_133 = arith.constant 0 : index
    %108 = vector.load %arg13[%c768, %c0_133] : memref<1600x128xbf16, #tpu.memory_space<vmem>>, vector<64x128xbf16>
    tpu.vector_store %arg13[%c768, %c0_133], %107 {strides = array<i32>} : memref<1600x128xbf16, #tpu.memory_space<vmem>>, vector<64x128xbf16>,
    %c0_134 = arith.constant 0 : index
    %c35_135 = arith.constant 35 : index
    %109 = vector.load %arg12[%c0_134, %c35_135] : memref<64x256xbf16, #tpu.memory_space<vmem>>, vector<64x128xbf16>
    %c832 = arith.constant 832 : index
    %c0_136 = arith.constant 0 : index
    %110 = vector.load %arg13[%c832, %c0_136] : memref<1600x128xbf16, #tpu.memory_space<vmem>>, vector<64x128xbf16>
    tpu.vector_store %arg13[%c832, %c0_136], %109 {strides = array<i32>} : memref<1600x128xbf16, #tpu.memory_space<vmem>>, vector<64x128xbf16>,
    %c0_137 = arith.constant 0 : index
    %c36_138 = arith.constant 36 : index
    %111 = vector.load %arg12[%c0_137, %c36_138] : memref<64x256xbf16, #tpu.memory_space<vmem>>, vector<64x128xbf16>
    %c896 = arith.constant 896 : index
    %c0_139 = arith.constant 0 : index
    %112 = vector.load %arg13[%c896, %c0_139] : memref<1600x128xbf16, #tpu.memory_space<vmem>>, vector<64x128xbf16>
    tpu.vector_store %arg13[%c896, %c0_139], %111 {strides = array<i32>} : memref<1600x128xbf16, #tpu.memory_space<vmem>>, vector<64x128xbf16>,
    %c0_140 = arith.constant 0 : index
    %c48_141 = arith.constant 48 : index
    %113 = vector.load %arg12[%c0_140, %c48_141] : memref<64x256xbf16, #tpu.memory_space<vmem>>, vector<64x128xbf16>
    %c960 = arith.constant 960 : index
    %c0_142 = arith.constant 0 : index
    %114 = vector.load %arg13[%c960, %c0_142] : memref<1600x128xbf16, #tpu.memory_space<vmem>>, vector<64x128xbf16>
    tpu.vector_store %arg13[%c960, %c0_142], %113 {strides = array<i32>} : memref<1600x128xbf16, #tpu.memory_space<vmem>>, vector<64x128xbf16>,
    %c0_143 = arith.constant 0 : index
    %c49_144 = arith.constant 49 : index
    %115 = vector.load %arg12[%c0_143, %c49_144] : memref<64x256xbf16, #tpu.memory_space<vmem>>, vector<64x128xbf16>
    %c1024 = arith.constant 1024 : index
    %c0_145 = arith.constant 0 : index
    %116 = vector.load %arg13[%c1024, %c0_145] : memref<1600x128xbf16, #tpu.memory_space<vmem>>, vector<64x128xbf16>
    tpu.vector_store %arg13[%c1024, %c0_145], %115 {strides = array<i32>} : memref<1600x128xbf16, #tpu.memory_space<vmem>>, vector<64x128xbf16>,
    %c0_146 = arith.constant 0 : index
    %c50_147 = arith.constant 50 : index
    %117 = vector.load %arg12[%c0_146, %c50_147] : memref<64x256xbf16, #tpu.memory_space<vmem>>, vector<64x128xbf16>
    %c1088 = arith.constant 1088 : index
    %c0_148 = arith.constant 0 : index
    %118 = vector.load %arg13[%c1088, %c0_148] : memref<1600x128xbf16, #tpu.memory_space<vmem>>, vector<64x128xbf16>
    tpu.vector_store %arg13[%c1088, %c0_148], %117 {strides = array<i32>} : memref<1600x128xbf16, #tpu.memory_space<vmem>>, vector<64x128xbf16>,
    %c0_149 = arith.constant 0 : index
    %c51_150 = arith.constant 51 : index
    %119 = vector.load %arg12[%c0_149, %c51_150] : memref<64x256xbf16, #tpu.memory_space<vmem>>, vector<64x128xbf16>
    %c1152 = arith.constant 1152 : index
    %c0_151 = arith.constant 0 : index
    %120 = vector.load %arg13[%c1152, %c0_151] : memref<1600x128xbf16, #tpu.memory_space<vmem>>, vector<64x128xbf16>
    tpu.vector_store %arg13[%c1152, %c0_151], %119 {strides = array<i32>} : memref<1600x128xbf16, #tpu.memory_space<vmem>>, vector<64x128xbf16>,
    %c0_152 = arith.constant 0 : index
    %c52_153 = arith.constant 52 : index
    %121 = vector.load %arg12[%c0_152, %c52_153] : memref<64x256xbf16, #tpu.memory_space<vmem>>, vector<64x128xbf16>
    %c1216 = arith.constant 1216 : index
    %c0_154 = arith.constant 0 : index
    %122 = vector.load %arg13[%c1216, %c0_154] : memref<1600x128xbf16, #tpu.memory_space<vmem>>, vector<64x128xbf16>
    tpu.vector_store %arg13[%c1216, %c0_154], %121 {strides = array<i32>} : memref<1600x128xbf16, #tpu.memory_space<vmem>>, vector<64x128xbf16>,
    %c0_155 = arith.constant 0 : index
    %c64_156 = arith.constant 64 : index
    %123 = vector.load %arg12[%c0_155, %c64_156] : memref<64x256xbf16, #tpu.memory_space<vmem>>, vector<64x128xbf16>
    %c1280 = arith.constant 1280 : index
    %c0_157 = arith.constant 0 : index
    %124 = vector.load %arg13[%c1280, %c0_157] : memref<1600x128xbf16, #tpu.memory_space<vmem>>, vector<64x128xbf16>
    tpu.vector_store %arg13[%c1280, %c0_157], %123 {strides = array<i32>} : memref<1600x128xbf16, #tpu.memory_space<vmem>>, vector<64x128xbf16>,
    %c0_158 = arith.constant 0 : index
    %c65_159 = arith.constant 65 : index
    %125 = vector.load %arg12[%c0_158, %c65_159] : memref<64x256xbf16, #tpu.memory_space<vmem>>, vector<64x128xbf16>
    %c1344 = arith.constant 1344 : index
    %c0_160 = arith.constant 0 : index
    %126 = vector.load %arg13[%c1344, %c0_160] : memref<1600x128xbf16, #tpu.memory_space<vmem>>, vector<64x128xbf16>
    tpu.vector_store %arg13[%c1344, %c0_160], %125 {strides = array<i32>} : memref<1600x128xbf16, #tpu.memory_space<vmem>>, vector<64x128xbf16>,
    %c0_161 = arith.constant 0 : index
    %c66_162 = arith.constant 66 : index
    %127 = vector.load %arg12[%c0_161, %c66_162] : memref<64x256xbf16, #tpu.memory_space<vmem>>, vector<64x128xbf16>
    %c1408 = arith.constant 1408 : index
    %c0_163 = arith.constant 0 : index
    %128 = vector.load %arg13[%c1408, %c0_163] : memref<1600x128xbf16, #tpu.memory_space<vmem>>, vector<64x128xbf16>
    tpu.vector_store %arg13[%c1408, %c0_163], %127 {strides = array<i32>} : memref<1600x128xbf16, #tpu.memory_space<vmem>>, vector<64x128xbf16>,
    %c0_164 = arith.constant 0 : index
    %c67_165 = arith.constant 67 : index
    %129 = vector.load %arg12[%c0_164, %c67_165] : memref<64x256xbf16, #tpu.memory_space<vmem>>, vector<64x128xbf16>
    %c1472 = arith.constant 1472 : index
    %c0_166 = arith.constant 0 : index
    %130 = vector.load %arg13[%c1472, %c0_166] : memref<1600x128xbf16, #tpu.memory_space<vmem>>, vector<64x128xbf16>
    tpu.vector_store %arg13[%c1472, %c0_166], %129 {strides = array<i32>} : memref<1600x128xbf16, #tpu.memory_space<vmem>>, vector<64x128xbf16>,
    %c0_167 = arith.constant 0 : index
    %c68_168 = arith.constant 68 : index
    %131 = vector.load %arg12[%c0_167, %c68_168] : memref<64x256xbf16, #tpu.memory_space<vmem>>, vector<64x128xbf16>
    %c1536 = arith.constant 1536 : index
    %c0_169 = arith.constant 0 : index
    %132 = vector.load %arg13[%c1536, %c0_169] : memref<1600x128xbf16, #tpu.memory_space<vmem>>, vector<64x128xbf16>
    tpu.vector_store %arg13[%c1536, %c0_169], %131 {strides = array<i32>} : memref<1600x128xbf16, #tpu.memory_space<vmem>>, vector<64x128xbf16>,
    %c0_170 = arith.constant 0 : index
    %c0_171 = arith.constant 0 : index
    %133 = vector.load %arg4[%c0_170, %c0_171] : memref<32x1600xbf16, #tpu.memory_space<vmem>>, vector<32x1600xbf16>
    %c0_172 = arith.constant 0 : index
    %c0_173 = arith.constant 0 : index
    %134 = vector.load %arg13[%c0_172, %c0_173] : memref<1600x128xbf16, #tpu.memory_space<vmem>>, vector<1600x128xbf16>
    %cst_174 = arith.constant dense<0.000000e+00> : vector<32x128xf32>
    %135 = tpu.matmul %133, %134, %cst_174 {dimension_numbers = #tpu.dot_dimension_numbers<[1], [0], [0], [1], [0, 0, 1, 1], [], []>} : vector<32x1600xbf16>, vector<1600x128xbf16>, vector<32x128xf32> -> vector<32x128xf32>
    %c0_175 = arith.constant 0 : index
    %c0_176 = arith.constant 0 : index
    %136 = vector.load %arg5[%c0_175, %c0_176] : memref<32x1xf32, #tpu.memory_space<vmem>>, vector<32x1xf32>
    %137 = vector.broadcast %136 : vector<32x1xf32> to vector<32x128xf32>
    %138 = arith.addf %135, %137 : vector<32x128xf32>
    %139 = arith.truncf %138 : vector<32x128xf32> to vector<32x128xbf16>
    %c0_177 = arith.constant 0 : index
    %c0_178 = arith.constant 0 : index
    %c0_179 = arith.constant 0 : index
    %140 = vector.load %arg14[%c0_177, %c0_178, %c0_179] : memref<2x32x128xbf16, #tpu.memory_space<vmem>>, vector<1x32x128xbf16>
    %141 = vector.shape_cast %140 : vector<1x32x128xbf16> to vector<32x128xbf16>
    %142 = vector.shape_cast %139 : vector<32x128xbf16> to vector<1x32x128xbf16>
    tpu.vector_store %arg14[%c0_177, %c0_178, %c0_179], %142 {strides = array<i32>} : memref<2x32x128xbf16, #tpu.memory_space<vmem>>, vector<1x32x128xbf16>,
    %c1_180 = arith.constant 1 : index
    %c0_181 = arith.constant 0 : index
    %c0_182 = arith.constant 0 : index
    %143 = vector.load %arg1[%c1_180, %c0_181, %c0_182] : memref<2x16x384xbf16, #tpu.memory_space<vmem>>, vector<1x16x256xbf16>
    %144 = vector.shape_cast %143 : vector<1x16x256xbf16> to vector<16x256xbf16>
    %c0_183 = arith.constant 0 : index
    %c0_184 = arith.constant 0 : index
    %145 = vector.load %arg11[%c0_183, %c0_184] : memref<400x256xbf16, #tpu.memory_space<vmem>>, vector<16x256xbf16>
    tpu.vector_store %arg11[%c0_183, %c0_184], %144 {strides = array<i32>} : memref<400x256xbf16, #tpu.memory_space<vmem>>, vector<16x256xbf16>,
    %c1_185 = arith.constant 1 : index
    %c0_186 = arith.constant 0 : index
    %c1_187 = arith.constant 1 : index
    %146 = vector.load %arg1[%c1_185, %c0_186, %c1_187] : memref<2x16x384xbf16, #tpu.memory_space<vmem>>, vector<1x16x256xbf16>
    %147 = vector.shape_cast %146 : vector<1x16x256xbf16> to vector<16x256xbf16>
    %c16_188 = arith.constant 16 : index
    %c0_189 = arith.constant 0 : index
    %148 = vector.load %arg11[%c16_188, %c0_189] : memref<400x256xbf16, #tpu.memory_space<vmem>>, vector<16x256xbf16>
    tpu.vector_store %arg11[%c16_188, %c0_189], %147 {strides = array<i32>} : memref<400x256xbf16, #tpu.memory_space<vmem>>, vector<16x256xbf16>,
    %c1_190 = arith.constant 1 : index
    %c0_191 = arith.constant 0 : index
    %c2_192 = arith.constant 2 : index
    %149 = vector.load %arg1[%c1_190, %c0_191, %c2_192] : memref<2x16x384xbf16, #tpu.memory_space<vmem>>, vector<1x16x256xbf16>
    %150 = vector.shape_cast %149 : vector<1x16x256xbf16> to vector<16x256xbf16>
    %c32_193 = arith.constant 32 : index
    %c0_194 = arith.constant 0 : index
    %151 = vector.load %arg11[%c32_193, %c0_194] : memref<400x256xbf16, #tpu.memory_space<vmem>>, vector<16x256xbf16>
    tpu.vector_store %arg11[%c32_193, %c0_194], %150 {strides = array<i32>} : memref<400x256xbf16, #tpu.memory_space<vmem>>, vector<16x256xbf16>,
    %c1_195 = arith.constant 1 : index
    %c0_196 = arith.constant 0 : index
    %c3_197 = arith.constant 3 : index
    %152 = vector.load %arg1[%c1_195, %c0_196, %c3_197] : memref<2x16x384xbf16, #tpu.memory_space<vmem>>, vector<1x16x256xbf16>
    %153 = vector.shape_cast %152 : vector<1x16x256xbf16> to vector<16x256xbf16>
    %c48_198 = arith.constant 48 : index
    %c0_199 = arith.constant 0 : index
    %154 = vector.load %arg11[%c48_198, %c0_199] : memref<400x256xbf16, #tpu.memory_space<vmem>>, vector<16x256xbf16>
    tpu.vector_store %arg11[%c48_198, %c0_199], %153 {strides = array<i32>} : memref<400x256xbf16, #tpu.memory_space<vmem>>, vector<16x256xbf16>,
    %c1_200 = arith.constant 1 : index
    %c0_201 = arith.constant 0 : index
    %c4_202 = arith.constant 4 : index
    %155 = vector.load %arg1[%c1_200, %c0_201, %c4_202] : memref<2x16x384xbf16, #tpu.memory_space<vmem>>, vector<1x16x256xbf16>
    %156 = vector.shape_cast %155 : vector<1x16x256xbf16> to vector<16x256xbf16>
    %c64_203 = arith.constant 64 : index
    %c0_204 = arith.constant 0 : index
    %157 = vector.load %arg11[%c64_203, %c0_204] : memref<400x256xbf16, #tpu.memory_space<vmem>>, vector<16x256xbf16>
    tpu.vector_store %arg11[%c64_203, %c0_204], %156 {strides = array<i32>} : memref<400x256xbf16, #tpu.memory_space<vmem>>, vector<16x256xbf16>,
    %c1_205 = arith.constant 1 : index
    %c0_206 = arith.constant 0 : index
    %c16_207 = arith.constant 16 : index
    %158 = vector.load %arg1[%c1_205, %c0_206, %c16_207] : memref<2x16x384xbf16, #tpu.memory_space<vmem>>, vector<1x16x256xbf16>
    %159 = vector.shape_cast %158 : vector<1x16x256xbf16> to vector<16x256xbf16>
    %c80_208 = arith.constant 80 : index
    %c0_209 = arith.constant 0 : index
    %160 = vector.load %arg11[%c80_208, %c0_209] : memref<400x256xbf16, #tpu.memory_space<vmem>>, vector<16x256xbf16>
    tpu.vector_store %arg11[%c80_208, %c0_209], %159 {strides = array<i32>} : memref<400x256xbf16, #tpu.memory_space<vmem>>, vector<16x256xbf16>,
    %c1_210 = arith.constant 1 : index
    %c0_211 = arith.constant 0 : index
    %c17_212 = arith.constant 17 : index
    %161 = vector.load %arg1[%c1_210, %c0_211, %c17_212] : memref<2x16x384xbf16, #tpu.memory_space<vmem>>, vector<1x16x256xbf16>
    %162 = vector.shape_cast %161 : vector<1x16x256xbf16> to vector<16x256xbf16>
    %c96_213 = arith.constant 96 : index
    %c0_214 = arith.constant 0 : index
    %163 = vector.load %arg11[%c96_213, %c0_214] : memref<400x256xbf16, #tpu.memory_space<vmem>>, vector<16x256xbf16>
    tpu.vector_store %arg11[%c96_213, %c0_214], %162 {strides = array<i32>} : memref<400x256xbf16, #tpu.memory_space<vmem>>, vector<16x256xbf16>,
    %c1_215 = arith.constant 1 : index
    %c0_216 = arith.constant 0 : index
    %c18_217 = arith.constant 18 : index
    %164 = vector.load %arg1[%c1_215, %c0_216, %c18_217] : memref<2x16x384xbf16, #tpu.memory_space<vmem>>, vector<1x16x256xbf16>
    %165 = vector.shape_cast %164 : vector<1x16x256xbf16> to vector<16x256xbf16>
    %c112_218 = arith.constant 112 : index
    %c0_219 = arith.constant 0 : index
    %166 = vector.load %arg11[%c112_218, %c0_219] : memref<400x256xbf16, #tpu.memory_space<vmem>>, vector<16x256xbf16>
    tpu.vector_store %arg11[%c112_218, %c0_219], %165 {strides = array<i32>} : memref<400x256xbf16, #tpu.memory_space<vmem>>, vector<16x256xbf16>,
    %c1_220 = arith.constant 1 : index
    %c0_221 = arith.constant 0 : index
    %c19_222 = arith.constant 19 : index
    %167 = vector.load %arg1[%c1_220, %c0_221, %c19_222] : memref<2x16x384xbf16, #tpu.memory_space<vmem>>, vector<1x16x256xbf16>
    %168 = vector.shape_cast %167 : vector<1x16x256xbf16> to vector<16x256xbf16>
    %c128_223 = arith.constant 128 : index
    %c0_224 = arith.constant 0 : index
    %169 = vector.load %arg11[%c128_223, %c0_224] : memref<400x256xbf16, #tpu.memory_space<vmem>>, vector<16x256xbf16>
    tpu.vector_store %arg11[%c128_223, %c0_224], %168 {strides = array<i32>} : memref<400x256xbf16, #tpu.memory_space<vmem>>, vector<16x256xbf16>,
    %c1_225 = arith.constant 1 : index
    %c0_226 = arith.constant 0 : index
    %c20_227 = arith.constant 20 : index
    %170 = vector.load %arg1[%c1_225, %c0_226, %c20_227] : memref<2x16x384xbf16, #tpu.memory_space<vmem>>, vector<1x16x256xbf16>
    %171 = vector.shape_cast %170 : vector<1x16x256xbf16> to vector<16x256xbf16>
    %c144_228 = arith.constant 144 : index
    %c0_229 = arith.constant 0 : index
    %172 = vector.load %arg11[%c144_228, %c0_229] : memref<400x256xbf16, #tpu.memory_space<vmem>>, vector<16x256xbf16>
    tpu.vector_store %arg11[%c144_228, %c0_229], %171 {strides = array<i32>} : memref<400x256xbf16, #tpu.memory_space<vmem>>, vector<16x256xbf16>,
    %c1_230 = arith.constant 1 : index
    %c0_231 = arith.constant 0 : index
    %c32_232 = arith.constant 32 : index
    %173 = vector.load %arg1[%c1_230, %c0_231, %c32_232] : memref<2x16x384xbf16, #tpu.memory_space<vmem>>, vector<1x16x256xbf16>
    %174 = vector.shape_cast %173 : vector<1x16x256xbf16> to vector<16x256xbf16>
    %c160_233 = arith.constant 160 : index
    %c0_234 = arith.constant 0 : index
    %175 = vector.load %arg11[%c160_233, %c0_234] : memref<400x256xbf16, #tpu.memory_space<vmem>>, vector<16x256xbf16>
    tpu.vector_store %arg11[%c160_233, %c0_234], %174 {strides = array<i32>} : memref<400x256xbf16, #tpu.memory_space<vmem>>, vector<16x256xbf16>,
    %c1_235 = arith.constant 1 : index
    %c0_236 = arith.constant 0 : index
    %c33_237 = arith.constant 33 : index
    %176 = vector.load %arg1[%c1_235, %c0_236, %c33_237] : memref<2x16x384xbf16, #tpu.memory_space<vmem>>, vector<1x16x256xbf16>
    %177 = vector.shape_cast %176 : vector<1x16x256xbf16> to vector<16x256xbf16>
    %c176_238 = arith.constant 176 : index
    %c0_239 = arith.constant 0 : index
    %178 = vector.load %arg11[%c176_238, %c0_239] : memref<400x256xbf16, #tpu.memory_space<vmem>>, vector<16x256xbf16>
    tpu.vector_store %arg11[%c176_238, %c0_239], %177 {strides = array<i32>} : memref<400x256xbf16, #tpu.memory_space<vmem>>, vector<16x256xbf16>,
    %c1_240 = arith.constant 1 : index
    %c0_241 = arith.constant 0 : index
    %c34_242 = arith.constant 34 : index
    %179 = vector.load %arg1[%c1_240, %c0_241, %c34_242] : memref<2x16x384xbf16, #tpu.memory_space<vmem>>, vector<1x16x256xbf16>
    %180 = vector.shape_cast %179 : vector<1x16x256xbf16> to vector<16x256xbf16>
    %c192_243 = arith.constant 192 : index
    %c0_244 = arith.constant 0 : index
    %181 = vector.load %arg11[%c192_243, %c0_244] : memref<400x256xbf16, #tpu.memory_space<vmem>>, vector<16x256xbf16>
    tpu.vector_store %arg11[%c192_243, %c0_244], %180 {strides = array<i32>} : memref<400x256xbf16, #tpu.memory_space<vmem>>, vector<16x256xbf16>,
    %c1_245 = arith.constant 1 : index
    %c0_246 = arith.constant 0 : index
    %c35_247 = arith.constant 35 : index
    %182 = vector.load %arg1[%c1_245, %c0_246, %c35_247] : memref<2x16x384xbf16, #tpu.memory_space<vmem>>, vector<1x16x256xbf16>
    %183 = vector.shape_cast %182 : vector<1x16x256xbf16> to vector<16x256xbf16>
    %c208_248 = arith.constant 208 : index
    %c0_249 = arith.constant 0 : index
    %184 = vector.load %arg11[%c208_248, %c0_249] : memref<400x256xbf16, #tpu.memory_space<vmem>>, vector<16x256xbf16>
    tpu.vector_store %arg11[%c208_248, %c0_249], %183 {strides = array<i32>} : memref<400x256xbf16, #tpu.memory_space<vmem>>, vector<16x256xbf16>,
    %c1_250 = arith.constant 1 : index
    %c0_251 = arith.constant 0 : index
    %c36_252 = arith.constant 36 : index
    %185 = vector.load %arg1[%c1_250, %c0_251, %c36_252] : memref<2x16x384xbf16, #tpu.memory_space<vmem>>, vector<1x16x256xbf16>
    %186 = vector.shape_cast %185 : vector<1x16x256xbf16> to vector<16x256xbf16>
    %c224_253 = arith.constant 224 : index
    %c0_254 = arith.constant 0 : index
    %187 = vector.load %arg11[%c224_253, %c0_254] : memref<400x256xbf16, #tpu.memory_space<vmem>>, vector<16x256xbf16>
    tpu.vector_store %arg11[%c224_253, %c0_254], %186 {strides = array<i32>} : memref<400x256xbf16, #tpu.memory_space<vmem>>, vector<16x256xbf16>,
    %c1_255 = arith.constant 1 : index
    %c0_256 = arith.constant 0 : index
    %c48_257 = arith.constant 48 : index
    %188 = vector.load %arg1[%c1_255, %c0_256, %c48_257] : memref<2x16x384xbf16, #tpu.memory_space<vmem>>, vector<1x16x256xbf16>
    %189 = vector.shape_cast %188 : vector<1x16x256xbf16> to vector<16x256xbf16>
    %c240_258 = arith.constant 240 : index
    %c0_259 = arith.constant 0 : index
    %190 = vector.load %arg11[%c240_258, %c0_259] : memref<400x256xbf16, #tpu.memory_space<vmem>>, vector<16x256xbf16>
    tpu.vector_store %arg11[%c240_258, %c0_259], %189 {strides = array<i32>} : memref<400x256xbf16, #tpu.memory_space<vmem>>, vector<16x256xbf16>,
    %c1_260 = arith.constant 1 : index
    %c0_261 = arith.constant 0 : index
    %c49_262 = arith.constant 49 : index
    %191 = vector.load %arg1[%c1_260, %c0_261, %c49_262] : memref<2x16x384xbf16, #tpu.memory_space<vmem>>, vector<1x16x256xbf16>
    %192 = vector.shape_cast %191 : vector<1x16x256xbf16> to vector<16x256xbf16>
    %c256_263 = arith.constant 256 : index
    %c0_264 = arith.constant 0 : index
    %193 = vector.load %arg11[%c256_263, %c0_264] : memref<400x256xbf16, #tpu.memory_space<vmem>>, vector<16x256xbf16>
    tpu.vector_store %arg11[%c256_263, %c0_264], %192 {strides = array<i32>} : memref<400x256xbf16, #tpu.memory_space<vmem>>, vector<16x256xbf16>,
    %c1_265 = arith.constant 1 : index
    %c0_266 = arith.constant 0 : index
    %c50_267 = arith.constant 50 : index
    %194 = vector.load %arg1[%c1_265, %c0_266, %c50_267] : memref<2x16x384xbf16, #tpu.memory_space<vmem>>, vector<1x16x256xbf16>
    %195 = vector.shape_cast %194 : vector<1x16x256xbf16> to vector<16x256xbf16>
    %c272_268 = arith.constant 272 : index
    %c0_269 = arith.constant 0 : index
    %196 = vector.load %arg11[%c272_268, %c0_269] : memref<400x256xbf16, #tpu.memory_space<vmem>>, vector<16x256xbf16>
    tpu.vector_store %arg11[%c272_268, %c0_269], %195 {strides = array<i32>} : memref<400x256xbf16, #tpu.memory_space<vmem>>, vector<16x256xbf16>,
    %c1_270 = arith.constant 1 : index
    %c0_271 = arith.constant 0 : index
    %c51_272 = arith.constant 51 : index
    %197 = vector.load %arg1[%c1_270, %c0_271, %c51_272] : memref<2x16x384xbf16, #tpu.memory_space<vmem>>, vector<1x16x256xbf16>
    %198 = vector.shape_cast %197 : vector<1x16x256xbf16> to vector<16x256xbf16>
    %c288_273 = arith.constant 288 : index
    %c0_274 = arith.constant 0 : index
    %199 = vector.load %arg11[%c288_273, %c0_274] : memref<400x256xbf16, #tpu.memory_space<vmem>>, vector<16x256xbf16>
    tpu.vector_store %arg11[%c288_273, %c0_274], %198 {strides = array<i32>} : memref<400x256xbf16, #tpu.memory_space<vmem>>, vector<16x256xbf16>,
    %c1_275 = arith.constant 1 : index
    %c0_276 = arith.constant 0 : index
    %c52_277 = arith.constant 52 : index
    %200 = vector.load %arg1[%c1_275, %c0_276, %c52_277] : memref<2x16x384xbf16, #tpu.memory_space<vmem>>, vector<1x16x256xbf16>
    %201 = vector.shape_cast %200 : vector<1x16x256xbf16> to vector<16x256xbf16>
    %c304_278 = arith.constant 304 : index
    %c0_279 = arith.constant 0 : index
    %202 = vector.load %arg11[%c304_278, %c0_279] : memref<400x256xbf16, #tpu.memory_space<vmem>>, vector<16x256xbf16>
    tpu.vector_store %arg11[%c304_278, %c0_279], %201 {strides = array<i32>} : memref<400x256xbf16, #tpu.memory_space<vmem>>, vector<16x256xbf16>,
    %c1_280 = arith.constant 1 : index
    %c0_281 = arith.constant 0 : index
    %c64_282 = arith.constant 64 : index
    %203 = vector.load %arg1[%c1_280, %c0_281, %c64_282] : memref<2x16x384xbf16, #tpu.memory_space<vmem>>, vector<1x16x256xbf16>
    %204 = vector.shape_cast %203 : vector<1x16x256xbf16> to vector<16x256xbf16>
    %c320_283 = arith.constant 320 : index
    %c0_284 = arith.constant 0 : index
    %205 = vector.load %arg11[%c320_283, %c0_284] : memref<400x256xbf16, #tpu.memory_space<vmem>>, vector<16x256xbf16>
    tpu.vector_store %arg11[%c320_283, %c0_284], %204 {strides = array<i32>} : memref<400x256xbf16, #tpu.memory_space<vmem>>, vector<16x256xbf16>,
    %c1_285 = arith.constant 1 : index
    %c0_286 = arith.constant 0 : index
    %c65_287 = arith.constant 65 : index
    %206 = vector.load %arg1[%c1_285, %c0_286, %c65_287] : memref<2x16x384xbf16, #tpu.memory_space<vmem>>, vector<1x16x256xbf16>
    %207 = vector.shape_cast %206 : vector<1x16x256xbf16> to vector<16x256xbf16>
    %c336_288 = arith.constant 336 : index
    %c0_289 = arith.constant 0 : index
    %208 = vector.load %arg11[%c336_288, %c0_289] : memref<400x256xbf16, #tpu.memory_space<vmem>>, vector<16x256xbf16>
    tpu.vector_store %arg11[%c336_288, %c0_289], %207 {strides = array<i32>} : memref<400x256xbf16, #tpu.memory_space<vmem>>, vector<16x256xbf16>,
    %c1_290 = arith.constant 1 : index
    %c0_291 = arith.constant 0 : index
    %c66_292 = arith.constant 66 : index
    %209 = vector.load %arg1[%c1_290, %c0_291, %c66_292] : memref<2x16x384xbf16, #tpu.memory_space<vmem>>, vector<1x16x256xbf16>
    %210 = vector.shape_cast %209 : vector<1x16x256xbf16> to vector<16x256xbf16>
    %c352_293 = arith.constant 352 : index
    %c0_294 = arith.constant 0 : index
    %211 = vector.load %arg11[%c352_293, %c0_294] : memref<400x256xbf16, #tpu.memory_space<vmem>>, vector<16x256xbf16>
    tpu.vector_store %arg11[%c352_293, %c0_294], %210 {strides = array<i32>} : memref<400x256xbf16, #tpu.memory_space<vmem>>, vector<16x256xbf16>,
    %c1_295 = arith.constant 1 : index
    %c0_296 = arith.constant 0 : index
    %c67_297 = arith.constant 67 : index
    %212 = vector.load %arg1[%c1_295, %c0_296, %c67_297] : memref<2x16x384xbf16, #tpu.memory_space<vmem>>, vector<1x16x256xbf16>
    %213 = vector.shape_cast %212 : vector<1x16x256xbf16> to vector<16x256xbf16>
    %c368_298 = arith.constant 368 : index
    %c0_299 = arith.constant 0 : index
    %214 = vector.load %arg11[%c368_298, %c0_299] : memref<400x256xbf16, #tpu.memory_space<vmem>>, vector<16x256xbf16>
    tpu.vector_store %arg11[%c368_298, %c0_299], %213 {strides = array<i32>} : memref<400x256xbf16, #tpu.memory_space<vmem>>, vector<16x256xbf16>,
    %c1_300 = arith.constant 1 : index
    %c0_301 = arith.constant 0 : index
    %c68_302 = arith.constant 68 : index
    %215 = vector.load %arg1[%c1_300, %c0_301, %c68_302] : memref<2x16x384xbf16, #tpu.memory_space<vmem>>, vector<1x16x256xbf16>
    %216 = vector.shape_cast %215 : vector<1x16x256xbf16> to vector<16x256xbf16>
    %c384_303 = arith.constant 384 : index
    %c0_304 = arith.constant 0 : index
    %217 = vector.load %arg11[%c384_303, %c0_304] : memref<400x256xbf16, #tpu.memory_space<vmem>>, vector<16x256xbf16>
    tpu.vector_store %arg11[%c384_303, %c0_304], %216 {strides = array<i32>} : memref<400x256xbf16, #tpu.memory_space<vmem>>, vector<16x256xbf16>,
    %c0_305 = arith.constant 0 : index
    %c0_306 = arith.constant 0 : index
    %218 = vector.load %arg2[%c0_305, %c0_306] : memref<64x400xbf16, #tpu.memory_space<vmem>>, vector<64x400xbf16>
    %c0_307 = arith.constant 0 : index
    %c0_308 = arith.constant 0 : index
    %219 = vector.load %arg11[%c0_307, %c0_308] : memref<400x256xbf16, #tpu.memory_space<vmem>>, vector<400x256xbf16>
    %cst_309 = arith.constant dense<0.000000e+00> : vector<64x256xf32>
    %220 = tpu.matmul %218, %219, %cst_309 {dimension_numbers = #tpu.dot_dimension_numbers<[1], [0], [0], [1], [0, 0, 1, 1], [], []>} : vector<64x400xbf16>, vector<400x256xbf16>, vector<64x256xf32> -> vector<64x256xf32>
    %c0_310 = arith.constant 0 : index
    %c0_311 = arith.constant 0 : index
    %221 = vector.load %arg3[%c0_310, %c0_311] : memref<64x1xf32, #tpu.memory_space<vmem>>, vector<64x1xf32>
    %222 = vector.broadcast %221 : vector<64x1xf32> to vector<64x256xf32>
    %223 = arith.addf %220, %222 : vector<64x256xf32>
    %224 = arith.truncf %223 : vector<64x256xf32> to vector<64x256xbf16>
    %c0_312 = arith.constant 0 : index
    %c0_313 = arith.constant 0 : index
    %225 = vector.load %arg12[%c0_312, %c0_313] : memref<64x256xbf16, #tpu.memory_space<vmem>>, vector<64x256xbf16>
    tpu.vector_store %arg12[%c0_312, %c0_313], %224 {strides = array<i32>} : memref<64x256xbf16, #tpu.memory_space<vmem>>, vector<64x256xbf16>,
    %c0_314 = arith.constant 0 : index
    %c0_315 = arith.constant 0 : index
    %226 = vector.load %arg12[%c0_314, %c0_315] : memref<64x256xbf16, #tpu.memory_space<vmem>>, vector<64x128xbf16>
    %c0_316 = arith.constant 0 : index
    %c0_317 = arith.constant 0 : index
    %227 = vector.load %arg13[%c0_316, %c0_317] : memref<1600x128xbf16, #tpu.memory_space<vmem>>, vector<64x128xbf16>
    tpu.vector_store %arg13[%c0_316, %c0_317], %226 {strides = array<i32>} : memref<1600x128xbf16, #tpu.memory_space<vmem>>, vector<64x128xbf16>,
    %c0_318 = arith.constant 0 : index
    %c1_319 = arith.constant 1 : index
    %228 = vector.load %arg12[%c0_318, %c1_319] : memref<64x256xbf16, #tpu.memory_space<vmem>>, vector<64x128xbf16>
    %c64_320 = arith.constant 64 : index
    %c0_321 = arith.constant 0 : index
    %229 = vector.load %arg13[%c64_320, %c0_321] : memref<1600x128xbf16, #tpu.memory_space<vmem>>, vector<64x128xbf16>
    tpu.vector_store %arg13[%c64_320, %c0_321], %228 {strides = array<i32>} : memref<1600x128xbf16, #tpu.memory_space<vmem>>, vector<64x128xbf16>,
    %c0_322 = arith.constant 0 : index
    %c2_323 = arith.constant 2 : index
    %230 = vector.load %arg12[%c0_322, %c2_323] : memref<64x256xbf16, #tpu.memory_space<vmem>>, vector<64x128xbf16>
    %c128_324 = arith.constant 128 : index
    %c0_325 = arith.constant 0 : index
    %231 = vector.load %arg13[%c128_324, %c0_325] : memref<1600x128xbf16, #tpu.memory_space<vmem>>, vector<64x128xbf16>
    tpu.vector_store %arg13[%c128_324, %c0_325], %230 {strides = array<i32>} : memref<1600x128xbf16, #tpu.memory_space<vmem>>, vector<64x128xbf16>,
    %c0_326 = arith.constant 0 : index
    %c3_327 = arith.constant 3 : index
    %232 = vector.load %arg12[%c0_326, %c3_327] : memref<64x256xbf16, #tpu.memory_space<vmem>>, vector<64x128xbf16>
    %c192_328 = arith.constant 192 : index
    %c0_329 = arith.constant 0 : index
    %233 = vector.load %arg13[%c192_328, %c0_329] : memref<1600x128xbf16, #tpu.memory_space<vmem>>, vector<64x128xbf16>
    tpu.vector_store %arg13[%c192_328, %c0_329], %232 {strides = array<i32>} : memref<1600x128xbf16, #tpu.memory_space<vmem>>, vector<64x128xbf16>,
    %c0_330 = arith.constant 0 : index
    %c4_331 = arith.constant 4 : index
    %234 = vector.load %arg12[%c0_330, %c4_331] : memref<64x256xbf16, #tpu.memory_space<vmem>>, vector<64x128xbf16>
    %c256_332 = arith.constant 256 : index
    %c0_333 = arith.constant 0 : index
    %235 = vector.load %arg13[%c256_332, %c0_333] : memref<1600x128xbf16, #tpu.memory_space<vmem>>, vector<64x128xbf16>
    tpu.vector_store %arg13[%c256_332, %c0_333], %234 {strides = array<i32>} : memref<1600x128xbf16, #tpu.memory_space<vmem>>, vector<64x128xbf16>,
    %c0_334 = arith.constant 0 : index
    %c16_335 = arith.constant 16 : index
    %236 = vector.load %arg12[%c0_334, %c16_335] : memref<64x256xbf16, #tpu.memory_space<vmem>>, vector<64x128xbf16>
    %c320_336 = arith.constant 320 : index
    %c0_337 = arith.constant 0 : index
    %237 = vector.load %arg13[%c320_336, %c0_337] : memref<1600x128xbf16, #tpu.memory_space<vmem>>, vector<64x128xbf16>
    tpu.vector_store %arg13[%c320_336, %c0_337], %236 {strides = array<i32>} : memref<1600x128xbf16, #tpu.memory_space<vmem>>, vector<64x128xbf16>,
    %c0_338 = arith.constant 0 : index
    %c17_339 = arith.constant 17 : index
    %238 = vector.load %arg12[%c0_338, %c17_339] : memref<64x256xbf16, #tpu.memory_space<vmem>>, vector<64x128xbf16>
    %c384_340 = arith.constant 384 : index
    %c0_341 = arith.constant 0 : index
    %239 = vector.load %arg13[%c384_340, %c0_341] : memref<1600x128xbf16, #tpu.memory_space<vmem>>, vector<64x128xbf16>
    tpu.vector_store %arg13[%c384_340, %c0_341], %238 {strides = array<i32>} : memref<1600x128xbf16, #tpu.memory_space<vmem>>, vector<64x128xbf16>,
    %c0_342 = arith.constant 0 : index
    %c18_343 = arith.constant 18 : index
    %240 = vector.load %arg12[%c0_342, %c18_343] : memref<64x256xbf16, #tpu.memory_space<vmem>>, vector<64x128xbf16>
    %c448_344 = arith.constant 448 : index
    %c0_345 = arith.constant 0 : index
    %241 = vector.load %arg13[%c448_344, %c0_345] : memref<1600x128xbf16, #tpu.memory_space<vmem>>, vector<64x128xbf16>
    tpu.vector_store %arg13[%c448_344, %c0_345], %240 {strides = array<i32>} : memref<1600x128xbf16, #tpu.memory_space<vmem>>, vector<64x128xbf16>,
    %c0_346 = arith.constant 0 : index
    %c19_347 = arith.constant 19 : index
    %242 = vector.load %arg12[%c0_346, %c19_347] : memref<64x256xbf16, #tpu.memory_space<vmem>>, vector<64x128xbf16>
    %c512_348 = arith.constant 512 : index
    %c0_349 = arith.constant 0 : index
    %243 = vector.load %arg13[%c512_348, %c0_349] : memref<1600x128xbf16, #tpu.memory_space<vmem>>, vector<64x128xbf16>
    tpu.vector_store %arg13[%c512_348, %c0_349], %242 {strides = array<i32>} : memref<1600x128xbf16, #tpu.memory_space<vmem>>, vector<64x128xbf16>,
    %c0_350 = arith.constant 0 : index
    %c20_351 = arith.constant 20 : index
    %244 = vector.load %arg12[%c0_350, %c20_351] : memref<64x256xbf16, #tpu.memory_space<vmem>>, vector<64x128xbf16>
    %c576_352 = arith.constant 576 : index
    %c0_353 = arith.constant 0 : index
    %245 = vector.load %arg13[%c576_352, %c0_353] : memref<1600x128xbf16, #tpu.memory_space<vmem>>, vector<64x128xbf16>
    tpu.vector_store %arg13[%c576_352, %c0_353], %244 {strides = array<i32>} : memref<1600x128xbf16, #tpu.memory_space<vmem>>, vector<64x128xbf16>,
    %c0_354 = arith.constant 0 : index
    %c32_355 = arith.constant 32 : index
    %246 = vector.load %arg12[%c0_354, %c32_355] : memref<64x256xbf16, #tpu.memory_space<vmem>>, vector<64x128xbf16>
    %c640_356 = arith.constant 640 : index
    %c0_357 = arith.constant 0 : index
    %247 = vector.load %arg13[%c640_356, %c0_357] : memref<1600x128xbf16, #tpu.memory_space<vmem>>, vector<64x128xbf16>
    tpu.vector_store %arg13[%c640_356, %c0_357], %246 {strides = array<i32>} : memref<1600x128xbf16, #tpu.memory_space<vmem>>, vector<64x128xbf16>,
    %c0_358 = arith.constant 0 : index
    %c33_359 = arith.constant 33 : index
    %248 = vector.load %arg12[%c0_358, %c33_359] : memref<64x256xbf16, #tpu.memory_space<vmem>>, vector<64x128xbf16>
    %c704_360 = arith.constant 704 : index
    %c0_361 = arith.constant 0 : index
    %249 = vector.load %arg13[%c704_360, %c0_361] : memref<1600x128xbf16, #tpu.memory_space<vmem>>, vector<64x128xbf16>
    tpu.vector_store %arg13[%c704_360, %c0_361], %248 {strides = array<i32>} : memref<1600x128xbf16, #tpu.memory_space<vmem>>, vector<64x128xbf16>,
    %c0_362 = arith.constant 0 : index
    %c34_363 = arith.constant 34 : index
    %250 = vector.load %arg12[%c0_362, %c34_363] : memref<64x256xbf16, #tpu.memory_space<vmem>>, vector<64x128xbf16>
    %c768_364 = arith.constant 768 : index
    %c0_365 = arith.constant 0 : index
    %251 = vector.load %arg13[%c768_364, %c0_365] : memref<1600x128xbf16, #tpu.memory_space<vmem>>, vector<64x128xbf16>
    tpu.vector_store %arg13[%c768_364, %c0_365], %250 {strides = array<i32>} : memref<1600x128xbf16, #tpu.memory_space<vmem>>, vector<64x128xbf16>,
    %c0_366 = arith.constant 0 : index
    %c35_367 = arith.constant 35 : index
    %252 = vector.load %arg12[%c0_366, %c35_367] : memref<64x256xbf16, #tpu.memory_space<vmem>>, vector<64x128xbf16>
    %c832_368 = arith.constant 832 : index
    %c0_369 = arith.constant 0 : index
    %253 = vector.load %arg13[%c832_368, %c0_369] : memref<1600x128xbf16, #tpu.memory_space<vmem>>, vector<64x128xbf16>
    tpu.vector_store %arg13[%c832_368, %c0_369], %252 {strides = array<i32>} : memref<1600x128xbf16, #tpu.memory_space<vmem>>, vector<64x128xbf16>,
    %c0_370 = arith.constant 0 : index
    %c36_371 = arith.constant 36 : index
    %254 = vector.load %arg12[%c0_370, %c36_371] : memref<64x256xbf16, #tpu.memory_space<vmem>>, vector<64x128xbf16>
    %c896_372 = arith.constant 896 : index
    %c0_373 = arith.constant 0 : index
    %255 = vector.load %arg13[%c896_372, %c0_373] : memref<1600x128xbf16, #tpu.memory_space<vmem>>, vector<64x128xbf16>
    tpu.vector_store %arg13[%c896_372, %c0_373], %254 {strides = array<i32>} : memref<1600x128xbf16, #tpu.memory_space<vmem>>, vector<64x128xbf16>,
    %c0_374 = arith.constant 0 : index
    %c48_375 = arith.constant 48 : index
    %256 = vector.load %arg12[%c0_374, %c48_375] : memref<64x256xbf16, #tpu.memory_space<vmem>>, vector<64x128xbf16>
    %c960_376 = arith.constant 960 : index
    %c0_377 = arith.constant 0 : index
    %257 = vector.load %arg13[%c960_376, %c0_377] : memref<1600x128xbf16, #tpu.memory_space<vmem>>, vector<64x128xbf16>
    tpu.vector_store %arg13[%c960_376, %c0_377], %256 {strides = array<i32>} : memref<1600x128xbf16, #tpu.memory_space<vmem>>, vector<64x128xbf16>,
    %c0_378 = arith.constant 0 : index
    %c49_379 = arith.constant 49 : index
    %258 = vector.load %arg12[%c0_378, %c49_379] : memref<64x256xbf16, #tpu.memory_space<vmem>>, vector<64x128xbf16>
    %c1024_380 = arith.constant 1024 : index
    %c0_381 = arith.constant 0 : index
    %259 = vector.load %arg13[%c1024_380, %c0_381] : memref<1600x128xbf16, #tpu.memory_space<vmem>>, vector<64x128xbf16>
    tpu.vector_store %arg13[%c1024_380, %c0_381], %258 {strides = array<i32>} : memref<1600x128xbf16, #tpu.memory_space<vmem>>, vector<64x128xbf16>,
    %c0_382 = arith.constant 0 : index
    %c50_383 = arith.constant 50 : index
    %260 = vector.load %arg12[%c0_382, %c50_383] : memref<64x256xbf16, #tpu.memory_space<vmem>>, vector<64x128xbf16>
    %c1088_384 = arith.constant 1088 : index
    %c0_385 = arith.constant 0 : index
    %261 = vector.load %arg13[%c1088_384, %c0_385] : memref<1600x128xbf16, #tpu.memory_space<vmem>>, vector<64x128xbf16>
    tpu.vector_store %arg13[%c1088_384, %c0_385], %260 {strides = array<i32>} : memref<1600x128xbf16, #tpu.memory_space<vmem>>, vector<64x128xbf16>,
    %c0_386 = arith.constant 0 : index
    %c51_387 = arith.constant 51 : index
    %262 = vector.load %arg12[%c0_386, %c51_387] : memref<64x256xbf16, #tpu.memory_space<vmem>>, vector<64x128xbf16>
    %c1152_388 = arith.constant 1152 : index
    %c0_389 = arith.constant 0 : index
    %263 = vector.load %arg13[%c1152_388, %c0_389] : memref<1600x128xbf16, #tpu.memory_space<vmem>>, vector<64x128xbf16>
    tpu.vector_store %arg13[%c1152_388, %c0_389], %262 {strides = array<i32>} : memref<1600x128xbf16, #tpu.memory_space<vmem>>, vector<64x128xbf16>,
    %c0_390 = arith.constant 0 : index
    %c52_391 = arith.constant 52 : index
    %264 = vector.load %arg12[%c0_390, %c52_391] : memref<64x256xbf16, #tpu.memory_space<vmem>>, vector<64x128xbf16>
    %c1216_392 = arith.constant 1216 : index
    %c0_393 = arith.constant 0 : index
    %265 = vector.load %arg13[%c1216_392, %c0_393] : memref<1600x128xbf16, #tpu.memory_space<vmem>>, vector<64x128xbf16>
    tpu.vector_store %arg13[%c1216_392, %c0_393], %264 {strides = array<i32>} : memref<1600x128xbf16, #tpu.memory_space<vmem>>, vector<64x128xbf16>,
    %c0_394 = arith.constant 0 : index
    %c64_395 = arith.constant 64 : index
    %266 = vector.load %arg12[%c0_394, %c64_395] : memref<64x256xbf16, #tpu.memory_space<vmem>>, vector<64x128xbf16>
    %c1280_396 = arith.constant 1280 : index
    %c0_397 = arith.constant 0 : index
    %267 = vector.load %arg13[%c1280_396, %c0_397] : memref<1600x128xbf16, #tpu.memory_space<vmem>>, vector<64x128xbf16>
    tpu.vector_store %arg13[%c1280_396, %c0_397], %266 {strides = array<i32>} : memref<1600x128xbf16, #tpu.memory_space<vmem>>, vector<64x128xbf16>,
    %c0_398 = arith.constant 0 : index
    %c65_399 = arith.constant 65 : index
    %268 = vector.load %arg12[%c0_398, %c65_399] : memref<64x256xbf16, #tpu.memory_space<vmem>>, vector<64x128xbf16>
    %c1344_400 = arith.constant 1344 : index
    %c0_401 = arith.constant 0 : index
    %269 = vector.load %arg13[%c1344_400, %c0_401] : memref<1600x128xbf16, #tpu.memory_space<vmem>>, vector<64x128xbf16>
    tpu.vector_store %arg13[%c1344_400, %c0_401], %268 {strides = array<i32>} : memref<1600x128xbf16, #tpu.memory_space<vmem>>, vector<64x128xbf16>,
    %c0_402 = arith.constant 0 : index
    %c66_403 = arith.constant 66 : index
    %270 = vector.load %arg12[%c0_402, %c66_403] : memref<64x256xbf16, #tpu.memory_space<vmem>>, vector<64x128xbf16>
    %c1408_404 = arith.constant 1408 : index
    %c0_405 = arith.constant 0 : index
    %271 = vector.load %arg13[%c1408_404, %c0_405] : memref<1600x128xbf16, #tpu.memory_space<vmem>>, vector<64x128xbf16>
    tpu.vector_store %arg13[%c1408_404, %c0_405], %270 {strides = array<i32>} : memref<1600x128xbf16, #tpu.memory_space<vmem>>, vector<64x128xbf16>,
    %c0_406 = arith.constant 0 : index
    %c67_407 = arith.constant 67 : index
    %272 = vector.load %arg12[%c0_406, %c67_407] : memref<64x256xbf16, #tpu.memory_space<vmem>>, vector<64x128xbf16>
    %c1472_408 = arith.constant 1472 : index
    %c0_409 = arith.constant 0 : index
    %273 = vector.load %arg13[%c1472_408, %c0_409] : memref<1600x128xbf16, #tpu.memory_space<vmem>>, vector<64x128xbf16>
    tpu.vector_store %arg13[%c1472_408, %c0_409], %272 {strides = array<i32>} : memref<1600x128xbf16, #tpu.memory_space<vmem>>, vector<64x128xbf16>,
    %c0_410 = arith.constant 0 : index
    %c68_411 = arith.constant 68 : index
    %274 = vector.load %arg12[%c0_410, %c68_411] : memref<64x256xbf16, #tpu.memory_space<vmem>>, vector<64x128xbf16>
    %c1536_412 = arith.constant 1536 : index
    %c0_413 = arith.constant 0 : index
    %275 = vector.load %arg13[%c1536_412, %c0_413] : memref<1600x128xbf16, #tpu.memory_space<vmem>>, vector<64x128xbf16>
    tpu.vector_store %arg13[%c1536_412, %c0_413], %274 {strides = array<i32>} : memref<1600x128xbf16, #tpu.memory_space<vmem>>, vector<64x128xbf16>,
    %c0_414 = arith.constant 0 : index
    %c0_415 = arith.constant 0 : index
    %276 = vector.load %arg4[%c0_414, %c0_415] : memref<32x1600xbf16, #tpu.memory_space<vmem>>, vector<32x1600xbf16>
    %c0_416 = arith.constant 0 : index
    %c0_417 = arith.constant 0 : index
    %277 = vector.load %arg13[%c0_416, %c0_417] : memref<1600x128xbf16, #tpu.memory_space<vmem>>, vector<1600x128xbf16>
    %cst_418 = arith.constant dense<0.000000e+00> : vector<32x128xf32>
    %278 = tpu.matmul %276, %277, %cst_418 {dimension_numbers = #tpu.dot_dimension_numbers<[1], [0], [0], [1], [0, 0, 1, 1], [], []>} : vector<32x1600xbf16>, vector<1600x128xbf16>, vector<32x128xf32> -> vector<32x128xf32>
    %c0_419 = arith.constant 0 : index
    %c0_420 = arith.constant 0 : index
    %279 = vector.load %arg5[%c0_419, %c0_420] : memref<32x1xf32, #tpu.memory_space<vmem>>, vector<32x1xf32>
    %280 = vector.broadcast %279 : vector<32x1xf32> to vector<32x128xf32>
    %281 = arith.addf %278, %280 : vector<32x128xf32>
    %282 = arith.truncf %281 : vector<32x128xf32> to vector<32x128xbf16>
    %c1_421 = arith.constant 1 : index
    %c0_422 = arith.constant 0 : index
    %c0_423 = arith.constant 0 : index
    %283 = vector.load %arg14[%c1_421, %c0_422, %c0_423] : memref<2x32x128xbf16, #tpu.memory_space<vmem>>, vector<1x32x128xbf16>
    %284 = vector.shape_cast %283 : vector<1x32x128xbf16> to vector<32x128xbf16>
    %285 = vector.shape_cast %282 : vector<32x128xbf16> to vector<1x32x128xbf16>
    tpu.vector_store %arg14[%c1_421, %c0_422, %c0_423], %285 {strides = array<i32>} : memref<2x32x128xbf16, #tpu.memory_space<vmem>>, vector<1x32x128xbf16>,
    %cst_424 = arith.constant 0.000000e+00 : f32
    %286 = vector.broadcast %cst_424 : f32 to vector<2x64xf32>
    %c0_425 = arith.constant 0 : index
    %c0_426 = arith.constant 0 : index
    %287 = vector.load %arg7[%c0_425, %c0_426] : memref<1x64xf32, #tpu.memory_space<vmem>>, vector<1x64xf32>
    %288 = vector.broadcast %287 : vector<1x64xf32> to vector<2x64xf32>
    %289 = arith.addf %286, %288 : vector<2x64xf32>
    %c0_427 = arith.constant 0 : index
    %c0_428 = arith.constant 0 : index
    %c0_429 = arith.constant 0 : index
    %290 = vector.load %arg14[%c0_427, %c0_428, %c0_429] : memref<2x32x128xbf16, #tpu.memory_space<vmem>>, vector<2x1x128xbf16>
    %291 = vector.shape_cast %290 : vector<2x1x128xbf16> to vector<2x128xbf16>
    %c0_430 = arith.constant 0 : index
    %c0_431 = arith.constant 0 : index
    %c0_432 = arith.constant 0 : index
    %292 = vector.load %arg6[%c0_430, %c0_431, %c0_432] : memref<32x128x64xbf16, #tpu.memory_space<vmem>>, vector<1x128x64xbf16>
    %293 = vector.shape_cast %292 : vector<1x128x64xbf16> to vector<128x64xbf16>
    %cst_433 = arith.constant dense<0.000000e+00> : vector<2x64xf32>
    %294 = tpu.matmul %291, %293, %cst_433 {dimension_numbers = #tpu.dot_dimension_numbers<[1], [0], [0], [1], [0, 0, 1, 1], [], []>} : vector<2x128xbf16>, vector<128x64xbf16>, vector<2x64xf32> -> vector<2x64xf32>
    %295 = arith.addf %289, %294 : vector<2x64xf32>
    %c0_434 = arith.constant 0 : index
    %c1_435 = arith.constant 1 : index
    %c0_436 = arith.constant 0 : index
    %296 = vector.load %arg14[%c0_434, %c1_435, %c0_436] : memref<2x32x128xbf16, #tpu.memory_space<vmem>>, vector<2x1x128xbf16>
    %297 = vector.shape_cast %296 : vector<2x1x128xbf16> to vector<2x128xbf16>
    %c1_437 = arith.constant 1 : index
    %c0_438 = arith.constant 0 : index
    %c0_439 = arith.constant 0 : index
    %298 = vector.load %arg6[%c1_437, %c0_438, %c0_439] : memref<32x128x64xbf16, #tpu.memory_space<vmem>>, vector<1x128x64xbf16>
    %299 = vector.shape_cast %298 : vector<1x128x64xbf16> to vector<128x64xbf16>
    %cst_440 = arith.constant dense<0.000000e+00> : vector<2x64xf32>
    %300 = tpu.matmul %297, %299, %cst_440 {dimension_numbers = #tpu.dot_dimension_numbers<[1], [0], [0], [1], [0, 0, 1, 1], [], []>} : vector<2x128xbf16>, vector<128x64xbf16>, vector<2x64xf32> -> vector<2x64xf32>
    %301 = arith.addf %295, %300 : vector<2x64xf32>
    %c0_441 = arith.constant 0 : index
    %c2_442 = arith.constant 2 : index
    %c0_443 = arith.constant 0 : index
    %302 = vector.load %arg14[%c0_441, %c2_442, %c0_443] : memref<2x32x128xbf16, #tpu.memory_space<vmem>>, vector<2x1x128xbf16>
    %303 = vector.shape_cast %302 : vector<2x1x128xbf16> to vector<2x128xbf16>
    %c2_444 = arith.constant 2 : index
    %c0_445 = arith.constant 0 : index
    %c0_446 = arith.constant 0 : index
    %304 = vector.load %arg6[%c2_444, %c0_445, %c0_446] : memref<32x128x64xbf16, #tpu.memory_space<vmem>>, vector<1x128x64xbf16>
    %305 = vector.shape_cast %304 : vector<1x128x64xbf16> to vector<128x64xbf16>
    %cst_447 = arith.constant dense<0.000000e+00> : vector<2x64xf32>
    %306 = tpu.matmul %303, %305, %cst_447 {dimension_numbers = #tpu.dot_dimension_numbers<[1], [0], [0], [1], [0, 0, 1, 1], [], []>} : vector<2x128xbf16>, vector<128x64xbf16>, vector<2x64xf32> -> vector<2x64xf32>
    %307 = arith.addf %301, %306 : vector<2x64xf32>
    %c0_448 = arith.constant 0 : index
    %c3_449 = arith.constant 3 : index
    %c0_450 = arith.constant 0 : index
    %308 = vector.load %arg14[%c0_448, %c3_449, %c0_450] : memref<2x32x128xbf16, #tpu.memory_space<vmem>>, vector<2x1x128xbf16>
    %309 = vector.shape_cast %308 : vector<2x1x128xbf16> to vector<2x128xbf16>
    %c3_451 = arith.constant 3 : index
    %c0_452 = arith.constant 0 : index
    %c0_453 = arith.constant 0 : index
    %310 = vector.load %arg6[%c3_451, %c0_452, %c0_453] : memref<32x128x64xbf16, #tpu.memory_space<vmem>>, vector<1x128x64xbf16>
    %311 = vector.shape_cast %310 : vector<1x128x64xbf16> to vector<128x64xbf16>
    %cst_454 = arith.constant dense<0.000000e+00> : vector<2x64xf32>
    %312 = tpu.matmul %309, %311, %cst_454 {dimension_numbers = #tpu.dot_dimension_numbers<[1], [0], [0], [1], [0, 0, 1, 1], [], []>} : vector<2x128xbf16>, vector<128x64xbf16>, vector<2x64xf32> -> vector<2x64xf32>
    %313 = arith.addf %307, %312 : vector<2x64xf32>
    %c0_455 = arith.constant 0 : index
    %c4_456 = arith.constant 4 : index
    %c0_457 = arith.constant 0 : index
    %314 = vector.load %arg14[%c0_455, %c4_456, %c0_457] : memref<2x32x128xbf16, #tpu.memory_space<vmem>>, vector<2x1x128xbf16>
    %315 = vector.shape_cast %314 : vector<2x1x128xbf16> to vector<2x128xbf16>
    %c4_458 = arith.constant 4 : index
    %c0_459 = arith.constant 0 : index
    %c0_460 = arith.constant 0 : index
    %316 = vector.load %arg6[%c4_458, %c0_459, %c0_460] : memref<32x128x64xbf16, #tpu.memory_space<vmem>>, vector<1x128x64xbf16>
    %317 = vector.shape_cast %316 : vector<1x128x64xbf16> to vector<128x64xbf16>
    %cst_461 = arith.constant dense<0.000000e+00> : vector<2x64xf32>
    %318 = tpu.matmul %315, %317, %cst_461 {dimension_numbers = #tpu.dot_dimension_numbers<[1], [0], [0], [1], [0, 0, 1, 1], [], []>} : vector<2x128xbf16>, vector<128x64xbf16>, vector<2x64xf32> -> vector<2x64xf32>
    %319 = arith.addf %313, %318 : vector<2x64xf32>
    %c0_462 = arith.constant 0 : index
    %c5 = arith.constant 5 : index
    %c0_463 = arith.constant 0 : index
    %320 = vector.load %arg14[%c0_462, %c5, %c0_463] : memref<2x32x128xbf16, #tpu.memory_space<vmem>>, vector<2x1x128xbf16>
    %321 = vector.shape_cast %320 : vector<2x1x128xbf16> to vector<2x128xbf16>
    %c5_464 = arith.constant 5 : index
    %c0_465 = arith.constant 0 : index
    %c0_466 = arith.constant 0 : index
    %322 = vector.load %arg6[%c5_464, %c0_465, %c0_466] : memref<32x128x64xbf16, #tpu.memory_space<vmem>>, vector<1x128x64xbf16>
    %323 = vector.shape_cast %322 : vector<1x128x64xbf16> to vector<128x64xbf16>
    %cst_467 = arith.constant dense<0.000000e+00> : vector<2x64xf32>
    %324 = tpu.matmul %321, %323, %cst_467 {dimension_numbers = #tpu.dot_dimension_numbers<[1], [0], [0], [1], [0, 0, 1, 1], [], []>} : vector<2x128xbf16>, vector<128x64xbf16>, vector<2x64xf32> -> vector<2x64xf32>
    %325 = arith.addf %319, %324 : vector<2x64xf32>
    %c0_468 = arith.constant 0 : index
    %c6 = arith.constant 6 : index
    %c0_469 = arith.constant 0 : index
    %326 = vector.load %arg14[%c0_468, %c6, %c0_469] : memref<2x32x128xbf16, #tpu.memory_space<vmem>>, vector<2x1x128xbf16>
    %327 = vector.shape_cast %326 : vector<2x1x128xbf16> to vector<2x128xbf16>
    %c6_470 = arith.constant 6 : index
    %c0_471 = arith.constant 0 : index
    %c0_472 = arith.constant 0 : index
    %328 = vector.load %arg6[%c6_470, %c0_471, %c0_472] : memref<32x128x64xbf16, #tpu.memory_space<vmem>>, vector<1x128x64xbf16>
    %329 = vector.shape_cast %328 : vector<1x128x64xbf16> to vector<128x64xbf16>
    %cst_473 = arith.constant dense<0.000000e+00> : vector<2x64xf32>
    %330 = tpu.matmul %327, %329, %cst_473 {dimension_numbers = #tpu.dot_dimension_numbers<[1], [0], [0], [1], [0, 0, 1, 1], [], []>} : vector<2x128xbf16>, vector<128x64xbf16>, vector<2x64xf32> -> vector<2x64xf32>
    %331 = arith.addf %325, %330 : vector<2x64xf32>
    %c0_474 = arith.constant 0 : index
    %c7 = arith.constant 7 : index
    %c0_475 = arith.constant 0 : index
    %332 = vector.load %arg14[%c0_474, %c7, %c0_475] : memref<2x32x128xbf16, #tpu.memory_space<vmem>>, vector<2x1x128xbf16>
    %333 = vector.shape_cast %332 : vector<2x1x128xbf16> to vector<2x128xbf16>
    %c7_476 = arith.constant 7 : index
    %c0_477 = arith.constant 0 : index
    %c0_478 = arith.constant 0 : index
    %334 = vector.load %arg6[%c7_476, %c0_477, %c0_478] : memref<32x128x64xbf16, #tpu.memory_space<vmem>>, vector<1x128x64xbf16>
    %335 = vector.shape_cast %334 : vector<1x128x64xbf16> to vector<128x64xbf16>
    %cst_479 = arith.constant dense<0.000000e+00> : vector<2x64xf32>
    %336 = tpu.matmul %333, %335, %cst_479 {dimension_numbers = #tpu.dot_dimension_numbers<[1], [0], [0], [1], [0, 0, 1, 1], [], []>} : vector<2x128xbf16>, vector<128x64xbf16>, vector<2x64xf32> -> vector<2x64xf32>
    %337 = arith.addf %331, %336 : vector<2x64xf32>
    %c0_480 = arith.constant 0 : index
    %c8 = arith.constant 8 : index
    %c0_481 = arith.constant 0 : index
    %338 = vector.load %arg14[%c0_480, %c8, %c0_481] : memref<2x32x128xbf16, #tpu.memory_space<vmem>>, vector<2x1x128xbf16>
    %339 = vector.shape_cast %338 : vector<2x1x128xbf16> to vector<2x128xbf16>
    %c8_482 = arith.constant 8 : index
    %c0_483 = arith.constant 0 : index
    %c0_484 = arith.constant 0 : index
    %340 = vector.load %arg6[%c8_482, %c0_483, %c0_484] : memref<32x128x64xbf16, #tpu.memory_space<vmem>>, vector<1x128x64xbf16>
    %341 = vector.shape_cast %340 : vector<1x128x64xbf16> to vector<128x64xbf16>
    %cst_485 = arith.constant dense<0.000000e+00> : vector<2x64xf32>
    %342 = tpu.matmul %339, %341, %cst_485 {dimension_numbers = #tpu.dot_dimension_numbers<[1], [0], [0], [1], [0, 0, 1, 1], [], []>} : vector<2x128xbf16>, vector<128x64xbf16>, vector<2x64xf32> -> vector<2x64xf32>
    %343 = arith.addf %337, %342 : vector<2x64xf32>
    %c0_486 = arith.constant 0 : index
    %c9 = arith.constant 9 : index
    %c0_487 = arith.constant 0 : index
    %344 = vector.load %arg14[%c0_486, %c9, %c0_487] : memref<2x32x128xbf16, #tpu.memory_space<vmem>>, vector<2x1x128xbf16>
    %345 = vector.shape_cast %344 : vector<2x1x128xbf16> to vector<2x128xbf16>
    %c9_488 = arith.constant 9 : index
    %c0_489 = arith.constant 0 : index
    %c0_490 = arith.constant 0 : index
    %346 = vector.load %arg6[%c9_488, %c0_489, %c0_490] : memref<32x128x64xbf16, #tpu.memory_space<vmem>>, vector<1x128x64xbf16>
    %347 = vector.shape_cast %346 : vector<1x128x64xbf16> to vector<128x64xbf16>
    %cst_491 = arith.constant dense<0.000000e+00> : vector<2x64xf32>
    %348 = tpu.matmul %345, %347, %cst_491 {dimension_numbers = #tpu.dot_dimension_numbers<[1], [0], [0], [1], [0, 0, 1, 1], [], []>} : vector<2x128xbf16>, vector<128x64xbf16>, vector<2x64xf32> -> vector<2x64xf32>
    %349 = arith.addf %343, %348 : vector<2x64xf32>
    %c0_492 = arith.constant 0 : index
    %c10 = arith.constant 10 : index
    %c0_493 = arith.constant 0 : index
    %350 = vector.load %arg14[%c0_492, %c10, %c0_493] : memref<2x32x128xbf16, #tpu.memory_space<vmem>>, vector<2x1x128xbf16>
    %351 = vector.shape_cast %350 : vector<2x1x128xbf16> to vector<2x128xbf16>
    %c10_494 = arith.constant 10 : index
    %c0_495 = arith.constant 0 : index
    %c0_496 = arith.constant 0 : index
    %352 = vector.load %arg6[%c10_494, %c0_495, %c0_496] : memref<32x128x64xbf16, #tpu.memory_space<vmem>>, vector<1x128x64xbf16>
    %353 = vector.shape_cast %352 : vector<1x128x64xbf16> to vector<128x64xbf16>
    %cst_497 = arith.constant dense<0.000000e+00> : vector<2x64xf32>
    %354 = tpu.matmul %351, %353, %cst_497 {dimension_numbers = #tpu.dot_dimension_numbers<[1], [0], [0], [1], [0, 0, 1, 1], [], []>} : vector<2x128xbf16>, vector<128x64xbf16>, vector<2x64xf32> -> vector<2x64xf32>
    %355 = arith.addf %349, %354 : vector<2x64xf32>
    %c0_498 = arith.constant 0 : index
    %c11 = arith.constant 11 : index
    %c0_499 = arith.constant 0 : index
    %356 = vector.load %arg14[%c0_498, %c11, %c0_499] : memref<2x32x128xbf16, #tpu.memory_space<vmem>>, vector<2x1x128xbf16>
    %357 = vector.shape_cast %356 : vector<2x1x128xbf16> to vector<2x128xbf16>
    %c11_500 = arith.constant 11 : index
    %c0_501 = arith.constant 0 : index
    %c0_502 = arith.constant 0 : index
    %358 = vector.load %arg6[%c11_500, %c0_501, %c0_502] : memref<32x128x64xbf16, #tpu.memory_space<vmem>>, vector<1x128x64xbf16>
    %359 = vector.shape_cast %358 : vector<1x128x64xbf16> to vector<128x64xbf16>
    %cst_503 = arith.constant dense<0.000000e+00> : vector<2x64xf32>
    %360 = tpu.matmul %357, %359, %cst_503 {dimension_numbers = #tpu.dot_dimension_numbers<[1], [0], [0], [1], [0, 0, 1, 1], [], []>} : vector<2x128xbf16>, vector<128x64xbf16>, vector<2x64xf32> -> vector<2x64xf32>
    %361 = arith.addf %355, %360 : vector<2x64xf32>
    %c0_504 = arith.constant 0 : index
    %c12 = arith.constant 12 : index
    %c0_505 = arith.constant 0 : index
    %362 = vector.load %arg14[%c0_504, %c12, %c0_505] : memref<2x32x128xbf16, #tpu.memory_space<vmem>>, vector<2x1x128xbf16>
    %363 = vector.shape_cast %362 : vector<2x1x128xbf16> to vector<2x128xbf16>
    %c12_506 = arith.constant 12 : index
    %c0_507 = arith.constant 0 : index
    %c0_508 = arith.constant 0 : index
    %364 = vector.load %arg6[%c12_506, %c0_507, %c0_508] : memref<32x128x64xbf16, #tpu.memory_space<vmem>>, vector<1x128x64xbf16>
    %365 = vector.shape_cast %364 : vector<1x128x64xbf16> to vector<128x64xbf16>
    %cst_509 = arith.constant dense<0.000000e+00> : vector<2x64xf32>
    %366 = tpu.matmul %363, %365, %cst_509 {dimension_numbers = #tpu.dot_dimension_numbers<[1], [0], [0], [1], [0, 0, 1, 1], [], []>} : vector<2x128xbf16>, vector<128x64xbf16>, vector<2x64xf32> -> vector<2x64xf32>
    %367 = arith.addf %361, %366 : vector<2x64xf32>
    %c0_510 = arith.constant 0 : index
    %c13 = arith.constant 13 : index
    %c0_511 = arith.constant 0 : index
    %368 = vector.load %arg14[%c0_510, %c13, %c0_511] : memref<2x32x128xbf16, #tpu.memory_space<vmem>>, vector<2x1x128xbf16>
    %369 = vector.shape_cast %368 : vector<2x1x128xbf16> to vector<2x128xbf16>
    %c13_512 = arith.constant 13 : index
    %c0_513 = arith.constant 0 : index
    %c0_514 = arith.constant 0 : index
    %370 = vector.load %arg6[%c13_512, %c0_513, %c0_514] : memref<32x128x64xbf16, #tpu.memory_space<vmem>>, vector<1x128x64xbf16>
    %371 = vector.shape_cast %370 : vector<1x128x64xbf16> to vector<128x64xbf16>
    %cst_515 = arith.constant dense<0.000000e+00> : vector<2x64xf32>
    %372 = tpu.matmul %369, %371, %cst_515 {dimension_numbers = #tpu.dot_dimension_numbers<[1], [0], [0], [1], [0, 0, 1, 1], [], []>} : vector<2x128xbf16>, vector<128x64xbf16>, vector<2x64xf32> -> vector<2x64xf32>
    %373 = arith.addf %367, %372 : vector<2x64xf32>
    %c0_516 = arith.constant 0 : index
    %c14 = arith.constant 14 : index
    %c0_517 = arith.constant 0 : index
    %374 = vector.load %arg14[%c0_516, %c14, %c0_517] : memref<2x32x128xbf16, #tpu.memory_space<vmem>>, vector<2x1x128xbf16>
    %375 = vector.shape_cast %374 : vector<2x1x128xbf16> to vector<2x128xbf16>
    %c14_518 = arith.constant 14 : index
    %c0_519 = arith.constant 0 : index
    %c0_520 = arith.constant 0 : index
    %376 = vector.load %arg6[%c14_518, %c0_519, %c0_520] : memref<32x128x64xbf16, #tpu.memory_space<vmem>>, vector<1x128x64xbf16>
    %377 = vector.shape_cast %376 : vector<1x128x64xbf16> to vector<128x64xbf16>
    %cst_521 = arith.constant dense<0.000000e+00> : vector<2x64xf32>
    %378 = tpu.matmul %375, %377, %cst_521 {dimension_numbers = #tpu.dot_dimension_numbers<[1], [0], [0], [1], [0, 0, 1, 1], [], []>} : vector<2x128xbf16>, vector<128x64xbf16>, vector<2x64xf32> -> vector<2x64xf32>
    %379 = arith.addf %373, %378 : vector<2x64xf32>
    %c0_522 = arith.constant 0 : index
    %c15 = arith.constant 15 : index
    %c0_523 = arith.constant 0 : index
    %380 = vector.load %arg14[%c0_522, %c15, %c0_523] : memref<2x32x128xbf16, #tpu.memory_space<vmem>>, vector<2x1x128xbf16>
    %381 = vector.shape_cast %380 : vector<2x1x128xbf16> to vector<2x128xbf16>
    %c15_524 = arith.constant 15 : index
    %c0_525 = arith.constant 0 : index
    %c0_526 = arith.constant 0 : index
    %382 = vector.load %arg6[%c15_524, %c0_525, %c0_526] : memref<32x128x64xbf16, #tpu.memory_space<vmem>>, vector<1x128x64xbf16>
    %383 = vector.shape_cast %382 : vector<1x128x64xbf16> to vector<128x64xbf16>
    %cst_527 = arith.constant dense<0.000000e+00> : vector<2x64xf32>
    %384 = tpu.matmul %381, %383, %cst_527 {dimension_numbers = #tpu.dot_dimension_numbers<[1], [0], [0], [1], [0, 0, 1, 1], [], []>} : vector<2x128xbf16>, vector<128x64xbf16>, vector<2x64xf32> -> vector<2x64xf32>
    %385 = arith.addf %379, %384 : vector<2x64xf32>
    %c0_528 = arith.constant 0 : index
    %c16_529 = arith.constant 16 : index
    %c0_530 = arith.constant 0 : index
    %386 = vector.load %arg14[%c0_528, %c16_529, %c0_530] : memref<2x32x128xbf16, #tpu.memory_space<vmem>>, vector<2x1x128xbf16>
    %387 = vector.shape_cast %386 : vector<2x1x128xbf16> to vector<2x128xbf16>
    %c16_531 = arith.constant 16 : index
    %c0_532 = arith.constant 0 : index
    %c0_533 = arith.constant 0 : index
    %388 = vector.load %arg6[%c16_531, %c0_532, %c0_533] : memref<32x128x64xbf16, #tpu.memory_space<vmem>>, vector<1x128x64xbf16>
    %389 = vector.shape_cast %388 : vector<1x128x64xbf16> to vector<128x64xbf16>
    %cst_534 = arith.constant dense<0.000000e+00> : vector<2x64xf32>
    %390 = tpu.matmul %387, %389, %cst_534 {dimension_numbers = #tpu.dot_dimension_numbers<[1], [0], [0], [1], [0, 0, 1, 1], [], []>} : vector<2x128xbf16>, vector<128x64xbf16>, vector<2x64xf32> -> vector<2x64xf32>
    %391 = arith.addf %385, %390 : vector<2x64xf32>
    %c0_535 = arith.constant 0 : index
    %c17_536 = arith.constant 17 : index
    %c0_537 = arith.constant 0 : index
    %392 = vector.load %arg14[%c0_535, %c17_536, %c0_537] : memref<2x32x128xbf16, #tpu.memory_space<vmem>>, vector<2x1x128xbf16>
    %393 = vector.shape_cast %392 : vector<2x1x128xbf16> to vector<2x128xbf16>
    %c17_538 = arith.constant 17 : index
    %c0_539 = arith.constant 0 : index
    %c0_540 = arith.constant 0 : index
    %394 = vector.load %arg6[%c17_538, %c0_539, %c0_540] : memref<32x128x64xbf16, #tpu.memory_space<vmem>>, vector<1x128x64xbf16>
    %395 = vector.shape_cast %394 : vector<1x128x64xbf16> to vector<128x64xbf16>
    %cst_541 = arith.constant dense<0.000000e+00> : vector<2x64xf32>
    %396 = tpu.matmul %393, %395, %cst_541 {dimension_numbers = #tpu.dot_dimension_numbers<[1], [0], [0], [1], [0, 0, 1, 1], [], []>} : vector<2x128xbf16>, vector<128x64xbf16>, vector<2x64xf32> -> vector<2x64xf32>
    %397 = arith.addf %391, %396 : vector<2x64xf32>
    %c0_542 = arith.constant 0 : index
    %c18_543 = arith.constant 18 : index
    %c0_544 = arith.constant 0 : index
    %398 = vector.load %arg14[%c0_542, %c18_543, %c0_544] : memref<2x32x128xbf16, #tpu.memory_space<vmem>>, vector<2x1x128xbf16>
    %399 = vector.shape_cast %398 : vector<2x1x128xbf16> to vector<2x128xbf16>
    %c18_545 = arith.constant 18 : index
    %c0_546 = arith.constant 0 : index
    %c0_547 = arith.constant 0 : index
    %400 = vector.load %arg6[%c18_545, %c0_546, %c0_547] : memref<32x128x64xbf16, #tpu.memory_space<vmem>>, vector<1x128x64xbf16>
    %401 = vector.shape_cast %400 : vector<1x128x64xbf16> to vector<128x64xbf16>
    %cst_548 = arith.constant dense<0.000000e+00> : vector<2x64xf32>
    %402 = tpu.matmul %399, %401, %cst_548 {dimension_numbers = #tpu.dot_dimension_numbers<[1], [0], [0], [1], [0, 0, 1, 1], [], []>} : vector<2x128xbf16>, vector<128x64xbf16>, vector<2x64xf32> -> vector<2x64xf32>
    %403 = arith.addf %397, %402 : vector<2x64xf32>
    %c0_549 = arith.constant 0 : index
    %c19_550 = arith.constant 19 : index
    %c0_551 = arith.constant 0 : index
    %404 = vector.load %arg14[%c0_549, %c19_550, %c0_551] : memref<2x32x128xbf16, #tpu.memory_space<vmem>>, vector<2x1x128xbf16>
    %405 = vector.shape_cast %404 : vector<2x1x128xbf16> to vector<2x128xbf16>
    %c19_552 = arith.constant 19 : index
    %c0_553 = arith.constant 0 : index
    %c0_554 = arith.constant 0 : index
    %406 = vector.load %arg6[%c19_552, %c0_553, %c0_554] : memref<32x128x64xbf16, #tpu.memory_space<vmem>>, vector<1x128x64xbf16>
    %407 = vector.shape_cast %406 : vector<1x128x64xbf16> to vector<128x64xbf16>
    %cst_555 = arith.constant dense<0.000000e+00> : vector<2x64xf32>
    %408 = tpu.matmul %405, %407, %cst_555 {dimension_numbers = #tpu.dot_dimension_numbers<[1], [0], [0], [1], [0, 0, 1, 1], [], []>} : vector<2x128xbf16>, vector<128x64xbf16>, vector<2x64xf32> -> vector<2x64xf32>
    %409 = arith.addf %403, %408 : vector<2x64xf32>
    %c0_556 = arith.constant 0 : index
    %c20_557 = arith.constant 20 : index
    %c0_558 = arith.constant 0 : index
    %410 = vector.load %arg14[%c0_556, %c20_557, %c0_558] : memref<2x32x128xbf16, #tpu.memory_space<vmem>>, vector<2x1x128xbf16>
    %411 = vector.shape_cast %410 : vector<2x1x128xbf16> to vector<2x128xbf16>
    %c20_559 = arith.constant 20 : index
    %c0_560 = arith.constant 0 : index
    %c0_561 = arith.constant 0 : index
    %412 = vector.load %arg6[%c20_559, %c0_560, %c0_561] : memref<32x128x64xbf16, #tpu.memory_space<vmem>>, vector<1x128x64xbf16>
    %413 = vector.shape_cast %412 : vector<1x128x64xbf16> to vector<128x64xbf16>
    %cst_562 = arith.constant dense<0.000000e+00> : vector<2x64xf32>
    %414 = tpu.matmul %411, %413, %cst_562 {dimension_numbers = #tpu.dot_dimension_numbers<[1], [0], [0], [1], [0, 0, 1, 1], [], []>} : vector<2x128xbf16>, vector<128x64xbf16>, vector<2x64xf32> -> vector<2x64xf32>
    %415 = arith.addf %409, %414 : vector<2x64xf32>
    %c0_563 = arith.constant 0 : index
    %c21 = arith.constant 21 : index
    %c0_564 = arith.constant 0 : index
    %416 = vector.load %arg14[%c0_563, %c21, %c0_564] : memref<2x32x128xbf16, #tpu.memory_space<vmem>>, vector<2x1x128xbf16>
    %417 = vector.shape_cast %416 : vector<2x1x128xbf16> to vector<2x128xbf16>
    %c21_565 = arith.constant 21 : index
    %c0_566 = arith.constant 0 : index
    %c0_567 = arith.constant 0 : index
    %418 = vector.load %arg6[%c21_565, %c0_566, %c0_567] : memref<32x128x64xbf16, #tpu.memory_space<vmem>>, vector<1x128x64xbf16>
    %419 = vector.shape_cast %418 : vector<1x128x64xbf16> to vector<128x64xbf16>
    %cst_568 = arith.constant dense<0.000000e+00> : vector<2x64xf32>
    %420 = tpu.matmul %417, %419, %cst_568 {dimension_numbers = #tpu.dot_dimension_numbers<[1], [0], [0], [1], [0, 0, 1, 1], [], []>} : vector<2x128xbf16>, vector<128x64xbf16>, vector<2x64xf32> -> vector<2x64xf32>
    %421 = arith.addf %415, %420 : vector<2x64xf32>
    %c0_569 = arith.constant 0 : index
    %c22 = arith.constant 22 : index
    %c0_570 = arith.constant 0 : index
    %422 = vector.load %arg14[%c0_569, %c22, %c0_570] : memref<2x32x128xbf16, #tpu.memory_space<vmem>>, vector<2x1x128xbf16>
    %423 = vector.shape_cast %422 : vector<2x1x128xbf16> to vector<2x128xbf16>
    %c22_571 = arith.constant 22 : index
    %c0_572 = arith.constant 0 : index
    %c0_573 = arith.constant 0 : index
    %424 = vector.load %arg6[%c22_571, %c0_572, %c0_573] : memref<32x128x64xbf16, #tpu.memory_space<vmem>>, vector<1x128x64xbf16>
    %425 = vector.shape_cast %424 : vector<1x128x64xbf16> to vector<128x64xbf16>
    %cst_574 = arith.constant dense<0.000000e+00> : vector<2x64xf32>
    %426 = tpu.matmul %423, %425, %cst_574 {dimension_numbers = #tpu.dot_dimension_numbers<[1], [0], [0], [1], [0, 0, 1, 1], [], []>} : vector<2x128xbf16>, vector<128x64xbf16>, vector<2x64xf32> -> vector<2x64xf32>
    %427 = arith.addf %421, %426 : vector<2x64xf32>
    %c0_575 = arith.constant 0 : index
    %c23 = arith.constant 23 : index
    %c0_576 = arith.constant 0 : index
    %428 = vector.load %arg14[%c0_575, %c23, %c0_576] : memref<2x32x128xbf16, #tpu.memory_space<vmem>>, vector<2x1x128xbf16>
    %429 = vector.shape_cast %428 : vector<2x1x128xbf16> to vector<2x128xbf16>
    %c23_577 = arith.constant 23 : index
    %c0_578 = arith.constant 0 : index
    %c0_579 = arith.constant 0 : index
    %430 = vector.load %arg6[%c23_577, %c0_578, %c0_579] : memref<32x128x64xbf16, #tpu.memory_space<vmem>>, vector<1x128x64xbf16>
    %431 = vector.shape_cast %430 : vector<1x128x64xbf16> to vector<128x64xbf16>
    %cst_580 = arith.constant dense<0.000000e+00> : vector<2x64xf32>
    %432 = tpu.matmul %429, %431, %cst_580 {dimension_numbers = #tpu.dot_dimension_numbers<[1], [0], [0], [1], [0, 0, 1, 1], [], []>} : vector<2x128xbf16>, vector<128x64xbf16>, vector<2x64xf32> -> vector<2x64xf32>
    %433 = arith.addf %427, %432 : vector<2x64xf32>
    %c0_581 = arith.constant 0 : index
    %c24 = arith.constant 24 : index
    %c0_582 = arith.constant 0 : index
    %434 = vector.load %arg14[%c0_581, %c24, %c0_582] : memref<2x32x128xbf16, #tpu.memory_space<vmem>>, vector<2x1x128xbf16>
    %435 = vector.shape_cast %434 : vector<2x1x128xbf16> to vector<2x128xbf16>
    %c24_583 = arith.constant 24 : index
    %c0_584 = arith.constant 0 : index
    %c0_585 = arith.constant 0 : index
    %436 = vector.load %arg6[%c24_583, %c0_584, %c0_585] : memref<32x128x64xbf16, #tpu.memory_space<vmem>>, vector<1x128x64xbf16>
    %437 = vector.shape_cast %436 : vector<1x128x64xbf16> to vector<128x64xbf16>
    %cst_586 = arith.constant dense<0.000000e+00> : vector<2x64xf32>
    %438 = tpu.matmul %435, %437, %cst_586 {dimension_numbers = #tpu.dot_dimension_numbers<[1], [0], [0], [1], [0, 0, 1, 1], [], []>} : vector<2x128xbf16>, vector<128x64xbf16>, vector<2x64xf32> -> vector<2x64xf32>
    %439 = arith.addf %433, %438 : vector<2x64xf32>
    %c0_587 = arith.constant 0 : index
    %c25 = arith.constant 25 : index
    %c0_588 = arith.constant 0 : index
    %440 = vector.load %arg14[%c0_587, %c25, %c0_588] : memref<2x32x128xbf16, #tpu.memory_space<vmem>>, vector<2x1x128xbf16>
    %441 = vector.shape_cast %440 : vector<2x1x128xbf16> to vector<2x128xbf16>
    %c25_589 = arith.constant 25 : index
    %c0_590 = arith.constant 0 : index
    %c0_591 = arith.constant 0 : index
    %442 = vector.load %arg6[%c25_589, %c0_590, %c0_591] : memref<32x128x64xbf16, #tpu.memory_space<vmem>>, vector<1x128x64xbf16>
    %443 = vector.shape_cast %442 : vector<1x128x64xbf16> to vector<128x64xbf16>
    %cst_592 = arith.constant dense<0.000000e+00> : vector<2x64xf32>
    %444 = tpu.matmul %441, %443, %cst_592 {dimension_numbers = #tpu.dot_dimension_numbers<[1], [0], [0], [1], [0, 0, 1, 1], [], []>} : vector<2x128xbf16>, vector<128x64xbf16>, vector<2x64xf32> -> vector<2x64xf32>
    %445 = arith.addf %439, %444 : vector<2x64xf32>
    %c0_593 = arith.constant 0 : index
    %c26 = arith.constant 26 : index
    %c0_594 = arith.constant 0 : index
    %446 = vector.load %arg14[%c0_593, %c26, %c0_594] : memref<2x32x128xbf16, #tpu.memory_space<vmem>>, vector<2x1x128xbf16>
    %447 = vector.shape_cast %446 : vector<2x1x128xbf16> to vector<2x128xbf16>
    %c26_595 = arith.constant 26 : index
    %c0_596 = arith.constant 0 : index
    %c0_597 = arith.constant 0 : index
    %448 = vector.load %arg6[%c26_595, %c0_596, %c0_597] : memref<32x128x64xbf16, #tpu.memory_space<vmem>>, vector<1x128x64xbf16>
    %449 = vector.shape_cast %448 : vector<1x128x64xbf16> to vector<128x64xbf16>
    %cst_598 = arith.constant dense<0.000000e+00> : vector<2x64xf32>
    %450 = tpu.matmul %447, %449, %cst_598 {dimension_numbers = #tpu.dot_dimension_numbers<[1], [0], [0], [1], [0, 0, 1, 1], [], []>} : vector<2x128xbf16>, vector<128x64xbf16>, vector<2x64xf32> -> vector<2x64xf32>
    %451 = arith.addf %445, %450 : vector<2x64xf32>
    %c0_599 = arith.constant 0 : index
    %c27 = arith.constant 27 : index
    %c0_600 = arith.constant 0 : index
    %452 = vector.load %arg14[%c0_599, %c27, %c0_600] : memref<2x32x128xbf16, #tpu.memory_space<vmem>>, vector<2x1x128xbf16>
    %453 = vector.shape_cast %452 : vector<2x1x128xbf16> to vector<2x128xbf16>
    %c27_601 = arith.constant 27 : index
    %c0_602 = arith.constant 0 : index
    %c0_603 = arith.constant 0 : index
    %454 = vector.load %arg6[%c27_601, %c0_602, %c0_603] : memref<32x128x64xbf16, #tpu.memory_space<vmem>>, vector<1x128x64xbf16>
    %455 = vector.shape_cast %454 : vector<1x128x64xbf16> to vector<128x64xbf16>
    %cst_604 = arith.constant dense<0.000000e+00> : vector<2x64xf32>
    %456 = tpu.matmul %453, %455, %cst_604 {dimension_numbers = #tpu.dot_dimension_numbers<[1], [0], [0], [1], [0, 0, 1, 1], [], []>} : vector<2x128xbf16>, vector<128x64xbf16>, vector<2x64xf32> -> vector<2x64xf32>
    %457 = arith.addf %451, %456 : vector<2x64xf32>
    %c0_605 = arith.constant 0 : index
    %c28 = arith.constant 28 : index
    %c0_606 = arith.constant 0 : index
    %458 = vector.load %arg14[%c0_605, %c28, %c0_606] : memref<2x32x128xbf16, #tpu.memory_space<vmem>>, vector<2x1x128xbf16>
    %459 = vector.shape_cast %458 : vector<2x1x128xbf16> to vector<2x128xbf16>
    %c28_607 = arith.constant 28 : index
    %c0_608 = arith.constant 0 : index
    %c0_609 = arith.constant 0 : index
    %460 = vector.load %arg6[%c28_607, %c0_608, %c0_609] : memref<32x128x64xbf16, #tpu.memory_space<vmem>>, vector<1x128x64xbf16>
    %461 = vector.shape_cast %460 : vector<1x128x64xbf16> to vector<128x64xbf16>
    %cst_610 = arith.constant dense<0.000000e+00> : vector<2x64xf32>
    %462 = tpu.matmul %459, %461, %cst_610 {dimension_numbers = #tpu.dot_dimension_numbers<[1], [0], [0], [1], [0, 0, 1, 1], [], []>} : vector<2x128xbf16>, vector<128x64xbf16>, vector<2x64xf32> -> vector<2x64xf32>
    %463 = arith.addf %457, %462 : vector<2x64xf32>
    %c0_611 = arith.constant 0 : index
    %c29 = arith.constant 29 : index
    %c0_612 = arith.constant 0 : index
    %464 = vector.load %arg14[%c0_611, %c29, %c0_612] : memref<2x32x128xbf16, #tpu.memory_space<vmem>>, vector<2x1x128xbf16>
    %465 = vector.shape_cast %464 : vector<2x1x128xbf16> to vector<2x128xbf16>
    %c29_613 = arith.constant 29 : index
    %c0_614 = arith.constant 0 : index
    %c0_615 = arith.constant 0 : index
    %466 = vector.load %arg6[%c29_613, %c0_614, %c0_615] : memref<32x128x64xbf16, #tpu.memory_space<vmem>>, vector<1x128x64xbf16>
    %467 = vector.shape_cast %466 : vector<1x128x64xbf16> to vector<128x64xbf16>
    %cst_616 = arith.constant dense<0.000000e+00> : vector<2x64xf32>
    %468 = tpu.matmul %465, %467, %cst_616 {dimension_numbers = #tpu.dot_dimension_numbers<[1], [0], [0], [1], [0, 0, 1, 1], [], []>} : vector<2x128xbf16>, vector<128x64xbf16>, vector<2x64xf32> -> vector<2x64xf32>
    %469 = arith.addf %463, %468 : vector<2x64xf32>
    %c0_617 = arith.constant 0 : index
    %c30 = arith.constant 30 : index
    %c0_618 = arith.constant 0 : index
    %470 = vector.load %arg14[%c0_617, %c30, %c0_618] : memref<2x32x128xbf16, #tpu.memory_space<vmem>>, vector<2x1x128xbf16>
    %471 = vector.shape_cast %470 : vector<2x1x128xbf16> to vector<2x128xbf16>
    %c30_619 = arith.constant 30 : index
    %c0_620 = arith.constant 0 : index
    %c0_621 = arith.constant 0 : index
    %472 = vector.load %arg6[%c30_619, %c0_620, %c0_621] : memref<32x128x64xbf16, #tpu.memory_space<vmem>>, vector<1x128x64xbf16>
    %473 = vector.shape_cast %472 : vector<1x128x64xbf16> to vector<128x64xbf16>
    %cst_622 = arith.constant dense<0.000000e+00> : vector<2x64xf32>
    %474 = tpu.matmul %471, %473, %cst_622 {dimension_numbers = #tpu.dot_dimension_numbers<[1], [0], [0], [1], [0, 0, 1, 1], [], []>} : vector<2x128xbf16>, vector<128x64xbf16>, vector<2x64xf32> -> vector<2x64xf32>
    %475 = arith.addf %469, %474 : vector<2x64xf32>
    %c0_623 = arith.constant 0 : index
    %c31 = arith.constant 31 : index
    %c0_624 = arith.constant 0 : index
    %476 = vector.load %arg14[%c0_623, %c31, %c0_624] : memref<2x32x128xbf16, #tpu.memory_space<vmem>>, vector<2x1x128xbf16>
    %477 = vector.shape_cast %476 : vector<2x1x128xbf16> to vector<2x128xbf16>
    %c31_625 = arith.constant 31 : index
    %c0_626 = arith.constant 0 : index
    %c0_627 = arith.constant 0 : index
    %478 = vector.load %arg6[%c31_625, %c0_626, %c0_627] : memref<32x128x64xbf16, #tpu.memory_space<vmem>>, vector<1x128x64xbf16>
    %479 = vector.shape_cast %478 : vector<1x128x64xbf16> to vector<128x64xbf16>
    %cst_628 = arith.constant dense<0.000000e+00> : vector<2x64xf32>
    %480 = tpu.matmul %477, %479, %cst_628 {dimension_numbers = #tpu.dot_dimension_numbers<[1], [0], [0], [1], [0, 0, 1, 1], [], []>} : vector<2x128xbf16>, vector<128x64xbf16>, vector<2x64xf32> -> vector<2x64xf32>
    %481 = arith.addf %475, %480 : vector<2x64xf32>
    %cst_629 = arith.constant 0.000000e+00 : f32
    %482 = vector.broadcast %cst_629 : f32 to vector<2x64xf32>
    %483 = arith.cmpf ogt, %481, %482 : vector<2x64xf32>
    %cst_630 = arith.constant 0.00999999977 : f32
    %484 = vector.broadcast %cst_630 : f32 to vector<2x64xf32>
    %485 = arith.mulf %484, %481 : vector<2x64xf32>
    %486 = arith.select %483, %481, %485 : vector<2x64xi1>, vector<2x64xf32>
    %487 = arith.truncf %486 : vector<2x64xf32> to vector<2x64xbf16>
    %c0_631 = arith.constant 0 : index
    %c0_632 = arith.constant 0 : index
    %488 = vector.load %arg8[%c0_631, %c0_632] : memref<64x128xbf16, #tpu.memory_space<vmem>>, vector<64x128xbf16>
    %cst_633 = arith.constant dense<0.000000e+00> : vector<2x128xf32>
    %489 = tpu.matmul %487, %488, %cst_633 {dimension_numbers = #tpu.dot_dimension_numbers<[1], [0], [0], [1], [0, 0, 1, 1], [], []>} : vector<2x64xbf16>, vector<64x128xbf16>, vector<2x128xf32> -> vector<2x128xf32>
    %c0_634 = arith.constant 0 : index
    %c0_635 = arith.constant 0 : index
    %490 = vector.load %arg9[%c0_634, %c0_635] : memref<1x128xf32, #tpu.memory_space<vmem>>, vector<1x128xf32>
    %491 = vector.broadcast %490 : vector<1x128xf32> to vector<2x128xf32>
    %492 = arith.addf %489, %491 : vector<2x128xf32>
    %c0_636 = arith.constant 0 : index
    %c0_637 = arith.constant 0 : index
    %493 = vector.load %arg10[%c0_636, %c0_637] : memref<2x128xf32, #tpu.memory_space<vmem>>, vector<2x128xf32>
    tpu.vector_store %arg10[%c0_636, %c0_637], %492 {strides = array<i32>} : memref<2x128xf32, #tpu.memory_space<vmem>>, vector<2x128xf32>,
    return
  }
  func.func @transform_0(%arg0: i32) -> (i32, i32, i32) {
    %c0_i32 = arith.constant 0 : i32
    %c0_i32_0 = arith.constant 0 : i32
    %c0_i32_1 = arith.constant 0 : i32
    return %arg0, %c0_i32, %c0_i32_0 : i32, i32, i32
  }
  func.func @transform_1(%arg0: i32) -> (i32, i32) {
    %c0_i32 = arith.constant 0 : i32
    %c0_i32_0 = arith.constant 0 : i32
    %c0_i32_1 = arith.constant 0 : i32
    return %c0_i32, %c0_i32_0 : i32, i32
  }
  func.func @transform_2(%arg0: i32) -> (i32, i32) {
    %c0_i32 = arith.constant 0 : i32
    %c0_i32_0 = arith.constant 0 : i32
    %c0_i32_1 = arith.constant 0 : i32
    return %c0_i32, %c0_i32_0 : i32, i32
  }
  func.func @transform_3(%arg0: i32) -> (i32, i32) {
    %c0_i32 = arith.constant 0 : i32
    %c0_i32_0 = arith.constant 0 : i32
    %c0_i32_1 = arith.constant 0 : i32
    return %c0_i32, %c0_i32_0 : i32, i32
  }
  func.func @transform_4(%arg0: i32) -> (i32, i32) {
    %c0_i32 = arith.constant 0 : i32
    %c0_i32_0 = arith.constant 0 : i32
    %c0_i32_1 = arith.constant 0 : i32
    return %c0_i32, %c0_i32_0 : i32, i32
  }
  func.func @transform_5(%arg0: i32) -> (i32, i32, i32) {
    %c0_i32 = arith.constant 0 : i32
    %c0_i32_0 = arith.constant 0 : i32
    %c0_i32_1 = arith.constant 0 : i32
    %c0_i32_2 = arith.constant 0 : i32
    return %c0_i32, %c0_i32_0, %c0_i32_1 : i32, i32, i32
  }
  func.func @transform_6(%arg0: i32) -> (i32, i32) {
    %c0_i32 = arith.constant 0 : i32
    %c0_i32_0 = arith.constant 0 : i32
    %c0_i32_1 = arith.constant 0 : i32
    return %c0_i32, %c0_i32_0 : i32, i32
  }
  func.func @transform_7(%arg0: i32) -> (i32, i32) {
    %c0_i32 = arith.constant 0 : i32
    %c0_i32_0 = arith.constant 0 : i32
    %c0_i32_1 = arith.constant 0 : i32
    return %c0_i32, %c0_i32_0 : i32, i32
  }
  func.func @transform_8(%arg0: i32) -> (i32, i32) {
    %c0_i32 = arith.constant 0 : i32
    %c0_i32_0 = arith.constant 0 : i32
    %c0_i32_1 = arith.constant 0 : i32
    return %c0_i32, %c0_i32_0 : i32, i32
  }
  func.func @transform_9(%arg0: i32) -> (i32, i32) {
    %c0_i32 = arith.constant 0 : i32
    %c0_i32_0 = arith.constant 0 : i32
    return %arg0, %c0_i32 : i32, i32
  }
}

</mosaic_0001>

<llo_original>
// kernel: ppo_image_critic_forward.1
$region0: #{ppo_image_critic_forward.1}
  #allocation0 [shape = 'u32[]', space=smem, size = 0x4, offset = 0x4, fixed_abs, tag = 'smem constant byte address 0x4 - core index']
  #allocation1 [shape = 'u32[144,128]{1,0:T(1,128)}', space=vmem, size = 0x12000, scoped, tag = 'internal scratch']
  #allocation2 [shape = 'bf16[400,256]{1,0:T(16,128)(2,1)}', space=vmem, size = 0x32000, scoped, tag = 'scratch operand']
  #allocation3 [shape = 'bf16[64,256]{1,0:T(16,128)(2,1)}', space=vmem, size = 0x8000, scoped, tag = 'scratch operand']
  #allocation4 [shape = 'bf16[1600,128]{1,0:T(16,128)(2,1)}', space=vmem, size = 0x64000, scoped, tag = 'scratch operand']
  #allocation5 [shape = 'bf16[2,32,128]{2,1,0:T(16,128)(2,1)}', space=vmem, size = 0x4000, scoped, tag = 'scratch operand']
  %s0 = inlined_call_operand.vmem [shape: bf16[2,16,384], index: 0, kind: input, shape index: {}]
  %s1 = inlined_call_operand.vmem [shape: bf16[64,400], index: 1, kind: input, shape index: {}]
  %s2 = inlined_call_operand.vmem [shape: f32[64,1], index: 2, kind: input, shape index: {}]
  %s3 = inlined_call_operand.vmem [shape: bf16[32,1600], index: 3, kind: input, shape index: {}]
  %s4 = inlined_call_operand.vmem [shape: f32[32,1], index: 4, kind: input, shape index: {}]
  %s5 = inlined_call_operand.vmem [shape: bf16[32,128,64], index: 5, kind: input, shape index: {}]
  %s6 = inlined_call_operand.vmem [shape: f32[1,64], index: 6, kind: input, shape index: {}]
  %s7 = inlined_call_operand.vmem [shape: bf16[64,128], index: 7, kind: input, shape index: {}]
  %s8 = inlined_call_operand.vmem [shape: f32[1,128], index: 8, kind: input, shape index: {}]
  %s9 = inlined_call_operand.vmem [shape: f32[2,128], index: 9, kind: output, shape index: {}]
  %s10 = sld [smem:[#allocation0]]
  $region46: #{ppo_image_critic_forward.1} parent=0
    _
  %s12 = ssub.s32 1, %s10
  %s13 = scalar_select 0, %s12, %s10
  // Predicated region
  $region2: #{ppo_image_critic_forward.1} parent=0 // pred_check
    _
  $region3: #{ppo_image_critic_forward.1} parent=0 // pred_check_branch
    %15 = sbr.rel (0) target = $region5
  $region4: #{ppo_image_critic_forward.1} parent=0 // pred_region
    _
  $region5: #{ppo_image_critic_forward.1} parent=0 // pred_fallthru
    _
  // Predicated region
  $region6: #{ppo_image_critic_forward.1} parent=0 // pred_check
    _
  $region7: #{ppo_image_critic_forward.1} parent=0 // pred_check_branch
    %17 = sbr.rel (0) target = $region9
  $region8: #{ppo_image_critic_forward.1} parent=0 // pred_region
    _
  $region9: #{ppo_image_critic_forward.1} parent=0 // pred_fallthru
    _
  // Predicated region
  $region10: #{ppo_image_critic_forward.1} parent=0 // pred_check
    _
  $region11: #{ppo_image_critic_forward.1} parent=0 // pred_check_branch
    %19 = sbr.rel (0) target = $region13
  $region12: #{ppo_image_critic_forward.1} parent=0 // pred_region
    _
  $region13: #{ppo_image_critic_forward.1} parent=0 // pred_fallthru
    _
  // Predicated region
  $region14: #{ppo_image_critic_forward.1} parent=0 // pred_check
    _
  $region15: #{ppo_image_critic_forward.1} parent=0 // pred_check_branch
    %21 = sbr.rel (0) target = $region17
  $region16: #{ppo_image_critic_forward.1} parent=0 // pred_region
    _
  $region17: #{ppo_image_critic_forward.1} parent=0 // pred_fallthru
    _
  // Predicated region
  $region18: #{ppo_image_critic_forward.1} parent=0 // pred_check
    _
  $region19: #{ppo_image_critic_forward.1} parent=0 // pred_check_branch
    %23 = sbr.rel (0) target = $region21
  $region20: #{ppo_image_critic_forward.1} parent=0 // pred_region
    _
  $region21: #{ppo_image_critic_forward.1} parent=0 // pred_fallthru
    _
  // Predicated region
  $region22: #{ppo_image_critic_forward.1} parent=0 // pred_check
    _
  $region23: #{ppo_image_critic_forward.1} parent=0 // pred_check_branch
    %25 = sbr.rel (0) target = $region25
  $region24: #{ppo_image_critic_forward.1} parent=0 // pred_region
    _
  $region25: #{ppo_image_critic_forward.1} parent=0 // pred_fallthru
    _
  // Predicated region
  $region26: #{ppo_image_critic_forward.1} parent=0 // pred_check
    _
  $region27: #{ppo_image_critic_forward.1} parent=0 // pred_check_branch
    %27 = sbr.rel (0) target = $region29
  $region28: #{ppo_image_critic_forward.1} parent=0 // pred_region
    _
  $region29: #{ppo_image_critic_forward.1} parent=0 // pred_fallthru
    _
  // Predicated region
  $region30: #{ppo_image_critic_forward.1} parent=0 // pred_check
    _
  $region31: #{ppo_image_critic_forward.1} parent=0 // pred_check_branch
    %29 = sbr.rel (0) target = $region33
  $region32: #{ppo_image_critic_forward.1} parent=0 // pred_region
    _
  $region33: #{ppo_image_critic_forward.1} parent=0 // pred_fallthru
    _
  // Predicated region
  $region34: #{ppo_image_critic_forward.1} parent=0 // pred_check
    _
  $region35: #{ppo_image_critic_forward.1} parent=0 // pred_check_branch
    %31 = sbr.rel (0) target = $region37
  $region36: #{ppo_image_critic_forward.1} parent=0 // pred_region
    _
  $region37: #{ppo_image_critic_forward.1} parent=0 // pred_fallthru
    _
  %v33 = vld [vmem:[%s0] sm:$0xff]
  %v34 = vld [vmem:[%s0 + $0xc] sm:$0xff]
  %v37 = vunpack.c.l.b16 %v33
  %v38 = vunpack.c.h.b16 %v33
  %v39 = vunpack.c.l.b16 %v34
  %v40 = vunpack.c.h.b16 %v34
  %v41 = vpack.c.b16 %v39, %v37
  %v42 = vpack.c.b16 %v40, %v38
  %45 = vst [vmem:[#allocation2] sm:$0xff] %v41
  %46 = vst [vmem:[#allocation2 + $0x8] sm:$0xff] %v42
  %v47 = vld [vmem:[%s0] sm:$0xff]
  %v48 = vld [vmem:[%s0 + $0x8] sm:$0xf]
  %v49 = vld [vmem:[%s0 + $0xc] sm:$0xff]
  %v50 = vld [vmem:[%s0 + $0x14] sm:$0xf]
  %v55 = vunpack.c.l.b16 %v47
  %v56 = vunpack.c.h.b16 %v47
  %v57 = vunpack.c.l.b16 %v48
  %v58 = vunpack.c.l.b16 %v49
  %v59 = vunpack.c.h.b16 %v49
  %v60 = vunpack.c.l.b16 %v50
  %v61 = vpack.c.b16 %v58, %v55
  %v62 = vpack.c.b16 %v59, %v56
  %v63 = vpack.c.b16 %v60, %v57
  %64 = vrot.lane.b32.xlu0 %v61, 127
  %v65 = vpop.permute.xlu0 %64
  %66 = vrot.lane.b32.xlu0 %v62, 127
  %v67 = vpop.permute.xlu0 %66
  %68 = vrot.lane.b32.xlu0 %v63, 127
  %v69 = vpop.permute.xlu0 %68
  %vm70 = vcmask 1039360
  %v71 = vsel %vm70, %v65, %v67
  %v72 = vsel %vm70, %v67, %v69
  %75 = vst [vmem:[#allocation2 + $0x10] sm:$0xff] %v71
  %76 = vst [vmem:[#allocation2 + $0x18] sm:$0xff] %v72
  %v77 = vld [vmem:[%s0] sm:$0xff]
  %v78 = vld [vmem:[%s0 + $0x8] sm:$0xf]
  %v79 = vld [vmem:[%s0 + $0xc] sm:$0xff]
  %v80 = vld [vmem:[%s0 + $0x14] sm:$0xf]
  %v85 = vunpack.c.l.b16 %v77
  %v86 = vunpack.c.h.b16 %v77
  %v87 = vunpack.c.l.b16 %v78
  %v88 = vunpack.c.l.b16 %v79
  %v89 = vunpack.c.h.b16 %v79
  %v90 = vunpack.c.l.b16 %v80
  %v91 = vpack.c.b16 %v88, %v85
  %v92 = vpack.c.b16 %v89, %v86
  %v93 = vpack.c.b16 %v90, %v87
  %94 = vrot.lane.b32.xlu0 %v91, 126
  %v95 = vpop.permute.xlu0 %94
  %96 = vrot.lane.b32.xlu0 %v92, 126
  %v97 = vpop.permute.xlu0 %96
  %98 = vrot.lane.b32.xlu0 %v93, 126
  %v99 = vpop.permute.xlu0 %98
  %vm100 = vcmask 1031168
  %v101 = vsel %vm100, %v95, %v97
  %v102 = vsel %vm100, %v97, %v99
  %105 = vst [vmem:[#allocation2 + $0x20] sm:$0xff] %v101
  %106 = vst [vmem:[#allocation2 + $0x28] sm:$0xff] %v102
  %v107 = vld [vmem:[%s0] sm:$0xff]
  %v108 = vld [vmem:[%s0 + $0x8] sm:$0xf]
  %v109 = vld [vmem:[%s0 + $0xc] sm:$0xff]
  %v110 = vld [vmem:[%s0 + $0x14] sm:$0xf]
  %v115 = vunpack.c.l.b16 %v107
  %v116 = vunpack.c.h.b16 %v107
  %v117 = vunpack.c.l.b16 %v108
  %v118 = vunpack.c.l.b16 %v109
  %v119 = vunpack.c.h.b16 %v109
  %v120 = vunpack.c.l.b16 %v110
  %v121 = vpack.c.b16 %v118, %v115
  %v122 = vpack.c.b16 %v119, %v116
  %v123 = vpack.c.b16 %v120, %v117
  %124 = vrot.lane.b32.xlu0 %v121, 125
  %v125 = vpop.permute.xlu0 %124
  %126 = vrot.lane.b32.xlu0 %v122, 125
  %v127 = vpop.permute.xlu0 %126
  %128 = vrot.lane.b32.xlu0 %v123, 125
  %v129 = vpop.permute.xlu0 %128
  %vm130 = vcmask 1022976
  %v131 = vsel %vm130, %v125, %v127
  %v132 = vsel %vm130, %v127, %v129
  %135 = vst [vmem:[#allocation2 + $0x30] sm:$0xff] %v131
  %136 = vst [vmem:[#allocation2 + $0x38] sm:$0xff] %v132
  %v137 = vld [vmem:[%s0] sm:$0xff]
  %v138 = vld [vmem:[%s0 + $0x8] sm:$0xf]
  %v139 = vld [vmem:[%s0 + $0xc] sm:$0xff]
  %v140 = vld [vmem:[%s0 + $0x14] sm:$0xf]
  %v145 = vunpack.c.l.b16 %v137
  %v146 = vunpack.c.h.b16 %v137
  %v147 = vunpack.c.l.b16 %v138
  %v148 = vunpack.c.l.b16 %v139
  %v149 = vunpack.c.h.b16 %v139
  %v150 = vunpack.c.l.b16 %v140
  %v151 = vpack.c.b16 %v148, %v145
  %v152 = vpack.c.b16 %v149, %v146
  %v153 = vpack.c.b16 %v150, %v147
  %154 = vrot.lane.b32.xlu0 %v151, 124
  %v155 = vpop.permute.xlu0 %154
  %156 = vrot.lane.b32.xlu0 %v152, 124
  %v157 = vpop.permute.xlu0 %156
  %158 = vrot.lane.b32.xlu0 %v153, 124
  %v159 = vpop.permute.xlu0 %158
  %vm160 = vcmask 1014784
  %v161 = vsel %vm160, %v155, %v157
  %v162 = vsel %vm160, %v157, %v159
  %165 = vst [vmem:[#allocation2 + $0x40] sm:$0xff] %v161
  %166 = vst [vmem:[#allocation2 + $0x48] sm:$0xff] %v162
  %v167 = vld [vmem:[%s0] sm:$0xff]
  %v168 = vld [vmem:[%s0 + $0x8] sm:$0xf]
  %v169 = vld [vmem:[%s0 + $0xc] sm:$0xff]
  %v170 = vld [vmem:[%s0 + $0x14] sm:$0xf]
  %v175 = vunpack.c.l.b16 %v167
  %v176 = vunpack.c.h.b16 %v167
  %v177 = vunpack.c.l.b16 %v168
  %v178 = vunpack.c.l.b16 %v169
  %v179 = vunpack.c.h.b16 %v169
  %v180 = vunpack.c.l.b16 %v170
  %v181 = vpack.c.b16 %v178, %v175
  %v182 = vpack.c.b16 %v179, %v176
  %v183 = vpack.c.b16 %v180, %v177
  %184 = vrot.lane.b32.xlu0 %v181, 112
  %v185 = vpop.permute.xlu0 %184
  %186 = vrot.lane.b32.xlu0 %v182, 112
  %v187 = vpop.permute.xlu0 %186
  %188 = vrot.lane.b32.xlu0 %v183, 112
  %v189 = vpop.permute.xlu0 %188
  %vm190 = vcmask 916480
  %v191 = vsel %vm190, %v185, %v187
  %v192 = vsel %vm190, %v187, %v189
  %195 = vst [vmem:[#allocation2 + $0x50] sm:$0xff] %v191
  %196 = vst [vmem:[#allocation2 + $0x58] sm:$0xff] %v192
  %v197 = vld [vmem:[%s0] sm:$0xff]
  %v198 = vld [vmem:[%s0 + $0x8] sm:$0xf]
  %v199 = vld [vmem:[%s0 + $0xc] sm:$0xff]
  %v200 = vld [vmem:[%s0 + $0x14] sm:$0xf]
  %v205 = vunpack.c.l.b16 %v197
  %v206 = vunpack.c.h.b16 %v197
  %v207 = vunpack.c.l.b16 %v198
  %v208 = vunpack.c.l.b16 %v199
  %v209 = vunpack.c.h.b16 %v199
  %v210 = vunpack.c.l.b16 %v200
  %v211 = vpack.c.b16 %v208, %v205
  %v212 = vpack.c.b16 %v209, %v206
  %v213 = vpack.c.b16 %v210, %v207
  %214 = vrot.lane.b32.xlu0 %v211, 111
  %v215 = vpop.permute.xlu0 %214
  %216 = vrot.lane.b32.xlu0 %v212, 111
  %v217 = vpop.permute.xlu0 %216
  %218 = vrot.lane.b32.xlu0 %v213, 111
  %v219 = vpop.permute.xlu0 %218
  %vm220 = vcmask 908288
  %v221 = vsel %vm220, %v215, %v217
  %v222 = vsel %vm220, %v217, %v219
  %225 = vst [vmem:[#allocation2 + $0x60] sm:$0xff] %v221
  %226 = vst [vmem:[#allocation2 + $0x68] sm:$0xff] %v222
  %v227 = vld [vmem:[%s0] sm:$0xff]
  %v228 = vld [vmem:[%s0 + $0x8] sm:$0xf]
  %v229 = vld [vmem:[%s0 + $0xc] sm:$0xff]
  %v230 = vld [vmem:[%s0 + $0x14] sm:$0xf]
  %v235 = vunpack.c.l.b16 %v227
  %v236 = vunpack.c.h.b16 %v227
  %v237 = vunpack.c.l.b16 %v228
  %v238 = vunpack.c.l.b16 %v229
  %v239 = vunpack.c.h.b16 %v229
  %v240 = vunpack.c.l.b16 %v230
  %v241 = vpack.c.b16 %v238, %v235
  %v242 = vpack.c.b16 %v239, %v236
  %v243 = vpack.c.b16 %v240, %v237
  %244 = vrot.lane.b32.xlu0 %v241, 110
  %v245 = vpop.permute.xlu0 %244
  %246 = vrot.lane.b32.xlu0 %v242, 110
  %v247 = vpop.permute.xlu0 %246
  %248 = vrot.lane.b32.xlu0 %v243, 110
  %v249 = vpop.permute.xlu0 %248
  %vm250 = vcmask 900096
  %v251 = vsel %vm250, %v245, %v247
  %v252 = vsel %vm250, %v247, %v249
  %255 = vst [vmem:[#allocation2 + $0x70] sm:$0xff] %v251
  %256 = vst [vmem:[#allocation2 + $0x78] sm:$0xff] %v252
  %v257 = vld [vmem:[%s0] sm:$0xff]
  %v258 = vld [vmem:[%s0 + $0x8] sm:$0xf]
  %v259 = vld [vmem:[%s0 + $0xc] sm:$0xff]
  %v260 = vld [vmem:[%s0 + $0x14] sm:$0xf]
  %v265 = vunpack.c.l.b16 %v257
  %v266 = vunpack.c.h.b16 %v257
  %v267 = vunpack.c.l.b16 %v258
  %v268 = vunpack.c.l.b16 %v259
  %v269 = vunpack.c.h.b16 %v259
  %v270 = vunpack.c.l.b16 %v260
  %v271 = vpack.c.b16 %v268, %v265
  %v272 = vpack.c.b16 %v269, %v266
  %v273 = vpack.c.b16 %v270, %v267
  %274 = vrot.lane.b32.xlu0 %v271, 109
  %v275 = vpop.permute.xlu0 %274
  %276 = vrot.lane.b32.xlu0 %v272, 109
  %v277 = vpop.permute.xlu0 %276
  %278 = vrot.lane.b32.xlu0 %v273, 109
  %v279 = vpop.permute.xlu0 %278
  %vm280 = vcmask 891904
  %v281 = vsel %vm280, %v275, %v277
  %v282 = vsel %vm280, %v277, %v279
  %285 = vst [vmem:[#allocation2 + $0x80] sm:$0xff] %v281
  %286 = vst [vmem:[#allocation2 + $0x88] sm:$0xff] %v282
  %v287 = vld [vmem:[%s0] sm:$0xff]
  %v288 = vld [vmem:[%s0 + $0x8] sm:$0xf]
  %v289 = vld [vmem:[%s0 + $0xc] sm:$0xff]
  %v290 = vld [vmem:[%s0 + $0x14] sm:$0xf]
  %v295 = vunpack.c.l.b16 %v287
  %v296 = vunpack.c.h.b16 %v287
  %v297 = vunpack.c.l.b16 %v288
  %v298 = vunpack.c.l.b16 %v289
  %v299 = vunpack.c.h.b16 %v289
  %v300 = vunpack.c.l.b16 %v290
  %v301 = vpack.c.b16 %v298, %v295
  %v302 = vpack.c.b16 %v299, %v296
  %v303 = vpack.c.b16 %v300, %v297
  %304 = vrot.lane.b32.xlu0 %v301, 108
  %v305 = vpop.permute.xlu0 %304
  %306 = vrot.lane.b32.xlu0 %v302, 108
  %v307 = vpop.permute.xlu0 %306
  %308 = vrot.lane.b32.xlu0 %v303, 108
  %v309 = vpop.permute.xlu0 %308
  %vm310 = vcmask 883712
  %v311 = vsel %vm310, %v305, %v307
  %v312 = vsel %vm310, %v307, %v309
  %315 = vst [vmem:[#allocation2 + $0x90] sm:$0xff] %v311
  %316 = vst [vmem:[#allocation2 + $0x98] sm:$0xff] %v312
  %v317 = vld [vmem:[%s0] sm:$0xff]
  %v318 = vld [vmem:[%s0 + $0x8] sm:$0xf]
  %v319 = vld [vmem:[%s0 + $0xc] sm:$0xff]
  %v320 = vld [vmem:[%s0 + $0x14] sm:$0xf]
  %v325 = vunpack.c.l.b16 %v317
  %v326 = vunpack.c.h.b16 %v317
  %v327 = vunpack.c.l.b16 %v318
  %v328 = vunpack.c.l.b16 %v319
  %v329 = vunpack.c.h.b16 %v319
  %v330 = vunpack.c.l.b16 %v320
  %v331 = vpack.c.b16 %v328, %v325
  %v332 = vpack.c.b16 %v329, %v326
  %v333 = vpack.c.b16 %v330, %v327
  %334 = vrot.lane.b32.xlu0 %v331, 96
  %v335 = vpop.permute.xlu0 %334
  %336 = vrot.lane.b32.xlu0 %v332, 96
  %v337 = vpop.permute.xlu0 %336
  %338 = vrot.lane.b32.xlu0 %v333, 96
  %v339 = vpop.permute.xlu0 %338
  %vm340 = vcmask 785408
  %v341 = vsel %vm340, %v335, %v337
  %v342 = vsel %vm340, %v337, %v339
  %345 = vst [vmem:[#allocation2 + $0xa0] sm:$0xff] %v341
  %346 = vst [vmem:[#allocation2 + $0xa8] sm:$0xff] %v342
  %v347 = vld [vmem:[%s0] sm:$0xff]
  %v348 = vld [vmem:[%s0 + $0x8] sm:$0xf]
  %v349 = vld [vmem:[%s0 + $0xc] sm:$0xff]
  %v350 = vld [vmem:[%s0 + $0x14] sm:$0xf]
  %v355 = vunpack.c.l.b16 %v347
  %v356 = vunpack.c.h.b16 %v347
  %v357 = vunpack.c.l.b16 %v348
  %v358 = vunpack.c.l.b16 %v349
  %v359 = vunpack.c.h.b16 %v349
  %v360 = vunpack.c.l.b16 %v350
  %v361 = vpack.c.b16 %v358, %v355
  %v362 = vpack.c.b16 %v359, %v356
  %v363 = vpack.c.b16 %v360, %v357
  %364 = vrot.lane.b32.xlu0 %v361, 95
  %v365 = vpop.permute.xlu0 %364
  %366 = vrot.lane.b32.xlu0 %v362, 95
  %v367 = vpop.permute.xlu0 %366
  %368 = vrot.lane.b32.xlu0 %v363, 95
  %v369 = vpop.permute.xlu0 %368
  %vm370 = vcmask 777216
  %v371 = vsel %vm370, %v365, %v367
  %v372 = vsel %vm370, %v367, %v369
  %375 = vst [vmem:[#allocation2 + $0xb0] sm:$0xff] %v371
  %376 = vst [vmem:[#allocation2 + $0xb8] sm:$0xff] %v372
  %v377 = vld [vmem:[%s0] sm:$0xff]
  %v378 = vld [vmem:[%s0 + $0x8] sm:$0xf]
  %v379 = vld [vmem:[%s0 + $0xc] sm:$0xff]
  %v380 = vld [vmem:[%s0 + $0x14] sm:$0xf]
  %v385 = vunpack.c.l.b16 %v377
  %v386 = vunpack.c.h.b16 %v377
  %v387 = vunpack.c.l.b16 %v378
  %v388 = vunpack.c.l.b16 %v379
  %v389 = vunpack.c.h.b16 %v379
  %v390 = vunpack.c.l.b16 %v380
  %v391 = vpack.c.b16 %v388, %v385
  %v392 = vpack.c.b16 %v389, %v386
  %v393 = vpack.c.b16 %v390, %v387
  %394 = vrot.lane.b32.xlu0 %v391, 94
  %v395 = vpop.permute.xlu0 %394
  %396 = vrot.lane.b32.xlu0 %v392, 94
  %v397 = vpop.permute.xlu0 %396
  %398 = vrot.lane.b32.xlu0 %v393, 94
  %v399 = vpop.permute.xlu0 %398
  %vm400 = vcmask 769024
  %v401 = vsel %vm400, %v395, %v397
  %v402 = vsel %vm400, %v397, %v399
  %405 = vst [vmem:[#allocation2 + $0xc0] sm:$0xff] %v401
  %406 = vst [vmem:[#allocation2 + $0xc8] sm:$0xff] %v402
  %v407 = vld [vmem:[%s0] sm:$0xff]
  %v408 = vld [vmem:[%s0 + $0x8] sm:$0xf]
  %v409 = vld [vmem:[%s0 + $0xc] sm:$0xff]
  %v410 = vld [vmem:[%s0 + $0x14] sm:$0xf]
  %v415 = vunpack.c.l.b16 %v407
  %v416 = vunpack.c.h.b16 %v407
  %v417 = vunpack.c.l.b16 %v408
  %v418 = vunpack.c.l.b16 %v409
  %v419 = vunpack.c.h.b16 %v409
  %v420 = vunpack.c.l.b16 %v410
  %v421 = vpack.c.b16 %v418, %v415
  %v422 = vpack.c.b16 %v419, %v416
  %v423 = vpack.c.b16 %v420, %v417
  %424 = vrot.lane.b32.xlu0 %v421, 93
  %v425 = vpop.permute.xlu0 %424
  %426 = vrot.lane.b32.xlu0 %v422, 93
  %v427 = vpop.permute.xlu0 %426
  %428 = vrot.lane.b32.xlu0 %v423, 93
  %v429 = vpop.permute.xlu0 %428
  %vm430 = vcmask 760832
  %v431 = vsel %vm430, %v425, %v427
  %v432 = vsel %vm430, %v427, %v429
  %435 = vst [vmem:[#allocation2 + $0xd0] sm:$0xff] %v431
  %436 = vst [vmem:[#allocation2 + $0xd8] sm:$0xff] %v432
  %v437 = vld [vmem:[%s0] sm:$0xff]
  %v438 = vld [vmem:[%s0 + $0x8] sm:$0xf]
  %v439 = vld [vmem:[%s0 + $0xc] sm:$0xff]
  %v440 = vld [vmem:[%s0 + $0x14] sm:$0xf]
  %v445 = vunpack.c.l.b16 %v437
  %v446 = vunpack.c.h.b16 %v437
  %v447 = vunpack.c.l.b16 %v438
  %v448 = vunpack.c.l.b16 %v439
  %v449 = vunpack.c.h.b16 %v439
  %v450 = vunpack.c.l.b16 %v440
  %v451 = vpack.c.b16 %v448, %v445
  %v452 = vpack.c.b16 %v449, %v446
  %v453 = vpack.c.b16 %v450, %v447
  %454 = vrot.lane.b32.xlu0 %v451, 92
  %v455 = vpop.permute.xlu0 %454
  %456 = vrot.lane.b32.xlu0 %v452, 92
  %v457 = vpop.permute.xlu0 %456
  %458 = vrot.lane.b32.xlu0 %v453, 92
  %v459 = vpop.permute.xlu0 %458
  %vm460 = vcmask 752640
  %v461 = vsel %vm460, %v455, %v457
  %v462 = vsel %vm460, %v457, %v459
  %465 = vst [vmem:[#allocation2 + $0xe0] sm:$0xff] %v461
  %466 = vst [vmem:[#allocation2 + $0xe8] sm:$0xff] %v462
  %v467 = vld [vmem:[%s0] sm:$0xff]
  %v468 = vld [vmem:[%s0 + $0x8] sm:$0xf]
  %v469 = vld [vmem:[%s0 + $0xc] sm:$0xff]
  %v470 = vld [vmem:[%s0 + $0x14] sm:$0xf]
  %v475 = vunpack.c.l.b16 %v467
  %v476 = vunpack.c.h.b16 %v467
  %v477 = vunpack.c.l.b16 %v468
  %v478 = vunpack.c.l.b16 %v469
  %v479 = vunpack.c.h.b16 %v469
  %v480 = vunpack.c.l.b16 %v470
  %v481 = vpack.c.b16 %v478, %v475
  %v482 = vpack.c.b16 %v479, %v476
  %v483 = vpack.c.b16 %v480, %v477
  %484 = vrot.lane.b32.xlu0 %v481, 80
  %v485 = vpop.permute.xlu0 %484
  %486 = vrot.lane.b32.xlu0 %v482, 80
  %v487 = vpop.permute.xlu0 %486
  %488 = vrot.lane.b32.xlu0 %v483, 80
  %v489 = vpop.permute.xlu0 %488
  %vm490 = vcmask 654336
  %v491 = vsel %vm490, %v485, %v487
  %v492 = vsel %vm490, %v487, %v489
  %495 = vst [vmem:[#allocation2 + $0xf0] sm:$0xff] %v491
  %496 = vst [vmem:[#allocation2 + $0xf8] sm:$0xff] %v492
  %v497 = vld [vmem:[%s0] sm:$0xff]
  %v498 = vld [vmem:[%s0 + $0x8] sm:$0xf]
  %v499 = vld [vmem:[%s0 + $0xc] sm:$0xff]
  %v500 = vld [vmem:[%s0 + $0x14] sm:$0xf]
  %v505 = vunpack.c.l.b16 %v497
  %v506 = vunpack.c.h.b16 %v497
  %v507 = vunpack.c.l.b16 %v498
  %v508 = vunpack.c.l.b16 %v499
  %v509 = vunpack.c.h.b16 %v499
  %v510 = vunpack.c.l.b16 %v500
  %v511 = vpack.c.b16 %v508, %v505
  %v512 = vpack.c.b16 %v509, %v506
  %v513 = vpack.c.b16 %v510, %v507
  %514 = vrot.lane.b32.xlu0 %v511, 79
  %v515 = vpop.permute.xlu0 %514
  %516 = vrot.lane.b32.xlu0 %v512, 79
  %v517 = vpop.permute.xlu0 %516
  %518 = vrot.lane.b32.xlu0 %v513, 79
  %v519 = vpop.permute.xlu0 %518
  %vm520 = vcmask 646144
  %v521 = vsel %vm520, %v515, %v517
  %v522 = vsel %vm520, %v517, %v519
  %525 = vst [vmem:[#allocation2 + $0x100] sm:$0xff] %v521
  %526 = vst [vmem:[#allocation2 + $0x108] sm:$0xff] %v522
  %v527 = vld [vmem:[%s0] sm:$0xff]
  %v528 = vld [vmem:[%s0 + $0x8] sm:$0xf]
  %v529 = vld [vmem:[%s0 + $0xc] sm:$0xff]
  %v530 = vld [vmem:[%s0 + $0x14] sm:$0xf]
  %v535 = vunpack.c.l.b16 %v527
  %v536 = vunpack.c.h.b16 %v527
  %v537 = vunpack.c.l.b16 %v528
  %v538 = vunpack.c.l.b16 %v529
  %v539 = vunpack.c.h.b16 %v529
  %v540 = vunpack.c.l.b16 %v530
  %v541 = vpack.c.b16 %v538, %v535
  %v542 = vpack.c.b16 %v539, %v536
  %v543 = vpack.c.b16 %v540, %v537
  %544 = vrot.lane.b32.xlu0 %v541, 78
  %v545 = vpop.permute.xlu0 %544
  %546 = vrot.lane.b32.xlu0 %v542, 78
  %v547 = vpop.permute.xlu0 %546
  %548 = vrot.lane.b32.xlu0 %v543, 78
  %v549 = vpop.permute.xlu0 %548
  %vm550 = vcmask 637952
  %v551 = vsel %vm550, %v545, %v547
  %v552 = vsel %vm550, %v547, %v549
  %555 = vst [vmem:[#allocation2 + $0x110] sm:$0xff] %v551
  %556 = vst [vmem:[#allocation2 + $0x118] sm:$0xff] %v552
  %v557 = vld [vmem:[%s0] sm:$0xff]
  %v558 = vld [vmem:[%s0 + $0x8] sm:$0xf]
  %v559 = vld [vmem:[%s0 + $0xc] sm:$0xff]
  %v560 = vld [vmem:[%s0 + $0x14] sm:$0xf]
  %v565 = vunpack.c.l.b16 %v557
  %v566 = vunpack.c.h.b16 %v557
  %v567 = vunpack.c.l.b16 %v558
  %v568 = vunpack.c.l.b16 %v559
  %v569 = vunpack.c.h.b16 %v559
  %v570 = vunpack.c.l.b16 %v560
  %v571 = vpack.c.b16 %v568, %v565
  %v572 = vpack.c.b16 %v569, %v566
  %v573 = vpack.c.b16 %v570, %v567
  %574 = vrot.lane.b32.xlu0 %v571, 77
  %v575 = vpop.permute.xlu0 %574
  %576 = vrot.lane.b32.xlu0 %v572, 77
  %v577 = vpop.permute.xlu0 %576
  %578 = vrot.lane.b32.xlu0 %v573, 77
  %v579 = vpop.permute.xlu0 %578
  %vm580 = vcmask 629760
  %v581 = vsel %vm580, %v575, %v577
  %v582 = vsel %vm580, %v577, %v579
  %585 = vst [vmem:[#allocation2 + $0x120] sm:$0xff] %v581
  %586 = vst [vmem:[#allocation2 + $0x128] sm:$0xff] %v582
  %v587 = vld [vmem:[%s0] sm:$0xff]
  %v588 = vld [vmem:[%s0 + $0x8] sm:$0xf]
  %v589 = vld [vmem:[%s0 + $0xc] sm:$0xff]
  %v590 = vld [vmem:[%s0 + $0x14] sm:$0xf]
  %v595 = vunpack.c.l.b16 %v587
  %v596 = vunpack.c.h.b16 %v587
  %v597 = vunpack.c.l.b16 %v588
  %v598 = vunpack.c.l.b16 %v589
  %v599 = vunpack.c.h.b16 %v589
  %v600 = vunpack.c.l.b16 %v590
  %v601 = vpack.c.b16 %v598, %v595
  %v602 = vpack.c.b16 %v599, %v596
  %v603 = vpack.c.b16 %v600, %v597
  %604 = vrot.lane.b32.xlu0 %v601, 76
  %v605 = vpop.permute.xlu0 %604
  %606 = vrot.lane.b32.xlu0 %v602, 76
  %v607 = vpop.permute.xlu0 %606
  %608 = vrot.lane.b32.xlu0 %v603, 76
  %v609 = vpop.permute.xlu0 %608
  %vm610 = vcmask 621568
  %v611 = vsel %vm610, %v605, %v607
  %v612 = vsel %vm610, %v607, %v609
  %615 = vst [vmem:[#allocation2 + $0x130] sm:$0xff] %v611
  %616 = vst [vmem:[#allocation2 + $0x138] sm:$0xff] %v612
  %v617 = vld [vmem:[%s0] sm:$0xff]
  %v618 = vld [vmem:[%s0 + $0x8] sm:$0xf]
  %v619 = vld [vmem:[%s0 + $0xc] sm:$0xff]
  %v620 = vld [vmem:[%s0 + $0x14] sm:$0xf]
  %v625 = vunpack.c.l.b16 %v617
  %v626 = vunpack.c.h.b16 %v617
  %v627 = vunpack.c.l.b16 %v618
  %v628 = vunpack.c.l.b16 %v619
  %v629 = vunpack.c.h.b16 %v619
  %v630 = vunpack.c.l.b16 %v620
  %v631 = vpack.c.b16 %v628, %v625
  %v632 = vpack.c.b16 %v629, %v626
  %v633 = vpack.c.b16 %v630, %v627
  %634 = vrot.lane.b32.xlu0 %v631, 64
  %v635 = vpop.permute.xlu0 %634
  %636 = vrot.lane.b32.xlu0 %v632, 64
  %v637 = vpop.permute.xlu0 %636
  %638 = vrot.lane.b32.xlu0 %v633, 64
  %v639 = vpop.permute.xlu0 %638
  %vm640 = vcmask 523264
  %v641 = vsel %vm640, %v635, %v637
  %v642 = vsel %vm640, %v637, %v639
  %645 = vst [vmem:[#allocation2 + $0x140] sm:$0xff] %v641
  %646 = vst [vmem:[#allocation2 + $0x148] sm:$0xff] %v642
  %v647 = vld [vmem:[%s0] sm:$0xff]
  %v648 = vld [vmem:[%s0 + $0x8] sm:$0xf]
  %v649 = vld [vmem:[%s0 + $0xc] sm:$0xff]
  %v650 = vld [vmem:[%s0 + $0x14] sm:$0xf]
  %v655 = vunpack.c.l.b16 %v647
  %v656 = vunpack.c.h.b16 %v647
  %v657 = vunpack.c.l.b16 %v648
  %v658 = vunpack.c.l.b16 %v649
  %v659 = vunpack.c.h.b16 %v649
  %v660 = vunpack.c.l.b16 %v650
  %v661 = vpack.c.b16 %v658, %v655
  %v662 = vpack.c.b16 %v659, %v656
  %v663 = vpack.c.b16 %v660, %v657
  %664 = vrot.lane.b32.xlu0 %v661, 63
  %v665 = vpop.permute.xlu0 %664
  %666 = vrot.lane.b32.xlu0 %v662, 63
  %v667 = vpop.permute.xlu0 %666
  %668 = vrot.lane.b32.xlu0 %v663, 63
  %v669 = vpop.permute.xlu0 %668
  %vm670 = vcmask 515072
  %v671 = vsel %vm670, %v665, %v667
  %v672 = vsel %vm670, %v667, %v669
  %675 = vst [vmem:[#allocation2 + $0x150] sm:$0xff] %v671
  %676 = vst [vmem:[#allocation2 + $0x158] sm:$0xff] %v672
  %v677 = vld [vmem:[%s0] sm:$0xff]
  %v678 = vld [vmem:[%s0 + $0x8] sm:$0xf]
  %v679 = vld [vmem:[%s0 + $0xc] sm:$0xff]
  %v680 = vld [vmem:[%s0 + $0x14] sm:$0xf]
  %v685 = vunpack.c.l.b16 %v677
  %v686 = vunpack.c.h.b16 %v677
  %v687 = vunpack.c.l.b16 %v678
  %v688 = vunpack.c.l.b16 %v679
  %v689 = vunpack.c.h.b16 %v679
  %v690 = vunpack.c.l.b16 %v680
  %v691 = vpack.c.b16 %v688, %v685
  %v692 = vpack.c.b16 %v689, %v686
  %v693 = vpack.c.b16 %v690, %v687
  %694 = vrot.lane.b32.xlu0 %v691, 62
  %v695 = vpop.permute.xlu0 %694
  %696 = vrot.lane.b32.xlu0 %v692, 62
  %v697 = vpop.permute.xlu0 %696
  %698 = vrot.lane.b32.xlu0 %v693, 62
  %v699 = vpop.permute.xlu0 %698
  %vm700 = vcmask 506880
  %v701 = vsel %vm700, %v695, %v697
  %v702 = vsel %vm700, %v697, %v699
  %705 = vst [vmem:[#allocation2 + $0x160] sm:$0xff] %v701
  %706 = vst [vmem:[#allocation2 + $0x168] sm:$0xff] %v702
  %v707 = vld [vmem:[%s0] sm:$0xff]
  %v708 = vld [vmem:[%s0 + $0x8] sm:$0xf]
  %v709 = vld [vmem:[%s0 + $0xc] sm:$0xff]
  %v710 = vld [vmem:[%s0 + $0x14] sm:$0xf]
  %v715 = vunpack.c.l.b16 %v707
  %v716 = vunpack.c.h.b16 %v707
  %v717 = vunpack.c.l.b16 %v708
  %v718 = vunpack.c.l.b16 %v709
  %v719 = vunpack.c.h.b16 %v709
  %v720 = vunpack.c.l.b16 %v710
  %v721 = vpack.c.b16 %v718, %v715
  %v722 = vpack.c.b16 %v719, %v716
  %v723 = vpack.c.b16 %v720, %v717
  %724 = vrot.lane.b32.xlu0 %v721, 61
  %v725 = vpop.permute.xlu0 %724
  %726 = vrot.lane.b32.xlu0 %v722, 61
  %v727 = vpop.permute.xlu0 %726
  %728 = vrot.lane.b32.xlu0 %v723, 61
  %v729 = vpop.permute.xlu0 %728
  %vm730 = vcmask 498688
  %v731 = vsel %vm730, %v725, %v727
  %v732 = vsel %vm730, %v727, %v729
  %735 = vst [vmem:[#allocation2 + $0x170] sm:$0xff] %v731
  %736 = vst [vmem:[#allocation2 + $0x178] sm:$0xff] %v732
  %v737 = vld [vmem:[%s0] sm:$0xff]
  %v738 = vld [vmem:[%s0 + $0x8] sm:$0xf]
  %v739 = vld [vmem:[%s0 + $0xc] sm:$0xff]
  %v740 = vld [vmem:[%s0 + $0x14] sm:$0xf]
  %v745 = vunpack.c.l.b16 %v737
  %v746 = vunpack.c.h.b16 %v737
  %v747 = vunpack.c.l.b16 %v738
  %v748 = vunpack.c.l.b16 %v739
  %v749 = vunpack.c.h.b16 %v739
  %v750 = vunpack.c.l.b16 %v740
  %v751 = vpack.c.b16 %v748, %v745
  %v752 = vpack.c.b16 %v749, %v746
  %v753 = vpack.c.b16 %v750, %v747
  %754 = vrot.lane.b32.xlu0 %v751, 60
  %v755 = vpop.permute.xlu0 %754
  %756 = vrot.lane.b32.xlu0 %v752, 60
  %v757 = vpop.permute.xlu0 %756
  %758 = vrot.lane.b32.xlu0 %v753, 60
  %v759 = vpop.permute.xlu0 %758
  %vm760 = vcmask 490496
  %v761 = vsel %vm760, %v755, %v757
  %v762 = vsel %vm760, %v757, %v759
  %765 = vst [vmem:[#allocation2 + $0x180] sm:$0xff] %v761
  %766 = vst [vmem:[#allocation2 + $0x188] sm:$0xff] %v762
  %v767 = vld [vmem:[%s1] sm:$0xff]
  %v768 = vld [vmem:[%s1 + $0x8] sm:$0xff]
  %v769 = vld [vmem:[%s1 + $0x10] sm:$0xff]
  %v770 = vld [vmem:[%s1 + $0x18] sm:$0xff]
  %v771 = vld [vmem:[%s1 + $0x20] sm:$0xff]
  %v772 = vld [vmem:[%s1 + $0x28] sm:$0xff]
  %v773 = vld [vmem:[%s1 + $0x30] sm:$0xff]
  %v774 = vld [vmem:[%s1 + $0x38] sm:$0xff]
  %v775 = vld [vmem:[%s1 + $0x40] sm:$0xff]
  %v776 = vld [vmem:[%s1 + $0x48] sm:$0xff]
  %v777 = vld [vmem:[%s1 + $0x50] sm:$0xff]
  %v778 = vld [vmem:[%s1 + $0x58] sm:$0xff]
  %v779 = vld [vmem:[%s1 + $0x60] sm:$0xff]
  %v780 = vld [vmem:[%s1 + $0x68] sm:$0xff]
  %v781 = vld [vmem:[%s1 + $0x70] sm:$0xff]
  %v782 = vld [vmem:[%s1 + $0x78] sm:$0xff]
  %v783 = vld [vmem:[#allocation2] sm:$0xff]
  %v784 = vld [vmem:[#allocation2 + $0x8] sm:$0xff]
  %v785 = vld [vmem:[#allocation2 + $0x10] sm:$0xff]
  %v786 = vld [vmem:[#allocation2 + $0x18] sm:$0xff]
  %v787 = vld [vmem:[#allocation2 + $0x20] sm:$0xff]
  %v788 = vld [vmem:[#allocation2 + $0x28] sm:$0xff]
  %v789 = vld [vmem:[#allocation2 + $0x30] sm:$0xff]
  %v790 = vld [vmem:[#allocation2 + $0x38] sm:$0xff]
  %v791 = vld [vmem:[#allocation2 + $0x40] sm:$0xff]
  %v792 = vld [vmem:[#allocation2 + $0x48] sm:$0xff]
  %v793 = vld [vmem:[#allocation2 + $0x50] sm:$0xff]
  %v794 = vld [vmem:[#allocation2 + $0x58] sm:$0xff]
  %v795 = vld [vmem:[#allocation2 + $0x60] sm:$0xff]
  %v796 = vld [vmem:[#allocation2 + $0x68] sm:$0xff]
  %v797 = vld [vmem:[#allocation2 + $0x70] sm:$0xff]
  %v798 = vld [vmem:[#allocation2 + $0x78] sm:$0xff]
  %v799 = vld [vmem:[#allocation2 + $0x80] sm:$0xff]
  %v800 = vld [vmem:[#allocation2 + $0x88] sm:$0xff]
  %v801 = vld [vmem:[#allocation2 + $0x90] sm:$0xff]
  %v802 = vld [vmem:[#allocation2 + $0x98] sm:$0xff]
  %v803 = vld [vmem:[#allocation2 + $0xa0] sm:$0xff]
  %v804 = vld [vmem:[#allocation2 + $0xa8] sm:$0xff]
  %v805 = vld [vmem:[#allocation2 + $0xb0] sm:$0xff]
  %v806 = vld [vmem:[#allocation2 + $0xb8] sm:$0xff]
  %v807 = vld [vmem:[#allocation2 + $0xc0] sm:$0xff]
  %v808 = vld [vmem:[#allocation2 + $0xc8] sm:$0xff]
  %v809 = vld [vmem:[#allocation2 + $0xd0] sm:$0xff]
  %v810 = vld [vmem:[#allocation2 + $0xd8] sm:$0xff]
  %v811 = vld [vmem:[#allocation2 + $0xe0] sm:$0xff]
  %v812 = vld [vmem:[#allocation2 + $0xe8] sm:$0xff]
  %v813 = vld [vmem:[#allocation2 + $0xf0] sm:$0xff]
  %v814 = vld [vmem:[#allocation2 + $0xf8] sm:$0xff]
  %v815 = vld [vmem:[#allocation2 + $0x100] sm:$0xff]
  %v816 = vld [vmem:[#allocation2 + $0x108] sm:$0xff]
  %v817 = vld [vmem:[#allocation2 + $0x110] sm:$0xff]
  %v818 = vld [vmem:[#allocation2 + $0x118] sm:$0xff]
  %v819 = vld [vmem:[#allocation2 + $0x120] sm:$0xff]
  %v820 = vld [vmem:[#allocation2 + $0x128] sm:$0xff]
  %v821 = vld [vmem:[#allocation2 + $0x130] sm:$0xff]
  %v822 = vld [vmem:[#allocation2 + $0x138] sm:$0xff]
  %v823 = vld [vmem:[#allocation2 + $0x140] sm:$0xff]
  %v824 = vld [vmem:[#allocation2 + $0x148] sm:$0xff]
  %v825 = vld [vmem:[#allocation2 + $0x150] sm:$0xff]
  %v826 = vld [vmem:[#allocation2 + $0x158] sm:$0xff]
  %v827 = vld [vmem:[#allocation2 + $0x160] sm:$0xff]
  %v828 = vld [vmem:[#allocation2 + $0x168] sm:$0xff]
  %v829 = vld [vmem:[#allocation2 + $0x170] sm:$0xff]
  %v830 = vld [vmem:[#allocation2 + $0x178] sm:$0xff]
  %v831 = vld [vmem:[#allocation2 + $0x180] sm:$0xff]
  %v832 = vld [vmem:[#allocation2 + $0x188] sm:$0xff]
  %v833 = vld [vmem:[%s2] sm:$0xff]
  %v834 = vld [vmem:[%s2 + $0x8] sm:$0xff]
  %v835 = vld [vmem:[%s2 + $0x10] sm:$0xff]
  %v836 = vld [vmem:[%s2 + $0x18] sm:$0xff]
  %v837 = vld [vmem:[%s2 + $0x20] sm:$0xff]
  %v838 = vld [vmem:[%s2 + $0x28] sm:$0xff]
  %v839 = vld [vmem:[%s2 + $0x30] sm:$0xff]
  %v840 = vld [vmem:[%s2 + $0x38] sm:$0xff]
  %842 = vset.pattern.permute.xlu0 0
  %843 = vperm.xlu0 %842, %v833
  %v844 = vpop.permute.xlu0 %843
  %847 = vset.pattern.permute.xlu0 0
  %848 = vperm.xlu0 %847, %v834
  %v849 = vpop.permute.xlu0 %848
  %852 = vset.pattern.permute.xlu0 0
  %853 = vperm.xlu0 %852, %v835
  %v854 = vpop.permute.xlu0 %853
  %857 = vset.pattern.permute.xlu0 0
  %858 = vperm.xlu0 %857, %v836
  %v859 = vpop.permute.xlu0 %858
  %862 = vset.pattern.permute.xlu0 0
  %863 = vperm.xlu0 %862, %v837
  %v864 = vpop.permute.xlu0 %863
  %867 = vset.pattern.permute.xlu0 0
  %868 = vperm.xlu0 %867, %v838
  %v869 = vpop.permute.xlu0 %868
  %872 = vset.pattern.permute.xlu0 0
  %873 = vperm.xlu0 %872, %v839
  %v874 = vpop.permute.xlu0 %873
  %877 = vset.pattern.permute.xlu0 0
  %878 = vperm.xlu0 %877, %v840
  %v879 = vpop.permute.xlu0 %878
  %v897 = vunpack.c.l.b16 %v767
  %v898 = vunpack.c.h.b16 %v767
  %v899 = vunpack.c.l.b16 %v768
  %v900 = vunpack.c.h.b16 %v768
  %v901 = vunpack.c.l.b16 %v769
  %v902 = vunpack.c.h.b16 %v769
  %v903 = vunpack.c.l.b16 %v770
  %v904 = vunpack.c.h.b16 %v770
  %v905 = vunpack.c.l.b16 %v771
  %v906 = vunpack.c.h.b16 %v771
  %v907 = vunpack.c.l.b16 %v772
  %v908 = vunpack.c.h.b16 %v772
  %v909 = vunpack.c.l.b16 %v773
  %v910 = vunpack.c.h.b16 %v773
  %v911 = vunpack.c.l.b16 %v774
  %v912 = vunpack.c.h.b16 %v774
  %v913 = vunpack.c.l.b16 %v775
  %v914 = vunpack.c.h.b16 %v775
  %v915 = vunpack.c.l.b16 %v776
  %v916 = vunpack.c.h.b16 %v776
  %v917 = vunpack.c.l.b16 %v777
  %v918 = vunpack.c.h.b16 %v777
  %v919 = vunpack.c.l.b16 %v778
  %v920 = vunpack.c.h.b16 %v778
  %v921 = vunpack.c.l.b16 %v779
  %v922 = vunpack.c.h.b16 %v779
  %v923 = vunpack.c.l.b16 %v780
  %v924 = vunpack.c.h.b16 %v780
  %v925 = vunpack.c.l.b16 %v781
  %v926 = vunpack.c.h.b16 %v781
  %v927 = vunpack.c.l.b16 %v782
  %v928 = vunpack.c.h.b16 %v782
  %v929 = vpack.c.b16 %v901, %v897
  %v930 = vpack.c.b16 %v902, %v898
  %v931 = vpack.c.b16 %v903, %v899
  %v932 = vpack.c.b16 %v904, %v900
  %v933 = vpack.c.b16 %v909, %v905
  %v934 = vpack.c.b16 %v910, %v906
  %v935 = vpack.c.b16 %v911, %v907
  %v936 = vpack.c.b16 %v912, %v908
  %v937 = vpack.c.b16 %v917, %v913
  %v938 = vpack.c.b16 %v918, %v914
  %v939 = vpack.c.b16 %v919, %v915
  %v940 = vpack.c.b16 %v920, %v916
  %v941 = vpack.c.b16 %v925, %v921
  %v942 = vpack.c.b16 %v926, %v922
  %v943 = vpack.c.b16 %v927, %v923
  %v944 = vpack.c.b16 %v928, %v924
  %vm957 = vcmask 130048
  %v959 = vsel %vm957, %v932, 0
  %v962 = vsel %vm957, %v936, 0
  %v965 = vsel %vm957, %v940, 0
  %v968 = vsel %vm957, %v944, 0
  %970 = vmatprep.subr.bf16.mxu0 %v784
  %971 = vmatpush1.bf16.msra.mxu0 %v783
  %972 = vmatprep.subr.bf16.mxu0 %v786
  %973 = vmatpush1.bf16.msra.mxu0 %v785
  %974 = vmatprep.subr.bf16.mxu0 %v788
  %975 = vmatpush1.bf16.msra.mxu0 %v787
  %976 = vmatprep.subr.bf16.mxu0 %v790
  %977 = vmatpush1.bf16.msra.mxu0 %v789
  %978 = vmatprep.subr.bf16.mxu0 %v792
  %979 = vmatpush1.bf16.msra.mxu0 %v791
  %980 = vmatprep.subr.bf16.mxu0 %v794
  %981 = vmatpush1.bf16.msra.mxu0 %v793
  %982 = vmatprep.subr.bf16.mxu0 %v796
  %983 = vmatpush1.bf16.msra.mxu0 %v795
  %984 = vmatprep.subr.bf16.mxu0 %v798
  %985 = vmatpush1.bf16.msra.mxu0 %v797
  %986 = vmatprep.subr.bf16.mxu0 %v800
  %987 = vmatpush1.bf16.msra.mxu0 %v799
  %988 = vmatprep.subr.bf16.mxu0 %v802
  %989 = vmatpush1.bf16.msra.mxu0 %v801
  %990 = vmatprep.subr.bf16.mxu0 %v804
  %991 = vmatpush1.bf16.msra.mxu0 %v803
  %992 = vmatprep.subr.bf16.mxu0 %v806
  %993 = vmatpush1.bf16.msra.mxu0 %v805
  %994 = vmatprep.subr.bf16.mxu0 %v808
  %995 = vmatpush1.bf16.msra.mxu0 %v807
  %996 = vmatprep.subr.bf16.mxu0 %v810
  %997 = vmatpush1.bf16.msra.mxu0 %v809
  %998 = vmatprep.subr.bf16.mxu0 %v812
  %999 = vmatpush1.bf16.msra.mxu0 %v811
  %1000 = vmatprep.subr.bf16.mxu0 %v814
  %1001 = vmatpush1.bf16.msra.mxu0 %v813
  %1002 = vmatprep.mubr.bf16.mxu0 %v930
  %1003 = vmatmul.mubr.bf16.gmra.mrb[0].mxu0 %v929
  %v1004 = vpop.f32.mrb[0].mxu0
  %v1005 = vadd.f32 %v844, %v1004
  %v1006 = vpop.f32.mrb[0].mxu0
  %v1007 = vadd.f32 %v844, %v1006
  %v1008 = vpop.f32.mrb[0].mxu0
  %v1009 = vadd.f32 %v849, %v1008
  %v1010 = vpop.f32.mrb[0].mxu0
  %v1011 = vadd.f32 %v849, %v1010
  %1012 = vmatprep.mubr.bf16.mxu0 %v934
  %1013 = vmatmul.mubr.bf16.gmra.mrb[0].mxu0 %v933
  %v1014 = vpop.f32.mrb[0].mxu0
  %v1015 = vadd.f32 %v854, %v1014
  %v1016 = vpop.f32.mrb[0].mxu0
  %v1017 = vadd.f32 %v854, %v1016
  %v1018 = vpop.f32.mrb[0].mxu0
  %v1019 = vadd.f32 %v859, %v1018
  %v1020 = vpop.f32.mrb[0].mxu0
  %v1021 = vadd.f32 %v859, %v1020
  %1022 = vmatprep.mubr.bf16.mxu0 %v938
  %1023 = vmatmul.mubr.bf16.gmra.mrb[0].mxu0 %v937
  %v1024 = vpop.f32.mrb[0].mxu0
  %v1025 = vadd.f32 %v864, %v1024
  %v1026 = vpop.f32.mrb[0].mxu0
  %v1027 = vadd.f32 %v864, %v1026
  %v1028 = vpop.f32.mrb[0].mxu0
  %v1029 = vadd.f32 %v869, %v1028
  %v1030 = vpop.f32.mrb[0].mxu0
  %v1031 = vadd.f32 %v869, %v1030
  %1032 = vmatprep.mubr.bf16.mxu0 %v942
  %1033 = vmatmul.mubr.bf16.gmra.mrb[0].mxu0 %v941
  %v1034 = vpop.f32.mrb[0].mxu0
  %v1035 = vadd.f32 %v874, %v1034
  %v1036 = vpop.f32.mrb[0].mxu0
  %v1037 = vadd.f32 %v874, %v1036
  %v1038 = vpop.f32.mrb[0].mxu0
  %v1039 = vadd.f32 %v879, %v1038
  %v1040 = vpop.f32.mrb[0].mxu0
  %v1041 = vadd.f32 %v879, %v1040
  %1042 = vdwg.mxu0
  %1043 = vmatprep.subr.bf16.mxu0 %v816
  %1044 = vmatpush1.bf16.msra.mxu0 %v815
  %1045 = vmatprep.subr.bf16.mxu0 %v818
  %1046 = vmatpush1.bf16.msra.mxu0 %v817
  %1047 = vmatprep.subr.bf16.mxu0 %v820
  %1048 = vmatpush1.bf16.msra.mxu0 %v819
  %1049 = vmatprep.subr.bf16.mxu0 %v822
  %1050 = vmatpush1.bf16.msra.mxu0 %v821
  %1051 = vmatprep.subr.bf16.mxu0 %v824
  %1052 = vmatpush1.bf16.msra.mxu0 %v823
  %1053 = vmatprep.subr.bf16.mxu0 %v826
  %1054 = vmatpush1.bf16.msra.mxu0 %v825
  %1055 = vmatprep.subr.bf16.mxu0 %v828
  %1056 = vmatpush1.bf16.msra.mxu0 %v827
  %1057 = vmatprep.subr.bf16.mxu0 %v830
  %1058 = vmatpush1.bf16.msra.mxu0 %v829
  %1059 = vmatprep.subr.bf16.mxu0 %v832
  %1060 = vmatpush1.bf16.msra.mxu0 %v831
  %1061 = vmatprep.subr.bf16.mxu0 0
  %1062 = vmatpush1.bf16.msra.mxu0 0
  %1063 = vmatprep.subr.bf16.mxu0 0
  %1064 = vmatpush1.bf16.msra.mxu0 0
  %1065 = vmatprep.subr.bf16.mxu0 0
  %1066 = vmatpush1.bf16.msra.mxu0 0
  %1067 = vmatprep.subr.bf16.mxu0 0
  %1068 = vmatpush1.bf16.msra.mxu0 0
  %1069 = vmatprep.subr.bf16.mxu0 0
  %1070 = vmatpush1.bf16.msra.mxu0 0
  %1071 = vmatprep.subr.bf16.mxu0 0
  %1072 = vmatpush1.bf16.msra.mxu0 0
  %1073 = vmatprep.subr.bf16.mxu0 0
  %1074 = vmatpush1.bf16.msra.mxu0 0
  %1075 = vmatprep.mubr.bf16.mxu0 %v959
  %1076 = vmatmul.mubr.bf16.gmra.mrb[0].mxu0 %v931
  %v1077 = vpop.f32.mrb[0].mxu0
  %v1078 = vadd.f32 %v1005, %v1077
  %v1079 = vpop.f32.mrb[0].mxu0
  %v1080 = vadd.f32 %v1007, %v1079
  %v1081 = vpop.f32.mrb[0].mxu0
  %v1082 = vadd.f32 %v1009, %v1081
  %v1083 = vpop.f32.mrb[0].mxu0
  %v1084 = vadd.f32 %v1011, %v1083
  %1085 = vmatprep.mubr.bf16.mxu0 %v962
  %1086 = vmatmul.mubr.bf16.gmra.mrb[0].mxu0 %v935
  %v1087 = vpop.f32.mrb[0].mxu0
  %v1088 = vadd.f32 %v1015, %v1087
  %v1089 = vpop.f32.mrb[0].mxu0
  %v1090 = vadd.f32 %v1017, %v1089
  %v1091 = vpop.f32.mrb[0].mxu0
  %v1092 = vadd.f32 %v1019, %v1091
  %v1093 = vpop.f32.mrb[0].mxu0
  %v1094 = vadd.f32 %v1021, %v1093
  %1095 = vmatprep.mubr.bf16.mxu0 %v965
  %1096 = vmatmul.mubr.bf16.gmra.mrb[0].mxu0 %v939
  %v1097 = vpop.f32.mrb[0].mxu0
  %v1098 = vadd.f32 %v1025, %v1097
  %v1099 = vpop.f32.mrb[0].mxu0
  %v1100 = vadd.f32 %v1027, %v1099
  %v1101 = vpop.f32.mrb[0].mxu0
  %v1102 = vadd.f32 %v1029, %v1101
  %v1103 = vpop.f32.mrb[0].mxu0
  %v1104 = vadd.f32 %v1031, %v1103
  %1105 = vmatprep.mubr.bf16.mxu0 %v968
  %1106 = vmatmul.mubr.bf16.gmra.mrb[0].mxu0 %v943
  %v1107 = vpop.f32.mrb[0].mxu0
  %v1108 = vadd.f32 %v1035, %v1107
  %v1109 = vpop.f32.mrb[0].mxu0
  %v1110 = vadd.f32 %v1037, %v1109
  %v1111 = vpop.f32.mrb[0].mxu0
  %v1112 = vadd.f32 %v1039, %v1111
  %v1113 = vpop.f32.mrb[0].mxu0
  %v1114 = vadd.f32 %v1041, %v1113
  %1115 = vdwg.mxu0
  %v1116 = vpack.c.bf16 %v1082, %v1078
  %v1117 = vpack.c.bf16 %v1084, %v1080
  %v1118 = vpack.c.bf16 %v1092, %v1088
  %v1119 = vpack.c.bf16 %v1094, %v1090
  %v1120 = vpack.c.bf16 %v1102, %v1098
  %v1121 = vpack.c.bf16 %v1104, %v1100
  %v1122 = vpack.c.bf16 %v1112, %v1108
  %v1123 = vpack.c.bf16 %v1114, %v1110
  %1124 = vst [vmem:[#allocation3] sm:$0xff] %v1116
  %1125 = vst [vmem:[#allocation3 + $0x8] sm:$0xff] %v1117
  %1126 = vst [vmem:[#allocation3 + $0x10] sm:$0xff] %v1118
  %1127 = vst [vmem:[#allocation3 + $0x18] sm:$0xff] %v1119
  %1128 = vst [vmem:[#allocation3 + $0x20] sm:$0xff] %v1120
  %1129 = vst [vmem:[#allocation3 + $0x28] sm:$0xff] %v1121
  %1130 = vst [vmem:[#allocation3 + $0x30] sm:$0xff] %v1122
  %1131 = vst [vmem:[#allocation3 + $0x38] sm:$0xff] %v1123
  %v1132 = vld [vmem:[#allocation3] sm:$0xff]
  %v1133 = vld [vmem:[#allocation3 + $0x10] sm:$0xff]
  %v1134 = vld [vmem:[#allocation3 + $0x20] sm:$0xff]
  %v1135 = vld [vmem:[#allocation3 + $0x30] sm:$0xff]
  %1136 = vst [vmem:[#allocation4] sm:$0xff] %v1132
  %1137 = vst [vmem:[#allocation4 + $0x8] sm:$0xff] %v1133
  %1138 = vst [vmem:[#allocation4 + $0x10] sm:$0xff] %v1134
  %1139 = vst [vmem:[#allocation4 + $0x18] sm:$0xff] %v1135
  %v1140 = vld [vmem:[#allocation3] sm:$0xff]
  %v1141 = vld [vmem:[#allocation3 + $0x8] sm:$0xff]
  %v1142 = vld [vmem:[#allocation3 + $0x10] sm:$0xff]
  %v1143 = vld [vmem:[#allocation3 + $0x18] sm:$0xff]
  %v1144 = vld [vmem:[#allocation3 + $0x20] sm:$0xff]
  %v1145 = vld [vmem:[#allocation3 + $0x28] sm:$0xff]
  %v1146 = vld [vmem:[#allocation3 + $0x30] sm:$0xff]
  %v1147 = vld [vmem:[#allocation3 + $0x38] sm:$0xff]
  %1156 = vrot.lane.b32.xlu0 %v1140, 127
  %v1157 = vpop.permute.xlu0 %1156
  %1158 = vrot.lane.b32.xlu0 %v1141, 127
  %v1159 = vpop.permute.xlu0 %1158
  %1160 = vrot.lane.b32.xlu0 %v1142, 127
  %v1161 = vpop.permute.xlu0 %1160
  %1162 = vrot.lane.b32.xlu0 %v1143, 127
  %v1163 = vpop.permute.xlu0 %1162
  %1164 = vrot.lane.b32.xlu0 %v1144, 127
  %v1165 = vpop.permute.xlu0 %1164
  %1166 = vrot.lane.b32.xlu0 %v1145, 127
  %v1167 = vpop.permute.xlu0 %1166
  %1168 = vrot.lane.b32.xlu0 %v1146, 127
  %v1169 = vpop.permute.xlu0 %1168
  %1170 = vrot.lane.b32.xlu0 %v1147, 127
  %v1171 = vpop.permute.xlu0 %1170
  %v1172 = vsel %vm70, %v1157, %v1159
  %v1173 = vsel %vm70, %v1161, %v1163
  %v1174 = vsel %vm70, %v1165, %v1167
  %v1175 = vsel %vm70, %v1169, %v1171
  %1180 = vst [vmem:[#allocation4 + $0x20] sm:$0xff] %v1172
  %1181 = vst [vmem:[#allocation4 + $0x28] sm:$0xff] %v1173
  %1182 = vst [vmem:[#allocation4 + $0x30] sm:$0xff] %v1174
  %1183 = vst [vmem:[#allocation4 + $0x38] sm:$0xff] %v1175
  %v1184 = vld [vmem:[#allocation3] sm:$0xff]
  %v1185 = vld [vmem:[#allocation3 + $0x8] sm:$0xff]
  %v1186 = vld [vmem:[#allocation3 + $0x10] sm:$0xff]
  %v1187 = vld [vmem:[#allocation3 + $0x18] sm:$0xff]
  %v1188 = vld [vmem:[#allocation3 + $0x20] sm:$0xff]
  %v1189 = vld [vmem:[#allocation3 + $0x28] sm:$0xff]
  %v1190 = vld [vmem:[#allocation3 + $0x30] sm:$0xff]
  %v1191 = vld [vmem:[#allocation3 + $0x38] sm:$0xff]
  %1200 = vrot.lane.b32.xlu0 %v1184, 126
  %v1201 = vpop.permute.xlu0 %1200
  %1202 = vrot.lane.b32.xlu0 %v1185, 126
  %v1203 = vpop.permute.xlu0 %1202
  %1204 = vrot.lane.b32.xlu0 %v1186, 126
  %v1205 = vpop.permute.xlu0 %1204
  %1206 = vrot.lane.b32.xlu0 %v1187, 126
  %v1207 = vpop.permute.xlu0 %1206
  %1208 = vrot.lane.b32.xlu0 %v1188, 126
  %v1209 = vpop.permute.xlu0 %1208
  %1210 = vrot.lane.b32.xlu0 %v1189, 126
  %v1211 = vpop.permute.xlu0 %1210
  %1212 = vrot.lane.b32.xlu0 %v1190, 126
  %v1213 = vpop.permute.xlu0 %1212
  %1214 = vrot.lane.b32.xlu0 %v1191, 126
  %v1215 = vpop.permute.xlu0 %1214
  %v1216 = vsel %vm100, %v1201, %v1203
  %v1217 = vsel %vm100, %v1205, %v1207
  %v1218 = vsel %vm100, %v1209, %v1211
  %v1219 = vsel %vm100, %v1213, %v1215
  %1224 = vst [vmem:[#allocation4 + $0x40] sm:$0xff] %v1216
  %1225 = vst [vmem:[#allocation4 + $0x48] sm:$0xff] %v1217
  %1226 = vst [vmem:[#allocation4 + $0x50] sm:$0xff] %v1218
  %1227 = vst [vmem:[#allocation4 + $0x58] sm:$0xff] %v1219
  %v1228 = vld [vmem:[#allocation3] sm:$0xff]
  %v1229 = vld [vmem:[#allocation3 + $0x8] sm:$0xff]
  %v1230 = vld [vmem:[#allocation3 + $0x10] sm:$0xff]
  %v1231 = vld [vmem:[#allocation3 + $0x18] sm:$0xff]
  %v1232 = vld [vmem:[#allocation3 + $0x20] sm:$0xff]
  %v1233 = vld [vmem:[#allocation3 + $0x28] sm:$0xff]
  %v1234 = vld [vmem:[#allocation3 + $0x30] sm:$0xff]
  %v1235 = vld [vmem:[#allocation3 + $0x38] sm:$0xff]
  %1244 = vrot.lane.b32.xlu0 %v1228, 125
  %v1245 = vpop.permute.xlu0 %1244
  %1246 = vrot.lane.b32.xlu0 %v1229, 125
  %v1247 = vpop.permute.xlu0 %1246
  %1248 = vrot.lane.b32.xlu0 %v1230, 125
  %v1249 = vpop.permute.xlu0 %1248
  %1250 = vrot.lane.b32.xlu0 %v1231, 125
  %v1251 = vpop.permute.xlu0 %1250
  %1252 = vrot.lane.b32.xlu0 %v1232, 125
  %v1253 = vpop.permute.xlu0 %1252
  %1254 = vrot.lane.b32.xlu0 %v1233, 125
  %v1255 = vpop.permute.xlu0 %1254
  %1256 = vrot.lane.b32.xlu0 %v1234, 125
  %v1257 = vpop.permute.xlu0 %1256
  %1258 = vrot.lane.b32.xlu0 %v1235, 125
  %v1259 = vpop.permute.xlu0 %1258
  %v1260 = vsel %vm130, %v1245, %v1247
  %v1261 = vsel %vm130, %v1249, %v1251
  %v1262 = vsel %vm130, %v1253, %v1255
  %v1263 = vsel %vm130, %v1257, %v1259
  %1268 = vst [vmem:[#allocation4 + $0x60] sm:$0xff] %v1260
  %1269 = vst [vmem:[#allocation4 + $0x68] sm:$0xff] %v1261
  %1270 = vst [vmem:[#allocation4 + $0x70] sm:$0xff] %v1262
  %1271 = vst [vmem:[#allocation4 + $0x78] sm:$0xff] %v1263
  %v1272 = vld [vmem:[#allocation3] sm:$0xff]
  %v1273 = vld [vmem:[#allocation3 + $0x8] sm:$0xff]
  %v1274 = vld [vmem:[#allocation3 + $0x10] sm:$0xff]
  %v1275 = vld [vmem:[#allocation3 + $0x18] sm:$0xff]
  %v1276 = vld [vmem:[#allocation3 + $0x20] sm:$0xff]
  %v1277 = vld [vmem:[#allocation3 + $0x28] sm:$0xff]
  %v1278 = vld [vmem:[#allocation3 + $0x30] sm:$0xff]
  %v1279 = vld [vmem:[#allocation3 + $0x38] sm:$0xff]
  %1288 = vrot.lane.b32.xlu0 %v1272, 124
  %v1289 = vpop.permute.xlu0 %1288
  %1290 = vrot.lane.b32.xlu0 %v1273, 124
  %v1291 = vpop.permute.xlu0 %1290
  %1292 = vrot.lane.b32.xlu0 %v1274, 124
  %v1293 = vpop.permute.xlu0 %1292
  %1294 = vrot.lane.b32.xlu0 %v1275, 124
  %v1295 = vpop.permute.xlu0 %1294
  %1296 = vrot.lane.b32.xlu0 %v1276, 124
  %v1297 = vpop.permute.xlu0 %1296
  %1298 = vrot.lane.b32.xlu0 %v1277, 124
  %v1299 = vpop.permute.xlu0 %1298
  %1300 = vrot.lane.b32.xlu0 %v1278, 124
  %v1301 = vpop.permute.xlu0 %1300
  %1302 = vrot.lane.b32.xlu0 %v1279, 124
  %v1303 = vpop.permute.xlu0 %1302
  %v1304 = vsel %vm160, %v1289, %v1291
  %v1305 = vsel %vm160, %v1293, %v1295
  %v1306 = vsel %vm160, %v1297, %v1299
  %v1307 = vsel %vm160, %v1301, %v1303
  %1312 = vst [vmem:[#allocation4 + $0x80] sm:$0xff] %v1304
  %1313 = vst [vmem:[#allocation4 + $0x88] sm:$0xff] %v1305
  %1314 = vst [vmem:[#allocation4 + $0x90] sm:$0xff] %v1306
  %1315 = vst [vmem:[#allocation4 + $0x98] sm:$0xff] %v1307
  %v1316 = vld [vmem:[#allocation3] sm:$0xff]
  %v1317 = vld [vmem:[#allocation3 + $0x8] sm:$0xff]
  %v1318 = vld [vmem:[#allocation3 + $0x10] sm:$0xff]
  %v1319 = vld [vmem:[#allocation3 + $0x18] sm:$0xff]
  %v1320 = vld [vmem:[#allocation3 + $0x20] sm:$0xff]
  %v1321 = vld [vmem:[#allocation3 + $0x28] sm:$0xff]
  %v1322 = vld [vmem:[#allocation3 + $0x30] sm:$0xff]
  %v1323 = vld [vmem:[#allocation3 + $0x38] sm:$0xff]
  %1332 = vrot.lane.b32.xlu0 %v1316, 112
  %v1333 = vpop.permute.xlu0 %1332
  %1334 = vrot.lane.b32.xlu0 %v1317, 112
  %v1335 = vpop.permute.xlu0 %1334
  %1336 = vrot.lane.b32.xlu0 %v1318, 112
  %v1337 = vpop.permute.xlu0 %1336
  %1338 = vrot.lane.b32.xlu0 %v1319, 112
  %v1339 = vpop.permute.xlu0 %1338
  %1340 = vrot.lane.b32.xlu0 %v1320, 112
  %v1341 = vpop.permute.xlu0 %1340
  %1342 = vrot.lane.b32.xlu0 %v1321, 112
  %v1343 = vpop.permute.xlu0 %1342
  %1344 = vrot.lane.b32.xlu0 %v1322, 112
  %v1345 = vpop.permute.xlu0 %1344
  %1346 = vrot.lane.b32.xlu0 %v1323, 112
  %v1347 = vpop.permute.xlu0 %1346
  %v1348 = vsel %vm190, %v1333, %v1335
  %v1349 = vsel %vm190, %v1337, %v1339
  %v1350 = vsel %vm190, %v1341, %v1343
  %v1351 = vsel %vm190, %v1345, %v1347
  %1356 = vst [vmem:[#allocation4 + $0xa0] sm:$0xff] %v1348
  %1357 = vst [vmem:[#allocation4 + $0xa8] sm:$0xff] %v1349
  %1358 = vst [vmem:[#allocation4 + $0xb0] sm:$0xff] %v1350
  %1359 = vst [vmem:[#allocation4 + $0xb8] sm:$0xff] %v1351
  %v1360 = vld [vmem:[#allocation3] sm:$0xff]
  %v1361 = vld [vmem:[#allocation3 + $0x8] sm:$0xff]
  %v1362 = vld [vmem:[#allocation3 + $0x10] sm:$0xff]
  %v1363 = vld [vmem:[#allocation3 + $0x18] sm:$0xff]
  %v1364 = vld [vmem:[#allocation3 + $0x20] sm:$0xff]
  %v1365 = vld [vmem:[#allocation3 + $0x28] sm:$0xff]
  %v1366 = vld [vmem:[#allocation3 + $0x30] sm:$0xff]
  %v1367 = vld [vmem:[#allocation3 + $0x38] sm:$0xff]
  %1376 = vrot.lane.b32.xlu0 %v1360, 111
  %v1377 = vpop.permute.xlu0 %1376
  %1378 = vrot.lane.b32.xlu0 %v1361, 111
  %v1379 = vpop.permute.xlu0 %1378
  %1380 = vrot.lane.b32.xlu0 %v1362, 111
  %v1381 = vpop.permute.xlu0 %1380
  %1382 = vrot.lane.b32.xlu0 %v1363, 111
  %v1383 = vpop.permute.xlu0 %1382
  %1384 = vrot.lane.b32.xlu0 %v1364, 111
  %v1385 = vpop.permute.xlu0 %1384
  %1386 = vrot.lane.b32.xlu0 %v1365, 111
  %v1387 = vpop.permute.xlu0 %1386
  %1388 = vrot.lane.b32.xlu0 %v1366, 111
  %v1389 = vpop.permute.xlu0 %1388
  %1390 = vrot.lane.b32.xlu0 %v1367, 111
  %v1391 = vpop.permute.xlu0 %1390
  %v1392 = vsel %vm220, %v1377, %v1379
  %v1393 = vsel %vm220, %v1381, %v1383
  %v1394 = vsel %vm220, %v1385, %v1387
  %v1395 = vsel %vm220, %v1389, %v1391
  %1400 = vst [vmem:[#allocation4 + $0xc0] sm:$0xff] %v1392
  %1401 = vst [vmem:[#allocation4 + $0xc8] sm:$0xff] %v1393
  %1402 = vst [vmem:[#allocation4 + $0xd0] sm:$0xff] %v1394
  %1403 = vst [vmem:[#allocation4 + $0xd8] sm:$0xff] %v1395
  %v1404 = vld [vmem:[#allocation3] sm:$0xff]
  %v1405 = vld [vmem:[#allocation3 + $0x8] sm:$0xff]
  %v1406 = vld [vmem:[#allocation3 + $0x10] sm:$0xff]
  %v1407 = vld [vmem:[#allocation3 + $0x18] sm:$0xff]
  %v1408 = vld [vmem:[#allocation3 + $0x20] sm:$0xff]
  %v1409 = vld [vmem:[#allocation3 + $0x28] sm:$0xff]
  %v1410 = vld [vmem:[#allocation3 + $0x30] sm:$0xff]
  %v1411 = vld [vmem:[#allocation3 + $0x38] sm:$0xff]
  %1420 = vrot.lane.b32.xlu0 %v1404, 110
  %v1421 = vpop.permute.xlu0 %1420
  %1422 = vrot.lane.b32.xlu0 %v1405, 110
  %v1423 = vpop.permute.xlu0 %1422
  %1424 = vrot.lane.b32.xlu0 %v1406, 110
  %v1425 = vpop.permute.xlu0 %1424
  %1426 = vrot.lane.b32.xlu0 %v1407, 110
  %v1427 = vpop.permute.xlu0 %1426
  %1428 = vrot.lane.b32.xlu0 %v1408, 110
  %v1429 = vpop.permute.xlu0 %1428
  %1430 = vrot.lane.b32.xlu0 %v1409, 110
  %v1431 = vpop.permute.xlu0 %1430
  %1432 = vrot.lane.b32.xlu0 %v1410, 110
  %v1433 = vpop.permute.xlu0 %1432
  %1434 = vrot.lane.b32.xlu0 %v1411, 110
  %v1435 = vpop.permute.xlu0 %1434
  %v1436 = vsel %vm250, %v1421, %v1423
  %v1437 = vsel %vm250, %v1425, %v1427
  %v1438 = vsel %vm250, %v1429, %v1431
  %v1439 = vsel %vm250, %v1433, %v1435
  %1444 = vst [vmem:[#allocation4 + $0xe0] sm:$0xff] %v1436
  %1445 = vst [vmem:[#allocation4 + $0xe8] sm:$0xff] %v1437
  %1446 = vst [vmem:[#allocation4 + $0xf0] sm:$0xff] %v1438
  %1447 = vst [vmem:[#allocation4 + $0xf8] sm:$0xff] %v1439
  %v1448 = vld [vmem:[#allocation3] sm:$0xff]
  %v1449 = vld [vmem:[#allocation3 + $0x8] sm:$0xff]
  %v1450 = vld [vmem:[#allocation3 + $0x10] sm:$0xff]
  %v1451 = vld [vmem:[#allocation3 + $0x18] sm:$0xff]
  %v1452 = vld [vmem:[#allocation3 + $0x20] sm:$0xff]
  %v1453 = vld [vmem:[#allocation3 + $0x28] sm:$0xff]
  %v1454 = vld [vmem:[#allocation3 + $0x30] sm:$0xff]
  %v1455 = vld [vmem:[#allocation3 + $0x38] sm:$0xff]
  %1464 = vrot.lane.b32.xlu0 %v1448, 109
  %v1465 = vpop.permute.xlu0 %1464
  %1466 = vrot.lane.b32.xlu0 %v1449, 109
  %v1467 = vpop.permute.xlu0 %1466
  %1468 = vrot.lane.b32.xlu0 %v1450, 109
  %v1469 = vpop.permute.xlu0 %1468
  %1470 = vrot.lane.b32.xlu0 %v1451, 109
  %v1471 = vpop.permute.xlu0 %1470
  %1472 = vrot.lane.b32.xlu0 %v1452, 109
  %v1473 = vpop.permute.xlu0 %1472
  %1474 = vrot.lane.b32.xlu0 %v1453, 109
  %v1475 = vpop.permute.xlu0 %1474
  %1476 = vrot.lane.b32.xlu0 %v1454, 109
  %v1477 = vpop.permute.xlu0 %1476
  %1478 = vrot.lane.b32.xlu0 %v1455, 109
  %v1479 = vpop.permute.xlu0 %1478
  %v1480 = vsel %vm280, %v1465, %v1467
  %v1481 = vsel %vm280, %v1469, %v1471
  %v1482 = vsel %vm280, %v1473, %v1475
  %v1483 = vsel %vm280, %v1477, %v1479
  %1488 = vst [vmem:[#allocation4 + $0x100] sm:$0xff] %v1480
  %1489 = vst [vmem:[#allocation4 + $0x108] sm:$0xff] %v1481
  %1490 = vst [vmem:[#allocation4 + $0x110] sm:$0xff] %v1482
  %1491 = vst [vmem:[#allocation4 + $0x118] sm:$0xff] %v1483
  %v1492 = vld [vmem:[#allocation3] sm:$0xff]
  %v1493 = vld [vmem:[#allocation3 + $0x8] sm:$0xff]
  %v1494 = vld [vmem:[#allocation3 + $0x10] sm:$0xff]
  %v1495 = vld [vmem:[#allocation3 + $0x18] sm:$0xff]
  %v1496 = vld [vmem:[#allocation3 + $0x20] sm:$0xff]
  %v1497 = vld [vmem:[#allocation3 + $0x28] sm:$0xff]
  %v1498 = vld [vmem:[#allocation3 + $0x30] sm:$0xff]
  %v1499 = vld [vmem:[#allocation3 + $0x38] sm:$0xff]
  %1508 = vrot.lane.b32.xlu0 %v1492, 108
  %v1509 = vpop.permute.xlu0 %1508
  %1510 = vrot.lane.b32.xlu0 %v1493, 108
  %v1511 = vpop.permute.xlu0 %1510
  %1512 = vrot.lane.b32.xlu0 %v1494, 108
  %v1513 = vpop.permute.xlu0 %1512
  %1514 = vrot.lane.b32.xlu0 %v1495, 108
  %v1515 = vpop.permute.xlu0 %1514
  %1516 = vrot.lane.b32.xlu0 %v1496, 108
  %v1517 = vpop.permute.xlu0 %1516
  %1518 = vrot.lane.b32.xlu0 %v1497, 108
  %v1519 = vpop.permute.xlu0 %1518
  %1520 = vrot.lane.b32.xlu0 %v1498, 108
  %v1521 = vpop.permute.xlu0 %1520
  %1522 = vrot.lane.b32.xlu0 %v1499, 108
  %v1523 = vpop.permute.xlu0 %1522
  %v1524 = vsel %vm310, %v1509, %v1511
  %v1525 = vsel %vm310, %v1513, %v1515
  %v1526 = vsel %vm310, %v1517, %v1519
  %v1527 = vsel %vm310, %v1521, %v1523
  %1532 = vst [vmem:[#allocation4 + $0x120] sm:$0xff] %v1524
  %1533 = vst [vmem:[#allocation4 + $0x128] sm:$0xff] %v1525
  %1534 = vst [vmem:[#allocation4 + $0x130] sm:$0xff] %v1526
  %1535 = vst [vmem:[#allocation4 + $0x138] sm:$0xff] %v1527
  %v1536 = vld [vmem:[#allocation3] sm:$0xff]
  %v1537 = vld [vmem:[#allocation3 + $0x8] sm:$0xff]
  %v1538 = vld [vmem:[#allocation3 + $0x10] sm:$0xff]
  %v1539 = vld [vmem:[#allocation3 + $0x18] sm:$0xff]
  %v1540 = vld [vmem:[#allocation3 + $0x20] sm:$0xff]
  %v1541 = vld [vmem:[#allocation3 + $0x28] sm:$0xff]
  %v1542 = vld [vmem:[#allocation3 + $0x30] sm:$0xff]
  %v1543 = vld [vmem:[#allocation3 + $0x38] sm:$0xff]
  %1552 = vrot.lane.b32.xlu0 %v1536, 96
  %v1553 = vpop.permute.xlu0 %1552
  %1554 = vrot.lane.b32.xlu0 %v1537, 96
  %v1555 = vpop.permute.xlu0 %1554
  %1556 = vrot.lane.b32.xlu0 %v1538, 96
  %v1557 = vpop.permute.xlu0 %1556
  %1558 = vrot.lane.b32.xlu0 %v1539, 96
  %v1559 = vpop.permute.xlu0 %1558
  %1560 = vrot.lane.b32.xlu0 %v1540, 96
  %v1561 = vpop.permute.xlu0 %1560
  %1562 = vrot.lane.b32.xlu0 %v1541, 96
  %v1563 = vpop.permute.xlu0 %1562
  %1564 = vrot.lane.b32.xlu0 %v1542, 96
  %v1565 = vpop.permute.xlu0 %1564
  %1566 = vrot.lane.b32.xlu0 %v1543, 96
  %v1567 = vpop.permute.xlu0 %1566
  %v1568 = vsel %vm340, %v1553, %v1555
  %v1569 = vsel %vm340, %v1557, %v1559
  %v1570 = vsel %vm340, %v1561, %v1563
  %v1571 = vsel %vm340, %v1565, %v1567
  %1576 = vst [vmem:[#allocation4 + $0x140] sm:$0xff] %v1568
  %1577 = vst [vmem:[#allocation4 + $0x148] sm:$0xff] %v1569
  %1578 = vst [vmem:[#allocation4 + $0x150] sm:$0xff] %v1570
  %1579 = vst [vmem:[#allocation4 + $0x158] sm:$0xff] %v1571
  %v1580 = vld [vmem:[#allocation3] sm:$0xff]
  %v1581 = vld [vmem:[#allocation3 + $0x8] sm:$0xff]
  %v1582 = vld [vmem:[#allocation3 + $0x10] sm:$0xff]
  %v1583 = vld [vmem:[#allocation3 + $0x18] sm:$0xff]
  %v1584 = vld [vmem:[#allocation3 + $0x20] sm:$0xff]
  %v1585 = vld [vmem:[#allocation3 + $0x28] sm:$0xff]
  %v1586 = vld [vmem:[#allocation3 + $0x30] sm:$0xff]
  %v1587 = vld [vmem:[#allocation3 + $0x38] sm:$0xff]
  %1596 = vrot.lane.b32.xlu0 %v1580, 95
  %v1597 = vpop.permute.xlu0 %1596
  %1598 = vrot.lane.b32.xlu0 %v1581, 95
  %v1599 = vpop.permute.xlu0 %1598
  %1600 = vrot.lane.b32.xlu0 %v1582, 95
  %v1601 = vpop.permute.xlu0 %1600
  %1602 = vrot.lane.b32.xlu0 %v1583, 95
  %v1603 = vpop.permute.xlu0 %1602
  %1604 = vrot.lane.b32.xlu0 %v1584, 95
  %v1605 = vpop.permute.xlu0 %1604
  %1606 = vrot.lane.b32.xlu0 %v1585, 95
  %v1607 = vpop.permute.xlu0 %1606
  %1608 = vrot.lane.b32.xlu0 %v1586, 95
  %v1609 = vpop.permute.xlu0 %1608
  %1610 = vrot.lane.b32.xlu0 %v1587, 95
  %v1611 = vpop.permute.xlu0 %1610
  %v1612 = vsel %vm370, %v1597, %v1599
  %v1613 = vsel %vm370, %v1601, %v1603
  %v1614 = vsel %vm370, %v1605, %v1607
  %v1615 = vsel %vm370, %v1609, %v1611
  %1620 = vst [vmem:[#allocation4 + $0x160] sm:$0xff] %v1612
  %1621 = vst [vmem:[#allocation4 + $0x168] sm:$0xff] %v1613
  %1622 = vst [vmem:[#allocation4 + $0x170] sm:$0xff] %v1614
  %1623 = vst [vmem:[#allocation4 + $0x178] sm:$0xff] %v1615
  %v1624 = vld [vmem:[#allocation3] sm:$0xff]
  %v1625 = vld [vmem:[#allocation3 + $0x8] sm:$0xff]
  %v1626 = vld [vmem:[#allocation3 + $0x10] sm:$0xff]
  %v1627 = vld [vmem:[#allocation3 + $0x18] sm:$0xff]
  %v1628 = vld [vmem:[#allocation3 + $0x20] sm:$0xff]
  %v1629 = vld [vmem:[#allocation3 + $0x28] sm:$0xff]
  %v1630 = vld [vmem:[#allocation3 + $0x30] sm:$0xff]
  %v1631 = vld [vmem:[#allocation3 + $0x38] sm:$0xff]
  %1640 = vrot.lane.b32.xlu0 %v1624, 94
  %v1641 = vpop.permute.xlu0 %1640
  %1642 = vrot.lane.b32.xlu0 %v1625, 94
  %v1643 = vpop.permute.xlu0 %1642
  %1644 = vrot.lane.b32.xlu0 %v1626, 94
  %v1645 = vpop.permute.xlu0 %1644
  %1646 = vrot.lane.b32.xlu0 %v1627, 94
  %v1647 = vpop.permute.xlu0 %1646
  %1648 = vrot.lane.b32.xlu0 %v1628, 94
  %v1649 = vpop.permute.xlu0 %1648
  %1650 = vrot.lane.b32.xlu0 %v1629, 94
  %v1651 = vpop.permute.xlu0 %1650
  %1652 = vrot.lane.b32.xlu0 %v1630, 94
  %v1653 = vpop.permute.xlu0 %1652
  %1654 = vrot.lane.b32.xlu0 %v1631, 94
  %v1655 = vpop.permute.xlu0 %1654
  %v1656 = vsel %vm400, %v1641, %v1643
  %v1657 = vsel %vm400, %v1645, %v1647
  %v1658 = vsel %vm400, %v1649, %v1651
  %v1659 = vsel %vm400, %v1653, %v1655
  %1664 = vst [vmem:[#allocation4 + $0x180] sm:$0xff] %v1656
  %1665 = vst [vmem:[#allocation4 + $0x188] sm:$0xff] %v1657
  %1666 = vst [vmem:[#allocation4 + $0x190] sm:$0xff] %v1658
  %1667 = vst [vmem:[#allocation4 + $0x198] sm:$0xff] %v1659
  %v1668 = vld [vmem:[#allocation3] sm:$0xff]
  %v1669 = vld [vmem:[#allocation3 + $0x8] sm:$0xff]
  %v1670 = vld [vmem:[#allocation3 + $0x10] sm:$0xff]
  %v1671 = vld [vmem:[#allocation3 + $0x18] sm:$0xff]
  %v1672 = vld [vmem:[#allocation3 + $0x20] sm:$0xff]
  %v1673 = vld [vmem:[#allocation3 + $0x28] sm:$0xff]
  %v1674 = vld [vmem:[#allocation3 + $0x30] sm:$0xff]
  %v1675 = vld [vmem:[#allocation3 + $0x38] sm:$0xff]
  %1684 = vrot.lane.b32.xlu0 %v1668, 93
  %v1685 = vpop.permute.xlu0 %1684
  %1686 = vrot.lane.b32.xlu0 %v1669, 93
  %v1687 = vpop.permute.xlu0 %1686
  %1688 = vrot.lane.b32.xlu0 %v1670, 93
  %v1689 = vpop.permute.xlu0 %1688
  %1690 = vrot.lane.b32.xlu0 %v1671, 93
  %v1691 = vpop.permute.xlu0 %1690
  %1692 = vrot.lane.b32.xlu0 %v1672, 93
  %v1693 = vpop.permute.xlu0 %1692
  %1694 = vrot.lane.b32.xlu0 %v1673, 93
  %v1695 = vpop.permute.xlu0 %1694
  %1696 = vrot.lane.b32.xlu0 %v1674, 93
  %v1697 = vpop.permute.xlu0 %1696
  %1698 = vrot.lane.b32.xlu0 %v1675, 93
  %v1699 = vpop.permute.xlu0 %1698
  %v1700 = vsel %vm430, %v1685, %v1687
  %v1701 = vsel %vm430, %v1689, %v1691
  %v1702 = vsel %vm430, %v1693, %v1695
  %v1703 = vsel %vm430, %v1697, %v1699
  %1708 = vst [vmem:[#allocation4 + $0x1a0] sm:$0xff] %v1700
  %1709 = vst [vmem:[#allocation4 + $0x1a8] sm:$0xff] %v1701
  %1710 = vst [vmem:[#allocation4 + $0x1b0] sm:$0xff] %v1702
  %1711 = vst [vmem:[#allocation4 + $0x1b8] sm:$0xff] %v1703
  %v1712 = vld [vmem:[#allocation3] sm:$0xff]
  %v1713 = vld [vmem:[#allocation3 + $0x8] sm:$0xff]
  %v1714 = vld [vmem:[#allocation3 + $0x10] sm:$0xff]
  %v1715 = vld [vmem:[#allocation3 + $0x18] sm:$0xff]
  %v1716 = vld [vmem:[#allocation3 + $0x20] sm:$0xff]
  %v1717 = vld [vmem:[#allocation3 + $0x28] sm:$0xff]
  %v1718 = vld [vmem:[#allocation3 + $0x30] sm:$0xff]
  %v1719 = vld [vmem:[#allocation3 + $0x38] sm:$0xff]
  %1728 = vrot.lane.b32.xlu0 %v1712, 92
  %v1729 = vpop.permute.xlu0 %1728
  %1730 = vrot.lane.b32.xlu0 %v1713, 92
  %v1731 = vpop.permute.xlu0 %1730
  %1732 = vrot.lane.b32.xlu0 %v1714, 92
  %v1733 = vpop.permute.xlu0 %1732
  %1734 = vrot.lane.b32.xlu0 %v1715, 92
  %v1735 = vpop.permute.xlu0 %1734
  %1736 = vrot.lane.b32.xlu0 %v1716, 92
  %v1737 = vpop.permute.xlu0 %1736
  %1738 = vrot.lane.b32.xlu0 %v1717, 92
  %v1739 = vpop.permute.xlu0 %1738
  %1740 = vrot.lane.b32.xlu0 %v1718, 92
  %v1741 = vpop.permute.xlu0 %1740
  %1742 = vrot.lane.b32.xlu0 %v1719, 92
  %v1743 = vpop.permute.xlu0 %1742
  %v1744 = vsel %vm460, %v1729, %v1731
  %v1745 = vsel %vm460, %v1733, %v1735
  %v1746 = vsel %vm460, %v1737, %v1739
  %v1747 = vsel %vm460, %v1741, %v1743
  %1752 = vst [vmem:[#allocation4 + $0x1c0] sm:$0xff] %v1744
  %1753 = vst [vmem:[#allocation4 + $0x1c8] sm:$0xff] %v1745
  %1754 = vst [vmem:[#allocation4 + $0x1d0] sm:$0xff] %v1746
  %1755 = vst [vmem:[#allocation4 + $0x1d8] sm:$0xff] %v1747
  %v1756 = vld [vmem:[#allocation3] sm:$0xff]
  %v1757 = vld [vmem:[#allocation3 + $0x8] sm:$0xff]
  %v1758 = vld [vmem:[#allocation3 + $0x10] sm:$0xff]
  %v1759 = vld [vmem:[#allocation3 + $0x18] sm:$0xff]
  %v1760 = vld [vmem:[#allocation3 + $0x20] sm:$0xff]
  %v1761 = vld [vmem:[#allocation3 + $0x28] sm:$0xff]
  %v1762 = vld [vmem:[#allocation3 + $0x30] sm:$0xff]
  %v1763 = vld [vmem:[#allocation3 + $0x38] sm:$0xff]
  %1772 = vrot.lane.b32.xlu0 %v1756, 80
  %v1773 = vpop.permute.xlu0 %1772
  %1774 = vrot.lane.b32.xlu0 %v1757, 80
  %v1775 = vpop.permute.xlu0 %1774
  %1776 = vrot.lane.b32.xlu0 %v1758, 80
  %v1777 = vpop.permute.xlu0 %1776
  %1778 = vrot.lane.b32.xlu0 %v1759, 80
  %v1779 = vpop.permute.xlu0 %1778
  %1780 = vrot.lane.b32.xlu0 %v1760, 80
  %v1781 = vpop.permute.xlu0 %1780
  %1782 = vrot.lane.b32.xlu0 %v1761, 80
  %v1783 = vpop.permute.xlu0 %1782
  %1784 = vrot.lane.b32.xlu0 %v1762, 80
  %v1785 = vpop.permute.xlu0 %1784
  %1786 = vrot.lane.b32.xlu0 %v1763, 80
  %v1787 = vpop.permute.xlu0 %1786
  %v1788 = vsel %vm490, %v1773, %v1775
  %v1789 = vsel %vm490, %v1777, %v1779
  %v1790 = vsel %vm490, %v1781, %v1783
  %v1791 = vsel %vm490, %v1785, %v1787
  %1796 = vst [vmem:[#allocation4 + $0x1e0] sm:$0xff] %v1788
  %1797 = vst [vmem:[#allocation4 + $0x1e8] sm:$0xff] %v1789
  %1798 = vst [vmem:[#allocation4 + $0x1f0] sm:$0xff] %v1790
  %1799 = vst [vmem:[#allocation4 + $0x1f8] sm:$0xff] %v1791
  %v1800 = vld [vmem:[#allocation3] sm:$0xff]
  %v1801 = vld [vmem:[#allocation3 + $0x8] sm:$0xff]
  %v1802 = vld [vmem:[#allocation3 + $0x10] sm:$0xff]
  %v1803 = vld [vmem:[#allocation3 + $0x18] sm:$0xff]
  %v1804 = vld [vmem:[#allocation3 + $0x20] sm:$0xff]
  %v1805 = vld [vmem:[#allocation3 + $0x28] sm:$0xff]
  %v1806 = vld [vmem:[#allocation3 + $0x30] sm:$0xff]
  %v1807 = vld [vmem:[#allocation3 + $0x38] sm:$0xff]
  %1816 = vrot.lane.b32.xlu0 %v1800, 79
  %v1817 = vpop.permute.xlu0 %1816
  %1818 = vrot.lane.b32.xlu0 %v1801, 79
  %v1819 = vpop.permute.xlu0 %1818
  %1820 = vrot.lane.b32.xlu0 %v1802, 79
  %v1821 = vpop.permute.xlu0 %1820
  %1822 = vrot.lane.b32.xlu0 %v1803, 79
  %v1823 = vpop.permute.xlu0 %1822
  %1824 = vrot.lane.b32.xlu0 %v1804, 79
  %v1825 = vpop.permute.xlu0 %1824
  %1826 = vrot.lane.b32.xlu0 %v1805, 79
  %v1827 = vpop.permute.xlu0 %1826
  %1828 = vrot.lane.b32.xlu0 %v1806, 79
  %v1829 = vpop.permute.xlu0 %1828
  %1830 = vrot.lane.b32.xlu0 %v1807, 79
  %v1831 = vpop.permute.xlu0 %1830
  %v1832 = vsel %vm520, %v1817, %v1819
  %v1833 = vsel %vm520, %v1821, %v1823
  %v1834 = vsel %vm520, %v1825, %v1827
  %v1835 = vsel %vm520, %v1829, %v1831
  %1840 = vst [vmem:[#allocation4 + $0x200] sm:$0xff] %v1832
  %1841 = vst [vmem:[#allocation4 + $0x208] sm:$0xff] %v1833
  %1842 = vst [vmem:[#allocation4 + $0x210] sm:$0xff] %v1834
  %1843 = vst [vmem:[#allocation4 + $0x218] sm:$0xff] %v1835
  %v1844 = vld [vmem:[#allocation3] sm:$0xff]
  %v1845 = vld [vmem:[#allocation3 + $0x8] sm:$0xff]
  %v1846 = vld [vmem:[#allocation3 + $0x10] sm:$0xff]
  %v1847 = vld [vmem:[#allocation3 + $0x18] sm:$0xff]
  %v1848 = vld [vmem:[#allocation3 + $0x20] sm:$0xff]
  %v1849 = vld [vmem:[#allocation3 + $0x28] sm:$0xff]
  %v1850 = vld [vmem:[#allocation3 + $0x30] sm:$0xff]
  %v1851 = vld [vmem:[#allocation3 + $0x38] sm:$0xff]
  %1860 = vrot.lane.b32.xlu0 %v1844, 78
  %v1861 = vpop.permute.xlu0 %1860
  %1862 = vrot.lane.b32.xlu0 %v1845, 78
  %v1863 = vpop.permute.xlu0 %1862
  %1864 = vrot.lane.b32.xlu0 %v1846, 78
  %v1865 = vpop.permute.xlu0 %1864
  %1866 = vrot.lane.b32.xlu0 %v1847, 78
  %v1867 = vpop.permute.xlu0 %1866
  %1868 = vrot.lane.b32.xlu0 %v1848, 78
  %v1869 = vpop.permute.xlu0 %1868
  %1870 = vrot.lane.b32.xlu0 %v1849, 78
  %v1871 = vpop.permute.xlu0 %1870
  %1872 = vrot.lane.b32.xlu0 %v1850, 78
  %v1873 = vpop.permute.xlu0 %1872
  %1874 = vrot.lane.b32.xlu0 %v1851, 78
  %v1875 = vpop.permute.xlu0 %1874
  %v1876 = vsel %vm550, %v1861, %v1863
  %v1877 = vsel %vm550, %v1865, %v1867
  %v1878 = vsel %vm550, %v1869, %v1871
  %v1879 = vsel %vm550, %v1873, %v1875
  %1884 = vst [vmem:[#allocation4 + $0x220] sm:$0xff] %v1876
  %1885 = vst [vmem:[#allocation4 + $0x228] sm:$0xff] %v1877
  %1886 = vst [vmem:[#allocation4 + $0x230] sm:$0xff] %v1878
  %1887 = vst [vmem:[#allocation4 + $0x238] sm:$0xff] %v1879
  %v1888 = vld [vmem:[#allocation3] sm:$0xff]
  %v1889 = vld [vmem:[#allocation3 + $0x8] sm:$0xff]
  %v1890 = vld [vmem:[#allocation3 + $0x10] sm:$0xff]
  %v1891 = vld [vmem:[#allocation3 + $0x18] sm:$0xff]
  %v1892 = vld [vmem:[#allocation3 + $0x20] sm:$0xff]
  %v1893 = vld [vmem:[#allocation3 + $0x28] sm:$0xff]
  %v1894 = vld [vmem:[#allocation3 + $0x30] sm:$0xff]
  %v1895 = vld [vmem:[#allocation3 + $0x38] sm:$0xff]
  %1904 = vrot.lane.b32.xlu0 %v1888, 77
  %v1905 = vpop.permute.xlu0 %1904
  %1906 = vrot.lane.b32.xlu0 %v1889, 77
  %v1907 = vpop.permute.xlu0 %1906
  %1908 = vrot.lane.b32.xlu0 %v1890, 77
  %v1909 = vpop.permute.xlu0 %1908
  %1910 = vrot.lane.b32.xlu0 %v1891, 77
  %v1911 = vpop.permute.xlu0 %1910
  %1912 = vrot.lane.b32.xlu0 %v1892, 77
  %v1913 = vpop.permute.xlu0 %1912
  %1914 = vrot.lane.b32.xlu0 %v1893, 77
  %v1915 = vpop.permute.xlu0 %1914
  %1916 = vrot.lane.b32.xlu0 %v1894, 77
  %v1917 = vpop.permute.xlu0 %1916
  %1918 = vrot.lane.b32.xlu0 %v1895, 77
  %v1919 = vpop.permute.xlu0 %1918
  %v1920 = vsel %vm580, %v1905, %v1907
  %v1921 = vsel %vm580, %v1909, %v1911
  %v1922 = vsel %vm580, %v1913, %v1915
  %v1923 = vsel %vm580, %v1917, %v1919
  %1928 = vst [vmem:[#allocation4 + $0x240] sm:$0xff] %v1920
  %1929 = vst [vmem:[#allocation4 + $0x248] sm:$0xff] %v1921
  %1930 = vst [vmem:[#allocation4 + $0x250] sm:$0xff] %v1922
  %1931 = vst [vmem:[#allocation4 + $0x258] sm:$0xff] %v1923
  %v1932 = vld [vmem:[#allocation3] sm:$0xff]
  %v1933 = vld [vmem:[#allocation3 + $0x8] sm:$0xff]
  %v1934 = vld [vmem:[#allocation3 + $0x10] sm:$0xff]
  %v1935 = vld [vmem:[#allocation3 + $0x18] sm:$0xff]
  %v1936 = vld [vmem:[#allocation3 + $0x20] sm:$0xff]
  %v1937 = vld [vmem:[#allocation3 + $0x28] sm:$0xff]
  %v1938 = vld [vmem:[#allocation3 + $0x30] sm:$0xff]
  %v1939 = vld [vmem:[#allocation3 + $0x38] sm:$0xff]
  %1948 = vrot.lane.b32.xlu0 %v1932, 76
  %v1949 = vpop.permute.xlu0 %1948
  %1950 = vrot.lane.b32.xlu0 %v1933, 76
  %v1951 = vpop.permute.xlu0 %1950
  %1952 = vrot.lane.b32.xlu0 %v1934, 76
  %v1953 = vpop.permute.xlu0 %1952
  %1954 = vrot.lane.b32.xlu0 %v1935, 76
  %v1955 = vpop.permute.xlu0 %1954
  %1956 = vrot.lane.b32.xlu0 %v1936, 76
  %v1957 = vpop.permute.xlu0 %1956
  %1958 = vrot.lane.b32.xlu0 %v1937, 76
  %v1959 = vpop.permute.xlu0 %1958
  %1960 = vrot.lane.b32.xlu0 %v1938, 76
  %v1961 = vpop.permute.xlu0 %1960
  %1962 = vrot.lane.b32.xlu0 %v1939, 76
  %v1963 = vpop.permute.xlu0 %1962
  %v1964 = vsel %vm610, %v1949, %v1951
  %v1965 = vsel %vm610, %v1953, %v1955
  %v1966 = vsel %vm610, %v1957, %v1959
  %v1967 = vsel %vm610, %v1961, %v1963
  %1972 = vst [vmem:[#allocation4 + $0x260] sm:$0xff] %v1964
  %1973 = vst [vmem:[#allocation4 + $0x268] sm:$0xff] %v1965
  %1974 = vst [vmem:[#allocation4 + $0x270] sm:$0xff] %v1966
  %1975 = vst [vmem:[#allocation4 + $0x278] sm:$0xff] %v1967
  %v1976 = vld [vmem:[#allocation3] sm:$0xff]
  %v1977 = vld [vmem:[#allocation3 + $0x8] sm:$0xff]
  %v1978 = vld [vmem:[#allocation3 + $0x10] sm:$0xff]
  %v1979 = vld [vmem:[#allocation3 + $0x18] sm:$0xff]
  %v1980 = vld [vmem:[#allocation3 + $0x20] sm:$0xff]
  %v1981 = vld [vmem:[#allocation3 + $0x28] sm:$0xff]
  %v1982 = vld [vmem:[#allocation3 + $0x30] sm:$0xff]
  %v1983 = vld [vmem:[#allocation3 + $0x38] sm:$0xff]
  %1992 = vrot.lane.b32.xlu0 %v1976, 64
  %v1993 = vpop.permute.xlu0 %1992
  %1994 = vrot.lane.b32.xlu0 %v1977, 64
  %v1995 = vpop.permute.xlu0 %1994
  %1996 = vrot.lane.b32.xlu0 %v1978, 64
  %v1997 = vpop.permute.xlu0 %1996
  %1998 = vrot.lane.b32.xlu0 %v1979, 64
  %v1999 = vpop.permute.xlu0 %1998
  %2000 = vrot.lane.b32.xlu0 %v1980, 64
  %v2001 = vpop.permute.xlu0 %2000
  %2002 = vrot.lane.b32.xlu0 %v1981, 64
  %v2003 = vpop.permute.xlu0 %2002
  %2004 = vrot.lane.b32.xlu0 %v1982, 64
  %v2005 = vpop.permute.xlu0 %2004
  %2006 = vrot.lane.b32.xlu0 %v1983, 64
  %v2007 = vpop.permute.xlu0 %2006
  %v2008 = vsel %vm640, %v1993, %v1995
  %v2009 = vsel %vm640, %v1997, %v1999
  %v2010 = vsel %vm640, %v2001, %v2003
  %v2011 = vsel %vm640, %v2005, %v2007
  %2016 = vst [vmem:[#allocation4 + $0x280] sm:$0xff] %v2008
  %2017 = vst [vmem:[#allocation4 + $0x288] sm:$0xff] %v2009
  %2018 = vst [vmem:[#allocation4 + $0x290] sm:$0xff] %v2010
  %2019 = vst [vmem:[#allocation4 + $0x298] sm:$0xff] %v2011
  %v2020 = vld [vmem:[#allocation3] sm:$0xff]
  %v2021 = vld [vmem:[#allocation3 + $0x8] sm:$0xff]
  %v2022 = vld [vmem:[#allocation3 + $0x10] sm:$0xff]
  %v2023 = vld [vmem:[#allocation3 + $0x18] sm:$0xff]
  %v2024 = vld [vmem:[#allocation3 + $0x20] sm:$0xff]
  %v2025 = vld [vmem:[#allocation3 + $0x28] sm:$0xff]
  %v2026 = vld [vmem:[#allocation3 + $0x30] sm:$0xff]
  %v2027 = vld [vmem:[#allocation3 + $0x38] sm:$0xff]
  %2036 = vrot.lane.b32.xlu0 %v2020, 63
  %v2037 = vpop.permute.xlu0 %2036
  %2038 = vrot.lane.b32.xlu0 %v2021, 63
  %v2039 = vpop.permute.xlu0 %2038
  %2040 = vrot.lane.b32.xlu0 %v2022, 63
  %v2041 = vpop.permute.xlu0 %2040
  %2042 = vrot.lane.b32.xlu0 %v2023, 63
  %v2043 = vpop.permute.xlu0 %2042
  %2044 = vrot.lane.b32.xlu0 %v2024, 63
  %v2045 = vpop.permute.xlu0 %2044
  %2046 = vrot.lane.b32.xlu0 %v2025, 63
  %v2047 = vpop.permute.xlu0 %2046
  %2048 = vrot.lane.b32.xlu0 %v2026, 63
  %v2049 = vpop.permute.xlu0 %2048
  %2050 = vrot.lane.b32.xlu0 %v2027, 63
  %v2051 = vpop.permute.xlu0 %2050
  %v2052 = vsel %vm670, %v2037, %v2039
  %v2053 = vsel %vm670, %v2041, %v2043
  %v2054 = vsel %vm670, %v2045, %v2047
  %v2055 = vsel %vm670, %v2049, %v2051
  %2060 = vst [vmem:[#allocation4 + $0x2a0] sm:$0xff] %v2052
  %2061 = vst [vmem:[#allocation4 + $0x2a8] sm:$0xff] %v2053
  %2062 = vst [vmem:[#allocation4 + $0x2b0] sm:$0xff] %v2054
  %2063 = vst [vmem:[#allocation4 + $0x2b8] sm:$0xff] %v2055
  %v2064 = vld [vmem:[#allocation3] sm:$0xff]
  %v2065 = vld [vmem:[#allocation3 + $0x8] sm:$0xff]
  %v2066 = vld [vmem:[#allocation3 + $0x10] sm:$0xff]
  %v2067 = vld [vmem:[#allocation3 + $0x18] sm:$0xff]
  %v2068 = vld [vmem:[#allocation3 + $0x20] sm:$0xff]
  %v2069 = vld [vmem:[#allocation3 + $0x28] sm:$0xff]
  %v2070 = vld [vmem:[#allocation3 + $0x30] sm:$0xff]
  %v2071 = vld [vmem:[#allocation3 + $0x38] sm:$0xff]
  %2080 = vrot.lane.b32.xlu0 %v2064, 62
  %v2081 = vpop.permute.xlu0 %2080
  %2082 = vrot.lane.b32.xlu0 %v2065, 62
  %v2083 = vpop.permute.xlu0 %2082
  %2084 = vrot.lane.b32.xlu0 %v2066, 62
  %v2085 = vpop.permute.xlu0 %2084
  %2086 = vrot.lane.b32.xlu0 %v2067, 62
  %v2087 = vpop.permute.xlu0 %2086
  %2088 = vrot.lane.b32.xlu0 %v2068, 62
  %v2089 = vpop.permute.xlu0 %2088
  %2090 = vrot.lane.b32.xlu0 %v2069, 62
  %v2091 = vpop.permute.xlu0 %2090
  %2092 = vrot.lane.b32.xlu0 %v2070, 62
  %v2093 = vpop.permute.xlu0 %2092
  %2094 = vrot.lane.b32.xlu0 %v2071, 62
  %v2095 = vpop.permute.xlu0 %2094
  %v2096 = vsel %vm700, %v2081, %v2083
  %v2097 = vsel %vm700, %v2085, %v2087
  %v2098 = vsel %vm700, %v2089, %v2091
  %v2099 = vsel %vm700, %v2093, %v2095
  %2104 = vst [vmem:[#allocation4 + $0x2c0] sm:$0xff] %v2096
  %2105 = vst [vmem:[#allocation4 + $0x2c8] sm:$0xff] %v2097
  %2106 = vst [vmem:[#allocation4 + $0x2d0] sm:$0xff] %v2098
  %2107 = vst [vmem:[#allocation4 + $0x2d8] sm:$0xff] %v2099
  %v2108 = vld [vmem:[#allocation3] sm:$0xff]
  %v2109 = vld [vmem:[#allocation3 + $0x8] sm:$0xff]
  %v2110 = vld [vmem:[#allocation3 + $0x10] sm:$0xff]
  %v2111 = vld [vmem:[#allocation3 + $0x18] sm:$0xff]
  %v2112 = vld [vmem:[#allocation3 + $0x20] sm:$0xff]
  %v2113 = vld [vmem:[#allocation3 + $0x28] sm:$0xff]
  %v2114 = vld [vmem:[#allocation3 + $0x30] sm:$0xff]
  %v2115 = vld [vmem:[#allocation3 + $0x38] sm:$0xff]
  %2124 = vrot.lane.b32.xlu0 %v2108, 61
  %v2125 = vpop.permute.xlu0 %2124
  %2126 = vrot.lane.b32.xlu0 %v2109, 61
  %v2127 = vpop.permute.xlu0 %2126
  %2128 = vrot.lane.b32.xlu0 %v2110, 61
  %v2129 = vpop.permute.xlu0 %2128
  %2130 = vrot.lane.b32.xlu0 %v2111, 61
  %v2131 = vpop.permute.xlu0 %2130
  %2132 = vrot.lane.b32.xlu0 %v2112, 61
  %v2133 = vpop.permute.xlu0 %2132
  %2134 = vrot.lane.b32.xlu0 %v2113, 61
  %v2135 = vpop.permute.xlu0 %2134
  %2136 = vrot.lane.b32.xlu0 %v2114, 61
  %v2137 = vpop.permute.xlu0 %2136
  %2138 = vrot.lane.b32.xlu0 %v2115, 61
  %v2139 = vpop.permute.xlu0 %2138
  %v2140 = vsel %vm730, %v2125, %v2127
  %v2141 = vsel %vm730, %v2129, %v2131
  %v2142 = vsel %vm730, %v2133, %v2135
  %v2143 = vsel %vm730, %v2137, %v2139
  %2148 = vst [vmem:[#allocation4 + $0x2e0] sm:$0xff] %v2140
  %2149 = vst [vmem:[#allocation4 + $0x2e8] sm:$0xff] %v2141
  %2150 = vst [vmem:[#allocation4 + $0x2f0] sm:$0xff] %v2142
  %2151 = vst [vmem:[#allocation4 + $0x2f8] sm:$0xff] %v2143
  %v2152 = vld [vmem:[#allocation3] sm:$0xff]
  %v2153 = vld [vmem:[#allocation3 + $0x8] sm:$0xff]
  %v2154 = vld [vmem:[#allocation3 + $0x10] sm:$0xff]
  %v2155 = vld [vmem:[#allocation3 + $0x18] sm:$0xff]
  %v2156 = vld [vmem:[#allocation3 + $0x20] sm:$0xff]
  %v2157 = vld [vmem:[#allocation3 + $0x28] sm:$0xff]
  %v2158 = vld [vmem:[#allocation3 + $0x30] sm:$0xff]
  %v2159 = vld [vmem:[#allocation3 + $0x38] sm:$0xff]
  %2168 = vrot.lane.b32.xlu0 %v2152, 60
  %v2169 = vpop.permute.xlu0 %2168
  %2170 = vrot.lane.b32.xlu0 %v2153, 60
  %v2171 = vpop.permute.xlu0 %2170
  %2172 = vrot.lane.b32.xlu0 %v2154, 60
  %v2173 = vpop.permute.xlu0 %2172
  %2174 = vrot.lane.b32.xlu0 %v2155, 60
  %v2175 = vpop.permute.xlu0 %2174
  %2176 = vrot.lane.b32.xlu0 %v2156, 60
  %v2177 = vpop.permute.xlu0 %2176
  %2178 = vrot.lane.b32.xlu0 %v2157, 60
  %v2179 = vpop.permute.xlu0 %2178
  %2180 = vrot.lane.b32.xlu0 %v2158, 60
  %v2181 = vpop.permute.xlu0 %2180
  %2182 = vrot.lane.b32.xlu0 %v2159, 60
  %v2183 = vpop.permute.xlu0 %2182
  %v2184 = vsel %vm760, %v2169, %v2171
  %v2185 = vsel %vm760, %v2173, %v2175
  %v2186 = vsel %vm760, %v2177, %v2179
  %v2187 = vsel %vm760, %v2181, %v2183
  %2192 = vst [vmem:[#allocation4 + $0x300] sm:$0xff] %v2184
  %2193 = vst [vmem:[#allocation4 + $0x308] sm:$0xff] %v2185
  %2194 = vst [vmem:[#allocation4 + $0x310] sm:$0xff] %v2186
  %2195 = vst [vmem:[#allocation4 + $0x318] sm:$0xff] %v2187
  %v2196 = vld [vmem:[%s3] sm:$0xff]
  %v2197 = vld [vmem:[%s3 + $0x8] sm:$0xff]
  %v2198 = vld [vmem:[%s3 + $0x10] sm:$0xff]
  %v2199 = vld [vmem:[%s3 + $0x18] sm:$0xff]
  %v2200 = vld [vmem:[%s3 + $0x20] sm:$0xff]
  %v2201 = vld [vmem:[%s3 + $0x28] sm:$0xff]
  %v2202 = vld [vmem:[%s3 + $0x30] sm:$0xf]
  %v2203 = vld [vmem:[%s3 + $0x34] sm:$0xff]
  %v2204 = vld [vmem:[%s3 + $0x3c] sm:$0xff]
  %v2205 = vld [vmem:[%s3 + $0x44] sm:$0xff]
  %v2206 = vld [vmem:[%s3 + $0x4c] sm:$0xff]
  %v2207 = vld [vmem:[%s3 + $0x54] sm:$0xff]
  %v2208 = vld [vmem:[%s3 + $0x5c] sm:$0xff]
  %v2209 = vld [vmem:[%s3 + $0x64] sm:$0xf]
  %v2210 = vld [vmem:[%s3 + $0x68] sm:$0xff]
  %v2211 = vld [vmem:[%s3 + $0x70] sm:$0xff]
  %v2212 = vld [vmem:[%s3 + $0x78] sm:$0xff]
  %v2213 = vld [vmem:[%s3 + $0x80] sm:$0xff]
  %v2214 = vld [vmem:[%s3 + $0x88] sm:$0xff]
  %v2215 = vld [vmem:[%s3 + $0x90] sm:$0xff]
  %v2216 = vld [vmem:[%s3 + $0x98] sm:$0xf]
  %v2217 = vld [vmem:[%s3 + $0x9c] sm:$0xff]
  %v2218 = vld [vmem:[%s3 + $0xa4] sm:$0xff]
  %v2219 = vld [vmem:[%s3 + $0xac] sm:$0xff]
  %v2220 = vld [vmem:[%s3 + $0xb4] sm:$0xff]
  %v2221 = vld [vmem:[%s3 + $0xbc] sm:$0xff]
  %v2222 = vld [vmem:[%s3 + $0xc4] sm:$0xff]
  %v2223 = vld [vmem:[%s3 + $0xcc] sm:$0xf]
  %v2224 = vld [vmem:[#allocation4] sm:$0xff]
  %v2225 = vld [vmem:[#allocation4 + $0x8] sm:$0xff]
  %v2226 = vld [vmem:[#allocation4 + $0x10] sm:$0xff]
  %v2227 = vld [vmem:[#allocation4 + $0x18] sm:$0xff]
  %v2228 = vld [vmem:[#allocation4 + $0x20] sm:$0xff]
  %v2229 = vld [vmem:[#allocation4 + $0x28] sm:$0xff]
  %v2230 = vld [vmem:[#allocation4 + $0x30] sm:$0xff]
  %v2231 = vld [vmem:[#allocation4 + $0x38] sm:$0xff]
  %v2232 = vld [vmem:[#allocation4 + $0x40] sm:$0xff]
  %v2233 = vld [vmem:[#allocation4 + $0x48] sm:$0xff]
  %v2234 = vld [vmem:[#allocation4 + $0x50] sm:$0xff]
  %v2235 = vld [vmem:[#allocation4 + $0x58] sm:$0xff]
  %v2236 = vld [vmem:[#allocation4 + $0x60] sm:$0xff]
  %v2237 = vld [vmem:[#allocation4 + $0x68] sm:$0xff]
  %v2238 = vld [vmem:[#allocation4 + $0x70] sm:$0xff]
  %v2239 = vld [vmem:[#allocation4 + $0x78] sm:$0xff]
  %v2240 = vld [vmem:[#allocation4 + $0x80] sm:$0xff]
  %v2241 = vld [vmem:[#allocation4 + $0x88] sm:$0xff]
  %v2242 = vld [vmem:[#allocation4 + $0x90] sm:$0xff]
  %v2243 = vld [vmem:[#allocation4 + $0x98] sm:$0xff]
  %v2244 = vld [vmem:[#allocation4 + $0xa0] sm:$0xff]
  %v2245 = vld [vmem:[#allocation4 + $0xa8] sm:$0xff]
  %v2246 = vld [vmem:[#allocation4 + $0xb0] sm:$0xff]
  %v2247 = vld [vmem:[#allocation4 + $0xb8] sm:$0xff]
  %v2248 = vld [vmem:[#allocation4 + $0xc0] sm:$0xff]
  %v2249 = vld [vmem:[#allocation4 + $0xc8] sm:$0xff]
  %v2250 = vld [vmem:[#allocation4 + $0xd0] sm:$0xff]
  %v2251 = vld [vmem:[#allocation4 + $0xd8] sm:$0xff]
  %v2252 = vld [vmem:[#allocation4 + $0xe0] sm:$0xff]
  %v2253 = vld [vmem:[#allocation4 + $0xe8] sm:$0xff]
  %v2254 = vld [vmem:[#allocation4 + $0xf0] sm:$0xff]
  %v2255 = vld [vmem:[#allocation4 + $0xf8] sm:$0xff]
  %v2256 = vld [vmem:[#allocation4 + $0x100] sm:$0xff]
  %v2257 = vld [vmem:[#allocation4 + $0x108] sm:$0xff]
  %v2258 = vld [vmem:[#allocation4 + $0x110] sm:$0xff]
  %v2259 = vld [vmem:[#allocation4 + $0x118] sm:$0xff]
  %v2260 = vld [vmem:[#allocation4 + $0x120] sm:$0xff]
  %v2261 = vld [vmem:[#allocation4 + $0x128] sm:$0xff]
  %v2262 = vld [vmem:[#allocation4 + $0x130] sm:$0xff]
  %v2263 = vld [vmem:[#allocation4 + $0x138] sm:$0xff]
  %v2264 = vld [vmem:[#allocation4 + $0x140] sm:$0xff]
  %v2265 = vld [vmem:[#allocation4 + $0x148] sm:$0xff]
  %v2266 = vld [vmem:[#allocation4 + $0x150] sm:$0xff]
  %v2267 = vld [vmem:[#allocation4 + $0x158] sm:$0xff]
  %v2268 = vld [vmem:[#allocation4 + $0x160] sm:$0xff]
  %v2269 = vld [vmem:[#allocation4 + $0x168] sm:$0xff]
  %v2270 = vld [vmem:[#allocation4 + $0x170] sm:$0xff]
  %v2271 = vld [vmem:[#allocation4 + $0x178] sm:$0xff]
  %v2272 = vld [vmem:[#allocation4 + $0x180] sm:$0xff]
  %v2273 = vld [vmem:[#allocation4 + $0x188] sm:$0xff]
  %v2274 = vld [vmem:[#allocation4 + $0x190] sm:$0xff]
  %v2275 = vld [vmem:[#allocation4 + $0x198] sm:$0xff]
  %v2276 = vld [vmem:[#allocation4 + $0x1a0] sm:$0xff]
  %v2277 = vld [vmem:[#allocation4 + $0x1a8] sm:$0xff]
  %v2278 = vld [vmem:[#allocation4 + $0x1b0] sm:$0xff]
  %v2279 = vld [vmem:[#allocation4 + $0x1b8] sm:$0xff]
  %v2280 = vld [vmem:[#allocation4 + $0x1c0] sm:$0xff]
  %v2281 = vld [vmem:[#allocation4 + $0x1c8] sm:$0xff]
  %v2282 = vld [vmem:[#allocation4 + $0x1d0] sm:$0xff]
  %v2283 = vld [vmem:[#allocation4 + $0x1d8] sm:$0xff]
  %v2284 = vld [vmem:[#allocation4 + $0x1e0] sm:$0xff]
  %v2285 = vld [vmem:[#allocation4 + $0x1e8] sm:$0xff]
  %v2286 = vld [vmem:[#allocation4 + $0x1f0] sm:$0xff]
  %v2287 = vld [vmem:[#allocation4 + $0x1f8] sm:$0xff]
  %v2288 = vld [vmem:[#allocation4 + $0x200] sm:$0xff]
  %v2289 = vld [vmem:[#allocation4 + $0x208] sm:$0xff]
  %v2290 = vld [vmem:[#allocation4 + $0x210] sm:$0xff]
  %v2291 = vld [vmem:[#allocation4 + $0x218] sm:$0xff]
  %v2292 = vld [vmem:[#allocation4 + $0x220] sm:$0xff]
  %v2293 = vld [vmem:[#allocation4 + $0x228] sm:$0xff]
  %v2294 = vld [vmem:[#allocation4 + $0x230] sm:$0xff]
  %v2295 = vld [vmem:[#allocation4 + $0x238] sm:$0xff]
  %v2296 = vld [vmem:[#allocation4 + $0x240] sm:$0xff]
  %v2297 = vld [vmem:[#allocation4 + $0x248] sm:$0xff]
  %v2298 = vld [vmem:[#allocation4 + $0x250] sm:$0xff]
  %v2299 = vld [vmem:[#allocation4 + $0x258] sm:$0xff]
  %v2300 = vld [vmem:[#allocation4 + $0x260] sm:$0xff]
  %v2301 = vld [vmem:[#allocation4 + $0x268] sm:$0xff]
  %v2302 = vld [vmem:[#allocation4 + $0x270] sm:$0xff]
  %v2303 = vld [vmem:[#allocation4 + $0x278] sm:$0xff]
  %v2304 = vld [vmem:[#allocation4 + $0x280] sm:$0xff]
  %v2305 = vld [vmem:[#allocation4 + $0x288] sm:$0xff]
  %v2306 = vld [vmem:[#allocation4 + $0x290] sm:$0xff]
  %v2307 = vld [vmem:[#allocation4 + $0x298] sm:$0xff]
  %v2308 = vld [vmem:[#allocation4 + $0x2a0] sm:$0xff]
  %v2309 = vld [vmem:[#allocation4 + $0x2a8] sm:$0xff]
  %v2310 = vld [vmem:[#allocation4 + $0x2b0] sm:$0xff]
  %v2311 = vld [vmem:[#allocation4 + $0x2b8] sm:$0xff]
  %v2312 = vld [vmem:[#allocation4 + $0x2c0] sm:$0xff]
  %v2313 = vld [vmem:[#allocation4 + $0x2c8] sm:$0xff]
  %v2314 = vld [vmem:[#allocation4 + $0x2d0] sm:$0xff]
  %v2315 = vld [vmem:[#allocation4 + $0x2d8] sm:$0xff]
  %v2316 = vld [vmem:[#allocation4 + $0x2e0] sm:$0xff]
  %v2317 = vld [vmem:[#allocation4 + $0x2e8] sm:$0xff]
  %v2318 = vld [vmem:[#allocation4 + $0x2f0] sm:$0xff]
  %v2319 = vld [vmem:[#allocation4 + $0x2f8] sm:$0xff]
  %v2320 = vld [vmem:[#allocation4 + $0x300] sm:$0xff]
  %v2321 = vld [vmem:[#allocation4 + $0x308] sm:$0xff]
  %v2322 = vld [vmem:[#allocation4 + $0x310] sm:$0xff]
  %v2323 = vld [vmem:[#allocation4 + $0x318] sm:$0xff]
  %v2324 = vld [vmem:[%s4] sm:$0xff]
  %v2325 = vld [vmem:[%s4 + $0x8] sm:$0xff]
  %v2326 = vld [vmem:[%s4 + $0x10] sm:$0xff]
  %v2327 = vld [vmem:[%s4 + $0x18] sm:$0xff]
  %2329 = vset.pattern.permute.xlu0 0
  %2330 = vperm.xlu0 %2329, %v2324
  %v2331 = vpop.permute.xlu0 %2330
  %2334 = vset.pattern.permute.xlu0 0
  %2335 = vperm.xlu0 %2334, %v2325
  %v2336 = vpop.permute.xlu0 %2335
  %2339 = vset.pattern.permute.xlu0 0
  %2340 = vperm.xlu0 %2339, %v2326
  %v2341 = vpop.permute.xlu0 %2340
  %2344 = vset.pattern.permute.xlu0 0
  %2345 = vperm.xlu0 %2344, %v2327
  %v2346 = vpop.permute.xlu0 %2345
  %v2376 = vunpack.c.l.b16 %v2196
  %v2377 = vunpack.c.h.b16 %v2196
  %v2378 = vunpack.c.l.b16 %v2197
  %v2379 = vunpack.c.h.b16 %v2197
  %v2380 = vunpack.c.l.b16 %v2198
  %v2381 = vunpack.c.h.b16 %v2198
  %v2382 = vunpack.c.l.b16 %v2199
  %v2383 = vunpack.c.h.b16 %v2199
  %v2384 = vunpack.c.l.b16 %v2200
  %v2385 = vunpack.c.h.b16 %v2200
  %v2386 = vunpack.c.l.b16 %v2201
  %v2387 = vunpack.c.h.b16 %v2201
  %v2388 = vunpack.c.l.b16 %v2202
  %v2389 = vunpack.c.l.b16 %v2203
  %v2390 = vunpack.c.h.b16 %v2203
  %v2391 = vunpack.c.l.b16 %v2204
  %v2392 = vunpack.c.h.b16 %v2204
  %v2393 = vunpack.c.l.b16 %v2205
  %v2394 = vunpack.c.h.b16 %v2205
  %v2395 = vunpack.c.l.b16 %v2206
  %v2396 = vunpack.c.h.b16 %v2206
  %v2397 = vunpack.c.l.b16 %v2207
  %v2398 = vunpack.c.h.b16 %v2207
  %v2399 = vunpack.c.l.b16 %v2208
  %v2400 = vunpack.c.h.b16 %v2208
  %v2401 = vunpack.c.l.b16 %v2209
  %v2402 = vunpack.c.l.b16 %v2210
  %v2403 = vunpack.c.h.b16 %v2210
  %v2404 = vunpack.c.l.b16 %v2211
  %v2405 = vunpack.c.h.b16 %v2211
  %v2406 = vunpack.c.l.b16 %v2212
  %v2407 = vunpack.c.h.b16 %v2212
  %v2408 = vunpack.c.l.b16 %v2213
  %v2409 = vunpack.c.h.b16 %v2213
  %v2410 = vunpack.c.l.b16 %v2214
  %v2411 = vunpack.c.h.b16 %v2214
  %v2412 = vunpack.c.l.b16 %v2215
  %v2413 = vunpack.c.h.b16 %v2215
  %v2414 = vunpack.c.l.b16 %v2216
  %v2415 = vunpack.c.l.b16 %v2217
  %v2416 = vunpack.c.h.b16 %v2217
  %v2417 = vunpack.c.l.b16 %v2218
  %v2418 = vunpack.c.h.b16 %v2218
  %v2419 = vunpack.c.l.b16 %v2219
  %v2420 = vunpack.c.h.b16 %v2219
  %v2421 = vunpack.c.l.b16 %v2220
  %v2422 = vunpack.c.h.b16 %v2220
  %v2423 = vunpack.c.l.b16 %v2221
  %v2424 = vunpack.c.h.b16 %v2221
  %v2425 = vunpack.c.l.b16 %v2222
  %v2426 = vunpack.c.h.b16 %v2222
  %v2427 = vunpack.c.l.b16 %v2223
  %v2428 = vpack.c.b16 %v2389, %v2376
  %v2429 = vpack.c.b16 %v2390, %v2377
  %v2430 = vpack.c.b16 %v2391, %v2378
  %v2431 = vpack.c.b16 %v2392, %v2379
  %v2432 = vpack.c.b16 %v2393, %v2380
  %v2433 = vpack.c.b16 %v2394, %v2381
  %v2434 = vpack.c.b16 %v2395, %v2382
  %v2435 = vpack.c.b16 %v2396, %v2383
  %v2436 = vpack.c.b16 %v2397, %v2384
  %v2437 = vpack.c.b16 %v2398, %v2385
  %v2438 = vpack.c.b16 %v2399, %v2386
  %v2439 = vpack.c.b16 %v2400, %v2387
  %v2440 = vpack.c.b16 %v2401, %v2388
  %v2441 = vpack.c.b16 %v2415, %v2402
  %v2442 = vpack.c.b16 %v2416, %v2403
  %v2443 = vpack.c.b16 %v2417, %v2404
  %v2444 = vpack.c.b16 %v2418, %v2405
  %v2445 = vpack.c.b16 %v2419, %v2406
  %v2446 = vpack.c.b16 %v2420, %v2407
  %v2447 = vpack.c.b16 %v2421, %v2408
  %v2448 = vpack.c.b16 %v2422, %v2409
  %v2449 = vpack.c.b16 %v2423, %v2410
  %v2450 = vpack.c.b16 %v2424, %v2411
  %v2451 = vpack.c.b16 %v2425, %v2412
  %v2452 = vpack.c.b16 %v2426, %v2413
  %v2453 = vpack.c.b16 %v2427, %v2414
  %vm2478 = vcmask 523264
  %v2480 = vsel %vm2478, %v2440, 0
  %v2483 = vsel %vm2478, %v2453, 0
  %2485 = vmatprep.subr.bf16.mxu0 0
  %2486 = vmatpush1.bf16.msra.mxu0 %v2224
  %2487 = vmatprep.subr.bf16.mxu0 0
  %2488 = vmatpush1.bf16.msra.mxu0 %v2225
  %2489 = vmatprep.subr.bf16.mxu0 0
  %2490 = vmatpush1.bf16.msra.mxu0 %v2226
  %2491 = vmatprep.subr.bf16.mxu0 0
  %2492 = vmatpush1.bf16.msra.mxu0 %v2227
  %2493 = vmatprep.subr.bf16.mxu0 0
  %2494 = vmatpush1.bf16.msra.mxu0 %v2228
  %2495 = vmatprep.subr.bf16.mxu0 0
  %2496 = vmatpush1.bf16.msra.mxu0 %v2229
  %2497 = vmatprep.subr.bf16.mxu0 0
  %2498 = vmatpush1.bf16.msra.mxu0 %v2230
  %2499 = vmatprep.subr.bf16.mxu0 0
  %2500 = vmatpush1.bf16.msra.mxu0 %v2231
  %2501 = vmatprep.subr.bf16.mxu0 0
  %2502 = vmatpush1.bf16.msra.mxu0 %v2232
  %2503 = vmatprep.subr.bf16.mxu0 0
  %2504 = vmatpush1.bf16.msra.mxu0 %v2233
  %2505 = vmatprep.subr.bf16.mxu0 0
  %2506 = vmatpush1.bf16.msra.mxu0 %v2234
  %2507 = vmatprep.subr.bf16.mxu0 0
  %2508 = vmatpush1.bf16.msra.mxu0 %v2235
  %2509 = vmatprep.subr.bf16.mxu0 0
  %2510 = vmatpush1.bf16.msra.mxu0 %v2236
  %2511 = vmatprep.subr.bf16.mxu0 0
  %2512 = vmatpush1.bf16.msra.mxu0 %v2237
  %2513 = vmatprep.subr.bf16.mxu0 0
  %2514 = vmatpush1.bf16.msra.mxu0 %v2238
  %2515 = vmatprep.subr.bf16.mxu0 0
  %2516 = vmatpush1.bf16.msra.mxu0 %v2239
  %2517 = vmatprep.mubr.bf16.mxu0 %v2429
  %2518 = vmatmul.mubr.bf16.gmra.mrb[0].mxu0 %v2428
  %v2519 = vpop.f32.mrb[0].mxu0
  %v2520 = vadd.f32 %v2331, %v2519
  %v2521 = vpop.f32.mrb[0].mxu0
  %v2522 = vpop.f32.mrb[0].mxu0
  %v2523 = vadd.f32 %v2336, %v2522
  %v2524 = vpop.f32.mrb[0].mxu0
  %2525 = vmatprep.mubr.bf16.mxu0 %v2442
  %2526 = vmatmul.mubr.bf16.gmra.mrb[0].mxu0 %v2441
  %v2527 = vpop.f32.mrb[0].mxu0
  %v2528 = vadd.f32 %v2341, %v2527
  %v2529 = vpop.f32.mrb[0].mxu0
  %v2530 = vpop.f32.mrb[0].mxu0
  %v2531 = vadd.f32 %v2346, %v2530
  %v2532 = vpop.f32.mrb[0].mxu0
  %2533 = vdwg.mxu0
  %2534 = vmatprep.subr.bf16.mxu0 0
  %2535 = vmatpush1.bf16.msra.mxu0 %v2240
  %2536 = vmatprep.subr.bf16.mxu0 0
  %2537 = vmatpush1.bf16.msra.mxu0 %v2241
  %2538 = vmatprep.subr.bf16.mxu0 0
  %2539 = vmatpush1.bf16.msra.mxu0 %v2242
  %2540 = vmatprep.subr.bf16.mxu0 0
  %2541 = vmatpush1.bf16.msra.mxu0 %v2243
  %2542 = vmatprep.subr.bf16.mxu0 0
  %2543 = vmatpush1.bf16.msra.mxu0 %v2244
  %2544 = vmatprep.subr.bf16.mxu0 0
  %2545 = vmatpush1.bf16.msra.mxu0 %v2245
  %2546 = vmatprep.subr.bf16.mxu0 0
  %2547 = vmatpush1.bf16.msra.mxu0 %v2246
  %2548 = vmatprep.subr.bf16.mxu0 0
  %2549 = vmatpush1.bf16.msra.mxu0 %v2247
  %2550 = vmatprep.subr.bf16.mxu0 0
  %2551 = vmatpush1.bf16.msra.mxu0 %v2248
  %2552 = vmatprep.subr.bf16.mxu0 0
  %2553 = vmatpush1.bf16.msra.mxu0 %v2249
  %2554 = vmatprep.subr.bf16.mxu0 0
  %2555 = vmatpush1.bf16.msra.mxu0 %v2250
  %2556 = vmatprep.subr.bf16.mxu0 0
  %2557 = vmatpush1.bf16.msra.mxu0 %v2251
  %2558 = vmatprep.subr.bf16.mxu0 0
  %2559 = vmatpush1.bf16.msra.mxu0 %v2252
  %2560 = vmatprep.subr.bf16.mxu0 0
  %2561 = vmatpush1.bf16.msra.mxu0 %v2253
  %2562 = vmatprep.subr.bf16.mxu0 0
  %2563 = vmatpush1.bf16.msra.mxu0 %v2254
  %2564 = vmatprep.subr.bf16.mxu0 0
  %2565 = vmatpush1.bf16.msra.mxu0 %v2255
  %2566 = vmatprep.mubr.bf16.mxu0 %v2431
  %2567 = vmatmul.mubr.bf16.gmra.mrb[0].mxu0 %v2430
  %v2568 = vpop.f32.mrb[0].mxu0
  %v2569 = vadd.f32 %v2520, %v2568
  %v2570 = vpop.f32.mrb[0].mxu0
  %v2571 = vpop.f32.mrb[0].mxu0
  %v2572 = vadd.f32 %v2523, %v2571
  %v2573 = vpop.f32.mrb[0].mxu0
  %2574 = vmatprep.mubr.bf16.mxu0 %v2444
  %2575 = vmatmul.mubr.bf16.gmra.mrb[0].mxu0 %v2443
  %v2576 = vpop.f32.mrb[0].mxu0
  %v2577 = vadd.f32 %v2528, %v2576
  %v2578 = vpop.f32.mrb[0].mxu0
  %v2579 = vpop.f32.mrb[0].mxu0
  %v2580 = vadd.f32 %v2531, %v2579
  %v2581 = vpop.f32.mrb[0].mxu0
  %2582 = vdwg.mxu0
  %2583 = vmatprep.subr.bf16.mxu0 0
  %2584 = vmatpush1.bf16.msra.mxu0 %v2256
  %2585 = vmatprep.subr.bf16.mxu0 0
  %2586 = vmatpush1.bf16.msra.mxu0 %v2257
  %2587 = vmatprep.subr.bf16.mxu0 0
  %2588 = vmatpush1.bf16.msra.mxu0 %v2258
  %2589 = vmatprep.subr.bf16.mxu0 0
  %2590 = vmatpush1.bf16.msra.mxu0 %v2259
  %2591 = vmatprep.subr.bf16.mxu0 0
  %2592 = vmatpush1.bf16.msra.mxu0 %v2260
  %2593 = vmatprep.subr.bf16.mxu0 0
  %2594 = vmatpush1.bf16.msra.mxu0 %v2261
  %2595 = vmatprep.subr.bf16.mxu0 0
  %2596 = vmatpush1.bf16.msra.mxu0 %v2262
  %2597 = vmatprep.subr.bf16.mxu0 0
  %2598 = vmatpush1.bf16.msra.mxu0 %v2263
  %2599 = vmatprep.subr.bf16.mxu0 0
  %2600 = vmatpush1.bf16.msra.mxu0 %v2264
  %2601 = vmatprep.subr.bf16.mxu0 0
  %2602 = vmatpush1.bf16.msra.mxu0 %v2265
  %2603 = vmatprep.subr.bf16.mxu0 0
  %2604 = vmatpush1.bf16.msra.mxu0 %v2266
  %2605 = vmatprep.subr.bf16.mxu0 0
  %2606 = vmatpush1.bf16.msra.mxu0 %v2267
  %2607 = vmatprep.subr.bf16.mxu0 0
  %2608 = vmatpush1.bf16.msra.mxu0 %v2268
  %2609 = vmatprep.subr.bf16.mxu0 0
  %2610 = vmatpush1.bf16.msra.mxu0 %v2269
  %2611 = vmatprep.subr.bf16.mxu0 0
  %2612 = vmatpush1.bf16.msra.mxu0 %v2270
  %2613 = vmatprep.subr.bf16.mxu0 0
  %2614 = vmatpush1.bf16.msra.mxu0 %v2271
  %2615 = vmatprep.mubr.bf16.mxu0 %v2433
  %2616 = vmatmul.mubr.bf16.gmra.mrb[0].mxu0 %v2432
  %v2617 = vpop.f32.mrb[0].mxu0
  %v2618 = vadd.f32 %v2569, %v2617
  %v2619 = vpop.f32.mrb[0].mxu0
  %v2620 = vpop.f32.mrb[0].mxu0
  %v2621 = vadd.f32 %v2572, %v2620
  %v2622 = vpop.f32.mrb[0].mxu0
  %2623 = vmatprep.mubr.bf16.mxu0 %v2446
  %2624 = vmatmul.mubr.bf16.gmra.mrb[0].mxu0 %v2445
  %v2625 = vpop.f32.mrb[0].mxu0
  %v2626 = vadd.f32 %v2577, %v2625
  %v2627 = vpop.f32.mrb[0].mxu0
  %v2628 = vpop.f32.mrb[0].mxu0
  %v2629 = vadd.f32 %v2580, %v2628
  %v2630 = vpop.f32.mrb[0].mxu0
  %2631 = vdwg.mxu0
  %2632 = vmatprep.subr.bf16.mxu0 0
  %2633 = vmatpush1.bf16.msra.mxu0 %v2272
  %2634 = vmatprep.subr.bf16.mxu0 0
  %2635 = vmatpush1.bf16.msra.mxu0 %v2273
  %2636 = vmatprep.subr.bf16.mxu0 0
  %2637 = vmatpush1.bf16.msra.mxu0 %v2274
  %2638 = vmatprep.subr.bf16.mxu0 0
  %2639 = vmatpush1.bf16.msra.mxu0 %v2275
  %2640 = vmatprep.subr.bf16.mxu0 0
  %2641 = vmatpush1.bf16.msra.mxu0 %v2276
  %2642 = vmatprep.subr.bf16.mxu0 0
  %2643 = vmatpush1.bf16.msra.mxu0 %v2277
  %2644 = vmatprep.subr.bf16.mxu0 0
  %2645 = vmatpush1.bf16.msra.mxu0 %v2278
  %2646 = vmatprep.subr.bf16.mxu0 0
  %2647 = vmatpush1.bf16.msra.mxu0 %v2279
  %2648 = vmatprep.subr.bf16.mxu0 0
  %2649 = vmatpush1.bf16.msra.mxu0 %v2280
  %2650 = vmatprep.subr.bf16.mxu0 0
  %2651 = vmatpush1.bf16.msra.mxu0 %v2281
  %2652 = vmatprep.subr.bf16.mxu0 0
  %2653 = vmatpush1.bf16.msra.mxu0 %v2282
  %2654 = vmatprep.subr.bf16.mxu0 0
  %2655 = vmatpush1.bf16.msra.mxu0 %v2283
  %2656 = vmatprep.subr.bf16.mxu0 0
  %2657 = vmatpush1.bf16.msra.mxu0 %v2284
  %2658 = vmatprep.subr.bf16.mxu0 0
  %2659 = vmatpush1.bf16.msra.mxu0 %v2285
  %2660 = vmatprep.subr.bf16.mxu0 0
  %2661 = vmatpush1.bf16.msra.mxu0 %v2286
  %2662 = vmatprep.subr.bf16.mxu0 0
  %2663 = vmatpush1.bf16.msra.mxu0 %v2287
  %2664 = vmatprep.mubr.bf16.mxu0 %v2435
  %2665 = vmatmul.mubr.bf16.gmra.mrb[0].mxu0 %v2434
  %v2666 = vpop.f32.mrb[0].mxu0
  %v2667 = vadd.f32 %v2618, %v2666
  %v2668 = vpop.f32.mrb[0].mxu0
  %v2669 = vpop.f32.mrb[0].mxu0
  %v2670 = vadd.f32 %v2621, %v2669
  %v2671 = vpop.f32.mrb[0].mxu0
  %2672 = vmatprep.mubr.bf16.mxu0 %v2448
  %2673 = vmatmul.mubr.bf16.gmra.mrb[0].mxu0 %v2447
  %v2674 = vpop.f32.mrb[0].mxu0
  %v2675 = vadd.f32 %v2626, %v2674
  %v2676 = vpop.f32.mrb[0].mxu0
  %v2677 = vpop.f32.mrb[0].mxu0
  %v2678 = vadd.f32 %v2629, %v2677
  %v2679 = vpop.f32.mrb[0].mxu0
  %2680 = vdwg.mxu0
  %2681 = vmatprep.subr.bf16.mxu0 0
  %2682 = vmatpush1.bf16.msra.mxu0 %v2288
  %2683 = vmatprep.subr.bf16.mxu0 0
  %2684 = vmatpush1.bf16.msra.mxu0 %v2289
  %2685 = vmatprep.subr.bf16.mxu0 0
  %2686 = vmatpush1.bf16.msra.mxu0 %v2290
  %2687 = vmatprep.subr.bf16.mxu0 0
  %2688 = vmatpush1.bf16.msra.mxu0 %v2291
  %2689 = vmatprep.subr.bf16.mxu0 0
  %2690 = vmatpush1.bf16.msra.mxu0 %v2292
  %2691 = vmatprep.subr.bf16.mxu0 0
  %2692 = vmatpush1.bf16.msra.mxu0 %v2293
  %2693 = vmatprep.subr.bf16.mxu0 0
  %2694 = vmatpush1.bf16.msra.mxu0 %v2294
  %2695 = vmatprep.subr.bf16.mxu0 0
  %2696 = vmatpush1.bf16.msra.mxu0 %v2295
  %2697 = vmatprep.subr.bf16.mxu0 0
  %2698 = vmatpush1.bf16.msra.mxu0 %v2296
  %2699 = vmatprep.subr.bf16.mxu0 0
  %2700 = vmatpush1.bf16.msra.mxu0 %v2297
  %2701 = vmatprep.subr.bf16.mxu0 0
  %2702 = vmatpush1.bf16.msra.mxu0 %v2298
  %2703 = vmatprep.subr.bf16.mxu0 0
  %2704 = vmatpush1.bf16.msra.mxu0 %v2299
  %2705 = vmatprep.subr.bf16.mxu0 0
  %2706 = vmatpush1.bf16.msra.mxu0 %v2300
  %2707 = vmatprep.subr.bf16.mxu0 0
  %2708 = vmatpush1.bf16.msra.mxu0 %v2301
  %2709 = vmatprep.subr.bf16.mxu0 0
  %2710 = vmatpush1.bf16.msra.mxu0 %v2302
  %2711 = vmatprep.subr.bf16.mxu0 0
  %2712 = vmatpush1.bf16.msra.mxu0 %v2303
  %2713 = vmatprep.mubr.bf16.mxu0 %v2437
  %2714 = vmatmul.mubr.bf16.gmra.mrb[0].mxu0 %v2436
  %v2715 = vpop.f32.mrb[0].mxu0
  %v2716 = vadd.f32 %v2667, %v2715
  %v2717 = vpop.f32.mrb[0].mxu0
  %v2718 = vpop.f32.mrb[0].mxu0
  %v2719 = vadd.f32 %v2670, %v2718
  %v2720 = vpop.f32.mrb[0].mxu0
  %2721 = vmatprep.mubr.bf16.mxu0 %v2450
  %2722 = vmatmul.mubr.bf16.gmra.mrb[0].mxu0 %v2449
  %v2723 = vpop.f32.mrb[0].mxu0
  %v2724 = vadd.f32 %v2675, %v2723
  %v2725 = vpop.f32.mrb[0].mxu0
  %v2726 = vpop.f32.mrb[0].mxu0
  %v2727 = vadd.f32 %v2678, %v2726
  %v2728 = vpop.f32.mrb[0].mxu0
  %2729 = vdwg.mxu0
  %2730 = vmatprep.subr.bf16.mxu0 0
  %2731 = vmatpush1.bf16.msra.mxu0 %v2304
  %2732 = vmatprep.subr.bf16.mxu0 0
  %2733 = vmatpush1.bf16.msra.mxu0 %v2305
  %2734 = vmatprep.subr.bf16.mxu0 0
  %2735 = vmatpush1.bf16.msra.mxu0 %v2306
  %2736 = vmatprep.subr.bf16.mxu0 0
  %2737 = vmatpush1.bf16.msra.mxu0 %v2307
  %2738 = vmatprep.subr.bf16.mxu0 0
  %2739 = vmatpush1.bf16.msra.mxu0 %v2308
  %2740 = vmatprep.subr.bf16.mxu0 0
  %2741 = vmatpush1.bf16.msra.mxu0 %v2309
  %2742 = vmatprep.subr.bf16.mxu0 0
  %2743 = vmatpush1.bf16.msra.mxu0 %v2310
  %2744 = vmatprep.subr.bf16.mxu0 0
  %2745 = vmatpush1.bf16.msra.mxu0 %v2311
  %2746 = vmatprep.subr.bf16.mxu0 0
  %2747 = vmatpush1.bf16.msra.mxu0 %v2312
  %2748 = vmatprep.subr.bf16.mxu0 0
  %2749 = vmatpush1.bf16.msra.mxu0 %v2313
  %2750 = vmatprep.subr.bf16.mxu0 0
  %2751 = vmatpush1.bf16.msra.mxu0 %v2314
  %2752 = vmatprep.subr.bf16.mxu0 0
  %2753 = vmatpush1.bf16.msra.mxu0 %v2315
  %2754 = vmatprep.subr.bf16.mxu0 0
  %2755 = vmatpush1.bf16.msra.mxu0 %v2316
  %2756 = vmatprep.subr.bf16.mxu0 0
  %2757 = vmatpush1.bf16.msra.mxu0 %v2317
  %2758 = vmatprep.subr.bf16.mxu0 0
  %2759 = vmatpush1.bf16.msra.mxu0 %v2318
  %2760 = vmatprep.subr.bf16.mxu0 0
  %2761 = vmatpush1.bf16.msra.mxu0 %v2319
  %2762 = vmatprep.mubr.bf16.mxu0 %v2439
  %2763 = vmatmul.mubr.bf16.gmra.mrb[0].mxu0 %v2438
  %v2764 = vpop.f32.mrb[0].mxu0
  %v2765 = vadd.f32 %v2716, %v2764
  %v2766 = vpop.f32.mrb[0].mxu0
  %v2767 = vpop.f32.mrb[0].mxu0
  %v2768 = vadd.f32 %v2719, %v2767
  %v2769 = vpop.f32.mrb[0].mxu0
  %2770 = vmatprep.mubr.bf16.mxu0 %v2452
  %2771 = vmatmul.mubr.bf16.gmra.mrb[0].mxu0 %v2451
  %v2772 = vpop.f32.mrb[0].mxu0
  %v2773 = vadd.f32 %v2724, %v2772
  %v2774 = vpop.f32.mrb[0].mxu0
  %v2775 = vpop.f32.mrb[0].mxu0
  %v2776 = vadd.f32 %v2727, %v2775
  %v2777 = vpop.f32.mrb[0].mxu0
  %2778 = vdwg.mxu0
  %2779 = vmatprep.subr.bf16.mxu0 0
  %2780 = vmatpush1.bf16.msra.mxu0 %v2320
  %2781 = vmatprep.subr.bf16.mxu0 0
  %2782 = vmatpush1.bf16.msra.mxu0 %v2321
  %2783 = vmatprep.subr.bf16.mxu0 0
  %2784 = vmatpush1.bf16.msra.mxu0 %v2322
  %2785 = vmatprep.subr.bf16.mxu0 0
  %2786 = vmatpush1.bf16.msra.mxu0 %v2323
  %2787 = vmatprep.subr.bf16.mxu0 0
  %2788 = vmatpush1.bf16.msra.mxu0 0
  %2789 = vmatprep.subr.bf16.mxu0 0
  %2790 = vmatpush1.bf16.msra.mxu0 0
  %2791 = vmatprep.subr.bf16.mxu0 0
  %2792 = vmatpush1.bf16.msra.mxu0 0
  %2793 = vmatprep.subr.bf16.mxu0 0
  %2794 = vmatpush1.bf16.msra.mxu0 0
  %2795 = vmatprep.subr.bf16.mxu0 0
  %2796 = vmatpush1.bf16.msra.mxu0 0
  %2797 = vmatprep.subr.bf16.mxu0 0
  %2798 = vmatpush1.bf16.msra.mxu0 0
  %2799 = vmatprep.subr.bf16.mxu0 0
  %2800 = vmatpush1.bf16.msra.mxu0 0
  %2801 = vmatprep.subr.bf16.mxu0 0
  %2802 = vmatpush1.bf16.msra.mxu0 0
  %2803 = vmatprep.subr.bf16.mxu0 0
  %2804 = vmatpush1.bf16.msra.mxu0 0
  %2805 = vmatprep.subr.bf16.mxu0 0
  %2806 = vmatpush1.bf16.msra.mxu0 0
  %2807 = vmatprep.subr.bf16.mxu0 0
  %2808 = vmatpush1.bf16.msra.mxu0 0
  %2809 = vmatprep.subr.bf16.mxu0 0
  %2810 = vmatpush1.bf16.msra.mxu0 0
  %2811 = vmatprep.mubr.bf16.mxu0 0
  %2812 = vmatmul.mubr.bf16.gmra.mrb[0].mxu0 %v2480
  %v2813 = vpop.f32.mrb[0].mxu0
  %v2814 = vadd.f32 %v2765, %v2813
  %v2815 = vpop.f32.mrb[0].mxu0
  %v2816 = vpop.f32.mrb[0].mxu0
  %v2817 = vadd.f32 %v2768, %v2816
  %v2818 = vpop.f32.mrb[0].mxu0
  %2819 = vmatprep.mubr.bf16.mxu0 0
  %2820 = vmatmul.mubr.bf16.gmra.mrb[0].mxu0 %v2483
  %v2821 = vpop.f32.mrb[0].mxu0
  %v2822 = vadd.f32 %v2773, %v2821
  %v2823 = vpop.f32.mrb[0].mxu0
  %v2824 = vpop.f32.mrb[0].mxu0
  %v2825 = vadd.f32 %v2776, %v2824
  %v2826 = vpop.f32.mrb[0].mxu0
  %2827 = vdwg.mxu0
  %v2828 = vpack.c.bf16 %v2817, %v2814
  %v2829 = vpack.c.bf16 %v2825, %v2822
  %2830 = vst [vmem:[#allocation5] sm:$0xff] %v2828
  %2831 = vst [vmem:[#allocation5 + $0x8] sm:$0xff] %v2829
  %s2832 = scalar_lea.vmem %s0, 24
  %v2833 = vld [vmem:[%s2832] sm:$0xff]
  %v2834 = vld [vmem:[%s2832 + $0xc] sm:$0xff]
  %v2837 = vunpack.c.l.b16 %v2833
  %v2838 = vunpack.c.h.b16 %v2833
  %v2839 = vunpack.c.l.b16 %v2834
  %v2840 = vunpack.c.h.b16 %v2834
  %v2841 = vpack.c.b16 %v2839, %v2837
  %v2842 = vpack.c.b16 %v2840, %v2838
  %2845 = vst [vmem:[#allocation2] sm:$0xff] %v2841
  %2846 = vst [vmem:[#allocation2 + $0x8] sm:$0xff] %v2842
  %v2847 = vld [vmem:[%s2832] sm:$0xff]
  %v2848 = vld [vmem:[%s2832 + $0x8] sm:$0xf]
  %v2849 = vld [vmem:[%s2832 + $0xc] sm:$0xff]
  %v2850 = vld [vmem:[%s2832 + $0x14] sm:$0xf]
  %v2855 = vunpack.c.l.b16 %v2847
  %v2856 = vunpack.c.h.b16 %v2847
  %v2857 = vunpack.c.l.b16 %v2848
  %v2858 = vunpack.c.l.b16 %v2849
  %v2859 = vunpack.c.h.b16 %v2849
  %v2860 = vunpack.c.l.b16 %v2850
  %v2861 = vpack.c.b16 %v2858, %v2855
  %v2862 = vpack.c.b16 %v2859, %v2856
  %v2863 = vpack.c.b16 %v2860, %v2857
  %2864 = vrot.lane.b32.xlu0 %v2861, 127
  %v2865 = vpop.permute.xlu0 %2864
  %2866 = vrot.lane.b32.xlu0 %v2862, 127
  %v2867 = vpop.permute.xlu0 %2866
  %2868 = vrot.lane.b32.xlu0 %v2863, 127
  %v2869 = vpop.permute.xlu0 %2868
  %v2870 = vsel %vm70, %v2865, %v2867
  %v2871 = vsel %vm70, %v2867, %v2869
  %2874 = vst [vmem:[#allocation2 + $0x10] sm:$0xff] %v2870
  %2875 = vst [vmem:[#allocation2 + $0x18] sm:$0xff] %v2871
  %v2876 = vld [vmem:[%s2832] sm:$0xff]
  %v2877 = vld [vmem:[%s2832 + $0x8] sm:$0xf]
  %v2878 = vld [vmem:[%s2832 + $0xc] sm:$0xff]
  %v2879 = vld [vmem:[%s2832 + $0x14] sm:$0xf]
  %v2884 = vunpack.c.l.b16 %v2876
  %v2885 = vunpack.c.h.b16 %v2876
  %v2886 = vunpack.c.l.b16 %v2877
  %v2887 = vunpack.c.l.b16 %v2878
  %v2888 = vunpack.c.h.b16 %v2878
  %v2889 = vunpack.c.l.b16 %v2879
  %v2890 = vpack.c.b16 %v2887, %v2884
  %v2891 = vpack.c.b16 %v2888, %v2885
  %v2892 = vpack.c.b16 %v2889, %v2886
  %2893 = vrot.lane.b32.xlu0 %v2890, 126
  %v2894 = vpop.permute.xlu0 %2893
  %2895 = vrot.lane.b32.xlu0 %v2891, 126
  %v2896 = vpop.permute.xlu0 %2895
  %2897 = vrot.lane.b32.xlu0 %v2892, 126
  %v2898 = vpop.permute.xlu0 %2897
  %v2899 = vsel %vm100, %v2894, %v2896
  %v2900 = vsel %vm100, %v2896, %v2898
  %2903 = vst [vmem:[#allocation2 + $0x20] sm:$0xff] %v2899
  %2904 = vst [vmem:[#allocation2 + $0x28] sm:$0xff] %v2900
  %v2905 = vld [vmem:[%s2832] sm:$0xff]
  %v2906 = vld [vmem:[%s2832 + $0x8] sm:$0xf]
  %v2907 = vld [vmem:[%s2832 + $0xc] sm:$0xff]
  %v2908 = vld [vmem:[%s2832 + $0x14] sm:$0xf]
  %v2913 = vunpack.c.l.b16 %v2905
  %v2914 = vunpack.c.h.b16 %v2905
  %v2915 = vunpack.c.l.b16 %v2906
  %v2916 = vunpack.c.l.b16 %v2907
  %v2917 = vunpack.c.h.b16 %v2907
  %v2918 = vunpack.c.l.b16 %v2908
  %v2919 = vpack.c.b16 %v2916, %v2913
  %v2920 = vpack.c.b16 %v2917, %v2914
  %v2921 = vpack.c.b16 %v2918, %v2915
  %2922 = vrot.lane.b32.xlu0 %v2919, 125
  %v2923 = vpop.permute.xlu0 %2922
  %2924 = vrot.lane.b32.xlu0 %v2920, 125
  %v2925 = vpop.permute.xlu0 %2924
  %2926 = vrot.lane.b32.xlu0 %v2921, 125
  %v2927 = vpop.permute.xlu0 %2926
  %v2928 = vsel %vm130, %v2923, %v2925
  %v2929 = vsel %vm130, %v2925, %v2927
  %2932 = vst [vmem:[#allocation2 + $0x30] sm:$0xff] %v2928
  %2933 = vst [vmem:[#allocation2 + $0x38] sm:$0xff] %v2929
  %v2934 = vld [vmem:[%s2832] sm:$0xff]
  %v2935 = vld [vmem:[%s2832 + $0x8] sm:$0xf]
  %v2936 = vld [vmem:[%s2832 + $0xc] sm:$0xff]
  %v2937 = vld [vmem:[%s2832 + $0x14] sm:$0xf]
  %v2942 = vunpack.c.l.b16 %v2934
  %v2943 = vunpack.c.h.b16 %v2934
  %v2944 = vunpack.c.l.b16 %v2935
  %v2945 = vunpack.c.l.b16 %v2936
  %v2946 = vunpack.c.h.b16 %v2936
  %v2947 = vunpack.c.l.b16 %v2937
  %v2948 = vpack.c.b16 %v2945, %v2942
  %v2949 = vpack.c.b16 %v2946, %v2943
  %v2950 = vpack.c.b16 %v2947, %v2944
  %2951 = vrot.lane.b32.xlu0 %v2948, 124
  %v2952 = vpop.permute.xlu0 %2951
  %2953 = vrot.lane.b32.xlu0 %v2949, 124
  %v2954 = vpop.permute.xlu0 %2953
  %2955 = vrot.lane.b32.xlu0 %v2950, 124
  %v2956 = vpop.permute.xlu0 %2955
  %v2957 = vsel %vm160, %v2952, %v2954
  %v2958 = vsel %vm160, %v2954, %v2956
  %2961 = vst [vmem:[#allocation2 + $0x40] sm:$0xff] %v2957
  %2962 = vst [vmem:[#allocation2 + $0x48] sm:$0xff] %v2958
  %v2963 = vld [vmem:[%s2832] sm:$0xff]
  %v2964 = vld [vmem:[%s2832 + $0x8] sm:$0xf]
  %v2965 = vld [vmem:[%s2832 + $0xc] sm:$0xff]
  %v2966 = vld [vmem:[%s2832 + $0x14] sm:$0xf]
  %v2971 = vunpack.c.l.b16 %v2963
  %v2972 = vunpack.c.h.b16 %v2963
  %v2973 = vunpack.c.l.b16 %v2964
  %v2974 = vunpack.c.l.b16 %v2965
  %v2975 = vunpack.c.h.b16 %v2965
  %v2976 = vunpack.c.l.b16 %v2966
  %v2977 = vpack.c.b16 %v2974, %v2971
  %v2978 = vpack.c.b16 %v2975, %v2972
  %v2979 = vpack.c.b16 %v2976, %v2973
  %2980 = vrot.lane.b32.xlu0 %v2977, 112
  %v2981 = vpop.permute.xlu0 %2980
  %2982 = vrot.lane.b32.xlu0 %v2978, 112
  %v2983 = vpop.permute.xlu0 %2982
  %2984 = vrot.lane.b32.xlu0 %v2979, 112
  %v2985 = vpop.permute.xlu0 %2984
  %v2986 = vsel %vm190, %v2981, %v2983
  %v2987 = vsel %vm190, %v2983, %v2985
  %2990 = vst [vmem:[#allocation2 + $0x50] sm:$0xff] %v2986
  %2991 = vst [vmem:[#allocation2 + $0x58] sm:$0xff] %v2987
  %v2992 = vld [vmem:[%s2832] sm:$0xff]
  %v2993 = vld [vmem:[%s2832 + $0x8] sm:$0xf]
  %v2994 = vld [vmem:[%s2832 + $0xc] sm:$0xff]
  %v2995 = vld [vmem:[%s2832 + $0x14] sm:$0xf]
  %v3000 = vunpack.c.l.b16 %v2992
  %v3001 = vunpack.c.h.b16 %v2992
  %v3002 = vunpack.c.l.b16 %v2993
  %v3003 = vunpack.c.l.b16 %v2994
  %v3004 = vunpack.c.h.b16 %v2994
  %v3005 = vunpack.c.l.b16 %v2995
  %v3006 = vpack.c.b16 %v3003, %v3000
  %v3007 = vpack.c.b16 %v3004, %v3001
  %v3008 = vpack.c.b16 %v3005, %v3002
  %3009 = vrot.lane.b32.xlu0 %v3006, 111
  %v3010 = vpop.permute.xlu0 %3009
  %3011 = vrot.lane.b32.xlu0 %v3007, 111
  %v3012 = vpop.permute.xlu0 %3011
  %3013 = vrot.lane.b32.xlu0 %v3008, 111
  %v3014 = vpop.permute.xlu0 %3013
  %v3015 = vsel %vm220, %v3010, %v3012
  %v3016 = vsel %vm220, %v3012, %v3014
  %3019 = vst [vmem:[#allocation2 + $0x60] sm:$0xff] %v3015
  %3020 = vst [vmem:[#allocation2 + $0x68] sm:$0xff] %v3016
  %v3021 = vld [vmem:[%s2832] sm:$0xff]
  %v3022 = vld [vmem:[%s2832 + $0x8] sm:$0xf]
  %v3023 = vld [vmem:[%s2832 + $0xc] sm:$0xff]
  %v3024 = vld [vmem:[%s2832 + $0x14] sm:$0xf]
  %v3029 = vunpack.c.l.b16 %v3021
  %v3030 = vunpack.c.h.b16 %v3021
  %v3031 = vunpack.c.l.b16 %v3022
  %v3032 = vunpack.c.l.b16 %v3023
  %v3033 = vunpack.c.h.b16 %v3023
  %v3034 = vunpack.c.l.b16 %v3024
  %v3035 = vpack.c.b16 %v3032, %v3029
  %v3036 = vpack.c.b16 %v3033, %v3030
  %v3037 = vpack.c.b16 %v3034, %v3031
  %3038 = vrot.lane.b32.xlu0 %v3035, 110
  %v3039 = vpop.permute.xlu0 %3038
  %3040 = vrot.lane.b32.xlu0 %v3036, 110
  %v3041 = vpop.permute.xlu0 %3040
  %3042 = vrot.lane.b32.xlu0 %v3037, 110
  %v3043 = vpop.permute.xlu0 %3042
  %v3044 = vsel %vm250, %v3039, %v3041
  %v3045 = vsel %vm250, %v3041, %v3043
  %3048 = vst [vmem:[#allocation2 + $0x70] sm:$0xff] %v3044
  %3049 = vst [vmem:[#allocation2 + $0x78] sm:$0xff] %v3045
  %v3050 = vld [vmem:[%s2832] sm:$0xff]
  %v3051 = vld [vmem:[%s2832 + $0x8] sm:$0xf]
  %v3052 = vld [vmem:[%s2832 + $0xc] sm:$0xff]
  %v3053 = vld [vmem:[%s2832 + $0x14] sm:$0xf]
  %v3058 = vunpack.c.l.b16 %v3050
  %v3059 = vunpack.c.h.b16 %v3050
  %v3060 = vunpack.c.l.b16 %v3051
  %v3061 = vunpack.c.l.b16 %v3052
  %v3062 = vunpack.c.h.b16 %v3052
  %v3063 = vunpack.c.l.b16 %v3053
  %v3064 = vpack.c.b16 %v3061, %v3058
  %v3065 = vpack.c.b16 %v3062, %v3059
  %v3066 = vpack.c.b16 %v3063, %v3060
  %3067 = vrot.lane.b32.xlu0 %v3064, 109
  %v3068 = vpop.permute.xlu0 %3067
  %3069 = vrot.lane.b32.xlu0 %v3065, 109
  %v3070 = vpop.permute.xlu0 %3069
  %3071 = vrot.lane.b32.xlu0 %v3066, 109
  %v3072 = vpop.permute.xlu0 %3071
  %v3073 = vsel %vm280, %v3068, %v3070
  %v3074 = vsel %vm280, %v3070, %v3072
  %3077 = vst [vmem:[#allocation2 + $0x80] sm:$0xff] %v3073
  %3078 = vst [vmem:[#allocation2 + $0x88] sm:$0xff] %v3074
  %v3079 = vld [vmem:[%s2832] sm:$0xff]
  %v3080 = vld [vmem:[%s2832 + $0x8] sm:$0xf]
  %v3081 = vld [vmem:[%s2832 + $0xc] sm:$0xff]
  %v3082 = vld [vmem:[%s2832 + $0x14] sm:$0xf]
  %v3087 = vunpack.c.l.b16 %v3079
  %v3088 = vunpack.c.h.b16 %v3079
  %v3089 = vunpack.c.l.b16 %v3080
  %v3090 = vunpack.c.l.b16 %v3081
  %v3091 = vunpack.c.h.b16 %v3081
  %v3092 = vunpack.c.l.b16 %v3082
  %v3093 = vpack.c.b16 %v3090, %v3087
  %v3094 = vpack.c.b16 %v3091, %v3088
  %v3095 = vpack.c.b16 %v3092, %v3089
  %3096 = vrot.lane.b32.xlu0 %v3093, 108
  %v3097 = vpop.permute.xlu0 %3096
  %3098 = vrot.lane.b32.xlu0 %v3094, 108
  %v3099 = vpop.permute.xlu0 %3098
  %3100 = vrot.lane.b32.xlu0 %v3095, 108
  %v3101 = vpop.permute.xlu0 %3100
  %v3102 = vsel %vm310, %v3097, %v3099
  %v3103 = vsel %vm310, %v3099, %v3101
  %3106 = vst [vmem:[#allocation2 + $0x90] sm:$0xff] %v3102
  %3107 = vst [vmem:[#allocation2 + $0x98] sm:$0xff] %v3103
  %v3108 = vld [vmem:[%s2832] sm:$0xff]
  %v3109 = vld [vmem:[%s2832 + $0x8] sm:$0xf]
  %v3110 = vld [vmem:[%s2832 + $0xc] sm:$0xff]
  %v3111 = vld [vmem:[%s2832 + $0x14] sm:$0xf]
  %v3116 = vunpack.c.l.b16 %v3108
  %v3117 = vunpack.c.h.b16 %v3108
  %v3118 = vunpack.c.l.b16 %v3109
  %v3119 = vunpack.c.l.b16 %v3110
  %v3120 = vunpack.c.h.b16 %v3110
  %v3121 = vunpack.c.l.b16 %v3111
  %v3122 = vpack.c.b16 %v3119, %v3116
  %v3123 = vpack.c.b16 %v3120, %v3117
  %v3124 = vpack.c.b16 %v3121, %v3118
  %3125 = vrot.lane.b32.xlu0 %v3122, 96
  %v3126 = vpop.permute.xlu0 %3125
  %3127 = vrot.lane.b32.xlu0 %v3123, 96
  %v3128 = vpop.permute.xlu0 %3127
  %3129 = vrot.lane.b32.xlu0 %v3124, 96
  %v3130 = vpop.permute.xlu0 %3129
  %v3131 = vsel %vm340, %v3126, %v3128
  %v3132 = vsel %vm340, %v3128, %v3130
  %3135 = vst [vmem:[#allocation2 + $0xa0] sm:$0xff] %v3131
  %3136 = vst [vmem:[#allocation2 + $0xa8] sm:$0xff] %v3132
  %v3137 = vld [vmem:[%s2832] sm:$0xff]
  %v3138 = vld [vmem:[%s2832 + $0x8] sm:$0xf]
  %v3139 = vld [vmem:[%s2832 + $0xc] sm:$0xff]
  %v3140 = vld [vmem:[%s2832 + $0x14] sm:$0xf]
  %v3145 = vunpack.c.l.b16 %v3137
  %v3146 = vunpack.c.h.b16 %v3137
  %v3147 = vunpack.c.l.b16 %v3138
  %v3148 = vunpack.c.l.b16 %v3139
  %v3149 = vunpack.c.h.b16 %v3139
  %v3150 = vunpack.c.l.b16 %v3140
  %v3151 = vpack.c.b16 %v3148, %v3145
  %v3152 = vpack.c.b16 %v3149, %v3146
  %v3153 = vpack.c.b16 %v3150, %v3147
  %3154 = vrot.lane.b32.xlu0 %v3151, 95
  %v3155 = vpop.permute.xlu0 %3154
  %3156 = vrot.lane.b32.xlu0 %v3152, 95
  %v3157 = vpop.permute.xlu0 %3156
  %3158 = vrot.lane.b32.xlu0 %v3153, 95
  %v3159 = vpop.permute.xlu0 %3158
  %v3160 = vsel %vm370, %v3155, %v3157
  %v3161 = vsel %vm370, %v3157, %v3159
  %3164 = vst [vmem:[#allocation2 + $0xb0] sm:$0xff] %v3160
  %3165 = vst [vmem:[#allocation2 + $0xb8] sm:$0xff] %v3161
  %v3166 = vld [vmem:[%s2832] sm:$0xff]
  %v3167 = vld [vmem:[%s2832 + $0x8] sm:$0xf]
  %v3168 = vld [vmem:[%s2832 + $0xc] sm:$0xff]
  %v3169 = vld [vmem:[%s2832 + $0x14] sm:$0xf]
  %v3174 = vunpack.c.l.b16 %v3166
  %v3175 = vunpack.c.h.b16 %v3166
  %v3176 = vunpack.c.l.b16 %v3167
  %v3177 = vunpack.c.l.b16 %v3168
  %v3178 = vunpack.c.h.b16 %v3168
  %v3179 = vunpack.c.l.b16 %v3169
  %v3180 = vpack.c.b16 %v3177, %v3174
  %v3181 = vpack.c.b16 %v3178, %v3175
  %v3182 = vpack.c.b16 %v3179, %v3176
  %3183 = vrot.lane.b32.xlu0 %v3180, 94
  %v3184 = vpop.permute.xlu0 %3183
  %3185 = vrot.lane.b32.xlu0 %v3181, 94
  %v3186 = vpop.permute.xlu0 %3185
  %3187 = vrot.lane.b32.xlu0 %v3182, 94
  %v3188 = vpop.permute.xlu0 %3187
  %v3189 = vsel %vm400, %v3184, %v3186
  %v3190 = vsel %vm400, %v3186, %v3188
  %3193 = vst [vmem:[#allocation2 + $0xc0] sm:$0xff] %v3189
  %3194 = vst [vmem:[#allocation2 + $0xc8] sm:$0xff] %v3190
  %v3195 = vld [vmem:[%s2832] sm:$0xff]
  %v3196 = vld [vmem:[%s2832 + $0x8] sm:$0xf]
  %v3197 = vld [vmem:[%s2832 + $0xc] sm:$0xff]
  %v3198 = vld [vmem:[%s2832 + $0x14] sm:$0xf]
  %v3203 = vunpack.c.l.b16 %v3195
  %v3204 = vunpack.c.h.b16 %v3195
  %v3205 = vunpack.c.l.b16 %v3196
  %v3206 = vunpack.c.l.b16 %v3197
  %v3207 = vunpack.c.h.b16 %v3197
  %v3208 = vunpack.c.l.b16 %v3198
  %v3209 = vpack.c.b16 %v3206, %v3203
  %v3210 = vpack.c.b16 %v3207, %v3204
  %v3211 = vpack.c.b16 %v3208, %v3205
  %3212 = vrot.lane.b32.xlu0 %v3209, 93
  %v3213 = vpop.permute.xlu0 %3212
  %3214 = vrot.lane.b32.xlu0 %v3210, 93
  %v3215 = vpop.permute.xlu0 %3214
  %3216 = vrot.lane.b32.xlu0 %v3211, 93
  %v3217 = vpop.permute.xlu0 %3216
  %v3218 = vsel %vm430, %v3213, %v3215
  %v3219 = vsel %vm430, %v3215, %v3217
  %3222 = vst [vmem:[#allocation2 + $0xd0] sm:$0xff] %v3218
  %3223 = vst [vmem:[#allocation2 + $0xd8] sm:$0xff] %v3219
  %v3224 = vld [vmem:[%s2832] sm:$0xff]
  %v3225 = vld [vmem:[%s2832 + $0x8] sm:$0xf]
  %v3226 = vld [vmem:[%s2832 + $0xc] sm:$0xff]
  %v3227 = vld [vmem:[%s2832 + $0x14] sm:$0xf]
  %v3232 = vunpack.c.l.b16 %v3224
  %v3233 = vunpack.c.h.b16 %v3224
  %v3234 = vunpack.c.l.b16 %v3225
  %v3235 = vunpack.c.l.b16 %v3226
  %v3236 = vunpack.c.h.b16 %v3226
  %v3237 = vunpack.c.l.b16 %v3227
  %v3238 = vpack.c.b16 %v3235, %v3232
  %v3239 = vpack.c.b16 %v3236, %v3233
  %v3240 = vpack.c.b16 %v3237, %v3234
  %3241 = vrot.lane.b32.xlu0 %v3238, 92
  %v3242 = vpop.permute.xlu0 %3241
  %3243 = vrot.lane.b32.xlu0 %v3239, 92
  %v3244 = vpop.permute.xlu0 %3243
  %3245 = vrot.lane.b32.xlu0 %v3240, 92
  %v3246 = vpop.permute.xlu0 %3245
  %v3247 = vsel %vm460, %v3242, %v3244
  %v3248 = vsel %vm460, %v3244, %v3246
  %3251 = vst [vmem:[#allocation2 + $0xe0] sm:$0xff] %v3247
  %3252 = vst [vmem:[#allocation2 + $0xe8] sm:$0xff] %v3248
  %v3253 = vld [vmem:[%s2832] sm:$0xff]
  %v3254 = vld [vmem:[%s2832 + $0x8] sm:$0xf]
  %v3255 = vld [vmem:[%s2832 + $0xc] sm:$0xff]
  %v3256 = vld [vmem:[%s2832 + $0x14] sm:$0xf]
  %v3261 = vunpack.c.l.b16 %v3253
  %v3262 = vunpack.c.h.b16 %v3253
  %v3263 = vunpack.c.l.b16 %v3254
  %v3264 = vunpack.c.l.b16 %v3255
  %v3265 = vunpack.c.h.b16 %v3255
  %v3266 = vunpack.c.l.b16 %v3256
  %v3267 = vpack.c.b16 %v3264, %v3261
  %v3268 = vpack.c.b16 %v3265, %v3262
  %v3269 = vpack.c.b16 %v3266, %v3263
  %3270 = vrot.lane.b32.xlu0 %v3267, 80
  %v3271 = vpop.permute.xlu0 %3270
  %3272 = vrot.lane.b32.xlu0 %v3268, 80
  %v3273 = vpop.permute.xlu0 %3272
  %3274 = vrot.lane.b32.xlu0 %v3269, 80
  %v3275 = vpop.permute.xlu0 %3274
  %v3276 = vsel %vm490, %v3271, %v3273
  %v3277 = vsel %vm490, %v3273, %v3275
  %3280 = vst [vmem:[#allocation2 + $0xf0] sm:$0xff] %v3276
  %3281 = vst [vmem:[#allocation2 + $0xf8] sm:$0xff] %v3277
  %v3282 = vld [vmem:[%s2832] sm:$0xff]
  %v3283 = vld [vmem:[%s2832 + $0x8] sm:$0xf]
  %v3284 = vld [vmem:[%s2832 + $0xc] sm:$0xff]
  %v3285 = vld [vmem:[%s2832 + $0x14] sm:$0xf]
  %v3290 = vunpack.c.l.b16 %v3282
  %v3291 = vunpack.c.h.b16 %v3282
  %v3292 = vunpack.c.l.b16 %v3283
  %v3293 = vunpack.c.l.b16 %v3284
  %v3294 = vunpack.c.h.b16 %v3284
  %v3295 = vunpack.c.l.b16 %v3285
  %v3296 = vpack.c.b16 %v3293, %v3290
  %v3297 = vpack.c.b16 %v3294, %v3291
  %v3298 = vpack.c.b16 %v3295, %v3292
  %3299 = vrot.lane.b32.xlu0 %v3296, 79
  %v3300 = vpop.permute.xlu0 %3299
  %3301 = vrot.lane.b32.xlu0 %v3297, 79
  %v3302 = vpop.permute.xlu0 %3301
  %3303 = vrot.lane.b32.xlu0 %v3298, 79
  %v3304 = vpop.permute.xlu0 %3303
  %v3305 = vsel %vm520, %v3300, %v3302
  %v3306 = vsel %vm520, %v3302, %v3304
  %3309 = vst [vmem:[#allocation2 + $0x100] sm:$0xff] %v3305
  %3310 = vst [vmem:[#allocation2 + $0x108] sm:$0xff] %v3306
  %v3311 = vld [vmem:[%s2832] sm:$0xff]
  %v3312 = vld [vmem:[%s2832 + $0x8] sm:$0xf]
  %v3313 = vld [vmem:[%s2832 + $0xc] sm:$0xff]
  %v3314 = vld [vmem:[%s2832 + $0x14] sm:$0xf]
  %v3319 = vunpack.c.l.b16 %v3311
  %v3320 = vunpack.c.h.b16 %v3311
  %v3321 = vunpack.c.l.b16 %v3312
  %v3322 = vunpack.c.l.b16 %v3313
  %v3323 = vunpack.c.h.b16 %v3313
  %v3324 = vunpack.c.l.b16 %v3314
  %v3325 = vpack.c.b16 %v3322, %v3319
  %v3326 = vpack.c.b16 %v3323, %v3320
  %v3327 = vpack.c.b16 %v3324, %v3321
  %3328 = vrot.lane.b32.xlu0 %v3325, 78
  %v3329 = vpop.permute.xlu0 %3328
  %3330 = vrot.lane.b32.xlu0 %v3326, 78
  %v3331 = vpop.permute.xlu0 %3330
  %3332 = vrot.lane.b32.xlu0 %v3327, 78
  %v3333 = vpop.permute.xlu0 %3332
  %v3334 = vsel %vm550, %v3329, %v3331
  %v3335 = vsel %vm550, %v3331, %v3333
  %3338 = vst [vmem:[#allocation2 + $0x110] sm:$0xff] %v3334
  %3339 = vst [vmem:[#allocation2 + $0x118] sm:$0xff] %v3335
  %v3340 = vld [vmem:[%s2832] sm:$0xff]
  %v3341 = vld [vmem:[%s2832 + $0x8] sm:$0xf]
  %v3342 = vld [vmem:[%s2832 + $0xc] sm:$0xff]
  %v3343 = vld [vmem:[%s2832 + $0x14] sm:$0xf]
  %v3348 = vunpack.c.l.b16 %v3340
  %v3349 = vunpack.c.h.b16 %v3340
  %v3350 = vunpack.c.l.b16 %v3341
  %v3351 = vunpack.c.l.b16 %v3342
  %v3352 = vunpack.c.h.b16 %v3342
  %v3353 = vunpack.c.l.b16 %v3343
  %v3354 = vpack.c.b16 %v3351, %v3348
  %v3355 = vpack.c.b16 %v3352, %v3349
  %v3356 = vpack.c.b16 %v3353, %v3350
  %3357 = vrot.lane.b32.xlu0 %v3354, 77
  %v3358 = vpop.permute.xlu0 %3357
  %3359 = vrot.lane.b32.xlu0 %v3355, 77
  %v3360 = vpop.permute.xlu0 %3359
  %3361 = vrot.lane.b32.xlu0 %v3356, 77
  %v3362 = vpop.permute.xlu0 %3361
  %v3363 = vsel %vm580, %v3358, %v3360
  %v3364 = vsel %vm580, %v3360, %v3362
  %3367 = vst [vmem:[#allocation2 + $0x120] sm:$0xff] %v3363
  %3368 = vst [vmem:[#allocation2 + $0x128] sm:$0xff] %v3364
  %v3369 = vld [vmem:[%s2832] sm:$0xff]
  %v3370 = vld [vmem:[%s2832 + $0x8] sm:$0xf]
  %v3371 = vld [vmem:[%s2832 + $0xc] sm:$0xff]
  %v3372 = vld [vmem:[%s2832 + $0x14] sm:$0xf]
  %v3377 = vunpack.c.l.b16 %v3369
  %v3378 = vunpack.c.h.b16 %v3369
  %v3379 = vunpack.c.l.b16 %v3370
  %v3380 = vunpack.c.l.b16 %v3371
  %v3381 = vunpack.c.h.b16 %v3371
  %v3382 = vunpack.c.l.b16 %v3372
  %v3383 = vpack.c.b16 %v3380, %v3377
  %v3384 = vpack.c.b16 %v3381, %v3378
  %v3385 = vpack.c.b16 %v3382, %v3379
  %3386 = vrot.lane.b32.xlu0 %v3383, 76
  %v3387 = vpop.permute.xlu0 %3386
  %3388 = vrot.lane.b32.xlu0 %v3384, 76
  %v3389 = vpop.permute.xlu0 %3388
  %3390 = vrot.lane.b32.xlu0 %v3385, 76
  %v3391 = vpop.permute.xlu0 %3390
  %v3392 = vsel %vm610, %v3387, %v3389
  %v3393 = vsel %vm610, %v3389, %v3391
  %3396 = vst [vmem:[#allocation2 + $0x130] sm:$0xff] %v3392
  %3397 = vst [vmem:[#allocation2 + $0x138] sm:$0xff] %v3393
  %v3398 = vld [vmem:[%s2832] sm:$0xff]
  %v3399 = vld [vmem:[%s2832 + $0x8] sm:$0xf]
  %v3400 = vld [vmem:[%s2832 + $0xc] sm:$0xff]
  %v3401 = vld [vmem:[%s2832 + $0x14] sm:$0xf]
  %v3406 = vunpack.c.l.b16 %v3398
  %v3407 = vunpack.c.h.b16 %v3398
  %v3408 = vunpack.c.l.b16 %v3399
  %v3409 = vunpack.c.l.b16 %v3400
  %v3410 = vunpack.c.h.b16 %v3400
  %v3411 = vunpack.c.l.b16 %v3401
  %v3412 = vpack.c.b16 %v3409, %v3406
  %v3413 = vpack.c.b16 %v3410, %v3407
  %v3414 = vpack.c.b16 %v3411, %v3408
  %3415 = vrot.lane.b32.xlu0 %v3412, 64
  %v3416 = vpop.permute.xlu0 %3415
  %3417 = vrot.lane.b32.xlu0 %v3413, 64
  %v3418 = vpop.permute.xlu0 %3417
  %3419 = vrot.lane.b32.xlu0 %v3414, 64
  %v3420 = vpop.permute.xlu0 %3419
  %v3421 = vsel %vm640, %v3416, %v3418
  %v3422 = vsel %vm640, %v3418, %v3420
  %3425 = vst [vmem:[#allocation2 + $0x140] sm:$0xff] %v3421
  %3426 = vst [vmem:[#allocation2 + $0x148] sm:$0xff] %v3422
  %v3427 = vld [vmem:[%s2832] sm:$0xff]
  %v3428 = vld [vmem:[%s2832 + $0x8] sm:$0xf]
  %v3429 = vld [vmem:[%s2832 + $0xc] sm:$0xff]
  %v3430 = vld [vmem:[%s2832 + $0x14] sm:$0xf]
  %v3435 = vunpack.c.l.b16 %v3427
  %v3436 = vunpack.c.h.b16 %v3427
  %v3437 = vunpack.c.l.b16 %v3428
  %v3438 = vunpack.c.l.b16 %v3429
  %v3439 = vunpack.c.h.b16 %v3429
  %v3440 = vunpack.c.l.b16 %v3430
  %v3441 = vpack.c.b16 %v3438, %v3435
  %v3442 = vpack.c.b16 %v3439, %v3436
  %v3443 = vpack.c.b16 %v3440, %v3437
  %3444 = vrot.lane.b32.xlu0 %v3441, 63
  %v3445 = vpop.permute.xlu0 %3444
  %3446 = vrot.lane.b32.xlu0 %v3442, 63
  %v3447 = vpop.permute.xlu0 %3446
  %3448 = vrot.lane.b32.xlu0 %v3443, 63
  %v3449 = vpop.permute.xlu0 %3448
  %v3450 = vsel %vm670, %v3445, %v3447
  %v3451 = vsel %vm670, %v3447, %v3449
  %3454 = vst [vmem:[#allocation2 + $0x150] sm:$0xff] %v3450
  %3455 = vst [vmem:[#allocation2 + $0x158] sm:$0xff] %v3451
  %v3456 = vld [vmem:[%s2832] sm:$0xff]
  %v3457 = vld [vmem:[%s2832 + $0x8] sm:$0xf]
  %v3458 = vld [vmem:[%s2832 + $0xc] sm:$0xff]
  %v3459 = vld [vmem:[%s2832 + $0x14] sm:$0xf]
  %v3464 = vunpack.c.l.b16 %v3456
  %v3465 = vunpack.c.h.b16 %v3456
  %v3466 = vunpack.c.l.b16 %v3457
  %v3467 = vunpack.c.l.b16 %v3458
  %v3468 = vunpack.c.h.b16 %v3458
  %v3469 = vunpack.c.l.b16 %v3459
  %v3470 = vpack.c.b16 %v3467, %v3464
  %v3471 = vpack.c.b16 %v3468, %v3465
  %v3472 = vpack.c.b16 %v3469, %v3466
  %3473 = vrot.lane.b32.xlu0 %v3470, 62
  %v3474 = vpop.permute.xlu0 %3473
  %3475 = vrot.lane.b32.xlu0 %v3471, 62
  %v3476 = vpop.permute.xlu0 %3475
  %3477 = vrot.lane.b32.xlu0 %v3472, 62
  %v3478 = vpop.permute.xlu0 %3477
  %v3479 = vsel %vm700, %v3474, %v3476
  %v3480 = vsel %vm700, %v3476, %v3478
  %3483 = vst [vmem:[#allocation2 + $0x160] sm:$0xff] %v3479
  %3484 = vst [vmem:[#allocation2 + $0x168] sm:$0xff] %v3480
  %v3485 = vld [vmem:[%s2832] sm:$0xff]
  %v3486 = vld [vmem:[%s2832 + $0x8] sm:$0xf]
  %v3487 = vld [vmem:[%s2832 + $0xc] sm:$0xff]
  %v3488 = vld [vmem:[%s2832 + $0x14] sm:$0xf]
  %v3493 = vunpack.c.l.b16 %v3485
  %v3494 = vunpack.c.h.b16 %v3485
  %v3495 = vunpack.c.l.b16 %v3486
  %v3496 = vunpack.c.l.b16 %v3487
  %v3497 = vunpack.c.h.b16 %v3487
  %v3498 = vunpack.c.l.b16 %v3488
  %v3499 = vpack.c.b16 %v3496, %v3493
  %v3500 = vpack.c.b16 %v3497, %v3494
  %v3501 = vpack.c.b16 %v3498, %v3495
  %3502 = vrot.lane.b32.xlu0 %v3499, 61
  %v3503 = vpop.permute.xlu0 %3502
  %3504 = vrot.lane.b32.xlu0 %v3500, 61
  %v3505 = vpop.permute.xlu0 %3504
  %3506 = vrot.lane.b32.xlu0 %v3501, 61
  %v3507 = vpop.permute.xlu0 %3506
  %v3508 = vsel %vm730, %v3503, %v3505
  %v3509 = vsel %vm730, %v3505, %v3507
  %3512 = vst [vmem:[#allocation2 + $0x170] sm:$0xff] %v3508
  %3513 = vst [vmem:[#allocation2 + $0x178] sm:$0xff] %v3509
  %v3514 = vld [vmem:[%s2832] sm:$0xff]
  %v3515 = vld [vmem:[%s2832 + $0x8] sm:$0xf]
  %v3516 = vld [vmem:[%s2832 + $0xc] sm:$0xff]
  %v3517 = vld [vmem:[%s2832 + $0x14] sm:$0xf]
  %v3522 = vunpack.c.l.b16 %v3514
  %v3523 = vunpack.c.h.b16 %v3514
  %v3524 = vunpack.c.l.b16 %v3515
  %v3525 = vunpack.c.l.b16 %v3516
  %v3526 = vunpack.c.h.b16 %v3516
  %v3527 = vunpack.c.l.b16 %v3517
  %v3528 = vpack.c.b16 %v3525, %v3522
  %v3529 = vpack.c.b16 %v3526, %v3523
  %v3530 = vpack.c.b16 %v3527, %v3524
  %3531 = vrot.lane.b32.xlu0 %v3528, 60
  %v3532 = vpop.permute.xlu0 %3531
  %3533 = vrot.lane.b32.xlu0 %v3529, 60
  %v3534 = vpop.permute.xlu0 %3533
  %3535 = vrot.lane.b32.xlu0 %v3530, 60
  %v3536 = vpop.permute.xlu0 %3535
  %v3537 = vsel %vm760, %v3532, %v3534
  %v3538 = vsel %vm760, %v3534, %v3536
  %3541 = vst [vmem:[#allocation2 + $0x180] sm:$0xff] %v3537
  %3542 = vst [vmem:[#allocation2 + $0x188] sm:$0xff] %v3538
  %v3543 = vld [vmem:[%s1] sm:$0xff]
  %v3544 = vld [vmem:[%s1 + $0x8] sm:$0xff]
  %v3545 = vld [vmem:[%s1 + $0x10] sm:$0xff]
  %v3546 = vld [vmem:[%s1 + $0x18] sm:$0xff]
  %v3547 = vld [vmem:[%s1 + $0x20] sm:$0xff]
  %v3548 = vld [vmem:[%s1 + $0x28] sm:$0xff]
  %v3549 = vld [vmem:[%s1 + $0x30] sm:$0xff]
  %v3550 = vld [vmem:[%s1 + $0x38] sm:$0xff]
  %v3551 = vld [vmem:[%s1 + $0x40] sm:$0xff]
  %v3552 = vld [vmem:[%s1 + $0x48] sm:$0xff]
  %v3553 = vld [vmem:[%s1 + $0x50] sm:$0xff]
  %v3554 = vld [vmem:[%s1 + $0x58] sm:$0xff]
  %v3555 = vld [vmem:[%s1 + $0x60] sm:$0xff]
  %v3556 = vld [vmem:[%s1 + $0x68] sm:$0xff]
  %v3557 = vld [vmem:[%s1 + $0x70] sm:$0xff]
  %v3558 = vld [vmem:[%s1 + $0x78] sm:$0xff]
  %v3559 = vld [vmem:[#allocation2] sm:$0xff]
  %v3560 = vld [vmem:[#allocation2 + $0x8] sm:$0xff]
  %v3561 = vld [vmem:[#allocation2 + $0x10] sm:$0xff]
  %v3562 = vld [vmem:[#allocation2 + $0x18] sm:$0xff]
  %v3563 = vld [vmem:[#allocation2 + $0x20] sm:$0xff]
  %v3564 = vld [vmem:[#allocation2 + $0x28] sm:$0xff]
  %v3565 = vld [vmem:[#allocation2 + $0x30] sm:$0xff]
  %v3566 = vld [vmem:[#allocation2 + $0x38] sm:$0xff]
  %v3567 = vld [vmem:[#allocation2 + $0x40] sm:$0xff]
  %v3568 = vld [vmem:[#allocation2 + $0x48] sm:$0xff]
  %v3569 = vld [vmem:[#allocation2 + $0x50] sm:$0xff]
  %v3570 = vld [vmem:[#allocation2 + $0x58] sm:$0xff]
  %v3571 = vld [vmem:[#allocation2 + $0x60] sm:$0xff]
  %v3572 = vld [vmem:[#allocation2 + $0x68] sm:$0xff]
  %v3573 = vld [vmem:[#allocation2 + $0x70] sm:$0xff]
  %v3574 = vld [vmem:[#allocation2 + $0x78] sm:$0xff]
  %v3575 = vld [vmem:[#allocation2 + $0x80] sm:$0xff]
  %v3576 = vld [vmem:[#allocation2 + $0x88] sm:$0xff]
  %v3577 = vld [vmem:[#allocation2 + $0x90] sm:$0xff]
  %v3578 = vld [vmem:[#allocation2 + $0x98] sm:$0xff]
  %v3579 = vld [vmem:[#allocation2 + $0xa0] sm:$0xff]
  %v3580 = vld [vmem:[#allocation2 + $0xa8] sm:$0xff]
  %v3581 = vld [vmem:[#allocation2 + $0xb0] sm:$0xff]
  %v3582 = vld [vmem:[#allocation2 + $0xb8] sm:$0xff]
  %v3583 = vld [vmem:[#allocation2 + $0xc0] sm:$0xff]
  %v3584 = vld [vmem:[#allocation2 + $0xc8] sm:$0xff]
  %v3585 = vld [vmem:[#allocation2 + $0xd0] sm:$0xff]
  %v3586 = vld [vmem:[#allocation2 + $0xd8] sm:$0xff]
  %v3587 = vld [vmem:[#allocation2 + $0xe0] sm:$0xff]
  %v3588 = vld [vmem:[#allocation2 + $0xe8] sm:$0xff]
  %v3589 = vld [vmem:[#allocation2 + $0xf0] sm:$0xff]
  %v3590 = vld [vmem:[#allocation2 + $0xf8] sm:$0xff]
  %v3591 = vld [vmem:[#allocation2 + $0x100] sm:$0xff]
  %v3592 = vld [vmem:[#allocation2 + $0x108] sm:$0xff]
  %v3593 = vld [vmem:[#allocation2 + $0x110] sm:$0xff]
  %v3594 = vld [vmem:[#allocation2 + $0x118] sm:$0xff]
  %v3595 = vld [vmem:[#allocation2 + $0x120] sm:$0xff]
  %v3596 = vld [vmem:[#allocation2 + $0x128] sm:$0xff]
  %v3597 = vld [vmem:[#allocation2 + $0x130] sm:$0xff]
  %v3598 = vld [vmem:[#allocation2 + $0x138] sm:$0xff]
  %v3599 = vld [vmem:[#allocation2 + $0x140] sm:$0xff]
  %v3600 = vld [vmem:[#allocation2 + $0x148] sm:$0xff]
  %v3601 = vld [vmem:[#allocation2 + $0x150] sm:$0xff]
  %v3602 = vld [vmem:[#allocation2 + $0x158] sm:$0xff]
  %v3603 = vld [vmem:[#allocation2 + $0x160] sm:$0xff]
  %v3604 = vld [vmem:[#allocation2 + $0x168] sm:$0xff]
  %v3605 = vld [vmem:[#allocation2 + $0x170] sm:$0xff]
  %v3606 = vld [vmem:[#allocation2 + $0x178] sm:$0xff]
  %v3607 = vld [vmem:[#allocation2 + $0x180] sm:$0xff]
  %v3608 = vld [vmem:[#allocation2 + $0x188] sm:$0xff]
  %v3609 = vld [vmem:[%s2] sm:$0xff]
  %v3610 = vld [vmem:[%s2 + $0x8] sm:$0xff]
  %v3611 = vld [vmem:[%s2 + $0x10] sm:$0xff]
  %v3612 = vld [vmem:[%s2 + $0x18] sm:$0xff]
  %v3613 = vld [vmem:[%s2 + $0x20] sm:$0xff]
  %v3614 = vld [vmem:[%s2 + $0x28] sm:$0xff]
  %v3615 = vld [vmem:[%s2 + $0x30] sm:$0xff]
  %v3616 = vld [vmem:[%s2 + $0x38] sm:$0xff]
  %3618 = vset.pattern.permute.xlu0 0
  %3619 = vperm.xlu0 %3618, %v3609
  %v3620 = vpop.permute.xlu0 %3619
  %3623 = vset.pattern.permute.xlu0 0
  %3624 = vperm.xlu0 %3623, %v3610
  %v3625 = vpop.permute.xlu0 %3624
  %3628 = vset.pattern.permute.xlu0 0
  %3629 = vperm.xlu0 %3628, %v3611
  %v3630 = vpop.permute.xlu0 %3629
  %3633 = vset.pattern.permute.xlu0 0
  %3634 = vperm.xlu0 %3633, %v3612
  %v3635 = vpop.permute.xlu0 %3634
  %3638 = vset.pattern.permute.xlu0 0
  %3639 = vperm.xlu0 %3638, %v3613
  %v3640 = vpop.permute.xlu0 %3639
  %3643 = vset.pattern.permute.xlu0 0
  %3644 = vperm.xlu0 %3643, %v3614
  %v3645 = vpop.permute.xlu0 %3644
  %3648 = vset.pattern.permute.xlu0 0
  %3649 = vperm.xlu0 %3648, %v3615
  %v3650 = vpop.permute.xlu0 %3649
  %3653 = vset.pattern.permute.xlu0 0
  %3654 = vperm.xlu0 %3653, %v3616
  %v3655 = vpop.permute.xlu0 %3654
  %v3673 = vunpack.c.l.b16 %v3543
  %v3674 = vunpack.c.h.b16 %v3543
  %v3675 = vunpack.c.l.b16 %v3544
  %v3676 = vunpack.c.h.b16 %v3544
  %v3677 = vunpack.c.l.b16 %v3545
  %v3678 = vunpack.c.h.b16 %v3545
  %v3679 = vunpack.c.l.b16 %v3546
  %v3680 = vunpack.c.h.b16 %v3546
  %v3681 = vunpack.c.l.b16 %v3547
  %v3682 = vunpack.c.h.b16 %v3547
  %v3683 = vunpack.c.l.b16 %v3548
  %v3684 = vunpack.c.h.b16 %v3548
  %v3685 = vunpack.c.l.b16 %v3549
  %v3686 = vunpack.c.h.b16 %v3549
  %v3687 = vunpack.c.l.b16 %v3550
  %v3688 = vunpack.c.h.b16 %v3550
  %v3689 = vunpack.c.l.b16 %v3551
  %v3690 = vunpack.c.h.b16 %v3551
  %v3691 = vunpack.c.l.b16 %v3552
  %v3692 = vunpack.c.h.b16 %v3552
  %v3693 = vunpack.c.l.b16 %v3553
  %v3694 = vunpack.c.h.b16 %v3553
  %v3695 = vunpack.c.l.b16 %v3554
  %v3696 = vunpack.c.h.b16 %v3554
  %v3697 = vunpack.c.l.b16 %v3555
  %v3698 = vunpack.c.h.b16 %v3555
  %v3699 = vunpack.c.l.b16 %v3556
  %v3700 = vunpack.c.h.b16 %v3556
  %v3701 = vunpack.c.l.b16 %v3557
  %v3702 = vunpack.c.h.b16 %v3557
  %v3703 = vunpack.c.l.b16 %v3558
  %v3704 = vunpack.c.h.b16 %v3558
  %v3705 = vpack.c.b16 %v3677, %v3673
  %v3706 = vpack.c.b16 %v3678, %v3674
  %v3707 = vpack.c.b16 %v3679, %v3675
  %v3708 = vpack.c.b16 %v3680, %v3676
  %v3709 = vpack.c.b16 %v3685, %v3681
  %v3710 = vpack.c.b16 %v3686, %v3682
  %v3711 = vpack.c.b16 %v3687, %v3683
  %v3712 = vpack.c.b16 %v3688, %v3684
  %v3713 = vpack.c.b16 %v3693, %v3689
  %v3714 = vpack.c.b16 %v3694, %v3690
  %v3715 = vpack.c.b16 %v3695, %v3691
  %v3716 = vpack.c.b16 %v3696, %v3692
  %v3717 = vpack.c.b16 %v3701, %v3697
  %v3718 = vpack.c.b16 %v3702, %v3698
  %v3719 = vpack.c.b16 %v3703, %v3699
  %v3720 = vpack.c.b16 %v3704, %v3700
  %v3734 = vsel %vm957, %v3708, 0
  %v3737 = vsel %vm957, %v3712, 0
  %v3740 = vsel %vm957, %v3716, 0
  %v3743 = vsel %vm957, %v3720, 0
  %3745 = vmatprep.subr.bf16.mxu0 %v3560
  %3746 = vmatpush1.bf16.msra.mxu0 %v3559
  %3747 = vmatprep.subr.bf16.mxu0 %v3562
  %3748 = vmatpush1.bf16.msra.mxu0 %v3561
  %3749 = vmatprep.subr.bf16.mxu0 %v3564
  %3750 = vmatpush1.bf16.msra.mxu0 %v3563
  %3751 = vmatprep.subr.bf16.mxu0 %v3566
  %3752 = vmatpush1.bf16.msra.mxu0 %v3565
  %3753 = vmatprep.subr.bf16.mxu0 %v3568
  %3754 = vmatpush1.bf16.msra.mxu0 %v3567
  %3755 = vmatprep.subr.bf16.mxu0 %v3570
  %3756 = vmatpush1.bf16.msra.mxu0 %v3569
  %3757 = vmatprep.subr.bf16.mxu0 %v3572
  %3758 = vmatpush1.bf16.msra.mxu0 %v3571
  %3759 = vmatprep.subr.bf16.mxu0 %v3574
  %3760 = vmatpush1.bf16.msra.mxu0 %v3573
  %3761 = vmatprep.subr.bf16.mxu0 %v3576
  %3762 = vmatpush1.bf16.msra.mxu0 %v3575
  %3763 = vmatprep.subr.bf16.mxu0 %v3578
  %3764 = vmatpush1.bf16.msra.mxu0 %v3577
  %3765 = vmatprep.subr.bf16.mxu0 %v3580
  %3766 = vmatpush1.bf16.msra.mxu0 %v3579
  %3767 = vmatprep.subr.bf16.mxu0 %v3582
  %3768 = vmatpush1.bf16.msra.mxu0 %v3581
  %3769 = vmatprep.subr.bf16.mxu0 %v3584
  %3770 = vmatpush1.bf16.msra.mxu0 %v3583
  %3771 = vmatprep.subr.bf16.mxu0 %v3586
  %3772 = vmatpush1.bf16.msra.mxu0 %v3585
  %3773 = vmatprep.subr.bf16.mxu0 %v3588
  %3774 = vmatpush1.bf16.msra.mxu0 %v3587
  %3775 = vmatprep.subr.bf16.mxu0 %v3590
  %3776 = vmatpush1.bf16.msra.mxu0 %v3589
  %3777 = vmatprep.mubr.bf16.mxu0 %v3706
  %3778 = vmatmul.mubr.bf16.gmra.mrb[0].mxu0 %v3705
  %v3779 = vpop.f32.mrb[0].mxu0
  %v3780 = vadd.f32 %v3620, %v3779
  %v3781 = vpop.f32.mrb[0].mxu0
  %v3782 = vadd.f32 %v3620, %v3781
  %v3783 = vpop.f32.mrb[0].mxu0
  %v3784 = vadd.f32 %v3625, %v3783
  %v3785 = vpop.f32.mrb[0].mxu0
  %v3786 = vadd.f32 %v3625, %v3785
  %3787 = vmatprep.mubr.bf16.mxu0 %v3710
  %3788 = vmatmul.mubr.bf16.gmra.mrb[0].mxu0 %v3709
  %v3789 = vpop.f32.mrb[0].mxu0
  %v3790 = vadd.f32 %v3630, %v3789
  %v3791 = vpop.f32.mrb[0].mxu0
  %v3792 = vadd.f32 %v3630, %v3791
  %v3793 = vpop.f32.mrb[0].mxu0
  %v3794 = vadd.f32 %v3635, %v3793
  %v3795 = vpop.f32.mrb[0].mxu0
  %v3796 = vadd.f32 %v3635, %v3795
  %3797 = vmatprep.mubr.bf16.mxu0 %v3714
  %3798 = vmatmul.mubr.bf16.gmra.mrb[0].mxu0 %v3713
  %v3799 = vpop.f32.mrb[0].mxu0
  %v3800 = vadd.f32 %v3640, %v3799
  %v3801 = vpop.f32.mrb[0].mxu0
  %v3802 = vadd.f32 %v3640, %v3801
  %v3803 = vpop.f32.mrb[0].mxu0
  %v3804 = vadd.f32 %v3645, %v3803
  %v3805 = vpop.f32.mrb[0].mxu0
  %v3806 = vadd.f32 %v3645, %v3805
  %3807 = vmatprep.mubr.bf16.mxu0 %v3718
  %3808 = vmatmul.mubr.bf16.gmra.mrb[0].mxu0 %v3717
  %v3809 = vpop.f32.mrb[0].mxu0
  %v3810 = vadd.f32 %v3650, %v3809
  %v3811 = vpop.f32.mrb[0].mxu0
  %v3812 = vadd.f32 %v3650, %v3811
  %v3813 = vpop.f32.mrb[0].mxu0
  %v3814 = vadd.f32 %v3655, %v3813
  %v3815 = vpop.f32.mrb[0].mxu0
  %v3816 = vadd.f32 %v3655, %v3815
  %3817 = vdwg.mxu0
  %3818 = vmatprep.subr.bf16.mxu0 %v3592
  %3819 = vmatpush1.bf16.msra.mxu0 %v3591
  %3820 = vmatprep.subr.bf16.mxu0 %v3594
  %3821 = vmatpush1.bf16.msra.mxu0 %v3593
  %3822 = vmatprep.subr.bf16.mxu0 %v3596
  %3823 = vmatpush1.bf16.msra.mxu0 %v3595
  %3824 = vmatprep.subr.bf16.mxu0 %v3598
  %3825 = vmatpush1.bf16.msra.mxu0 %v3597
  %3826 = vmatprep.subr.bf16.mxu0 %v3600
  %3827 = vmatpush1.bf16.msra.mxu0 %v3599
  %3828 = vmatprep.subr.bf16.mxu0 %v3602
  %3829 = vmatpush1.bf16.msra.mxu0 %v3601
  %3830 = vmatprep.subr.bf16.mxu0 %v3604
  %3831 = vmatpush1.bf16.msra.mxu0 %v3603
  %3832 = vmatprep.subr.bf16.mxu0 %v3606
  %3833 = vmatpush1.bf16.msra.mxu0 %v3605
  %3834 = vmatprep.subr.bf16.mxu0 %v3608
  %3835 = vmatpush1.bf16.msra.mxu0 %v3607
  %3836 = vmatprep.subr.bf16.mxu0 0
  %3837 = vmatpush1.bf16.msra.mxu0 0
  %3838 = vmatprep.subr.bf16.mxu0 0
  %3839 = vmatpush1.bf16.msra.mxu0 0
  %3840 = vmatprep.subr.bf16.mxu0 0
  %3841 = vmatpush1.bf16.msra.mxu0 0
  %3842 = vmatprep.subr.bf16.mxu0 0
  %3843 = vmatpush1.bf16.msra.mxu0 0
  %3844 = vmatprep.subr.bf16.mxu0 0
  %3845 = vmatpush1.bf16.msra.mxu0 0
  %3846 = vmatprep.subr.bf16.mxu0 0
  %3847 = vmatpush1.bf16.msra.mxu0 0
  %3848 = vmatprep.subr.bf16.mxu0 0
  %3849 = vmatpush1.bf16.msra.mxu0 0
  %3850 = vmatprep.mubr.bf16.mxu0 %v3734
  %3851 = vmatmul.mubr.bf16.gmra.mrb[0].mxu0 %v3707
  %v3852 = vpop.f32.mrb[0].mxu0
  %v3853 = vadd.f32 %v3780, %v3852
  %v3854 = vpop.f32.mrb[0].mxu0
  %v3855 = vadd.f32 %v3782, %v3854
  %v3856 = vpop.f32.mrb[0].mxu0
  %v3857 = vadd.f32 %v3784, %v3856
  %v3858 = vpop.f32.mrb[0].mxu0
  %v3859 = vadd.f32 %v3786, %v3858
  %3860 = vmatprep.mubr.bf16.mxu0 %v3737
  %3861 = vmatmul.mubr.bf16.gmra.mrb[0].mxu0 %v3711
  %v3862 = vpop.f32.mrb[0].mxu0
  %v3863 = vadd.f32 %v3790, %v3862
  %v3864 = vpop.f32.mrb[0].mxu0
  %v3865 = vadd.f32 %v3792, %v3864
  %v3866 = vpop.f32.mrb[0].mxu0
  %v3867 = vadd.f32 %v3794, %v3866
  %v3868 = vpop.f32.mrb[0].mxu0
  %v3869 = vadd.f32 %v3796, %v3868
  %3870 = vmatprep.mubr.bf16.mxu0 %v3740
  %3871 = vmatmul.mubr.bf16.gmra.mrb[0].mxu0 %v3715
  %v3872 = vpop.f32.mrb[0].mxu0
  %v3873 = vadd.f32 %v3800, %v3872
  %v3874 = vpop.f32.mrb[0].mxu0
  %v3875 = vadd.f32 %v3802, %v3874
  %v3876 = vpop.f32.mrb[0].mxu0
  %v3877 = vadd.f32 %v3804, %v3876
  %v3878 = vpop.f32.mrb[0].mxu0
  %v3879 = vadd.f32 %v3806, %v3878
  %3880 = vmatprep.mubr.bf16.mxu0 %v3743
  %3881 = vmatmul.mubr.bf16.gmra.mrb[0].mxu0 %v3719
  %v3882 = vpop.f32.mrb[0].mxu0
  %v3883 = vadd.f32 %v3810, %v3882
  %v3884 = vpop.f32.mrb[0].mxu0
  %v3885 = vadd.f32 %v3812, %v3884
  %v3886 = vpop.f32.mrb[0].mxu0
  %v3887 = vadd.f32 %v3814, %v3886
  %v3888 = vpop.f32.mrb[0].mxu0
  %v3889 = vadd.f32 %v3816, %v3888
  %3890 = vdwg.mxu0
  %v3891 = vpack.c.bf16 %v3857, %v3853
  %v3892 = vpack.c.bf16 %v3859, %v3855
  %v3893 = vpack.c.bf16 %v3867, %v3863
  %v3894 = vpack.c.bf16 %v3869, %v3865
  %v3895 = vpack.c.bf16 %v3877, %v3873
  %v3896 = vpack.c.bf16 %v3879, %v3875
  %v3897 = vpack.c.bf16 %v3887, %v3883
  %v3898 = vpack.c.bf16 %v3889, %v3885
  %3899 = vst [vmem:[#allocation3] sm:$0xff] %v3891
  %3900 = vst [vmem:[#allocation3 + $0x8] sm:$0xff] %v3892
  %3901 = vst [vmem:[#allocation3 + $0x10] sm:$0xff] %v3893
  %3902 = vst [vmem:[#allocation3 + $0x18] sm:$0xff] %v3894
  %3903 = vst [vmem:[#allocation3 + $0x20] sm:$0xff] %v3895
  %3904 = vst [vmem:[#allocation3 + $0x28] sm:$0xff] %v3896
  %3905 = vst [vmem:[#allocation3 + $0x30] sm:$0xff] %v3897
  %3906 = vst [vmem:[#allocation3 + $0x38] sm:$0xff] %v3898
  %v3907 = vld [vmem:[#allocation3] sm:$0xff]
  %v3908 = vld [vmem:[#allocation3 + $0x10] sm:$0xff]
  %v3909 = vld [vmem:[#allocation3 + $0x20] sm:$0xff]
  %v3910 = vld [vmem:[#allocation3 + $0x30] sm:$0xff]
  %3911 = vst [vmem:[#allocation4] sm:$0xff] %v3907
  %3912 = vst [vmem:[#allocation4 + $0x8] sm:$0xff] %v3908
  %3913 = vst [vmem:[#allocation4 + $0x10] sm:$0xff] %v3909
  %3914 = vst [vmem:[#allocation4 + $0x18] sm:$0xff] %v3910
  %v3915 = vld [vmem:[#allocation3] sm:$0xff]
  %v3916 = vld [vmem:[#allocation3 + $0x8] sm:$0xff]
  %v3917 = vld [vmem:[#allocation3 + $0x10] sm:$0xff]
  %v3918 = vld [vmem:[#allocation3 + $0x18] sm:$0xff]
  %v3919 = vld [vmem:[#allocation3 + $0x20] sm:$0xff]
  %v3920 = vld [vmem:[#allocation3 + $0x28] sm:$0xff]
  %v3921 = vld [vmem:[#allocation3 + $0x30] sm:$0xff]
  %v3922 = vld [vmem:[#allocation3 + $0x38] sm:$0xff]
  %3931 = vrot.lane.b32.xlu0 %v3915, 127
  %v3932 = vpop.permute.xlu0 %3931
  %3933 = vrot.lane.b32.xlu0 %v3916, 127
  %v3934 = vpop.permute.xlu0 %3933
  %3935 = vrot.lane.b32.xlu0 %v3917, 127
  %v3936 = vpop.permute.xlu0 %3935
  %3937 = vrot.lane.b32.xlu0 %v3918, 127
  %v3938 = vpop.permute.xlu0 %3937
  %3939 = vrot.lane.b32.xlu0 %v3919, 127
  %v3940 = vpop.permute.xlu0 %3939
  %3941 = vrot.lane.b32.xlu0 %v3920, 127
  %v3942 = vpop.permute.xlu0 %3941
  %3943 = vrot.lane.b32.xlu0 %v3921, 127
  %v3944 = vpop.permute.xlu0 %3943
  %3945 = vrot.lane.b32.xlu0 %v3922, 127
  %v3946 = vpop.permute.xlu0 %3945
  %v3947 = vsel %vm70, %v3932, %v3934
  %v3948 = vsel %vm70, %v3936, %v3938
  %v3949 = vsel %vm70, %v3940, %v3942
  %v3950 = vsel %vm70, %v3944, %v3946
  %3955 = vst [vmem:[#allocation4 + $0x20] sm:$0xff] %v3947
  %3956 = vst [vmem:[#allocation4 + $0x28] sm:$0xff] %v3948
  %3957 = vst [vmem:[#allocation4 + $0x30] sm:$0xff] %v3949
  %3958 = vst [vmem:[#allocation4 + $0x38] sm:$0xff] %v3950
  %v3959 = vld [vmem:[#allocation3] sm:$0xff]
  %v3960 = vld [vmem:[#allocation3 + $0x8] sm:$0xff]
  %v3961 = vld [vmem:[#allocation3 + $0x10] sm:$0xff]
  %v3962 = vld [vmem:[#allocation3 + $0x18] sm:$0xff]
  %v3963 = vld [vmem:[#allocation3 + $0x20] sm:$0xff]
  %v3964 = vld [vmem:[#allocation3 + $0x28] sm:$0xff]
  %v3965 = vld [vmem:[#allocation3 + $0x30] sm:$0xff]
  %v3966 = vld [vmem:[#allocation3 + $0x38] sm:$0xff]
  %3975 = vrot.lane.b32.xlu0 %v3959, 126
  %v3976 = vpop.permute.xlu0 %3975
  %3977 = vrot.lane.b32.xlu0 %v3960, 126
  %v3978 = vpop.permute.xlu0 %3977
  %3979 = vrot.lane.b32.xlu0 %v3961, 126
  %v3980 = vpop.permute.xlu0 %3979
  %3981 = vrot.lane.b32.xlu0 %v3962, 126
  %v3982 = vpop.permute.xlu0 %3981
  %3983 = vrot.lane.b32.xlu0 %v3963, 126
  %v3984 = vpop.permute.xlu0 %3983
  %3985 = vrot.lane.b32.xlu0 %v3964, 126
  %v3986 = vpop.permute.xlu0 %3985
  %3987 = vrot.lane.b32.xlu0 %v3965, 126
  %v3988 = vpop.permute.xlu0 %3987
  %3989 = vrot.lane.b32.xlu0 %v3966, 126
  %v3990 = vpop.permute.xlu0 %3989
  %v3991 = vsel %vm100, %v3976, %v3978
  %v3992 = vsel %vm100, %v3980, %v3982
  %v3993 = vsel %vm100, %v3984, %v3986
  %v3994 = vsel %vm100, %v3988, %v3990
  %3999 = vst [vmem:[#allocation4 + $0x40] sm:$0xff] %v3991
  %4000 = vst [vmem:[#allocation4 + $0x48] sm:$0xff] %v3992
  %4001 = vst [vmem:[#allocation4 + $0x50] sm:$0xff] %v3993
  %4002 = vst [vmem:[#allocation4 + $0x58] sm:$0xff] %v3994
  %v4003 = vld [vmem:[#allocation3] sm:$0xff]
  %v4004 = vld [vmem:[#allocation3 + $0x8] sm:$0xff]
  %v4005 = vld [vmem:[#allocation3 + $0x10] sm:$0xff]
  %v4006 = vld [vmem:[#allocation3 + $0x18] sm:$0xff]
  %v4007 = vld [vmem:[#allocation3 + $0x20] sm:$0xff]
  %v4008 = vld [vmem:[#allocation3 + $0x28] sm:$0xff]
  %v4009 = vld [vmem:[#allocation3 + $0x30] sm:$0xff]
  %v4010 = vld [vmem:[#allocation3 + $0x38] sm:$0xff]
  %4019 = vrot.lane.b32.xlu0 %v4003, 125
  %v4020 = vpop.permute.xlu0 %4019
  %4021 = vrot.lane.b32.xlu0 %v4004, 125
  %v4022 = vpop.permute.xlu0 %4021
  %4023 = vrot.lane.b32.xlu0 %v4005, 125
  %v4024 = vpop.permute.xlu0 %4023
  %4025 = vrot.lane.b32.xlu0 %v4006, 125
  %v4026 = vpop.permute.xlu0 %4025
  %4027 = vrot.lane.b32.xlu0 %v4007, 125
  %v4028 = vpop.permute.xlu0 %4027
  %4029 = vrot.lane.b32.xlu0 %v4008, 125
  %v4030 = vpop.permute.xlu0 %4029
  %4031 = vrot.lane.b32.xlu0 %v4009, 125
  %v4032 = vpop.permute.xlu0 %4031
  %4033 = vrot.lane.b32.xlu0 %v4010, 125
  %v4034 = vpop.permute.xlu0 %4033
  %v4035 = vsel %vm130, %v4020, %v4022
  %v4036 = vsel %vm130, %v4024, %v4026
  %v4037 = vsel %vm130, %v4028, %v4030
  %v4038 = vsel %vm130, %v4032, %v4034
  %4043 = vst [vmem:[#allocation4 + $0x60] sm:$0xff] %v4035
  %4044 = vst [vmem:[#allocation4 + $0x68] sm:$0xff] %v4036
  %4045 = vst [vmem:[#allocation4 + $0x70] sm:$0xff] %v4037
  %4046 = vst [vmem:[#allocation4 + $0x78] sm:$0xff] %v4038
  %v4047 = vld [vmem:[#allocation3] sm:$0xff]
  %v4048 = vld [vmem:[#allocation3 + $0x8] sm:$0xff]
  %v4049 = vld [vmem:[#allocation3 + $0x10] sm:$0xff]
  %v4050 = vld [vmem:[#allocation3 + $0x18] sm:$0xff]
  %v4051 = vld [vmem:[#allocation3 + $0x20] sm:$0xff]
  %v4052 = vld [vmem:[#allocation3 + $0x28] sm:$0xff]
  %v4053 = vld [vmem:[#allocation3 + $0x30] sm:$0xff]
  %v4054 = vld [vmem:[#allocation3 + $0x38] sm:$0xff]
  %4063 = vrot.lane.b32.xlu0 %v4047, 124
  %v4064 = vpop.permute.xlu0 %4063
  %4065 = vrot.lane.b32.xlu0 %v4048, 124
  %v4066 = vpop.permute.xlu0 %4065
  %4067 = vrot.lane.b32.xlu0 %v4049, 124
  %v4068 = vpop.permute.xlu0 %4067
  %4069 = vrot.lane.b32.xlu0 %v4050, 124
  %v4070 = vpop.permute.xlu0 %4069
  %4071 = vrot.lane.b32.xlu0 %v4051, 124
  %v4072 = vpop.permute.xlu0 %4071
  %4073 = vrot.lane.b32.xlu0 %v4052, 124
  %v4074 = vpop.permute.xlu0 %4073
  %4075 = vrot.lane.b32.xlu0 %v4053, 124
  %v4076 = vpop.permute.xlu0 %4075
  %4077 = vrot.lane.b32.xlu0 %v4054, 124
  %v4078 = vpop.permute.xlu0 %4077
  %v4079 = vsel %vm160, %v4064, %v4066
  %v4080 = vsel %vm160, %v4068, %v4070
  %v4081 = vsel %vm160, %v4072, %v4074
  %v4082 = vsel %vm160, %v4076, %v4078
  %4087 = vst [vmem:[#allocation4 + $0x80] sm:$0xff] %v4079
  %4088 = vst [vmem:[#allocation4 + $0x88] sm:$0xff] %v4080
  %4089 = vst [vmem:[#allocation4 + $0x90] sm:$0xff] %v4081
  %4090 = vst [vmem:[#allocation4 + $0x98] sm:$0xff] %v4082
  %v4091 = vld [vmem:[#allocation3] sm:$0xff]
  %v4092 = vld [vmem:[#allocation3 + $0x8] sm:$0xff]
  %v4093 = vld [vmem:[#allocation3 + $0x10] sm:$0xff]
  %v4094 = vld [vmem:[#allocation3 + $0x18] sm:$0xff]
  %v4095 = vld [vmem:[#allocation3 + $0x20] sm:$0xff]
  %v4096 = vld [vmem:[#allocation3 + $0x28] sm:$0xff]
  %v4097 = vld [vmem:[#allocation3 + $0x30] sm:$0xff]
  %v4098 = vld [vmem:[#allocation3 + $0x38] sm:$0xff]
  %4107 = vrot.lane.b32.xlu0 %v4091, 112
  %v4108 = vpop.permute.xlu0 %4107
  %4109 = vrot.lane.b32.xlu0 %v4092, 112
  %v4110 = vpop.permute.xlu0 %4109
  %4111 = vrot.lane.b32.xlu0 %v4093, 112
  %v4112 = vpop.permute.xlu0 %4111
  %4113 = vrot.lane.b32.xlu0 %v4094, 112
  %v4114 = vpop.permute.xlu0 %4113
  %4115 = vrot.lane.b32.xlu0 %v4095, 112
  %v4116 = vpop.permute.xlu0 %4115
  %4117 = vrot.lane.b32.xlu0 %v4096, 112
  %v4118 = vpop.permute.xlu0 %4117
  %4119 = vrot.lane.b32.xlu0 %v4097, 112
  %v4120 = vpop.permute.xlu0 %4119
  %4121 = vrot.lane.b32.xlu0 %v4098, 112
  %v4122 = vpop.permute.xlu0 %4121
  %v4123 = vsel %vm190, %v4108, %v4110
  %v4124 = vsel %vm190, %v4112, %v4114
  %v4125 = vsel %vm190, %v4116, %v4118
  %v4126 = vsel %vm190, %v4120, %v4122
  %4131 = vst [vmem:[#allocation4 + $0xa0] sm:$0xff] %v4123
  %4132 = vst [vmem:[#allocation4 + $0xa8] sm:$0xff] %v4124
  %4133 = vst [vmem:[#allocation4 + $0xb0] sm:$0xff] %v4125
  %4134 = vst [vmem:[#allocation4 + $0xb8] sm:$0xff] %v4126
  %v4135 = vld [vmem:[#allocation3] sm:$0xff]
  %v4136 = vld [vmem:[#allocation3 + $0x8] sm:$0xff]
  %v4137 = vld [vmem:[#allocation3 + $0x10] sm:$0xff]
  %v4138 = vld [vmem:[#allocation3 + $0x18] sm:$0xff]
  %v4139 = vld [vmem:[#allocation3 + $0x20] sm:$0xff]
  %v4140 = vld [vmem:[#allocation3 + $0x28] sm:$0xff]
  %v4141 = vld [vmem:[#allocation3 + $0x30] sm:$0xff]
  %v4142 = vld [vmem:[#allocation3 + $0x38] sm:$0xff]
  %4151 = vrot.lane.b32.xlu0 %v4135, 111
  %v4152 = vpop.permute.xlu0 %4151
  %4153 = vrot.lane.b32.xlu0 %v4136, 111
  %v4154 = vpop.permute.xlu0 %4153
  %4155 = vrot.lane.b32.xlu0 %v4137, 111
  %v4156 = vpop.permute.xlu0 %4155
  %4157 = vrot.lane.b32.xlu0 %v4138, 111
  %v4158 = vpop.permute.xlu0 %4157
  %4159 = vrot.lane.b32.xlu0 %v4139, 111
  %v4160 = vpop.permute.xlu0 %4159
  %4161 = vrot.lane.b32.xlu0 %v4140, 111
  %v4162 = vpop.permute.xlu0 %4161
  %4163 = vrot.lane.b32.xlu0 %v4141, 111
  %v4164 = vpop.permute.xlu0 %4163
  %4165 = vrot.lane.b32.xlu0 %v4142, 111
  %v4166 = vpop.permute.xlu0 %4165
  %v4167 = vsel %vm220, %v4152, %v4154
  %v4168 = vsel %vm220, %v4156, %v4158
  %v4169 = vsel %vm220, %v4160, %v4162
  %v4170 = vsel %vm220, %v4164, %v4166
  %4175 = vst [vmem:[#allocation4 + $0xc0] sm:$0xff] %v4167
  %4176 = vst [vmem:[#allocation4 + $0xc8] sm:$0xff] %v4168
  %4177 = vst [vmem:[#allocation4 + $0xd0] sm:$0xff] %v4169
  %4178 = vst [vmem:[#allocation4 + $0xd8] sm:$0xff] %v4170
  %v4179 = vld [vmem:[#allocation3] sm:$0xff]
  %v4180 = vld [vmem:[#allocation3 + $0x8] sm:$0xff]
  %v4181 = vld [vmem:[#allocation3 + $0x10] sm:$0xff]
  %v4182 = vld [vmem:[#allocation3 + $0x18] sm:$0xff]
  %v4183 = vld [vmem:[#allocation3 + $0x20] sm:$0xff]
  %v4184 = vld [vmem:[#allocation3 + $0x28] sm:$0xff]
  %v4185 = vld [vmem:[#allocation3 + $0x30] sm:$0xff]
  %v4186 = vld [vmem:[#allocation3 + $0x38] sm:$0xff]
  %4195 = vrot.lane.b32.xlu0 %v4179, 110
  %v4196 = vpop.permute.xlu0 %4195
  %4197 = vrot.lane.b32.xlu0 %v4180, 110
  %v4198 = vpop.permute.xlu0 %4197
  %4199 = vrot.lane.b32.xlu0 %v4181, 110
  %v4200 = vpop.permute.xlu0 %4199
  %4201 = vrot.lane.b32.xlu0 %v4182, 110
  %v4202 = vpop.permute.xlu0 %4201
  %4203 = vrot.lane.b32.xlu0 %v4183, 110
  %v4204 = vpop.permute.xlu0 %4203
  %4205 = vrot.lane.b32.xlu0 %v4184, 110
  %v4206 = vpop.permute.xlu0 %4205
  %4207 = vrot.lane.b32.xlu0 %v4185, 110
  %v4208 = vpop.permute.xlu0 %4207
  %4209 = vrot.lane.b32.xlu0 %v4186, 110
  %v4210 = vpop.permute.xlu0 %4209
  %v4211 = vsel %vm250, %v4196, %v4198
  %v4212 = vsel %vm250, %v4200, %v4202
  %v4213 = vsel %vm250, %v4204, %v4206
  %v4214 = vsel %vm250, %v4208, %v4210
  %4219 = vst [vmem:[#allocation4 + $0xe0] sm:$0xff] %v4211
  %4220 = vst [vmem:[#allocation4 + $0xe8] sm:$0xff] %v4212
  %4221 = vst [vmem:[#allocation4 + $0xf0] sm:$0xff] %v4213
  %4222 = vst [vmem:[#allocation4 + $0xf8] sm:$0xff] %v4214
  %v4223 = vld [vmem:[#allocation3] sm:$0xff]
  %v4224 = vld [vmem:[#allocation3 + $0x8] sm:$0xff]
  %v4225 = vld [vmem:[#allocation3 + $0x10] sm:$0xff]
  %v4226 = vld [vmem:[#allocation3 + $0x18] sm:$0xff]
  %v4227 = vld [vmem:[#allocation3 + $0x20] sm:$0xff]
  %v4228 = vld [vmem:[#allocation3 + $0x28] sm:$0xff]
  %v4229 = vld [vmem:[#allocation3 + $0x30] sm:$0xff]
  %v4230 = vld [vmem:[#allocation3 + $0x38] sm:$0xff]
  %4239 = vrot.lane.b32.xlu0 %v4223, 109
  %v4240 = vpop.permute.xlu0 %4239
  %4241 = vrot.lane.b32.xlu0 %v4224, 109
  %v4242 = vpop.permute.xlu0 %4241
  %4243 = vrot.lane.b32.xlu0 %v4225, 109
  %v4244 = vpop.permute.xlu0 %4243
  %4245 = vrot.lane.b32.xlu0 %v4226, 109
  %v4246 = vpop.permute.xlu0 %4245
  %4247 = vrot.lane.b32.xlu0 %v4227, 109
  %v4248 = vpop.permute.xlu0 %4247
  %4249 = vrot.lane.b32.xlu0 %v4228, 109
  %v4250 = vpop.permute.xlu0 %4249
  %4251 = vrot.lane.b32.xlu0 %v4229, 109
  %v4252 = vpop.permute.xlu0 %4251
  %4253 = vrot.lane.b32.xlu0 %v4230, 109
  %v4254 = vpop.permute.xlu0 %4253
  %v4255 = vsel %vm280, %v4240, %v4242
  %v4256 = vsel %vm280, %v4244, %v4246
  %v4257 = vsel %vm280, %v4248, %v4250
  %v4258 = vsel %vm280, %v4252, %v4254
  %4263 = vst [vmem:[#allocation4 + $0x100] sm:$0xff] %v4255
  %4264 = vst [vmem:[#allocation4 + $0x108] sm:$0xff] %v4256
  %4265 = vst [vmem:[#allocation4 + $0x110] sm:$0xff] %v4257
  %4266 = vst [vmem:[#allocation4 + $0x118] sm:$0xff] %v4258
  %v4267 = vld [vmem:[#allocation3] sm:$0xff]
  %v4268 = vld [vmem:[#allocation3 + $0x8] sm:$0xff]
  %v4269 = vld [vmem:[#allocation3 + $0x10] sm:$0xff]
  %v4270 = vld [vmem:[#allocation3 + $0x18] sm:$0xff]
  %v4271 = vld [vmem:[#allocation3 + $0x20] sm:$0xff]
  %v4272 = vld [vmem:[#allocation3 + $0x28] sm:$0xff]
  %v4273 = vld [vmem:[#allocation3 + $0x30] sm:$0xff]
  %v4274 = vld [vmem:[#allocation3 + $0x38] sm:$0xff]
  %4283 = vrot.lane.b32.xlu0 %v4267, 108
  %v4284 = vpop.permute.xlu0 %4283
  %4285 = vrot.lane.b32.xlu0 %v4268, 108
  %v4286 = vpop.permute.xlu0 %4285
  %4287 = vrot.lane.b32.xlu0 %v4269, 108
  %v4288 = vpop.permute.xlu0 %4287
  %4289 = vrot.lane.b32.xlu0 %v4270, 108
  %v4290 = vpop.permute.xlu0 %4289
  %4291 = vrot.lane.b32.xlu0 %v4271, 108
  %v4292 = vpop.permute.xlu0 %4291
  %4293 = vrot.lane.b32.xlu0 %v4272, 108
  %v4294 = vpop.permute.xlu0 %4293
  %4295 = vrot.lane.b32.xlu0 %v4273, 108
  %v4296 = vpop.permute.xlu0 %4295
  %4297 = vrot.lane.b32.xlu0 %v4274, 108
  %v4298 = vpop.permute.xlu0 %4297
  %v4299 = vsel %vm310, %v4284, %v4286
  %v4300 = vsel %vm310, %v4288, %v4290
  %v4301 = vsel %vm310, %v4292, %v4294
  %v4302 = vsel %vm310, %v4296, %v4298
  %4307 = vst [vmem:[#allocation4 + $0x120] sm:$0xff] %v4299
  %4308 = vst [vmem:[#allocation4 + $0x128] sm:$0xff] %v4300
  %4309 = vst [vmem:[#allocation4 + $0x130] sm:$0xff] %v4301
  %4310 = vst [vmem:[#allocation4 + $0x138] sm:$0xff] %v4302
  %v4311 = vld [vmem:[#allocation3] sm:$0xff]
  %v4312 = vld [vmem:[#allocation3 + $0x8] sm:$0xff]
  %v4313 = vld [vmem:[#allocation3 + $0x10] sm:$0xff]
  %v4314 = vld [vmem:[#allocation3 + $0x18] sm:$0xff]
  %v4315 = vld [vmem:[#allocation3 + $0x20] sm:$0xff]
  %v4316 = vld [vmem:[#allocation3 + $0x28] sm:$0xff]
  %v4317 = vld [vmem:[#allocation3 + $0x30] sm:$0xff]
  %v4318 = vld [vmem:[#allocation3 + $0x38] sm:$0xff]
  %4327 = vrot.lane.b32.xlu0 %v4311, 96
  %v4328 = vpop.permute.xlu0 %4327
  %4329 = vrot.lane.b32.xlu0 %v4312, 96
  %v4330 = vpop.permute.xlu0 %4329
  %4331 = vrot.lane.b32.xlu0 %v4313, 96
  %v4332 = vpop.permute.xlu0 %4331
  %4333 = vrot.lane.b32.xlu0 %v4314, 96
  %v4334 = vpop.permute.xlu0 %4333
  %4335 = vrot.lane.b32.xlu0 %v4315, 96
  %v4336 = vpop.permute.xlu0 %4335
  %4337 = vrot.lane.b32.xlu0 %v4316, 96
  %v4338 = vpop.permute.xlu0 %4337
  %4339 = vrot.lane.b32.xlu0 %v4317, 96
  %v4340 = vpop.permute.xlu0 %4339
  %4341 = vrot.lane.b32.xlu0 %v4318, 96
  %v4342 = vpop.permute.xlu0 %4341
  %v4343 = vsel %vm340, %v4328, %v4330
  %v4344 = vsel %vm340, %v4332, %v4334
  %v4345 = vsel %vm340, %v4336, %v4338
  %v4346 = vsel %vm340, %v4340, %v4342
  %4351 = vst [vmem:[#allocation4 + $0x140] sm:$0xff] %v4343
  %4352 = vst [vmem:[#allocation4 + $0x148] sm:$0xff] %v4344
  %4353 = vst [vmem:[#allocation4 + $0x150] sm:$0xff] %v4345
  %4354 = vst [vmem:[#allocation4 + $0x158] sm:$0xff] %v4346
  %v4355 = vld [vmem:[#allocation3] sm:$0xff]
  %v4356 = vld [vmem:[#allocation3 + $0x8] sm:$0xff]
  %v4357 = vld [vmem:[#allocation3 + $0x10] sm:$0xff]
  %v4358 = vld [vmem:[#allocation3 + $0x18] sm:$0xff]
  %v4359 = vld [vmem:[#allocation3 + $0x20] sm:$0xff]
  %v4360 = vld [vmem:[#allocation3 + $0x28] sm:$0xff]
  %v4361 = vld [vmem:[#allocation3 + $0x30] sm:$0xff]
  %v4362 = vld [vmem:[#allocation3 + $0x38] sm:$0xff]
  %4371 = vrot.lane.b32.xlu0 %v4355, 95
  %v4372 = vpop.permute.xlu0 %4371
  %4373 = vrot.lane.b32.xlu0 %v4356, 95
  %v4374 = vpop.permute.xlu0 %4373
  %4375 = vrot.lane.b32.xlu0 %v4357, 95
  %v4376 = vpop.permute.xlu0 %4375
  %4377 = vrot.lane.b32.xlu0 %v4358, 95
  %v4378 = vpop.permute.xlu0 %4377
  %4379 = vrot.lane.b32.xlu0 %v4359, 95
  %v4380 = vpop.permute.xlu0 %4379
  %4381 = vrot.lane.b32.xlu0 %v4360, 95
  %v4382 = vpop.permute.xlu0 %4381
  %4383 = vrot.lane.b32.xlu0 %v4361, 95
  %v4384 = vpop.permute.xlu0 %4383
  %4385 = vrot.lane.b32.xlu0 %v4362, 95
  %v4386 = vpop.permute.xlu0 %4385
  %v4387 = vsel %vm370, %v4372, %v4374
  %v4388 = vsel %vm370, %v4376, %v4378
  %v4389 = vsel %vm370, %v4380, %v4382
  %v4390 = vsel %vm370, %v4384, %v4386
  %4395 = vst [vmem:[#allocation4 + $0x160] sm:$0xff] %v4387
  %4396 = vst [vmem:[#allocation4 + $0x168] sm:$0xff] %v4388
  %4397 = vst [vmem:[#allocation4 + $0x170] sm:$0xff] %v4389
  %4398 = vst [vmem:[#allocation4 + $0x178] sm:$0xff] %v4390
  %v4399 = vld [vmem:[#allocation3] sm:$0xff]
  %v4400 = vld [vmem:[#allocation3 + $0x8] sm:$0xff]
  %v4401 = vld [vmem:[#allocation3 + $0x10] sm:$0xff]
  %v4402 = vld [vmem:[#allocation3 + $0x18] sm:$0xff]
  %v4403 = vld [vmem:[#allocation3 + $0x20] sm:$0xff]
  %v4404 = vld [vmem:[#allocation3 + $0x28] sm:$0xff]
  %v4405 = vld [vmem:[#allocation3 + $0x30] sm:$0xff]
  %v4406 = vld [vmem:[#allocation3 + $0x38] sm:$0xff]
  %4415 = vrot.lane.b32.xlu0 %v4399, 94
  %v4416 = vpop.permute.xlu0 %4415
  %4417 = vrot.lane.b32.xlu0 %v4400, 94
  %v4418 = vpop.permute.xlu0 %4417
  %4419 = vrot.lane.b32.xlu0 %v4401, 94
  %v4420 = vpop.permute.xlu0 %4419
  %4421 = vrot.lane.b32.xlu0 %v4402, 94
  %v4422 = vpop.permute.xlu0 %4421
  %4423 = vrot.lane.b32.xlu0 %v4403, 94
  %v4424 = vpop.permute.xlu0 %4423
  %4425 = vrot.lane.b32.xlu0 %v4404, 94
  %v4426 = vpop.permute.xlu0 %4425
  %4427 = vrot.lane.b32.xlu0 %v4405, 94
  %v4428 = vpop.permute.xlu0 %4427
  %4429 = vrot.lane.b32.xlu0 %v4406, 94
  %v4430 = vpop.permute.xlu0 %4429
  %v4431 = vsel %vm400, %v4416, %v4418
  %v4432 = vsel %vm400, %v4420, %v4422
  %v4433 = vsel %vm400, %v4424, %v4426
  %v4434 = vsel %vm400, %v4428, %v4430
  %4439 = vst [vmem:[#allocation4 + $0x180] sm:$0xff] %v4431
  %4440 = vst [vmem:[#allocation4 + $0x188] sm:$0xff] %v4432
  %4441 = vst [vmem:[#allocation4 + $0x190] sm:$0xff] %v4433
  %4442 = vst [vmem:[#allocation4 + $0x198] sm:$0xff] %v4434
  %v4443 = vld [vmem:[#allocation3] sm:$0xff]
  %v4444 = vld [vmem:[#allocation3 + $0x8] sm:$0xff]
  %v4445 = vld [vmem:[#allocation3 + $0x10] sm:$0xff]
  %v4446 = vld [vmem:[#allocation3 + $0x18] sm:$0xff]
  %v4447 = vld [vmem:[#allocation3 + $0x20] sm:$0xff]
  %v4448 = vld [vmem:[#allocation3 + $0x28] sm:$0xff]
  %v4449 = vld [vmem:[#allocation3 + $0x30] sm:$0xff]
  %v4450 = vld [vmem:[#allocation3 + $0x38] sm:$0xff]
  %4459 = vrot.lane.b32.xlu0 %v4443, 93
  %v4460 = vpop.permute.xlu0 %4459
  %4461 = vrot.lane.b32.xlu0 %v4444, 93
  %v4462 = vpop.permute.xlu0 %4461
  %4463 = vrot.lane.b32.xlu0 %v4445, 93
  %v4464 = vpop.permute.xlu0 %4463
  %4465 = vrot.lane.b32.xlu0 %v4446, 93
  %v4466 = vpop.permute.xlu0 %4465
  %4467 = vrot.lane.b32.xlu0 %v4447, 93
  %v4468 = vpop.permute.xlu0 %4467
  %4469 = vrot.lane.b32.xlu0 %v4448, 93
  %v4470 = vpop.permute.xlu0 %4469
  %4471 = vrot.lane.b32.xlu0 %v4449, 93
  %v4472 = vpop.permute.xlu0 %4471
  %4473 = vrot.lane.b32.xlu0 %v4450, 93
  %v4474 = vpop.permute.xlu0 %4473
  %v4475 = vsel %vm430, %v4460, %v4462
  %v4476 = vsel %vm430, %v4464, %v4466
  %v4477 = vsel %vm430, %v4468, %v4470
  %v4478 = vsel %vm430, %v4472, %v4474
  %4483 = vst [vmem:[#allocation4 + $0x1a0] sm:$0xff] %v4475
  %4484 = vst [vmem:[#allocation4 + $0x1a8] sm:$0xff] %v4476
  %4485 = vst [vmem:[#allocation4 + $0x1b0] sm:$0xff] %v4477
  %4486 = vst [vmem:[#allocation4 + $0x1b8] sm:$0xff] %v4478
  %v4487 = vld [vmem:[#allocation3] sm:$0xff]
  %v4488 = vld [vmem:[#allocation3 + $0x8] sm:$0xff]
  %v4489 = vld [vmem:[#allocation3 + $0x10] sm:$0xff]
  %v4490 = vld [vmem:[#allocation3 + $0x18] sm:$0xff]
  %v4491 = vld [vmem:[#allocation3 + $0x20] sm:$0xff]
  %v4492 = vld [vmem:[#allocation3 + $0x28] sm:$0xff]
  %v4493 = vld [vmem:[#allocation3 + $0x30] sm:$0xff]
  %v4494 = vld [vmem:[#allocation3 + $0x38] sm:$0xff]
  %4503 = vrot.lane.b32.xlu0 %v4487, 92
  %v4504 = vpop.permute.xlu0 %4503
  %4505 = vrot.lane.b32.xlu0 %v4488, 92
  %v4506 = vpop.permute.xlu0 %4505
  %4507 = vrot.lane.b32.xlu0 %v4489, 92
  %v4508 = vpop.permute.xlu0 %4507
  %4509 = vrot.lane.b32.xlu0 %v4490, 92
  %v4510 = vpop.permute.xlu0 %4509
  %4511 = vrot.lane.b32.xlu0 %v4491, 92
  %v4512 = vpop.permute.xlu0 %4511
  %4513 = vrot.lane.b32.xlu0 %v4492, 92
  %v4514 = vpop.permute.xlu0 %4513
  %4515 = vrot.lane.b32.xlu0 %v4493, 92
  %v4516 = vpop.permute.xlu0 %4515
  %4517 = vrot.lane.b32.xlu0 %v4494, 92
  %v4518 = vpop.permute.xlu0 %4517
  %v4519 = vsel %vm460, %v4504, %v4506
  %v4520 = vsel %vm460, %v4508, %v4510
  %v4521 = vsel %vm460, %v4512, %v4514
  %v4522 = vsel %vm460, %v4516, %v4518
  %4527 = vst [vmem:[#allocation4 + $0x1c0] sm:$0xff] %v4519
  %4528 = vst [vmem:[#allocation4 + $0x1c8] sm:$0xff] %v4520
  %4529 = vst [vmem:[#allocation4 + $0x1d0] sm:$0xff] %v4521
  %4530 = vst [vmem:[#allocation4 + $0x1d8] sm:$0xff] %v4522
  %v4531 = vld [vmem:[#allocation3] sm:$0xff]
  %v4532 = vld [vmem:[#allocation3 + $0x8] sm:$0xff]
  %v4533 = vld [vmem:[#allocation3 + $0x10] sm:$0xff]
  %v4534 = vld [vmem:[#allocation3 + $0x18] sm:$0xff]
  %v4535 = vld [vmem:[#allocation3 + $0x20] sm:$0xff]
  %v4536 = vld [vmem:[#allocation3 + $0x28] sm:$0xff]
  %v4537 = vld [vmem:[#allocation3 + $0x30] sm:$0xff]
  %v4538 = vld [vmem:[#allocation3 + $0x38] sm:$0xff]
  %4547 = vrot.lane.b32.xlu0 %v4531, 80
  %v4548 = vpop.permute.xlu0 %4547
  %4549 = vrot.lane.b32.xlu0 %v4532, 80
  %v4550 = vpop.permute.xlu0 %4549
  %4551 = vrot.lane.b32.xlu0 %v4533, 80
  %v4552 = vpop.permute.xlu0 %4551
  %4553 = vrot.lane.b32.xlu0 %v4534, 80
  %v4554 = vpop.permute.xlu0 %4553
  %4555 = vrot.lane.b32.xlu0 %v4535, 80
  %v4556 = vpop.permute.xlu0 %4555
  %4557 = vrot.lane.b32.xlu0 %v4536, 80
  %v4558 = vpop.permute.xlu0 %4557
  %4559 = vrot.lane.b32.xlu0 %v4537, 80
  %v4560 = vpop.permute.xlu0 %4559
  %4561 = vrot.lane.b32.xlu0 %v4538, 80
  %v4562 = vpop.permute.xlu0 %4561
  %v4563 = vsel %vm490, %v4548, %v4550
  %v4564 = vsel %vm490, %v4552, %v4554
  %v4565 = vsel %vm490, %v4556, %v4558
  %v4566 = vsel %vm490, %v4560, %v4562
  %4571 = vst [vmem:[#allocation4 + $0x1e0] sm:$0xff] %v4563
  %4572 = vst [vmem:[#allocation4 + $0x1e8] sm:$0xff] %v4564
  %4573 = vst [vmem:[#allocation4 + $0x1f0] sm:$0xff] %v4565
  %4574 = vst [vmem:[#allocation4 + $0x1f8] sm:$0xff] %v4566
  %v4575 = vld [vmem:[#allocation3] sm:$0xff]
  %v4576 = vld [vmem:[#allocation3 + $0x8] sm:$0xff]
  %v4577 = vld [vmem:[#allocation3 + $0x10] sm:$0xff]
  %v4578 = vld [vmem:[#allocation3 + $0x18] sm:$0xff]
  %v4579 = vld [vmem:[#allocation3 + $0x20] sm:$0xff]
  %v4580 = vld [vmem:[#allocation3 + $0x28] sm:$0xff]
  %v4581 = vld [vmem:[#allocation3 + $0x30] sm:$0xff]
  %v4582 = vld [vmem:[#allocation3 + $0x38] sm:$0xff]
  %4591 = vrot.lane.b32.xlu0 %v4575, 79
  %v4592 = vpop.permute.xlu0 %4591
  %4593 = vrot.lane.b32.xlu0 %v4576, 79
  %v4594 = vpop.permute.xlu0 %4593
  %4595 = vrot.lane.b32.xlu0 %v4577, 79
  %v4596 = vpop.permute.xlu0 %4595
  %4597 = vrot.lane.b32.xlu0 %v4578, 79
  %v4598 = vpop.permute.xlu0 %4597
  %4599 = vrot.lane.b32.xlu0 %v4579, 79
  %v4600 = vpop.permute.xlu0 %4599
  %4601 = vrot.lane.b32.xlu0 %v4580, 79
  %v4602 = vpop.permute.xlu0 %4601
  %4603 = vrot.lane.b32.xlu0 %v4581, 79
  %v4604 = vpop.permute.xlu0 %4603
  %4605 = vrot.lane.b32.xlu0 %v4582, 79
  %v4606 = vpop.permute.xlu0 %4605
  %v4607 = vsel %vm520, %v4592, %v4594
  %v4608 = vsel %vm520, %v4596, %v4598
  %v4609 = vsel %vm520, %v4600, %v4602
  %v4610 = vsel %vm520, %v4604, %v4606
  %4615 = vst [vmem:[#allocation4 + $0x200] sm:$0xff] %v4607
  %4616 = vst [vmem:[#allocation4 + $0x208] sm:$0xff] %v4608
  %4617 = vst [vmem:[#allocation4 + $0x210] sm:$0xff] %v4609
  %4618 = vst [vmem:[#allocation4 + $0x218] sm:$0xff] %v4610
  %v4619 = vld [vmem:[#allocation3] sm:$0xff]
  %v4620 = vld [vmem:[#allocation3 + $0x8] sm:$0xff]
  %v4621 = vld [vmem:[#allocation3 + $0x10] sm:$0xff]
  %v4622 = vld [vmem:[#allocation3 + $0x18] sm:$0xff]
  %v4623 = vld [vmem:[#allocation3 + $0x20] sm:$0xff]
  %v4624 = vld [vmem:[#allocation3 + $0x28] sm:$0xff]
  %v4625 = vld [vmem:[#allocation3 + $0x30] sm:$0xff]
  %v4626 = vld [vmem:[#allocation3 + $0x38] sm:$0xff]
  %4635 = vrot.lane.b32.xlu0 %v4619, 78
  %v4636 = vpop.permute.xlu0 %4635
  %4637 = vrot.lane.b32.xlu0 %v4620, 78
  %v4638 = vpop.permute.xlu0 %4637
  %4639 = vrot.lane.b32.xlu0 %v4621, 78
  %v4640 = vpop.permute.xlu0 %4639
  %4641 = vrot.lane.b32.xlu0 %v4622, 78
  %v4642 = vpop.permute.xlu0 %4641
  %4643 = vrot.lane.b32.xlu0 %v4623, 78
  %v4644 = vpop.permute.xlu0 %4643
  %4645 = vrot.lane.b32.xlu0 %v4624, 78
  %v4646 = vpop.permute.xlu0 %4645
  %4647 = vrot.lane.b32.xlu0 %v4625, 78
  %v4648 = vpop.permute.xlu0 %4647
  %4649 = vrot.lane.b32.xlu0 %v4626, 78
  %v4650 = vpop.permute.xlu0 %4649
  %v4651 = vsel %vm550, %v4636, %v4638
  %v4652 = vsel %vm550, %v4640, %v4642
  %v4653 = vsel %vm550, %v4644, %v4646
  %v4654 = vsel %vm550, %v4648, %v4650
  %4659 = vst [vmem:[#allocation4 + $0x220] sm:$0xff] %v4651
  %4660 = vst [vmem:[#allocation4 + $0x228] sm:$0xff] %v4652
  %4661 = vst [vmem:[#allocation4 + $0x230] sm:$0xff] %v4653
  %4662 = vst [vmem:[#allocation4 + $0x238] sm:$0xff] %v4654
  %v4663 = vld [vmem:[#allocation3] sm:$0xff]
  %v4664 = vld [vmem:[#allocation3 + $0x8] sm:$0xff]
  %v4665 = vld [vmem:[#allocation3 + $0x10] sm:$0xff]
  %v4666 = vld [vmem:[#allocation3 + $0x18] sm:$0xff]
  %v4667 = vld [vmem:[#allocation3 + $0x20] sm:$0xff]
  %v4668 = vld [vmem:[#allocation3 + $0x28] sm:$0xff]
  %v4669 = vld [vmem:[#allocation3 + $0x30] sm:$0xff]
  %v4670 = vld [vmem:[#allocation3 + $0x38] sm:$0xff]
  %4679 = vrot.lane.b32.xlu0 %v4663, 77
  %v4680 = vpop.permute.xlu0 %4679
  %4681 = vrot.lane.b32.xlu0 %v4664, 77
  %v4682 = vpop.permute.xlu0 %4681
  %4683 = vrot.lane.b32.xlu0 %v4665, 77
  %v4684 = vpop.permute.xlu0 %4683
  %4685 = vrot.lane.b32.xlu0 %v4666, 77
  %v4686 = vpop.permute.xlu0 %4685
  %4687 = vrot.lane.b32.xlu0 %v4667, 77
  %v4688 = vpop.permute.xlu0 %4687
  %4689 = vrot.lane.b32.xlu0 %v4668, 77
  %v4690 = vpop.permute.xlu0 %4689
  %4691 = vrot.lane.b32.xlu0 %v4669, 77
  %v4692 = vpop.permute.xlu0 %4691
  %4693 = vrot.lane.b32.xlu0 %v4670, 77
  %v4694 = vpop.permute.xlu0 %4693
  %v4695 = vsel %vm580, %v4680, %v4682
  %v4696 = vsel %vm580, %v4684, %v4686
  %v4697 = vsel %vm580, %v4688, %v4690
  %v4698 = vsel %vm580, %v4692, %v4694
  %4703 = vst [vmem:[#allocation4 + $0x240] sm:$0xff] %v4695
  %4704 = vst [vmem:[#allocation4 + $0x248] sm:$0xff] %v4696
  %4705 = vst [vmem:[#allocation4 + $0x250] sm:$0xff] %v4697
  %4706 = vst [vmem:[#allocation4 + $0x258] sm:$0xff] %v4698
  %v4707 = vld [vmem:[#allocation3] sm:$0xff]
  %v4708 = vld [vmem:[#allocation3 + $0x8] sm:$0xff]
  %v4709 = vld [vmem:[#allocation3 + $0x10] sm:$0xff]
  %v4710 = vld [vmem:[#allocation3 + $0x18] sm:$0xff]
  %v4711 = vld [vmem:[#allocation3 + $0x20] sm:$0xff]
  %v4712 = vld [vmem:[#allocation3 + $0x28] sm:$0xff]
  %v4713 = vld [vmem:[#allocation3 + $0x30] sm:$0xff]
  %v4714 = vld [vmem:[#allocation3 + $0x38] sm:$0xff]
  %4723 = vrot.lane.b32.xlu0 %v4707, 76
  %v4724 = vpop.permute.xlu0 %4723
  %4725 = vrot.lane.b32.xlu0 %v4708, 76
  %v4726 = vpop.permute.xlu0 %4725
  %4727 = vrot.lane.b32.xlu0 %v4709, 76
  %v4728 = vpop.permute.xlu0 %4727
  %4729 = vrot.lane.b32.xlu0 %v4710, 76
  %v4730 = vpop.permute.xlu0 %4729
  %4731 = vrot.lane.b32.xlu0 %v4711, 76
  %v4732 = vpop.permute.xlu0 %4731
  %4733 = vrot.lane.b32.xlu0 %v4712, 76
  %v4734 = vpop.permute.xlu0 %4733
  %4735 = vrot.lane.b32.xlu0 %v4713, 76
  %v4736 = vpop.permute.xlu0 %4735
  %4737 = vrot.lane.b32.xlu0 %v4714, 76
  %v4738 = vpop.permute.xlu0 %4737
  %v4739 = vsel %vm610, %v4724, %v4726
  %v4740 = vsel %vm610, %v4728, %v4730
  %v4741 = vsel %vm610, %v4732, %v4734
  %v4742 = vsel %vm610, %v4736, %v4738
  %4747 = vst [vmem:[#allocation4 + $0x260] sm:$0xff] %v4739
  %4748 = vst [vmem:[#allocation4 + $0x268] sm:$0xff] %v4740
  %4749 = vst [vmem:[#allocation4 + $0x270] sm:$0xff] %v4741
  %4750 = vst [vmem:[#allocation4 + $0x278] sm:$0xff] %v4742
  %v4751 = vld [vmem:[#allocation3] sm:$0xff]
  %v4752 = vld [vmem:[#allocation3 + $0x8] sm:$0xff]
  %v4753 = vld [vmem:[#allocation3 + $0x10] sm:$0xff]
  %v4754 = vld [vmem:[#allocation3 + $0x18] sm:$0xff]
  %v4755 = vld [vmem:[#allocation3 + $0x20] sm:$0xff]
  %v4756 = vld [vmem:[#allocation3 + $0x28] sm:$0xff]
  %v4757 = vld [vmem:[#allocation3 + $0x30] sm:$0xff]
  %v4758 = vld [vmem:[#allocation3 + $0x38] sm:$0xff]
  %4767 = vrot.lane.b32.xlu0 %v4751, 64
  %v4768 = vpop.permute.xlu0 %4767
  %4769 = vrot.lane.b32.xlu0 %v4752, 64
  %v4770 = vpop.permute.xlu0 %4769
  %4771 = vrot.lane.b32.xlu0 %v4753, 64
  %v4772 = vpop.permute.xlu0 %4771
  %4773 = vrot.lane.b32.xlu0 %v4754, 64
  %v4774 = vpop.permute.xlu0 %4773
  %4775 = vrot.lane.b32.xlu0 %v4755, 64
  %v4776 = vpop.permute.xlu0 %4775
  %4777 = vrot.lane.b32.xlu0 %v4756, 64
  %v4778 = vpop.permute.xlu0 %4777
  %4779 = vrot.lane.b32.xlu0 %v4757, 64
  %v4780 = vpop.permute.xlu0 %4779
  %4781 = vrot.lane.b32.xlu0 %v4758, 64
  %v4782 = vpop.permute.xlu0 %4781
  %v4783 = vsel %vm640, %v4768, %v4770
  %v4784 = vsel %vm640, %v4772, %v4774
  %v4785 = vsel %vm640, %v4776, %v4778
  %v4786 = vsel %vm640, %v4780, %v4782
  %4791 = vst [vmem:[#allocation4 + $0x280] sm:$0xff] %v4783
  %4792 = vst [vmem:[#allocation4 + $0x288] sm:$0xff] %v4784
  %4793 = vst [vmem:[#allocation4 + $0x290] sm:$0xff] %v4785
  %4794 = vst [vmem:[#allocation4 + $0x298] sm:$0xff] %v4786
  %v4795 = vld [vmem:[#allocation3] sm:$0xff]
  %v4796 = vld [vmem:[#allocation3 + $0x8] sm:$0xff]
  %v4797 = vld [vmem:[#allocation3 + $0x10] sm:$0xff]
  %v4798 = vld [vmem:[#allocation3 + $0x18] sm:$0xff]
  %v4799 = vld [vmem:[#allocation3 + $0x20] sm:$0xff]
  %v4800 = vld [vmem:[#allocation3 + $0x28] sm:$0xff]
  %v4801 = vld [vmem:[#allocation3 + $0x30] sm:$0xff]
  %v4802 = vld [vmem:[#allocation3 + $0x38] sm:$0xff]
  %4811 = vrot.lane.b32.xlu0 %v4795, 63
  %v4812 = vpop.permute.xlu0 %4811
  %4813 = vrot.lane.b32.xlu0 %v4796, 63
  %v4814 = vpop.permute.xlu0 %4813
  %4815 = vrot.lane.b32.xlu0 %v4797, 63
  %v4816 = vpop.permute.xlu0 %4815
  %4817 = vrot.lane.b32.xlu0 %v4798, 63
  %v4818 = vpop.permute.xlu0 %4817
  %4819 = vrot.lane.b32.xlu0 %v4799, 63
  %v4820 = vpop.permute.xlu0 %4819
  %4821 = vrot.lane.b32.xlu0 %v4800, 63
  %v4822 = vpop.permute.xlu0 %4821
  %4823 = vrot.lane.b32.xlu0 %v4801, 63
  %v4824 = vpop.permute.xlu0 %4823
  %4825 = vrot.lane.b32.xlu0 %v4802, 63
  %v4826 = vpop.permute.xlu0 %4825
  %v4827 = vsel %vm670, %v4812, %v4814
  %v4828 = vsel %vm670, %v4816, %v4818
  %v4829 = vsel %vm670, %v4820, %v4822
  %v4830 = vsel %vm670, %v4824, %v4826
  %4835 = vst [vmem:[#allocation4 + $0x2a0] sm:$0xff] %v4827
  %4836 = vst [vmem:[#allocation4 + $0x2a8] sm:$0xff] %v4828
  %4837 = vst [vmem:[#allocation4 + $0x2b0] sm:$0xff] %v4829
  %4838 = vst [vmem:[#allocation4 + $0x2b8] sm:$0xff] %v4830
  %v4839 = vld [vmem:[#allocation3] sm:$0xff]
  %v4840 = vld [vmem:[#allocation3 + $0x8] sm:$0xff]
  %v4841 = vld [vmem:[#allocation3 + $0x10] sm:$0xff]
  %v4842 = vld [vmem:[#allocation3 + $0x18] sm:$0xff]
  %v4843 = vld [vmem:[#allocation3 + $0x20] sm:$0xff]
  %v4844 = vld [vmem:[#allocation3 + $0x28] sm:$0xff]
  %v4845 = vld [vmem:[#allocation3 + $0x30] sm:$0xff]
  %v4846 = vld [vmem:[#allocation3 + $0x38] sm:$0xff]
  %4855 = vrot.lane.b32.xlu0 %v4839, 62
  %v4856 = vpop.permute.xlu0 %4855
  %4857 = vrot.lane.b32.xlu0 %v4840, 62
  %v4858 = vpop.permute.xlu0 %4857
  %4859 = vrot.lane.b32.xlu0 %v4841, 62
  %v4860 = vpop.permute.xlu0 %4859
  %4861 = vrot.lane.b32.xlu0 %v4842, 62
  %v4862 = vpop.permute.xlu0 %4861
  %4863 = vrot.lane.b32.xlu0 %v4843, 62
  %v4864 = vpop.permute.xlu0 %4863
  %4865 = vrot.lane.b32.xlu0 %v4844, 62
  %v4866 = vpop.permute.xlu0 %4865
  %4867 = vrot.lane.b32.xlu0 %v4845, 62
  %v4868 = vpop.permute.xlu0 %4867
  %4869 = vrot.lane.b32.xlu0 %v4846, 62
  %v4870 = vpop.permute.xlu0 %4869
  %v4871 = vsel %vm700, %v4856, %v4858
  %v4872 = vsel %vm700, %v4860, %v4862
  %v4873 = vsel %vm700, %v4864, %v4866
  %v4874 = vsel %vm700, %v4868, %v4870
  %4879 = vst [vmem:[#allocation4 + $0x2c0] sm:$0xff] %v4871
  %4880 = vst [vmem:[#allocation4 + $0x2c8] sm:$0xff] %v4872
  %4881 = vst [vmem:[#allocation4 + $0x2d0] sm:$0xff] %v4873
  %4882 = vst [vmem:[#allocation4 + $0x2d8] sm:$0xff] %v4874
  %v4883 = vld [vmem:[#allocation3] sm:$0xff]
  %v4884 = vld [vmem:[#allocation3 + $0x8] sm:$0xff]
  %v4885 = vld [vmem:[#allocation3 + $0x10] sm:$0xff]
  %v4886 = vld [vmem:[#allocation3 + $0x18] sm:$0xff]
  %v4887 = vld [vmem:[#allocation3 + $0x20] sm:$0xff]
  %v4888 = vld [vmem:[#allocation3 + $0x28] sm:$0xff]
  %v4889 = vld [vmem:[#allocation3 + $0x30] sm:$0xff]
  %v4890 = vld [vmem:[#allocation3 + $0x38] sm:$0xff]
  %4899 = vrot.lane.b32.xlu0 %v4883, 61
  %v4900 = vpop.permute.xlu0 %4899
  %4901 = vrot.lane.b32.xlu0 %v4884, 61
  %v4902 = vpop.permute.xlu0 %4901
  %4903 = vrot.lane.b32.xlu0 %v4885, 61
  %v4904 = vpop.permute.xlu0 %4903
  %4905 = vrot.lane.b32.xlu0 %v4886, 61
  %v4906 = vpop.permute.xlu0 %4905
  %4907 = vrot.lane.b32.xlu0 %v4887, 61
  %v4908 = vpop.permute.xlu0 %4907
  %4909 = vrot.lane.b32.xlu0 %v4888, 61
  %v4910 = vpop.permute.xlu0 %4909
  %4911 = vrot.lane.b32.xlu0 %v4889, 61
  %v4912 = vpop.permute.xlu0 %4911
  %4913 = vrot.lane.b32.xlu0 %v4890, 61
  %v4914 = vpop.permute.xlu0 %4913
  %v4915 = vsel %vm730, %v4900, %v4902
  %v4916 = vsel %vm730, %v4904, %v4906
  %v4917 = vsel %vm730, %v4908, %v4910
  %v4918 = vsel %vm730, %v4912, %v4914
  %4923 = vst [vmem:[#allocation4 + $0x2e0] sm:$0xff] %v4915
  %4924 = vst [vmem:[#allocation4 + $0x2e8] sm:$0xff] %v4916
  %4925 = vst [vmem:[#allocation4 + $0x2f0] sm:$0xff] %v4917
  %4926 = vst [vmem:[#allocation4 + $0x2f8] sm:$0xff] %v4918
  %v4927 = vld [vmem:[#allocation3] sm:$0xff]
  %v4928 = vld [vmem:[#allocation3 + $0x8] sm:$0xff]
  %v4929 = vld [vmem:[#allocation3 + $0x10] sm:$0xff]
  %v4930 = vld [vmem:[#allocation3 + $0x18] sm:$0xff]
  %v4931 = vld [vmem:[#allocation3 + $0x20] sm:$0xff]
  %v4932 = vld [vmem:[#allocation3 + $0x28] sm:$0xff]
  %v4933 = vld [vmem:[#allocation3 + $0x30] sm:$0xff]
  %v4934 = vld [vmem:[#allocation3 + $0x38] sm:$0xff]
  %4943 = vrot.lane.b32.xlu0 %v4927, 60
  %v4944 = vpop.permute.xlu0 %4943
  %4945 = vrot.lane.b32.xlu0 %v4928, 60
  %v4946 = vpop.permute.xlu0 %4945
  %4947 = vrot.lane.b32.xlu0 %v4929, 60
  %v4948 = vpop.permute.xlu0 %4947
  %4949 = vrot.lane.b32.xlu0 %v4930, 60
  %v4950 = vpop.permute.xlu0 %4949
  %4951 = vrot.lane.b32.xlu0 %v4931, 60
  %v4952 = vpop.permute.xlu0 %4951
  %4953 = vrot.lane.b32.xlu0 %v4932, 60
  %v4954 = vpop.permute.xlu0 %4953
  %4955 = vrot.lane.b32.xlu0 %v4933, 60
  %v4956 = vpop.permute.xlu0 %4955
  %4957 = vrot.lane.b32.xlu0 %v4934, 60
  %v4958 = vpop.permute.xlu0 %4957
  %v4959 = vsel %vm760, %v4944, %v4946
  %v4960 = vsel %vm760, %v4948, %v4950
  %v4961 = vsel %vm760, %v4952, %v4954
  %v4962 = vsel %vm760, %v4956, %v4958
  %4967 = vst [vmem:[#allocation4 + $0x300] sm:$0xff] %v4959
  %4968 = vst [vmem:[#allocation4 + $0x308] sm:$0xff] %v4960
  %4969 = vst [vmem:[#allocation4 + $0x310] sm:$0xff] %v4961
  %4970 = vst [vmem:[#allocation4 + $0x318] sm:$0xff] %v4962
  %v4971 = vld [vmem:[%s3] sm:$0xff]
  %v4972 = vld [vmem:[%s3 + $0x8] sm:$0xff]
  %v4973 = vld [vmem:[%s3 + $0x10] sm:$0xff]
  %v4974 = vld [vmem:[%s3 + $0x18] sm:$0xff]
  %v4975 = vld [vmem:[%s3 + $0x20] sm:$0xff]
  %v4976 = vld [vmem:[%s3 + $0x28] sm:$0xff]
  %v4977 = vld [vmem:[%s3 + $0x30] sm:$0xf]
  %v4978 = vld [vmem:[%s3 + $0x34] sm:$0xff]
  %v4979 = vld [vmem:[%s3 + $0x3c] sm:$0xff]
  %v4980 = vld [vmem:[%s3 + $0x44] sm:$0xff]
  %v4981 = vld [vmem:[%s3 + $0x4c] sm:$0xff]
  %v4982 = vld [vmem:[%s3 + $0x54] sm:$0xff]
  %v4983 = vld [vmem:[%s3 + $0x5c] sm:$0xff]
  %v4984 = vld [vmem:[%s3 + $0x64] sm:$0xf]
  %v4985 = vld [vmem:[%s3 + $0x68] sm:$0xff]
  %v4986 = vld [vmem:[%s3 + $0x70] sm:$0xff]
  %v4987 = vld [vmem:[%s3 + $0x78] sm:$0xff]
  %v4988 = vld [vmem:[%s3 + $0x80] sm:$0xff]
  %v4989 = vld [vmem:[%s3 + $0x88] sm:$0xff]
  %v4990 = vld [vmem:[%s3 + $0x90] sm:$0xff]
  %v4991 = vld [vmem:[%s3 + $0x98] sm:$0xf]
  %v4992 = vld [vmem:[%s3 + $0x9c] sm:$0xff]
  %v4993 = vld [vmem:[%s3 + $0xa4] sm:$0xff]
  %v4994 = vld [vmem:[%s3 + $0xac] sm:$0xff]
  %v4995 = vld [vmem:[%s3 + $0xb4] sm:$0xff]
  %v4996 = vld [vmem:[%s3 + $0xbc] sm:$0xff]
  %v4997 = vld [vmem:[%s3 + $0xc4] sm:$0xff]
  %v4998 = vld [vmem:[%s3 + $0xcc] sm:$0xf]
  %v4999 = vld [vmem:[#allocation4] sm:$0xff]
  %v5000 = vld [vmem:[#allocation4 + $0x8] sm:$0xff]
  %v5001 = vld [vmem:[#allocation4 + $0x10] sm:$0xff]
  %v5002 = vld [vmem:[#allocation4 + $0x18] sm:$0xff]
  %v5003 = vld [vmem:[#allocation4 + $0x20] sm:$0xff]
  %v5004 = vld [vmem:[#allocation4 + $0x28] sm:$0xff]
  %v5005 = vld [vmem:[#allocation4 + $0x30] sm:$0xff]
  %v5006 = vld [vmem:[#allocation4 + $0x38] sm:$0xff]
  %v5007 = vld [vmem:[#allocation4 + $0x40] sm:$0xff]
  %v5008 = vld [vmem:[#allocation4 + $0x48] sm:$0xff]
  %v5009 = vld [vmem:[#allocation4 + $0x50] sm:$0xff]
  %v5010 = vld [vmem:[#allocation4 + $0x58] sm:$0xff]
  %v5011 = vld [vmem:[#allocation4 + $0x60] sm:$0xff]
  %v5012 = vld [vmem:[#allocation4 + $0x68] sm:$0xff]
  %v5013 = vld [vmem:[#allocation4 + $0x70] sm:$0xff]
  %v5014 = vld [vmem:[#allocation4 + $0x78] sm:$0xff]
  %v5015 = vld [vmem:[#allocation4 + $0x80] sm:$0xff]
  %v5016 = vld [vmem:[#allocation4 + $0x88] sm:$0xff]
  %v5017 = vld [vmem:[#allocation4 + $0x90] sm:$0xff]
  %v5018 = vld [vmem:[#allocation4 + $0x98] sm:$0xff]
  %v5019 = vld [vmem:[#allocation4 + $0xa0] sm:$0xff]
  %v5020 = vld [vmem:[#allocation4 + $0xa8] sm:$0xff]
  %v5021 = vld [vmem:[#allocation4 + $0xb0] sm:$0xff]
  %v5022 = vld [vmem:[#allocation4 + $0xb8] sm:$0xff]
  %v5023 = vld [vmem:[#allocation4 + $0xc0] sm:$0xff]
  %v5024 = vld [vmem:[#allocation4 + $0xc8] sm:$0xff]
  %v5025 = vld [vmem:[#allocation4 + $0xd0] sm:$0xff]
  %v5026 = vld [vmem:[#allocation4 + $0xd8] sm:$0xff]
  %v5027 = vld [vmem:[#allocation4 + $0xe0] sm:$0xff]
  %v5028 = vld [vmem:[#allocation4 + $0xe8] sm:$0xff]
  %v5029 = vld [vmem:[#allocation4 + $0xf0] sm:$0xff]
  %v5030 = vld [vmem:[#allocation4 + $0xf8] sm:$0xff]
  %v5031 = vld [vmem:[#allocation4 + $0x100] sm:$0xff]
  %v5032 = vld [vmem:[#allocation4 + $0x108] sm:$0xff]
  %v5033 = vld [vmem:[#allocation4 + $0x110] sm:$0xff]
  %v5034 = vld [vmem:[#allocation4 + $0x118] sm:$0xff]
  %v5035 = vld [vmem:[#allocation4 + $0x120] sm:$0xff]
  %v5036 = vld [vmem:[#allocation4 + $0x128] sm:$0xff]
  %v5037 = vld [vmem:[#allocation4 + $0x130] sm:$0xff]
  %v5038 = vld [vmem:[#allocation4 + $0x138] sm:$0xff]
  %v5039 = vld [vmem:[#allocation4 + $0x140] sm:$0xff]
  %v5040 = vld [vmem:[#allocation4 + $0x148] sm:$0xff]
  %v5041 = vld [vmem:[#allocation4 + $0x150] sm:$0xff]
  %v5042 = vld [vmem:[#allocation4 + $0x158] sm:$0xff]
  %v5043 = vld [vmem:[#allocation4 + $0x160] sm:$0xff]
  %v5044 = vld [vmem:[#allocation4 + $0x168] sm:$0xff]
  %v5045 = vld [vmem:[#allocation4 + $0x170] sm:$0xff]
  %v5046 = vld [vmem:[#allocation4 + $0x178] sm:$0xff]
  %v5047 = vld [vmem:[#allocation4 + $0x180] sm:$0xff]
  %v5048 = vld [vmem:[#allocation4 + $0x188] sm:$0xff]
  %v5049 = vld [vmem:[#allocation4 + $0x190] sm:$0xff]
  %v5050 = vld [vmem:[#allocation4 + $0x198] sm:$0xff]
  %v5051 = vld [vmem:[#allocation4 + $0x1a0] sm:$0xff]
  %v5052 = vld [vmem:[#allocation4 + $0x1a8] sm:$0xff]
  %v5053 = vld [vmem:[#allocation4 + $0x1b0] sm:$0xff]
  %v5054 = vld [vmem:[#allocation4 + $0x1b8] sm:$0xff]
  %v5055 = vld [vmem:[#allocation4 + $0x1c0] sm:$0xff]
  %v5056 = vld [vmem:[#allocation4 + $0x1c8] sm:$0xff]
  %v5057 = vld [vmem:[#allocation4 + $0x1d0] sm:$0xff]
  %v5058 = vld [vmem:[#allocation4 + $0x1d8] sm:$0xff]
  %v5059 = vld [vmem:[#allocation4 + $0x1e0] sm:$0xff]
  %v5060 = vld [vmem:[#allocation4 + $0x1e8] sm:$0xff]
  %v5061 = vld [vmem:[#allocation4 + $0x1f0] sm:$0xff]
  %v5062 = vld [vmem:[#allocation4 + $0x1f8] sm:$0xff]
  %v5063 = vld [vmem:[#allocation4 + $0x200] sm:$0xff]
  %v5064 = vld [vmem:[#allocation4 + $0x208] sm:$0xff]
  %v5065 = vld [vmem:[#allocation4 + $0x210] sm:$0xff]
  %v5066 = vld [vmem:[#allocation4 + $0x218] sm:$0xff]
  %v5067 = vld [vmem:[#allocation4 + $0x220] sm:$0xff]
  %v5068 = vld [vmem:[#allocation4 + $0x228] sm:$0xff]
  %v5069 = vld [vmem:[#allocation4 + $0x230] sm:$0xff]
  %v5070 = vld [vmem:[#allocation4 + $0x238] sm:$0xff]
  %v5071 = vld [vmem:[#allocation4 + $0x240] sm:$0xff]
  %v5072 = vld [vmem:[#allocation4 + $0x248] sm:$0xff]
  %v5073 = vld [vmem:[#allocation4 + $0x250] sm:$0xff]
  %v5074 = vld [vmem:[#allocation4 + $0x258] sm:$0xff]
  %v5075 = vld [vmem:[#allocation4 + $0x260] sm:$0xff]
  %v5076 = vld [vmem:[#allocation4 + $0x268] sm:$0xff]
  %v5077 = vld [vmem:[#allocation4 + $0x270] sm:$0xff]
  %v5078 = vld [vmem:[#allocation4 + $0x278] sm:$0xff]
  %v5079 = vld [vmem:[#allocation4 + $0x280] sm:$0xff]
  %v5080 = vld [vmem:[#allocation4 + $0x288] sm:$0xff]
  %v5081 = vld [vmem:[#allocation4 + $0x290] sm:$0xff]
  %v5082 = vld [vmem:[#allocation4 + $0x298] sm:$0xff]
  %v5083 = vld [vmem:[#allocation4 + $0x2a0] sm:$0xff]
  %v5084 = vld [vmem:[#allocation4 + $0x2a8] sm:$0xff]
  %v5085 = vld [vmem:[#allocation4 + $0x2b0] sm:$0xff]
  %v5086 = vld [vmem:[#allocation4 + $0x2b8] sm:$0xff]
  %v5087 = vld [vmem:[#allocation4 + $0x2c0] sm:$0xff]
  %v5088 = vld [vmem:[#allocation4 + $0x2c8] sm:$0xff]
  %v5089 = vld [vmem:[#allocation4 + $0x2d0] sm:$0xff]
  %v5090 = vld [vmem:[#allocation4 + $0x2d8] sm:$0xff]
  %v5091 = vld [vmem:[#allocation4 + $0x2e0] sm:$0xff]
  %v5092 = vld [vmem:[#allocation4 + $0x2e8] sm:$0xff]
  %v5093 = vld [vmem:[#allocation4 + $0x2f0] sm:$0xff]
  %v5094 = vld [vmem:[#allocation4 + $0x2f8] sm:$0xff]
  %v5095 = vld [vmem:[#allocation4 + $0x300] sm:$0xff]
  %v5096 = vld [vmem:[#allocation4 + $0x308] sm:$0xff]
  %v5097 = vld [vmem:[#allocation4 + $0x310] sm:$0xff]
  %v5098 = vld [vmem:[#allocation4 + $0x318] sm:$0xff]
  %v5099 = vld [vmem:[%s4] sm:$0xff]
  %v5100 = vld [vmem:[%s4 + $0x8] sm:$0xff]
  %v5101 = vld [vmem:[%s4 + $0x10] sm:$0xff]
  %v5102 = vld [vmem:[%s4 + $0x18] sm:$0xff]
  %5104 = vset.pattern.permute.xlu0 0
  %5105 = vperm.xlu0 %5104, %v5099
  %v5106 = vpop.permute.xlu0 %5105
  %5109 = vset.pattern.permute.xlu0 0
  %5110 = vperm.xlu0 %5109, %v5100
  %v5111 = vpop.permute.xlu0 %5110
  %5114 = vset.pattern.permute.xlu0 0
  %5115 = vperm.xlu0 %5114, %v5101
  %v5116 = vpop.permute.xlu0 %5115
  %5119 = vset.pattern.permute.xlu0 0
  %5120 = vperm.xlu0 %5119, %v5102
  %v5121 = vpop.permute.xlu0 %5120
  %v5151 = vunpack.c.l.b16 %v4971
  %v5152 = vunpack.c.h.b16 %v4971
  %v5153 = vunpack.c.l.b16 %v4972
  %v5154 = vunpack.c.h.b16 %v4972
  %v5155 = vunpack.c.l.b16 %v4973
  %v5156 = vunpack.c.h.b16 %v4973
  %v5157 = vunpack.c.l.b16 %v4974
  %v5158 = vunpack.c.h.b16 %v4974
  %v5159 = vunpack.c.l.b16 %v4975
  %v5160 = vunpack.c.h.b16 %v4975
  %v5161 = vunpack.c.l.b16 %v4976
  %v5162 = vunpack.c.h.b16 %v4976
  %v5163 = vunpack.c.l.b16 %v4977
  %v5164 = vunpack.c.l.b16 %v4978
  %v5165 = vunpack.c.h.b16 %v4978
  %v5166 = vunpack.c.l.b16 %v4979
  %v5167 = vunpack.c.h.b16 %v4979
  %v5168 = vunpack.c.l.b16 %v4980
  %v5169 = vunpack.c.h.b16 %v4980
  %v5170 = vunpack.c.l.b16 %v4981
  %v5171 = vunpack.c.h.b16 %v4981
  %v5172 = vunpack.c.l.b16 %v4982
  %v5173 = vunpack.c.h.b16 %v4982
  %v5174 = vunpack.c.l.b16 %v4983
  %v5175 = vunpack.c.h.b16 %v4983
  %v5176 = vunpack.c.l.b16 %v4984
  %v5177 = vunpack.c.l.b16 %v4985
  %v5178 = vunpack.c.h.b16 %v4985
  %v5179 = vunpack.c.l.b16 %v4986
  %v5180 = vunpack.c.h.b16 %v4986
  %v5181 = vunpack.c.l.b16 %v4987
  %v5182 = vunpack.c.h.b16 %v4987
  %v5183 = vunpack.c.l.b16 %v4988
  %v5184 = vunpack.c.h.b16 %v4988
  %v5185 = vunpack.c.l.b16 %v4989
  %v5186 = vunpack.c.h.b16 %v4989
  %v5187 = vunpack.c.l.b16 %v4990
  %v5188 = vunpack.c.h.b16 %v4990
  %v5189 = vunpack.c.l.b16 %v4991
  %v5190 = vunpack.c.l.b16 %v4992
  %v5191 = vunpack.c.h.b16 %v4992
  %v5192 = vunpack.c.l.b16 %v4993
  %v5193 = vunpack.c.h.b16 %v4993
  %v5194 = vunpack.c.l.b16 %v4994
  %v5195 = vunpack.c.h.b16 %v4994
  %v5196 = vunpack.c.l.b16 %v4995
  %v5197 = vunpack.c.h.b16 %v4995
  %v5198 = vunpack.c.l.b16 %v4996
  %v5199 = vunpack.c.h.b16 %v4996
  %v5200 = vunpack.c.l.b16 %v4997
  %v5201 = vunpack.c.h.b16 %v4997
  %v5202 = vunpack.c.l.b16 %v4998
  %v5203 = vpack.c.b16 %v5164, %v5151
  %v5204 = vpack.c.b16 %v5165, %v5152
  %v5205 = vpack.c.b16 %v5166, %v5153
  %v5206 = vpack.c.b16 %v5167, %v5154
  %v5207 = vpack.c.b16 %v5168, %v5155
  %v5208 = vpack.c.b16 %v5169, %v5156
  %v5209 = vpack.c.b16 %v5170, %v5157
  %v5210 = vpack.c.b16 %v5171, %v5158
  %v5211 = vpack.c.b16 %v5172, %v5159
  %v5212 = vpack.c.b16 %v5173, %v5160
  %v5213 = vpack.c.b16 %v5174, %v5161
  %v5214 = vpack.c.b16 %v5175, %v5162
  %v5215 = vpack.c.b16 %v5176, %v5163
  %v5216 = vpack.c.b16 %v5190, %v5177
  %v5217 = vpack.c.b16 %v5191, %v5178
  %v5218 = vpack.c.b16 %v5192, %v5179
  %v5219 = vpack.c.b16 %v5193, %v5180
  %v5220 = vpack.c.b16 %v5194, %v5181
  %v5221 = vpack.c.b16 %v5195, %v5182
  %v5222 = vpack.c.b16 %v5196, %v5183
  %v5223 = vpack.c.b16 %v5197, %v5184
  %v5224 = vpack.c.b16 %v5198, %v5185
  %v5225 = vpack.c.b16 %v5199, %v5186
  %v5226 = vpack.c.b16 %v5200, %v5187
  %v5227 = vpack.c.b16 %v5201, %v5188
  %v5228 = vpack.c.b16 %v5202, %v5189
  %v5254 = vsel %vm2478, %v5215, 0
  %v5257 = vsel %vm2478, %v5228, 0
  %5259 = vmatprep.subr.bf16.mxu0 0
  %5260 = vmatpush1.bf16.msra.mxu0 %v4999
  %5261 = vmatprep.subr.bf16.mxu0 0
  %5262 = vmatpush1.bf16.msra.mxu0 %v5000
  %5263 = vmatprep.subr.bf16.mxu0 0
  %5264 = vmatpush1.bf16.msra.mxu0 %v5001
  %5265 = vmatprep.subr.bf16.mxu0 0
  %5266 = vmatpush1.bf16.msra.mxu0 %v5002
  %5267 = vmatprep.subr.bf16.mxu0 0
  %5268 = vmatpush1.bf16.msra.mxu0 %v5003
  %5269 = vmatprep.subr.bf16.mxu0 0
  %5270 = vmatpush1.bf16.msra.mxu0 %v5004
  %5271 = vmatprep.subr.bf16.mxu0 0
  %5272 = vmatpush1.bf16.msra.mxu0 %v5005
  %5273 = vmatprep.subr.bf16.mxu0 0
  %5274 = vmatpush1.bf16.msra.mxu0 %v5006
  %5275 = vmatprep.subr.bf16.mxu0 0
  %5276 = vmatpush1.bf16.msra.mxu0 %v5007
  %5277 = vmatprep.subr.bf16.mxu0 0
  %5278 = vmatpush1.bf16.msra.mxu0 %v5008
  %5279 = vmatprep.subr.bf16.mxu0 0
  %5280 = vmatpush1.bf16.msra.mxu0 %v5009
  %5281 = vmatprep.subr.bf16.mxu0 0
  %5282 = vmatpush1.bf16.msra.mxu0 %v5010
  %5283 = vmatprep.subr.bf16.mxu0 0
  %5284 = vmatpush1.bf16.msra.mxu0 %v5011
  %5285 = vmatprep.subr.bf16.mxu0 0
  %5286 = vmatpush1.bf16.msra.mxu0 %v5012
  %5287 = vmatprep.subr.bf16.mxu0 0
  %5288 = vmatpush1.bf16.msra.mxu0 %v5013
  %5289 = vmatprep.subr.bf16.mxu0 0
  %5290 = vmatpush1.bf16.msra.mxu0 %v5014
  %5291 = vmatprep.mubr.bf16.mxu0 %v5204
  %5292 = vmatmul.mubr.bf16.gmra.mrb[0].mxu0 %v5203
  %v5293 = vpop.f32.mrb[0].mxu0
  %v5294 = vadd.f32 %v5106, %v5293
  %v5295 = vpop.f32.mrb[0].mxu0
  %v5296 = vpop.f32.mrb[0].mxu0
  %v5297 = vadd.f32 %v5111, %v5296
  %v5298 = vpop.f32.mrb[0].mxu0
  %5299 = vmatprep.mubr.bf16.mxu0 %v5217
  %5300 = vmatmul.mubr.bf16.gmra.mrb[0].mxu0 %v5216
  %v5301 = vpop.f32.mrb[0].mxu0
  %v5302 = vadd.f32 %v5116, %v5301
  %v5303 = vpop.f32.mrb[0].mxu0
  %v5304 = vpop.f32.mrb[0].mxu0
  %v5305 = vadd.f32 %v5121, %v5304
  %v5306 = vpop.f32.mrb[0].mxu0
  %5307 = vdwg.mxu0
  %5308 = vmatprep.subr.bf16.mxu0 0
  %5309 = vmatpush1.bf16.msra.mxu0 %v5015
  %5310 = vmatprep.subr.bf16.mxu0 0
  %5311 = vmatpush1.bf16.msra.mxu0 %v5016
  %5312 = vmatprep.subr.bf16.mxu0 0
  %5313 = vmatpush1.bf16.msra.mxu0 %v5017
  %5314 = vmatprep.subr.bf16.mxu0 0
  %5315 = vmatpush1.bf16.msra.mxu0 %v5018
  %5316 = vmatprep.subr.bf16.mxu0 0
  %5317 = vmatpush1.bf16.msra.mxu0 %v5019
  %5318 = vmatprep.subr.bf16.mxu0 0
  %5319 = vmatpush1.bf16.msra.mxu0 %v5020
  %5320 = vmatprep.subr.bf16.mxu0 0
  %5321 = vmatpush1.bf16.msra.mxu0 %v5021
  %5322 = vmatprep.subr.bf16.mxu0 0
  %5323 = vmatpush1.bf16.msra.mxu0 %v5022
  %5324 = vmatprep.subr.bf16.mxu0 0
  %5325 = vmatpush1.bf16.msra.mxu0 %v5023
  %5326 = vmatprep.subr.bf16.mxu0 0
  %5327 = vmatpush1.bf16.msra.mxu0 %v5024
  %5328 = vmatprep.subr.bf16.mxu0 0
  %5329 = vmatpush1.bf16.msra.mxu0 %v5025
  %5330 = vmatprep.subr.bf16.mxu0 0
  %5331 = vmatpush1.bf16.msra.mxu0 %v5026
  %5332 = vmatprep.subr.bf16.mxu0 0
  %5333 = vmatpush1.bf16.msra.mxu0 %v5027
  %5334 = vmatprep.subr.bf16.mxu0 0
  %5335 = vmatpush1.bf16.msra.mxu0 %v5028
  %5336 = vmatprep.subr.bf16.mxu0 0
  %5337 = vmatpush1.bf16.msra.mxu0 %v5029
  %5338 = vmatprep.subr.bf16.mxu0 0
  %5339 = vmatpush1.bf16.msra.mxu0 %v5030
  %5340 = vmatprep.mubr.bf16.mxu0 %v5206
  %5341 = vmatmul.mubr.bf16.gmra.mrb[0].mxu0 %v5205
  %v5342 = vpop.f32.mrb[0].mxu0
  %v5343 = vadd.f32 %v5294, %v5342
  %v5344 = vpop.f32.mrb[0].mxu0
  %v5345 = vpop.f32.mrb[0].mxu0
  %v5346 = vadd.f32 %v5297, %v5345
  %v5347 = vpop.f32.mrb[0].mxu0
  %5348 = vmatprep.mubr.bf16.mxu0 %v5219
  %5349 = vmatmul.mubr.bf16.gmra.mrb[0].mxu0 %v5218
  %v5350 = vpop.f32.mrb[0].mxu0
  %v5351 = vadd.f32 %v5302, %v5350
  %v5352 = vpop.f32.mrb[0].mxu0
  %v5353 = vpop.f32.mrb[0].mxu0
  %v5354 = vadd.f32 %v5305, %v5353
  %v5355 = vpop.f32.mrb[0].mxu0
  %5356 = vdwg.mxu0
  %5357 = vmatprep.subr.bf16.mxu0 0
  %5358 = vmatpush1.bf16.msra.mxu0 %v5031
  %5359 = vmatprep.subr.bf16.mxu0 0
  %5360 = vmatpush1.bf16.msra.mxu0 %v5032
  %5361 = vmatprep.subr.bf16.mxu0 0
  %5362 = vmatpush1.bf16.msra.mxu0 %v5033
  %5363 = vmatprep.subr.bf16.mxu0 0
  %5364 = vmatpush1.bf16.msra.mxu0 %v5034
  %5365 = vmatprep.subr.bf16.mxu0 0
  %5366 = vmatpush1.bf16.msra.mxu0 %v5035
  %5367 = vmatprep.subr.bf16.mxu0 0
  %5368 = vmatpush1.bf16.msra.mxu0 %v5036
  %5369 = vmatprep.subr.bf16.mxu0 0
  %5370 = vmatpush1.bf16.msra.mxu0 %v5037
  %5371 = vmatprep.subr.bf16.mxu0 0
  %5372 = vmatpush1.bf16.msra.mxu0 %v5038
  %5373 = vmatprep.subr.bf16.mxu0 0
  %5374 = vmatpush1.bf16.msra.mxu0 %v5039
  %5375 = vmatprep.subr.bf16.mxu0 0
  %5376 = vmatpush1.bf16.msra.mxu0 %v5040
  %5377 = vmatprep.subr.bf16.mxu0 0
  %5378 = vmatpush1.bf16.msra.mxu0 %v5041
  %5379 = vmatprep.subr.bf16.mxu0 0
  %5380 = vmatpush1.bf16.msra.mxu0 %v5042
  %5381 = vmatprep.subr.bf16.mxu0 0
  %5382 = vmatpush1.bf16.msra.mxu0 %v5043
  %5383 = vmatprep.subr.bf16.mxu0 0
  %5384 = vmatpush1.bf16.msra.mxu0 %v5044
  %5385 = vmatprep.subr.bf16.mxu0 0
  %5386 = vmatpush1.bf16.msra.mxu0 %v5045
  %5387 = vmatprep.subr.bf16.mxu0 0
  %5388 = vmatpush1.bf16.msra.mxu0 %v5046
  %5389 = vmatprep.mubr.bf16.mxu0 %v5208
  %5390 = vmatmul.mubr.bf16.gmra.mrb[0].mxu0 %v5207
  %v5391 = vpop.f32.mrb[0].mxu0
  %v5392 = vadd.f32 %v5343, %v5391
  %v5393 = vpop.f32.mrb[0].mxu0
  %v5394 = vpop.f32.mrb[0].mxu0
  %v5395 = vadd.f32 %v5346, %v5394
  %v5396 = vpop.f32.mrb[0].mxu0
  %5397 = vmatprep.mubr.bf16.mxu0 %v5221
  %5398 = vmatmul.mubr.bf16.gmra.mrb[0].mxu0 %v5220
  %v5399 = vpop.f32.mrb[0].mxu0
  %v5400 = vadd.f32 %v5351, %v5399
  %v5401 = vpop.f32.mrb[0].mxu0
  %v5402 = vpop.f32.mrb[0].mxu0
  %v5403 = vadd.f32 %v5354, %v5402
  %v5404 = vpop.f32.mrb[0].mxu0
  %5405 = vdwg.mxu0
  %5406 = vmatprep.subr.bf16.mxu0 0
  %5407 = vmatpush1.bf16.msra.mxu0 %v5047
  %5408 = vmatprep.subr.bf16.mxu0 0
  %5409 = vmatpush1.bf16.msra.mxu0 %v5048
  %5410 = vmatprep.subr.bf16.mxu0 0
  %5411 = vmatpush1.bf16.msra.mxu0 %v5049
  %5412 = vmatprep.subr.bf16.mxu0 0
  %5413 = vmatpush1.bf16.msra.mxu0 %v5050
  %5414 = vmatprep.subr.bf16.mxu0 0
  %5415 = vmatpush1.bf16.msra.mxu0 %v5051
  %5416 = vmatprep.subr.bf16.mxu0 0
  %5417 = vmatpush1.bf16.msra.mxu0 %v5052
  %5418 = vmatprep.subr.bf16.mxu0 0
  %5419 = vmatpush1.bf16.msra.mxu0 %v5053
  %5420 = vmatprep.subr.bf16.mxu0 0
  %5421 = vmatpush1.bf16.msra.mxu0 %v5054
  %5422 = vmatprep.subr.bf16.mxu0 0
  %5423 = vmatpush1.bf16.msra.mxu0 %v5055
  %5424 = vmatprep.subr.bf16.mxu0 0
  %5425 = vmatpush1.bf16.msra.mxu0 %v5056
  %5426 = vmatprep.subr.bf16.mxu0 0
  %5427 = vmatpush1.bf16.msra.mxu0 %v5057
  %5428 = vmatprep.subr.bf16.mxu0 0
  %5429 = vmatpush1.bf16.msra.mxu0 %v5058
  %5430 = vmatprep.subr.bf16.mxu0 0
  %5431 = vmatpush1.bf16.msra.mxu0 %v5059
  %5432 = vmatprep.subr.bf16.mxu0 0
  %5433 = vmatpush1.bf16.msra.mxu0 %v5060
  %5434 = vmatprep.subr.bf16.mxu0 0
  %5435 = vmatpush1.bf16.msra.mxu0 %v5061
  %5436 = vmatprep.subr.bf16.mxu0 0
  %5437 = vmatpush1.bf16.msra.mxu0 %v5062
  %5438 = vmatprep.mubr.bf16.mxu0 %v5210
  %5439 = vmatmul.mubr.bf16.gmra.mrb[0].mxu0 %v5209
  %v5440 = vpop.f32.mrb[0].mxu0
  %v5441 = vadd.f32 %v5392, %v5440
  %v5442 = vpop.f32.mrb[0].mxu0
  %v5443 = vpop.f32.mrb[0].mxu0
  %v5444 = vadd.f32 %v5395, %v5443
  %v5445 = vpop.f32.mrb[0].mxu0
  %5446 = vmatprep.mubr.bf16.mxu0 %v5223
  %5447 = vmatmul.mubr.bf16.gmra.mrb[0].mxu0 %v5222
  %v5448 = vpop.f32.mrb[0].mxu0
  %v5449 = vadd.f32 %v5400, %v5448
  %v5450 = vpop.f32.mrb[0].mxu0
  %v5451 = vpop.f32.mrb[0].mxu0
  %v5452 = vadd.f32 %v5403, %v5451
  %v5453 = vpop.f32.mrb[0].mxu0
  %5454 = vdwg.mxu0
  %5455 = vmatprep.subr.bf16.mxu0 0
  %5456 = vmatpush1.bf16.msra.mxu0 %v5063
  %5457 = vmatprep.subr.bf16.mxu0 0
  %5458 = vmatpush1.bf16.msra.mxu0 %v5064
  %5459 = vmatprep.subr.bf16.mxu0 0
  %5460 = vmatpush1.bf16.msra.mxu0 %v5065
  %5461 = vmatprep.subr.bf16.mxu0 0
  %5462 = vmatpush1.bf16.msra.mxu0 %v5066
  %5463 = vmatprep.subr.bf16.mxu0 0
  %5464 = vmatpush1.bf16.msra.mxu0 %v5067
  %5465 = vmatprep.subr.bf16.mxu0 0
  %5466 = vmatpush1.bf16.msra.mxu0 %v5068
  %5467 = vmatprep.subr.bf16.mxu0 0
  %5468 = vmatpush1.bf16.msra.mxu0 %v5069
  %5469 = vmatprep.subr.bf16.mxu0 0
  %5470 = vmatpush1.bf16.msra.mxu0 %v5070
  %5471 = vmatprep.subr.bf16.mxu0 0
  %5472 = vmatpush1.bf16.msra.mxu0 %v5071
  %5473 = vmatprep.subr.bf16.mxu0 0
  %5474 = vmatpush1.bf16.msra.mxu0 %v5072
  %5475 = vmatprep.subr.bf16.mxu0 0
  %5476 = vmatpush1.bf16.msra.mxu0 %v5073
  %5477 = vmatprep.subr.bf16.mxu0 0
  %5478 = vmatpush1.bf16.msra.mxu0 %v5074
  %5479 = vmatprep.subr.bf16.mxu0 0
  %5480 = vmatpush1.bf16.msra.mxu0 %v5075
  %5481 = vmatprep.subr.bf16.mxu0 0
  %5482 = vmatpush1.bf16.msra.mxu0 %v5076
  %5483 = vmatprep.subr.bf16.mxu0 0
  %5484 = vmatpush1.bf16.msra.mxu0 %v5077
  %5485 = vmatprep.subr.bf16.mxu0 0
  %5486 = vmatpush1.bf16.msra.mxu0 %v5078
  %5487 = vmatprep.mubr.bf16.mxu0 %v5212
  %5488 = vmatmul.mubr.bf16.gmra.mrb[0].mxu0 %v5211
  %v5489 = vpop.f32.mrb[0].mxu0
  %v5490 = vadd.f32 %v5441, %v5489
  %v5491 = vpop.f32.mrb[0].mxu0
  %v5492 = vpop.f32.mrb[0].mxu0
  %v5493 = vadd.f32 %v5444, %v5492
  %v5494 = vpop.f32.mrb[0].mxu0
  %5495 = vmatprep.mubr.bf16.mxu0 %v5225
  %5496 = vmatmul.mubr.bf16.gmra.mrb[0].mxu0 %v5224
  %v5497 = vpop.f32.mrb[0].mxu0
  %v5498 = vadd.f32 %v5449, %v5497
  %v5499 = vpop.f32.mrb[0].mxu0
  %v5500 = vpop.f32.mrb[0].mxu0
  %v5501 = vadd.f32 %v5452, %v5500
  %v5502 = vpop.f32.mrb[0].mxu0
  %5503 = vdwg.mxu0
  %5504 = vmatprep.subr.bf16.mxu0 0
  %5505 = vmatpush1.bf16.msra.mxu0 %v5079
  %5506 = vmatprep.subr.bf16.mxu0 0
  %5507 = vmatpush1.bf16.msra.mxu0 %v5080
  %5508 = vmatprep.subr.bf16.mxu0 0
  %5509 = vmatpush1.bf16.msra.mxu0 %v5081
  %5510 = vmatprep.subr.bf16.mxu0 0
  %5511 = vmatpush1.bf16.msra.mxu0 %v5082
  %5512 = vmatprep.subr.bf16.mxu0 0
  %5513 = vmatpush1.bf16.msra.mxu0 %v5083
  %5514 = vmatprep.subr.bf16.mxu0 0
  %5515 = vmatpush1.bf16.msra.mxu0 %v5084
  %5516 = vmatprep.subr.bf16.mxu0 0
  %5517 = vmatpush1.bf16.msra.mxu0 %v5085
  %5518 = vmatprep.subr.bf16.mxu0 0
  %5519 = vmatpush1.bf16.msra.mxu0 %v5086
  %5520 = vmatprep.subr.bf16.mxu0 0
  %5521 = vmatpush1.bf16.msra.mxu0 %v5087
  %5522 = vmatprep.subr.bf16.mxu0 0
  %5523 = vmatpush1.bf16.msra.mxu0 %v5088
  %5524 = vmatprep.subr.bf16.mxu0 0
  %5525 = vmatpush1.bf16.msra.mxu0 %v5089
  %5526 = vmatprep.subr.bf16.mxu0 0
  %5527 = vmatpush1.bf16.msra.mxu0 %v5090
  %5528 = vmatprep.subr.bf16.mxu0 0
  %5529 = vmatpush1.bf16.msra.mxu0 %v5091
  %5530 = vmatprep.subr.bf16.mxu0 0
  %5531 = vmatpush1.bf16.msra.mxu0 %v5092
  %5532 = vmatprep.subr.bf16.mxu0 0
  %5533 = vmatpush1.bf16.msra.mxu0 %v5093
  %5534 = vmatprep.subr.bf16.mxu0 0
  %5535 = vmatpush1.bf16.msra.mxu0 %v5094
  %5536 = vmatprep.mubr.bf16.mxu0 %v5214
  %5537 = vmatmul.mubr.bf16.gmra.mrb[0].mxu0 %v5213
  %v5538 = vpop.f32.mrb[0].mxu0
  %v5539 = vadd.f32 %v5490, %v5538
  %v5540 = vpop.f32.mrb[0].mxu0
  %v5541 = vpop.f32.mrb[0].mxu0
  %v5542 = vadd.f32 %v5493, %v5541
  %v5543 = vpop.f32.mrb[0].mxu0
  %5544 = vmatprep.mubr.bf16.mxu0 %v5227
  %5545 = vmatmul.mubr.bf16.gmra.mrb[0].mxu0 %v5226
  %v5546 = vpop.f32.mrb[0].mxu0
  %v5547 = vadd.f32 %v5498, %v5546
  %v5548 = vpop.f32.mrb[0].mxu0
  %v5549 = vpop.f32.mrb[0].mxu0
  %v5550 = vadd.f32 %v5501, %v5549
  %v5551 = vpop.f32.mrb[0].mxu0
  %5552 = vdwg.mxu0
  %5553 = vmatprep.subr.bf16.mxu0 0
  %5554 = vmatpush1.bf16.msra.mxu0 %v5095
  %5555 = vmatprep.subr.bf16.mxu0 0
  %5556 = vmatpush1.bf16.msra.mxu0 %v5096
  %5557 = vmatprep.subr.bf16.mxu0 0
  %5558 = vmatpush1.bf16.msra.mxu0 %v5097
  %5559 = vmatprep.subr.bf16.mxu0 0
  %5560 = vmatpush1.bf16.msra.mxu0 %v5098
  %5561 = vmatprep.subr.bf16.mxu0 0
  %5562 = vmatpush1.bf16.msra.mxu0 0
  %5563 = vmatprep.subr.bf16.mxu0 0
  %5564 = vmatpush1.bf16.msra.mxu0 0
  %5565 = vmatprep.subr.bf16.mxu0 0
  %5566 = vmatpush1.bf16.msra.mxu0 0
  %5567 = vmatprep.subr.bf16.mxu0 0
  %5568 = vmatpush1.bf16.msra.mxu0 0
  %5569 = vmatprep.subr.bf16.mxu0 0
  %5570 = vmatpush1.bf16.msra.mxu0 0
  %5571 = vmatprep.subr.bf16.mxu0 0
  %5572 = vmatpush1.bf16.msra.mxu0 0
  %5573 = vmatprep.subr.bf16.mxu0 0
  %5574 = vmatpush1.bf16.msra.mxu0 0
  %5575 = vmatprep.subr.bf16.mxu0 0
  %5576 = vmatpush1.bf16.msra.mxu0 0
  %5577 = vmatprep.subr.bf16.mxu0 0
  %5578 = vmatpush1.bf16.msra.mxu0 0
  %5579 = vmatprep.subr.bf16.mxu0 0
  %5580 = vmatpush1.bf16.msra.mxu0 0
  %5581 = vmatprep.subr.bf16.mxu0 0
  %5582 = vmatpush1.bf16.msra.mxu0 0
  %5583 = vmatprep.subr.bf16.mxu0 0
  %5584 = vmatpush1.bf16.msra.mxu0 0
  %5585 = vmatprep.mubr.bf16.mxu0 0
  %5586 = vmatmul.mubr.bf16.gmra.mrb[0].mxu0 %v5254
  %v5587 = vpop.f32.mrb[0].mxu0
  %v5588 = vadd.f32 %v5539, %v5587
  %v5589 = vpop.f32.mrb[0].mxu0
  %v5590 = vpop.f32.mrb[0].mxu0
  %v5591 = vadd.f32 %v5542, %v5590
  %v5592 = vpop.f32.mrb[0].mxu0
  %5593 = vmatprep.mubr.bf16.mxu0 0
  %5594 = vmatmul.mubr.bf16.gmra.mrb[0].mxu0 %v5257
  %v5595 = vpop.f32.mrb[0].mxu0
  %v5596 = vadd.f32 %v5547, %v5595
  %v5597 = vpop.f32.mrb[0].mxu0
  %v5598 = vpop.f32.mrb[0].mxu0
  %v5599 = vadd.f32 %v5550, %v5598
  %v5600 = vpop.f32.mrb[0].mxu0
  %5601 = vdwg.mxu0
  %v5602 = vpack.c.bf16 %v5591, %v5588
  %v5603 = vpack.c.bf16 %v5599, %v5596
  %s5604 = scalar_lea.vmem [#allocation5], 16
  %5605 = vst [vmem:[%s5604] sm:$0xff] %v5602
  %5606 = vst [vmem:[%s5604 + $0x8] sm:$0xff] %v5603
  %v5607 = vld [vmem:[%s6] sm:$0x1]
  %v5609 = vlaneseq
  %v5610 = vshrl.u32 %v5609, 7
  %v5611 = vsub.s32 0, %v5610
  %v5612 = vrot.slane %v5607, %v5611
  %v5614 = vadd.f32 %v5612, 0.0
  %v5615 = vld [vmem:[#allocation5] sm:$0x1]
  %v5616 = vld [vmem:[#allocation5 + $0x10] sm:$0x1]
  %v5617 = vld [vmem:[%s5] sm:$0xf]
  %v5618 = vld [vmem:[%s5 + $0x4] sm:$0xf]
  %v5619 = vld [vmem:[%s5 + $0x8] sm:$0xf]
  %v5620 = vld [vmem:[%s5 + $0xc] sm:$0xf]
  %v5621 = vld [vmem:[%s5 + $0x10] sm:$0xf]
  %v5622 = vld [vmem:[%s5 + $0x14] sm:$0xf]
  %v5623 = vld [vmem:[%s5 + $0x18] sm:$0xf]
  %v5624 = vld [vmem:[%s5 + $0x1c] sm:$0xf]
  %v5625 = vld [vmem:[%s5 + $0x20] sm:$0xf]
  %v5626 = vld [vmem:[%s5 + $0x24] sm:$0xf]
  %v5627 = vld [vmem:[%s5 + $0x28] sm:$0xf]
  %v5628 = vld [vmem:[%s5 + $0x2c] sm:$0xf]
  %v5629 = vld [vmem:[%s5 + $0x30] sm:$0xf]
  %v5630 = vld [vmem:[%s5 + $0x34] sm:$0xf]
  %v5631 = vld [vmem:[%s5 + $0x38] sm:$0xf]
  %v5632 = vld [vmem:[%s5 + $0x3c] sm:$0xf]
  %v5635 = vunpack.c.l.b16 %v5615
  %v5636 = vunpack.c.l.b16 %v5616
  %v5637 = vrot.slane %v5636, 7
  %vm5638 = vcmask 1041409
  %v5639 = vsel %vm5638, %v5637, %v5635
  %v5640 = vpack.c.b16 %v5639, %v5639
  %v5658 = vunpack.c.l.b16 %v5617
  %v5659 = vunpack.c.l.b16 %v5618
  %v5660 = vunpack.c.l.b16 %v5619
  %v5661 = vunpack.c.l.b16 %v5620
  %v5662 = vunpack.c.l.b16 %v5621
  %v5663 = vunpack.c.l.b16 %v5622
  %v5664 = vunpack.c.l.b16 %v5623
  %v5665 = vunpack.c.l.b16 %v5624
  %v5666 = vunpack.c.l.b16 %v5625
  %v5667 = vunpack.c.l.b16 %v5626
  %v5668 = vunpack.c.l.b16 %v5627
  %v5669 = vunpack.c.l.b16 %v5628
  %v5670 = vunpack.c.l.b16 %v5629
  %v5671 = vunpack.c.l.b16 %v5630
  %v5672 = vunpack.c.l.b16 %v5631
  %v5673 = vunpack.c.l.b16 %v5632
  %v5674 = vpack.c.b16 %v5659, %v5658
  %v5675 = vpack.c.b16 %v5661, %v5660
  %v5676 = vpack.c.b16 %v5663, %v5662
  %v5677 = vpack.c.b16 %v5665, %v5664
  %v5678 = vpack.c.b16 %v5667, %v5666
  %v5679 = vpack.c.b16 %v5669, %v5668
  %v5680 = vpack.c.b16 %v5671, %v5670
  %v5681 = vpack.c.b16 %v5673, %v5672
  %5690 = vmatprep.subr.bf16.mxu0 0
  %5691 = vmatpush1.bf16.msra.mxu0 %v5674
  %5692 = vmatprep.subr.bf16.mxu0 0
  %5693 = vmatpush1.bf16.msra.mxu0 %v5675
  %5694 = vmatprep.subr.bf16.mxu0 0
  %5695 = vmatpush1.bf16.msra.mxu0 %v5676
  %5696 = vmatprep.subr.bf16.mxu0 0
  %5697 = vmatpush1.bf16.msra.mxu0 %v5677
  %5698 = vmatprep.subr.bf16.mxu0 0
  %5699 = vmatpush1.bf16.msra.mxu0 %v5678
  %5700 = vmatprep.subr.bf16.mxu0 0
  %5701 = vmatpush1.bf16.msra.mxu0 %v5679
  %5702 = vmatprep.subr.bf16.mxu0 0
  %5703 = vmatpush1.bf16.msra.mxu0 %v5680
  %5704 = vmatprep.subr.bf16.mxu0 0
  %5705 = vmatpush1.bf16.msra.mxu0 %v5681
  %5706 = vmatprep.subr.bf16.mxu0 0
  %5707 = vmatpush1.bf16.msra.mxu0 0
  %5708 = vmatprep.subr.bf16.mxu0 0
  %5709 = vmatpush1.bf16.msra.mxu0 0
  %5710 = vmatprep.subr.bf16.mxu0 0
  %5711 = vmatpush1.bf16.msra.mxu0 0
  %5712 = vmatprep.subr.bf16.mxu0 0
  %5713 = vmatpush1.bf16.msra.mxu0 0
  %5714 = vmatprep.subr.bf16.mxu0 0
  %5715 = vmatpush1.bf16.msra.mxu0 0
  %5716 = vmatprep.subr.bf16.mxu0 0
  %5717 = vmatpush1.bf16.msra.mxu0 0
  %5718 = vmatprep.subr.bf16.mxu0 0
  %5719 = vmatpush1.bf16.msra.mxu0 0
  %5720 = vmatprep.subr.bf16.mxu0 0
  %5721 = vmatpush1.bf16.msra.mxu0 0
  %5722 = vmatprep.mubr.bf16.mxu0 0
  %5723 = vmatmul.mubr.bf16.gmra.mrb[0].mxu0 %v5640
  %v5724 = vpop.f32.mrb[0].mxu0
  %v5725 = vadd.f32 0.0, %v5724
  %v5726 = vpop.f32.mrb[0].mxu0
  %v5727 = vpop.f32.mrb[0].mxu0
  %v5728 = vpop.f32.mrb[0].mxu0
  %5729 = vdwg.mxu0
  %v5730 = vadd.f32 %v5614, %v5725
  %s5731 = scalar_lea.vmem %s5, 64
  %v5732 = vld [vmem:[%s5731] sm:$0xf]
  %v5733 = vld [vmem:[%s5731 + $0x4] sm:$0xf]
  %v5734 = vld [vmem:[%s5731 + $0x8] sm:$0xf]
  %v5735 = vld [vmem:[%s5731 + $0xc] sm:$0xf]
  %v5736 = vld [vmem:[%s5731 + $0x10] sm:$0xf]
  %v5737 = vld [vmem:[%s5731 + $0x14] sm:$0xf]
  %v5738 = vld [vmem:[%s5731 + $0x18] sm:$0xf]
  %v5739 = vld [vmem:[%s5731 + $0x1c] sm:$0xf]
  %v5740 = vld [vmem:[%s5731 + $0x20] sm:$0xf]
  %v5741 = vld [vmem:[%s5731 + $0x24] sm:$0xf]
  %v5742 = vld [vmem:[%s5731 + $0x28] sm:$0xf]
  %v5743 = vld [vmem:[%s5731 + $0x2c] sm:$0xf]
  %v5744 = vld [vmem:[%s5731 + $0x30] sm:$0xf]
  %v5745 = vld [vmem:[%s5731 + $0x34] sm:$0xf]
  %v5746 = vld [vmem:[%s5731 + $0x38] sm:$0xf]
  %v5747 = vld [vmem:[%s5731 + $0x3c] sm:$0xf]
  %v5748 = vrot.slane %v5635, 1
  %v5749 = vsel %vm5638, %v5636, %v5748
  %v5750 = vpack.c.b16 %v5749, %v5749
  %v5768 = vunpack.c.l.b16 %v5732
  %v5769 = vunpack.c.l.b16 %v5733
  %v5770 = vunpack.c.l.b16 %v5734
  %v5771 = vunpack.c.l.b16 %v5735
  %v5772 = vunpack.c.l.b16 %v5736
  %v5773 = vunpack.c.l.b16 %v5737
  %v5774 = vunpack.c.l.b16 %v5738
  %v5775 = vunpack.c.l.b16 %v5739
  %v5776 = vunpack.c.l.b16 %v5740
  %v5777 = vunpack.c.l.b16 %v5741
  %v5778 = vunpack.c.l.b16 %v5742
  %v5779 = vunpack.c.l.b16 %v5743
  %v5780 = vunpack.c.l.b16 %v5744
  %v5781 = vunpack.c.l.b16 %v5745
  %v5782 = vunpack.c.l.b16 %v5746
  %v5783 = vunpack.c.l.b16 %v5747
  %v5784 = vpack.c.b16 %v5769, %v5768
  %v5785 = vpack.c.b16 %v5771, %v5770
  %v5786 = vpack.c.b16 %v5773, %v5772
  %v5787 = vpack.c.b16 %v5775, %v5774
  %v5788 = vpack.c.b16 %v5777, %v5776
  %v5789 = vpack.c.b16 %v5779, %v5778
  %v5790 = vpack.c.b16 %v5781, %v5780
  %v5791 = vpack.c.b16 %v5783, %v5782
  %5800 = vmatprep.subr.bf16.mxu0 0
  %5801 = vmatpush1.bf16.msra.mxu0 %v5784
  %5802 = vmatprep.subr.bf16.mxu0 0
  %5803 = vmatpush1.bf16.msra.mxu0 %v5785
  %5804 = vmatprep.subr.bf16.mxu0 0
  %5805 = vmatpush1.bf16.msra.mxu0 %v5786
  %5806 = vmatprep.subr.bf16.mxu0 0
  %5807 = vmatpush1.bf16.msra.mxu0 %v5787
  %5808 = vmatprep.subr.bf16.mxu0 0
  %5809 = vmatpush1.bf16.msra.mxu0 %v5788
  %5810 = vmatprep.subr.bf16.mxu0 0
  %5811 = vmatpush1.bf16.msra.mxu0 %v5789
  %5812 = vmatprep.subr.bf16.mxu0 0
  %5813 = vmatpush1.bf16.msra.mxu0 %v5790
  %5814 = vmatprep.subr.bf16.mxu0 0
  %5815 = vmatpush1.bf16.msra.mxu0 %v5791
  %5816 = vmatprep.subr.bf16.mxu0 0
  %5817 = vmatpush1.bf16.msra.mxu0 0
  %5818 = vmatprep.subr.bf16.mxu0 0
  %5819 = vmatpush1.bf16.msra.mxu0 0
  %5820 = vmatprep.subr.bf16.mxu0 0
  %5821 = vmatpush1.bf16.msra.mxu0 0
  %5822 = vmatprep.subr.bf16.mxu0 0
  %5823 = vmatpush1.bf16.msra.mxu0 0
  %5824 = vmatprep.subr.bf16.mxu0 0
  %5825 = vmatpush1.bf16.msra.mxu0 0
  %5826 = vmatprep.subr.bf16.mxu0 0
  %5827 = vmatpush1.bf16.msra.mxu0 0
  %5828 = vmatprep.subr.bf16.mxu0 0
  %5829 = vmatpush1.bf16.msra.mxu0 0
  %5830 = vmatprep.subr.bf16.mxu0 0
  %5831 = vmatpush1.bf16.msra.mxu0 0
  %5832 = vmatprep.mubr.bf16.mxu0 0
  %5833 = vmatmul.mubr.bf16.gmra.mrb[0].mxu0 %v5750
  %v5834 = vpop.f32.mrb[0].mxu0
  %v5835 = vadd.f32 0.0, %v5834
  %v5836 = vpop.f32.mrb[0].mxu0
  %v5837 = vpop.f32.mrb[0].mxu0
  %v5838 = vpop.f32.mrb[0].mxu0
  %5839 = vdwg.mxu0
  %v5840 = vadd.f32 %v5730, %v5835
  %v5841 = vld [vmem:[#allocation5] sm:$0x2]
  %v5842 = vld [vmem:[#allocation5 + $0x10] sm:$0x2]
  %s5843 = scalar_lea.vmem %s5, 128
  %v5844 = vld [vmem:[%s5843] sm:$0xf]
  %v5845 = vld [vmem:[%s5843 + $0x4] sm:$0xf]
  %v5846 = vld [vmem:[%s5843 + $0x8] sm:$0xf]
  %v5847 = vld [vmem:[%s5843 + $0xc] sm:$0xf]
  %v5848 = vld [vmem:[%s5843 + $0x10] sm:$0xf]
  %v5849 = vld [vmem:[%s5843 + $0x14] sm:$0xf]
  %v5850 = vld [vmem:[%s5843 + $0x18] sm:$0xf]
  %v5851 = vld [vmem:[%s5843 + $0x1c] sm:$0xf]
  %v5852 = vld [vmem:[%s5843 + $0x20] sm:$0xf]
  %v5853 = vld [vmem:[%s5843 + $0x24] sm:$0xf]
  %v5854 = vld [vmem:[%s5843 + $0x28] sm:$0xf]
  %v5855 = vld [vmem:[%s5843 + $0x2c] sm:$0xf]
  %v5856 = vld [vmem:[%s5843 + $0x30] sm:$0xf]
  %v5857 = vld [vmem:[%s5843 + $0x34] sm:$0xf]
  %v5858 = vld [vmem:[%s5843 + $0x38] sm:$0xf]
  %v5859 = vld [vmem:[%s5843 + $0x3c] sm:$0xf]
  %v5862 = vunpack.c.l.b16 %v5841
  %v5863 = vunpack.c.l.b16 %v5842
  %v5864 = vrot.slane %v5862, 2
  %v5865 = vrot.slane %v5863, 1
  %v5866 = vsel %vm5638, %v5865, %v5864
  %v5867 = vpack.c.b16 %v5866, %v5866
  %v5885 = vunpack.c.l.b16 %v5844
  %v5886 = vunpack.c.l.b16 %v5845
  %v5887 = vunpack.c.l.b16 %v5846
  %v5888 = vunpack.c.l.b16 %v5847
  %v5889 = vunpack.c.l.b16 %v5848
  %v5890 = vunpack.c.l.b16 %v5849
  %v5891 = vunpack.c.l.b16 %v5850
  %v5892 = vunpack.c.l.b16 %v5851
  %v5893 = vunpack.c.l.b16 %v5852
  %v5894 = vunpack.c.l.b16 %v5853
  %v5895 = vunpack.c.l.b16 %v5854
  %v5896 = vunpack.c.l.b16 %v5855
  %v5897 = vunpack.c.l.b16 %v5856
  %v5898 = vunpack.c.l.b16 %v5857
  %v5899 = vunpack.c.l.b16 %v5858
  %v5900 = vunpack.c.l.b16 %v5859
  %v5901 = vpack.c.b16 %v5886, %v5885
  %v5902 = vpack.c.b16 %v5888, %v5887
  %v5903 = vpack.c.b16 %v5890, %v5889
  %v5904 = vpack.c.b16 %v5892, %v5891
  %v5905 = vpack.c.b16 %v5894, %v5893
  %v5906 = vpack.c.b16 %v5896, %v5895
  %v5907 = vpack.c.b16 %v5898, %v5897
  %v5908 = vpack.c.b16 %v5900, %v5899
  %5917 = vmatprep.subr.bf16.mxu0 0
  %5918 = vmatpush1.bf16.msra.mxu0 %v5901
  %5919 = vmatprep.subr.bf16.mxu0 0
  %5920 = vmatpush1.bf16.msra.mxu0 %v5902
  %5921 = vmatprep.subr.bf16.mxu0 0
  %5922 = vmatpush1.bf16.msra.mxu0 %v5903
  %5923 = vmatprep.subr.bf16.mxu0 0
  %5924 = vmatpush1.bf16.msra.mxu0 %v5904
  %5925 = vmatprep.subr.bf16.mxu0 0
  %5926 = vmatpush1.bf16.msra.mxu0 %v5905
  %5927 = vmatprep.subr.bf16.mxu0 0
  %5928 = vmatpush1.bf16.msra.mxu0 %v5906
  %5929 = vmatprep.subr.bf16.mxu0 0
  %5930 = vmatpush1.bf16.msra.mxu0 %v5907
  %5931 = vmatprep.subr.bf16.mxu0 0
  %5932 = vmatpush1.bf16.msra.mxu0 %v5908
  %5933 = vmatprep.subr.bf16.mxu0 0
  %5934 = vmatpush1.bf16.msra.mxu0 0
  %5935 = vmatprep.subr.bf16.mxu0 0
  %5936 = vmatpush1.bf16.msra.mxu0 0
  %5937 = vmatprep.subr.bf16.mxu0 0
  %5938 = vmatpush1.bf16.msra.mxu0 0
  %5939 = vmatprep.subr.bf16.mxu0 0
  %5940 = vmatpush1.bf16.msra.mxu0 0
  %5941 = vmatprep.subr.bf16.mxu0 0
  %5942 = vmatpush1.bf16.msra.mxu0 0
  %5943 = vmatprep.subr.bf16.mxu0 0
  %5944 = vmatpush1.bf16.msra.mxu0 0
  %5945 = vmatprep.subr.bf16.mxu0 0
  %5946 = vmatpush1.bf16.msra.mxu0 0
  %5947 = vmatprep.subr.bf16.mxu0 0
  %5948 = vmatpush1.bf16.msra.mxu0 0
  %5949 = vmatprep.mubr.bf16.mxu0 0
  %5950 = vmatmul.mubr.bf16.gmra.mrb[0].mxu0 %v5867
  %v5951 = vpop.f32.mrb[0].mxu0
  %v5952 = vadd.f32 0.0, %v5951
  %v5953 = vpop.f32.mrb[0].mxu0
  %v5954 = vpop.f32.mrb[0].mxu0
  %v5955 = vpop.f32.mrb[0].mxu0
  %5956 = vdwg.mxu0
  %v5957 = vadd.f32 %v5840, %v5952
  %s5958 = scalar_lea.vmem %s5, 192
  %v5959 = vld [vmem:[%s5958] sm:$0xf]
  %v5960 = vld [vmem:[%s5958 + $0x4] sm:$0xf]
  %v5961 = vld [vmem:[%s5958 + $0x8] sm:$0xf]
  %v5962 = vld [vmem:[%s5958 + $0xc] sm:$0xf]
  %v5963 = vld [vmem:[%s5958 + $0x10] sm:$0xf]
  %v5964 = vld [vmem:[%s5958 + $0x14] sm:$0xf]
  %v5965 = vld [vmem:[%s5958 + $0x18] sm:$0xf]
  %v5966 = vld [vmem:[%s5958 + $0x1c] sm:$0xf]
  %v5967 = vld [vmem:[%s5958 + $0x20] sm:$0xf]
  %v5968 = vld [vmem:[%s5958 + $0x24] sm:$0xf]
  %v5969 = vld [vmem:[%s5958 + $0x28] sm:$0xf]
  %v5970 = vld [vmem:[%s5958 + $0x2c] sm:$0xf]
  %v5971 = vld [vmem:[%s5958 + $0x30] sm:$0xf]
  %v5972 = vld [vmem:[%s5958 + $0x34] sm:$0xf]
  %v5973 = vld [vmem:[%s5958 + $0x38] sm:$0xf]
  %v5974 = vld [vmem:[%s5958 + $0x3c] sm:$0xf]
  %v5975 = vrot.slane %v5862, 3
  %v5976 = vrot.slane %v5863, 2
  %v5977 = vsel %vm5638, %v5976, %v5975
  %v5978 = vpack.c.b16 %v5977, %v5977
  %v5996 = vunpack.c.l.b16 %v5959
  %v5997 = vunpack.c.l.b16 %v5960
  %v5998 = vunpack.c.l.b16 %v5961
  %v5999 = vunpack.c.l.b16 %v5962
  %v6000 = vunpack.c.l.b16 %v5963
  %v6001 = vunpack.c.l.b16 %v5964
  %v6002 = vunpack.c.l.b16 %v5965
  %v6003 = vunpack.c.l.b16 %v5966
  %v6004 = vunpack.c.l.b16 %v5967
  %v6005 = vunpack.c.l.b16 %v5968
  %v6006 = vunpack.c.l.b16 %v5969
  %v6007 = vunpack.c.l.b16 %v5970
  %v6008 = vunpack.c.l.b16 %v5971
  %v6009 = vunpack.c.l.b16 %v5972
  %v6010 = vunpack.c.l.b16 %v5973
  %v6011 = vunpack.c.l.b16 %v5974
  %v6012 = vpack.c.b16 %v5997, %v5996
  %v6013 = vpack.c.b16 %v5999, %v5998
  %v6014 = vpack.c.b16 %v6001, %v6000
  %v6015 = vpack.c.b16 %v6003, %v6002
  %v6016 = vpack.c.b16 %v6005, %v6004
  %v6017 = vpack.c.b16 %v6007, %v6006
  %v6018 = vpack.c.b16 %v6009, %v6008
  %v6019 = vpack.c.b16 %v6011, %v6010
  %6028 = vmatprep.subr.bf16.mxu0 0
  %6029 = vmatpush1.bf16.msra.mxu0 %v6012
  %6030 = vmatprep.subr.bf16.mxu0 0
  %6031 = vmatpush1.bf16.msra.mxu0 %v6013
  %6032 = vmatprep.subr.bf16.mxu0 0
  %6033 = vmatpush1.bf16.msra.mxu0 %v6014
  %6034 = vmatprep.subr.bf16.mxu0 0
  %6035 = vmatpush1.bf16.msra.mxu0 %v6015
  %6036 = vmatprep.subr.bf16.mxu0 0
  %6037 = vmatpush1.bf16.msra.mxu0 %v6016
  %6038 = vmatprep.subr.bf16.mxu0 0
  %6039 = vmatpush1.bf16.msra.mxu0 %v6017
  %6040 = vmatprep.subr.bf16.mxu0 0
  %6041 = vmatpush1.bf16.msra.mxu0 %v6018
  %6042 = vmatprep.subr.bf16.mxu0 0
  %6043 = vmatpush1.bf16.msra.mxu0 %v6019
  %6044 = vmatprep.subr.bf16.mxu0 0
  %6045 = vmatpush1.bf16.msra.mxu0 0
  %6046 = vmatprep.subr.bf16.mxu0 0
  %6047 = vmatpush1.bf16.msra.mxu0 0
  %6048 = vmatprep.subr.bf16.mxu0 0
  %6049 = vmatpush1.bf16.msra.mxu0 0
  %6050 = vmatprep.subr.bf16.mxu0 0
  %6051 = vmatpush1.bf16.msra.mxu0 0
  %6052 = vmatprep.subr.bf16.mxu0 0
  %6053 = vmatpush1.bf16.msra.mxu0 0
  %6054 = vmatprep.subr.bf16.mxu0 0
  %6055 = vmatpush1.bf16.msra.mxu0 0
  %6056 = vmatprep.subr.bf16.mxu0 0
  %6057 = vmatpush1.bf16.msra.mxu0 0
  %6058 = vmatprep.subr.bf16.mxu0 0
  %6059 = vmatpush1.bf16.msra.mxu0 0
  %6060 = vmatprep.mubr.bf16.mxu0 0
  %6061 = vmatmul.mubr.bf16.gmra.mrb[0].mxu0 %v5978
  %v6062 = vpop.f32.mrb[0].mxu0
  %v6063 = vadd.f32 0.0, %v6062
  %v6064 = vpop.f32.mrb[0].mxu0
  %v6065 = vpop.f32.mrb[0].mxu0
  %v6066 = vpop.f32.mrb[0].mxu0
  %6067 = vdwg.mxu0
  %v6068 = vadd.f32 %v5957, %v6063
  %v6069 = vld [vmem:[#allocation5] sm:$0x4]
  %v6070 = vld [vmem:[#allocation5 + $0x10] sm:$0x4]
  %s6071 = scalar_lea.vmem %s5, 256
  %v6072 = vld [vmem:[%s6071] sm:$0xf]
  %v6073 = vld [vmem:[%s6071 + $0x4] sm:$0xf]
  %v6074 = vld [vmem:[%s6071 + $0x8] sm:$0xf]
  %v6075 = vld [vmem:[%s6071 + $0xc] sm:$0xf]
  %v6076 = vld [vmem:[%s6071 + $0x10] sm:$0xf]
  %v6077 = vld [vmem:[%s6071 + $0x14] sm:$0xf]
  %v6078 = vld [vmem:[%s6071 + $0x18] sm:$0xf]
  %v6079 = vld [vmem:[%s6071 + $0x1c] sm:$0xf]
  %v6080 = vld [vmem:[%s6071 + $0x20] sm:$0xf]
  %v6081 = vld [vmem:[%s6071 + $0x24] sm:$0xf]
  %v6082 = vld [vmem:[%s6071 + $0x28] sm:$0xf]
  %v6083 = vld [vmem:[%s6071 + $0x2c] sm:$0xf]
  %v6084 = vld [vmem:[%s6071 + $0x30] sm:$0xf]
  %v6085 = vld [vmem:[%s6071 + $0x34] sm:$0xf]
  %v6086 = vld [vmem:[%s6071 + $0x38] sm:$0xf]
  %v6087 = vld [vmem:[%s6071 + $0x3c] sm:$0xf]
  %v6090 = vunpack.c.l.b16 %v6069
  %v6091 = vunpack.c.l.b16 %v6070
  %v6092 = vrot.slane %v6090, 4
  %v6093 = vrot.slane %v6091, 3
  %v6094 = vsel %vm5638, %v6093, %v6092
  %v6095 = vpack.c.b16 %v6094, %v6094
  %v6113 = vunpack.c.l.b16 %v6072
  %v6114 = vunpack.c.l.b16 %v6073
  %v6115 = vunpack.c.l.b16 %v6074
  %v6116 = vunpack.c.l.b16 %v6075
  %v6117 = vunpack.c.l.b16 %v6076
  %v6118 = vunpack.c.l.b16 %v6077
  %v6119 = vunpack.c.l.b16 %v6078
  %v6120 = vunpack.c.l.b16 %v6079
  %v6121 = vunpack.c.l.b16 %v6080
  %v6122 = vunpack.c.l.b16 %v6081
  %v6123 = vunpack.c.l.b16 %v6082
  %v6124 = vunpack.c.l.b16 %v6083
  %v6125 = vunpack.c.l.b16 %v6084
  %v6126 = vunpack.c.l.b16 %v6085
  %v6127 = vunpack.c.l.b16 %v6086
  %v6128 = vunpack.c.l.b16 %v6087
  %v6129 = vpack.c.b16 %v6114, %v6113
  %v6130 = vpack.c.b16 %v6116, %v6115
  %v6131 = vpack.c.b16 %v6118, %v6117
  %v6132 = vpack.c.b16 %v6120, %v6119
  %v6133 = vpack.c.b16 %v6122, %v6121
  %v6134 = vpack.c.b16 %v6124, %v6123
  %v6135 = vpack.c.b16 %v6126, %v6125
  %v6136 = vpack.c.b16 %v6128, %v6127
  %6145 = vmatprep.subr.bf16.mxu0 0
  %6146 = vmatpush1.bf16.msra.mxu0 %v6129
  %6147 = vmatprep.subr.bf16.mxu0 0
  %6148 = vmatpush1.bf16.msra.mxu0 %v6130
  %6149 = vmatprep.subr.bf16.mxu0 0
  %6150 = vmatpush1.bf16.msra.mxu0 %v6131
  %6151 = vmatprep.subr.bf16.mxu0 0
  %6152 = vmatpush1.bf16.msra.mxu0 %v6132
  %6153 = vmatprep.subr.bf16.mxu0 0
  %6154 = vmatpush1.bf16.msra.mxu0 %v6133
  %6155 = vmatprep.subr.bf16.mxu0 0
  %6156 = vmatpush1.bf16.msra.mxu0 %v6134
  %6157 = vmatprep.subr.bf16.mxu0 0
  %6158 = vmatpush1.bf16.msra.mxu0 %v6135
  %6159 = vmatprep.subr.bf16.mxu0 0
  %6160 = vmatpush1.bf16.msra.mxu0 %v6136
  %6161 = vmatprep.subr.bf16.mxu0 0
  %6162 = vmatpush1.bf16.msra.mxu0 0
  %6163 = vmatprep.subr.bf16.mxu0 0
  %6164 = vmatpush1.bf16.msra.mxu0 0
  %6165 = vmatprep.subr.bf16.mxu0 0
  %6166 = vmatpush1.bf16.msra.mxu0 0
  %6167 = vmatprep.subr.bf16.mxu0 0
  %6168 = vmatpush1.bf16.msra.mxu0 0
  %6169 = vmatprep.subr.bf16.mxu0 0
  %6170 = vmatpush1.bf16.msra.mxu0 0
  %6171 = vmatprep.subr.bf16.mxu0 0
  %6172 = vmatpush1.bf16.msra.mxu0 0
  %6173 = vmatprep.subr.bf16.mxu0 0
  %6174 = vmatpush1.bf16.msra.mxu0 0
  %6175 = vmatprep.subr.bf16.mxu0 0
  %6176 = vmatpush1.bf16.msra.mxu0 0
  %6177 = vmatprep.mubr.bf16.mxu0 0
  %6178 = vmatmul.mubr.bf16.gmra.mrb[0].mxu0 %v6095
  %v6179 = vpop.f32.mrb[0].mxu0
  %v6180 = vadd.f32 0.0, %v6179
  %v6181 = vpop.f32.mrb[0].mxu0
  %v6182 = vpop.f32.mrb[0].mxu0
  %v6183 = vpop.f32.mrb[0].mxu0
  %6184 = vdwg.mxu0
  %v6185 = vadd.f32 %v6068, %v6180
  %s6186 = scalar_lea.vmem %s5, 320
  %v6187 = vld [vmem:[%s6186] sm:$0xf]
  %v6188 = vld [vmem:[%s6186 + $0x4] sm:$0xf]
  %v6189 = vld [vmem:[%s6186 + $0x8] sm:$0xf]
  %v6190 = vld [vmem:[%s6186 + $0xc] sm:$0xf]
  %v6191 = vld [vmem:[%s6186 + $0x10] sm:$0xf]
  %v6192 = vld [vmem:[%s6186 + $0x14] sm:$0xf]
  %v6193 = vld [vmem:[%s6186 + $0x18] sm:$0xf]
  %v6194 = vld [vmem:[%s6186 + $0x1c] sm:$0xf]
  %v6195 = vld [vmem:[%s6186 + $0x20] sm:$0xf]
  %v6196 = vld [vmem:[%s6186 + $0x24] sm:$0xf]
  %v6197 = vld [vmem:[%s6186 + $0x28] sm:$0xf]
  %v6198 = vld [vmem:[%s6186 + $0x2c] sm:$0xf]
  %v6199 = vld [vmem:[%s6186 + $0x30] sm:$0xf]
  %v6200 = vld [vmem:[%s6186 + $0x34] sm:$0xf]
  %v6201 = vld [vmem:[%s6186 + $0x38] sm:$0xf]
  %v6202 = vld [vmem:[%s6186 + $0x3c] sm:$0xf]
  %v6203 = vrot.slane %v6090, 5
  %v6204 = vrot.slane %v6091, 4
  %v6205 = vsel %vm5638, %v6204, %v6203
  %v6206 = vpack.c.b16 %v6205, %v6205
  %v6224 = vunpack.c.l.b16 %v6187
  %v6225 = vunpack.c.l.b16 %v6188
  %v6226 = vunpack.c.l.b16 %v6189
  %v6227 = vunpack.c.l.b16 %v6190
  %v6228 = vunpack.c.l.b16 %v6191
  %v6229 = vunpack.c.l.b16 %v6192
  %v6230 = vunpack.c.l.b16 %v6193
  %v6231 = vunpack.c.l.b16 %v6194
  %v6232 = vunpack.c.l.b16 %v6195
  %v6233 = vunpack.c.l.b16 %v6196
  %v6234 = vunpack.c.l.b16 %v6197
  %v6235 = vunpack.c.l.b16 %v6198
  %v6236 = vunpack.c.l.b16 %v6199
  %v6237 = vunpack.c.l.b16 %v6200
  %v6238 = vunpack.c.l.b16 %v6201
  %v6239 = vunpack.c.l.b16 %v6202
  %v6240 = vpack.c.b16 %v6225, %v6224
  %v6241 = vpack.c.b16 %v6227, %v6226
  %v6242 = vpack.c.b16 %v6229, %v6228
  %v6243 = vpack.c.b16 %v6231, %v6230
  %v6244 = vpack.c.b16 %v6233, %v6232
  %v6245 = vpack.c.b16 %v6235, %v6234
  %v6246 = vpack.c.b16 %v6237, %v6236
  %v6247 = vpack.c.b16 %v6239, %v6238
  %6256 = vmatprep.subr.bf16.mxu0 0
  %6257 = vmatpush1.bf16.msra.mxu0 %v6240
  %6258 = vmatprep.subr.bf16.mxu0 0
  %6259 = vmatpush1.bf16.msra.mxu0 %v6241
  %6260 = vmatprep.subr.bf16.mxu0 0
  %6261 = vmatpush1.bf16.msra.mxu0 %v6242
  %6262 = vmatprep.subr.bf16.mxu0 0
  %6263 = vmatpush1.bf16.msra.mxu0 %v6243
  %6264 = vmatprep.subr.bf16.mxu0 0
  %6265 = vmatpush1.bf16.msra.mxu0 %v6244
  %6266 = vmatprep.subr.bf16.mxu0 0
  %6267 = vmatpush1.bf16.msra.mxu0 %v6245
  %6268 = vmatprep.subr.bf16.mxu0 0
  %6269 = vmatpush1.bf16.msra.mxu0 %v6246
  %6270 = vmatprep.subr.bf16.mxu0 0
  %6271 = vmatpush1.bf16.msra.mxu0 %v6247
  %6272 = vmatprep.subr.bf16.mxu0 0
  %6273 = vmatpush1.bf16.msra.mxu0 0
  %6274 = vmatprep.subr.bf16.mxu0 0
  %6275 = vmatpush1.bf16.msra.mxu0 0
  %6276 = vmatprep.subr.bf16.mxu0 0
  %6277 = vmatpush1.bf16.msra.mxu0 0
  %6278 = vmatprep.subr.bf16.mxu0 0
  %6279 = vmatpush1.bf16.msra.mxu0 0
  %6280 = vmatprep.subr.bf16.mxu0 0
  %6281 = vmatpush1.bf16.msra.mxu0 0
  %6282 = vmatprep.subr.bf16.mxu0 0
  %6283 = vmatpush1.bf16.msra.mxu0 0
  %6284 = vmatprep.subr.bf16.mxu0 0
  %6285 = vmatpush1.bf16.msra.mxu0 0
  %6286 = vmatprep.subr.bf16.mxu0 0
  %6287 = vmatpush1.bf16.msra.mxu0 0
  %6288 = vmatprep.mubr.bf16.mxu0 0
  %6289 = vmatmul.mubr.bf16.gmra.mrb[0].mxu0 %v6206
  %v6290 = vpop.f32.mrb[0].mxu0
  %v6291 = vadd.f32 0.0, %v6290
  %v6292 = vpop.f32.mrb[0].mxu0
  %v6293 = vpop.f32.mrb[0].mxu0
  %v6294 = vpop.f32.mrb[0].mxu0
  %6295 = vdwg.mxu0
  %v6296 = vadd.f32 %v6185, %v6291
  %v6297 = vld [vmem:[#allocation5] sm:$0x8]
  %v6298 = vld [vmem:[#allocation5 + $0x10] sm:$0x8]
  %s6299 = scalar_lea.vmem %s5, 384
  %v6300 = vld [vmem:[%s6299] sm:$0xf]
  %v6301 = vld [vmem:[%s6299 + $0x4] sm:$0xf]
  %v6302 = vld [vmem:[%s6299 + $0x8] sm:$0xf]
  %v6303 = vld [vmem:[%s6299 + $0xc] sm:$0xf]
  %v6304 = vld [vmem:[%s6299 + $0x10] sm:$0xf]
  %v6305 = vld [vmem:[%s6299 + $0x14] sm:$0xf]
  %v6306 = vld [vmem:[%s6299 + $0x18] sm:$0xf]
  %v6307 = vld [vmem:[%s6299 + $0x1c] sm:$0xf]
  %v6308 = vld [vmem:[%s6299 + $0x20] sm:$0xf]
  %v6309 = vld [vmem:[%s6299 + $0x24] sm:$0xf]
  %v6310 = vld [vmem:[%s6299 + $0x28] sm:$0xf]
  %v6311 = vld [vmem:[%s6299 + $0x2c] sm:$0xf]
  %v6312 = vld [vmem:[%s6299 + $0x30] sm:$0xf]
  %v6313 = vld [vmem:[%s6299 + $0x34] sm:$0xf]
  %v6314 = vld [vmem:[%s6299 + $0x38] sm:$0xf]
  %v6315 = vld [vmem:[%s6299 + $0x3c] sm:$0xf]
  %v6318 = vunpack.c.l.b16 %v6297
  %v6319 = vunpack.c.l.b16 %v6298
  %v6320 = vrot.slane %v6318, 6
  %v6321 = vrot.slane %v6319, 5
  %v6322 = vsel %vm5638, %v6321, %v6320
  %v6323 = vpack.c.b16 %v6322, %v6322
  %v6341 = vunpack.c.l.b16 %v6300
  %v6342 = vunpack.c.l.b16 %v6301
  %v6343 = vunpack.c.l.b16 %v6302
  %v6344 = vunpack.c.l.b16 %v6303
  %v6345 = vunpack.c.l.b16 %v6304
  %v6346 = vunpack.c.l.b16 %v6305
  %v6347 = vunpack.c.l.b16 %v6306
  %v6348 = vunpack.c.l.b16 %v6307
  %v6349 = vunpack.c.l.b16 %v6308
  %v6350 = vunpack.c.l.b16 %v6309
  %v6351 = vunpack.c.l.b16 %v6310
  %v6352 = vunpack.c.l.b16 %v6311
  %v6353 = vunpack.c.l.b16 %v6312
  %v6354 = vunpack.c.l.b16 %v6313
  %v6355 = vunpack.c.l.b16 %v6314
  %v6356 = vunpack.c.l.b16 %v6315
  %v6357 = vpack.c.b16 %v6342, %v6341
  %v6358 = vpack.c.b16 %v6344, %v6343
  %v6359 = vpack.c.b16 %v6346, %v6345
  %v6360 = vpack.c.b16 %v6348, %v6347
  %v6361 = vpack.c.b16 %v6350, %v6349
  %v6362 = vpack.c.b16 %v6352, %v6351
  %v6363 = vpack.c.b16 %v6354, %v6353
  %v6364 = vpack.c.b16 %v6356, %v6355
  %6373 = vmatprep.subr.bf16.mxu0 0
  %6374 = vmatpush1.bf16.msra.mxu0 %v6357
  %6375 = vmatprep.subr.bf16.mxu0 0
  %6376 = vmatpush1.bf16.msra.mxu0 %v6358
  %6377 = vmatprep.subr.bf16.mxu0 0
  %6378 = vmatpush1.bf16.msra.mxu0 %v6359
  %6379 = vmatprep.subr.bf16.mxu0 0
  %6380 = vmatpush1.bf16.msra.mxu0 %v6360
  %6381 = vmatprep.subr.bf16.mxu0 0
  %6382 = vmatpush1.bf16.msra.mxu0 %v6361
  %6383 = vmatprep.subr.bf16.mxu0 0
  %6384 = vmatpush1.bf16.msra.mxu0 %v6362
  %6385 = vmatprep.subr.bf16.mxu0 0
  %6386 = vmatpush1.bf16.msra.mxu0 %v6363
  %6387 = vmatprep.subr.bf16.mxu0 0
  %6388 = vmatpush1.bf16.msra.mxu0 %v6364
  %6389 = vmatprep.subr.bf16.mxu0 0
  %6390 = vmatpush1.bf16.msra.mxu0 0
  %6391 = vmatprep.subr.bf16.mxu0 0
  %6392 = vmatpush1.bf16.msra.mxu0 0
  %6393 = vmatprep.subr.bf16.mxu0 0
  %6394 = vmatpush1.bf16.msra.mxu0 0
  %6395 = vmatprep.subr.bf16.mxu0 0
  %6396 = vmatpush1.bf16.msra.mxu0 0
  %6397 = vmatprep.subr.bf16.mxu0 0
  %6398 = vmatpush1.bf16.msra.mxu0 0
  %6399 = vmatprep.subr.bf16.mxu0 0
  %6400 = vmatpush1.bf16.msra.mxu0 0
  %6401 = vmatprep.subr.bf16.mxu0 0
  %6402 = vmatpush1.bf16.msra.mxu0 0
  %6403 = vmatprep.subr.bf16.mxu0 0
  %6404 = vmatpush1.bf16.msra.mxu0 0
  %6405 = vmatprep.mubr.bf16.mxu0 0
  %6406 = vmatmul.mubr.bf16.gmra.mrb[0].mxu0 %v6323
  %v6407 = vpop.f32.mrb[0].mxu0
  %v6408 = vadd.f32 0.0, %v6407
  %v6409 = vpop.f32.mrb[0].mxu0
  %v6410 = vpop.f32.mrb[0].mxu0
  %v6411 = vpop.f32.mrb[0].mxu0
  %6412 = vdwg.mxu0
  %v6413 = vadd.f32 %v6296, %v6408
  %s6414 = scalar_lea.vmem %s5, 448
  %v6415 = vld [vmem:[%s6414] sm:$0xf]
  %v6416 = vld [vmem:[%s6414 + $0x4] sm:$0xf]
  %v6417 = vld [vmem:[%s6414 + $0x8] sm:$0xf]
  %v6418 = vld [vmem:[%s6414 + $0xc] sm:$0xf]
  %v6419 = vld [vmem:[%s6414 + $0x10] sm:$0xf]
  %v6420 = vld [vmem:[%s6414 + $0x14] sm:$0xf]
  %v6421 = vld [vmem:[%s6414 + $0x18] sm:$0xf]
  %v6422 = vld [vmem:[%s6414 + $0x1c] sm:$0xf]
  %v6423 = vld [vmem:[%s6414 + $0x20] sm:$0xf]
  %v6424 = vld [vmem:[%s6414 + $0x24] sm:$0xf]
  %v6425 = vld [vmem:[%s6414 + $0x28] sm:$0xf]
  %v6426 = vld [vmem:[%s6414 + $0x2c] sm:$0xf]
  %v6427 = vld [vmem:[%s6414 + $0x30] sm:$0xf]
  %v6428 = vld [vmem:[%s6414 + $0x34] sm:$0xf]
  %v6429 = vld [vmem:[%s6414 + $0x38] sm:$0xf]
  %v6430 = vld [vmem:[%s6414 + $0x3c] sm:$0xf]
  %v6431 = vrot.slane %v6318, 7
  %v6432 = vrot.slane %v6319, 6
  %v6433 = vsel %vm5638, %v6432, %v6431
  %v6434 = vpack.c.b16 %v6433, %v6433
  %v6452 = vunpack.c.l.b16 %v6415
  %v6453 = vunpack.c.l.b16 %v6416
  %v6454 = vunpack.c.l.b16 %v6417
  %v6455 = vunpack.c.l.b16 %v6418
  %v6456 = vunpack.c.l.b16 %v6419
  %v6457 = vunpack.c.l.b16 %v6420
  %v6458 = vunpack.c.l.b16 %v6421
  %v6459 = vunpack.c.l.b16 %v6422
  %v6460 = vunpack.c.l.b16 %v6423
  %v6461 = vunpack.c.l.b16 %v6424
  %v6462 = vunpack.c.l.b16 %v6425
  %v6463 = vunpack.c.l.b16 %v6426
  %v6464 = vunpack.c.l.b16 %v6427
  %v6465 = vunpack.c.l.b16 %v6428
  %v6466 = vunpack.c.l.b16 %v6429
  %v6467 = vunpack.c.l.b16 %v6430
  %v6468 = vpack.c.b16 %v6453, %v6452
  %v6469 = vpack.c.b16 %v6455, %v6454
  %v6470 = vpack.c.b16 %v6457, %v6456
  %v6471 = vpack.c.b16 %v6459, %v6458
  %v6472 = vpack.c.b16 %v6461, %v6460
  %v6473 = vpack.c.b16 %v6463, %v6462
  %v6474 = vpack.c.b16 %v6465, %v6464
  %v6475 = vpack.c.b16 %v6467, %v6466
  %6484 = vmatprep.subr.bf16.mxu0 0
  %6485 = vmatpush1.bf16.msra.mxu0 %v6468
  %6486 = vmatprep.subr.bf16.mxu0 0
  %6487 = vmatpush1.bf16.msra.mxu0 %v6469
  %6488 = vmatprep.subr.bf16.mxu0 0
  %6489 = vmatpush1.bf16.msra.mxu0 %v6470
  %6490 = vmatprep.subr.bf16.mxu0 0
  %6491 = vmatpush1.bf16.msra.mxu0 %v6471
  %6492 = vmatprep.subr.bf16.mxu0 0
  %6493 = vmatpush1.bf16.msra.mxu0 %v6472
  %6494 = vmatprep.subr.bf16.mxu0 0
  %6495 = vmatpush1.bf16.msra.mxu0 %v6473
  %6496 = vmatprep.subr.bf16.mxu0 0
  %6497 = vmatpush1.bf16.msra.mxu0 %v6474
  %6498 = vmatprep.subr.bf16.mxu0 0
  %6499 = vmatpush1.bf16.msra.mxu0 %v6475
  %6500 = vmatprep.subr.bf16.mxu0 0
  %6501 = vmatpush1.bf16.msra.mxu0 0
  %6502 = vmatprep.subr.bf16.mxu0 0
  %6503 = vmatpush1.bf16.msra.mxu0 0
  %6504 = vmatprep.subr.bf16.mxu0 0
  %6505 = vmatpush1.bf16.msra.mxu0 0
  %6506 = vmatprep.subr.bf16.mxu0 0
  %6507 = vmatpush1.bf16.msra.mxu0 0
  %6508 = vmatprep.subr.bf16.mxu0 0
  %6509 = vmatpush1.bf16.msra.mxu0 0
  %6510 = vmatprep.subr.bf16.mxu0 0
  %6511 = vmatpush1.bf16.msra.mxu0 0
  %6512 = vmatprep.subr.bf16.mxu0 0
  %6513 = vmatpush1.bf16.msra.mxu0 0
  %6514 = vmatprep.subr.bf16.mxu0 0
  %6515 = vmatpush1.bf16.msra.mxu0 0
  %6516 = vmatprep.mubr.bf16.mxu0 0
  %6517 = vmatmul.mubr.bf16.gmra.mrb[0].mxu0 %v6434
  %v6518 = vpop.f32.mrb[0].mxu0
  %v6519 = vadd.f32 0.0, %v6518
  %v6520 = vpop.f32.mrb[0].mxu0
  %v6521 = vpop.f32.mrb[0].mxu0
  %v6522 = vpop.f32.mrb[0].mxu0
  %6523 = vdwg.mxu0
  %v6524 = vadd.f32 %v6413, %v6519
  %v6525 = vld [vmem:[#allocation5] sm:$0x10]
  %v6526 = vld [vmem:[#allocation5 + $0x10] sm:$0x10]
  %s6527 = scalar_lea.vmem %s5, 512
  %v6528 = vld [vmem:[%s6527] sm:$0xf]
  %v6529 = vld [vmem:[%s6527 + $0x4] sm:$0xf]
  %v6530 = vld [vmem:[%s6527 + $0x8] sm:$0xf]
  %v6531 = vld [vmem:[%s6527 + $0xc] sm:$0xf]
  %v6532 = vld [vmem:[%s6527 + $0x10] sm:$0xf]
  %v6533 = vld [vmem:[%s6527 + $0x14] sm:$0xf]
  %v6534 = vld [vmem:[%s6527 + $0x18] sm:$0xf]
  %v6535 = vld [vmem:[%s6527 + $0x1c] sm:$0xf]
  %v6536 = vld [vmem:[%s6527 + $0x20] sm:$0xf]
  %v6537 = vld [vmem:[%s6527 + $0x24] sm:$0xf]
  %v6538 = vld [vmem:[%s6527 + $0x28] sm:$0xf]
  %v6539 = vld [vmem:[%s6527 + $0x2c] sm:$0xf]
  %v6540 = vld [vmem:[%s6527 + $0x30] sm:$0xf]
  %v6541 = vld [vmem:[%s6527 + $0x34] sm:$0xf]
  %v6542 = vld [vmem:[%s6527 + $0x38] sm:$0xf]
  %v6543 = vld [vmem:[%s6527 + $0x3c] sm:$0xf]
  %v6546 = vunpack.c.h.b16 %v6525
  %v6547 = vunpack.c.h.b16 %v6526
  %v6548 = vrot.slane %v6547, 7
  %v6549 = vsel %vm5638, %v6548, %v6546
  %v6550 = vpack.c.b16 %v6549, %v6549
  %v6568 = vunpack.c.l.b16 %v6528
  %v6569 = vunpack.c.l.b16 %v6529
  %v6570 = vunpack.c.l.b16 %v6530
  %v6571 = vunpack.c.l.b16 %v6531
  %v6572 = vunpack.c.l.b16 %v6532
  %v6573 = vunpack.c.l.b16 %v6533
  %v6574 = vunpack.c.l.b16 %v6534
  %v6575 = vunpack.c.l.b16 %v6535
  %v6576 = vunpack.c.l.b16 %v6536
  %v6577 = vunpack.c.l.b16 %v6537
  %v6578 = vunpack.c.l.b16 %v6538
  %v6579 = vunpack.c.l.b16 %v6539
  %v6580 = vunpack.c.l.b16 %v6540
  %v6581 = vunpack.c.l.b16 %v6541
  %v6582 = vunpack.c.l.b16 %v6542
  %v6583 = vunpack.c.l.b16 %v6543
  %v6584 = vpack.c.b16 %v6569, %v6568
  %v6585 = vpack.c.b16 %v6571, %v6570
  %v6586 = vpack.c.b16 %v6573, %v6572
  %v6587 = vpack.c.b16 %v6575, %v6574
  %v6588 = vpack.c.b16 %v6577, %v6576
  %v6589 = vpack.c.b16 %v6579, %v6578
  %v6590 = vpack.c.b16 %v6581, %v6580
  %v6591 = vpack.c.b16 %v6583, %v6582
  %6600 = vmatprep.subr.bf16.mxu0 0
  %6601 = vmatpush1.bf16.msra.mxu0 %v6584
  %6602 = vmatprep.subr.bf16.mxu0 0
  %6603 = vmatpush1.bf16.msra.mxu0 %v6585
  %6604 = vmatprep.subr.bf16.mxu0 0
  %6605 = vmatpush1.bf16.msra.mxu0 %v6586
  %6606 = vmatprep.subr.bf16.mxu0 0
  %6607 = vmatpush1.bf16.msra.mxu0 %v6587
  %6608 = vmatprep.subr.bf16.mxu0 0
  %6609 = vmatpush1.bf16.msra.mxu0 %v6588
  %6610 = vmatprep.subr.bf16.mxu0 0
  %6611 = vmatpush1.bf16.msra.mxu0 %v6589
  %6612 = vmatprep.subr.bf16.mxu0 0
  %6613 = vmatpush1.bf16.msra.mxu0 %v6590
  %6614 = vmatprep.subr.bf16.mxu0 0
  %6615 = vmatpush1.bf16.msra.mxu0 %v6591
  %6616 = vmatprep.subr.bf16.mxu0 0
  %6617 = vmatpush1.bf16.msra.mxu0 0
  %6618 = vmatprep.subr.bf16.mxu0 0
  %6619 = vmatpush1.bf16.msra.mxu0 0
  %6620 = vmatprep.subr.bf16.mxu0 0
  %6621 = vmatpush1.bf16.msra.mxu0 0
  %6622 = vmatprep.subr.bf16.mxu0 0
  %6623 = vmatpush1.bf16.msra.mxu0 0
  %6624 = vmatprep.subr.bf16.mxu0 0
  %6625 = vmatpush1.bf16.msra.mxu0 0
  %6626 = vmatprep.subr.bf16.mxu0 0
  %6627 = vmatpush1.bf16.msra.mxu0 0
  %6628 = vmatprep.subr.bf16.mxu0 0
  %6629 = vmatpush1.bf16.msra.mxu0 0
  %6630 = vmatprep.subr.bf16.mxu0 0
  %6631 = vmatpush1.bf16.msra.mxu0 0
  %6632 = vmatprep.mubr.bf16.mxu0 0
  %6633 = vmatmul.mubr.bf16.gmra.mrb[0].mxu0 %v6550
  %v6634 = vpop.f32.mrb[0].mxu0
  %v6635 = vadd.f32 0.0, %v6634
  %v6636 = vpop.f32.mrb[0].mxu0
  %v6637 = vpop.f32.mrb[0].mxu0
  %v6638 = vpop.f32.mrb[0].mxu0
  %6639 = vdwg.mxu0
  %v6640 = vadd.f32 %v6524, %v6635
  %s6641 = scalar_lea.vmem %s5, 576
  %v6642 = vld [vmem:[%s6641] sm:$0xf]
  %v6643 = vld [vmem:[%s6641 + $0x4] sm:$0xf]
  %v6644 = vld [vmem:[%s6641 + $0x8] sm:$0xf]
  %v6645 = vld [vmem:[%s6641 + $0xc] sm:$0xf]
  %v6646 = vld [vmem:[%s6641 + $0x10] sm:$0xf]
  %v6647 = vld [vmem:[%s6641 + $0x14] sm:$0xf]
  %v6648 = vld [vmem:[%s6641 + $0x18] sm:$0xf]
  %v6649 = vld [vmem:[%s6641 + $0x1c] sm:$0xf]
  %v6650 = vld [vmem:[%s6641 + $0x20] sm:$0xf]
  %v6651 = vld [vmem:[%s6641 + $0x24] sm:$0xf]
  %v6652 = vld [vmem:[%s6641 + $0x28] sm:$0xf]
  %v6653 = vld [vmem:[%s6641 + $0x2c] sm:$0xf]
  %v6654 = vld [vmem:[%s6641 + $0x30] sm:$0xf]
  %v6655 = vld [vmem:[%s6641 + $0x34] sm:$0xf]
  %v6656 = vld [vmem:[%s6641 + $0x38] sm:$0xf]
  %v6657 = vld [vmem:[%s6641 + $0x3c] sm:$0xf]
  %v6658 = vrot.slane %v6546, 1
  %v6659 = vsel %vm5638, %v6547, %v6658
  %v6660 = vpack.c.b16 %v6659, %v6659
  %v6678 = vunpack.c.l.b16 %v6642
  %v6679 = vunpack.c.l.b16 %v6643
  %v6680 = vunpack.c.l.b16 %v6644
  %v6681 = vunpack.c.l.b16 %v6645
  %v6682 = vunpack.c.l.b16 %v6646
  %v6683 = vunpack.c.l.b16 %v6647
  %v6684 = vunpack.c.l.b16 %v6648
  %v6685 = vunpack.c.l.b16 %v6649
  %v6686 = vunpack.c.l.b16 %v6650
  %v6687 = vunpack.c.l.b16 %v6651
  %v6688 = vunpack.c.l.b16 %v6652
  %v6689 = vunpack.c.l.b16 %v6653
  %v6690 = vunpack.c.l.b16 %v6654
  %v6691 = vunpack.c.l.b16 %v6655
  %v6692 = vunpack.c.l.b16 %v6656
  %v6693 = vunpack.c.l.b16 %v6657
  %v6694 = vpack.c.b16 %v6679, %v6678
  %v6695 = vpack.c.b16 %v6681, %v6680
  %v6696 = vpack.c.b16 %v6683, %v6682
  %v6697 = vpack.c.b16 %v6685, %v6684
  %v6698 = vpack.c.b16 %v6687, %v6686
  %v6699 = vpack.c.b16 %v6689, %v6688
  %v6700 = vpack.c.b16 %v6691, %v6690
  %v6701 = vpack.c.b16 %v6693, %v6692
  %6710 = vmatprep.subr.bf16.mxu0 0
  %6711 = vmatpush1.bf16.msra.mxu0 %v6694
  %6712 = vmatprep.subr.bf16.mxu0 0
  %6713 = vmatpush1.bf16.msra.mxu0 %v6695
  %6714 = vmatprep.subr.bf16.mxu0 0
  %6715 = vmatpush1.bf16.msra.mxu0 %v6696
  %6716 = vmatprep.subr.bf16.mxu0 0
  %6717 = vmatpush1.bf16.msra.mxu0 %v6697
  %6718 = vmatprep.subr.bf16.mxu0 0
  %6719 = vmatpush1.bf16.msra.mxu0 %v6698
  %6720 = vmatprep.subr.bf16.mxu0 0
  %6721 = vmatpush1.bf16.msra.mxu0 %v6699
  %6722 = vmatprep.subr.bf16.mxu0 0
  %6723 = vmatpush1.bf16.msra.mxu0 %v6700
  %6724 = vmatprep.subr.bf16.mxu0 0
  %6725 = vmatpush1.bf16.msra.mxu0 %v6701
  %6726 = vmatprep.subr.bf16.mxu0 0
  %6727 = vmatpush1.bf16.msra.mxu0 0
  %6728 = vmatprep.subr.bf16.mxu0 0
  %6729 = vmatpush1.bf16.msra.mxu0 0
  %6730 = vmatprep.subr.bf16.mxu0 0
  %6731 = vmatpush1.bf16.msra.mxu0 0
  %6732 = vmatprep.subr.bf16.mxu0 0
  %6733 = vmatpush1.bf16.msra.mxu0 0
  %6734 = vmatprep.subr.bf16.mxu0 0
  %6735 = vmatpush1.bf16.msra.mxu0 0
  %6736 = vmatprep.subr.bf16.mxu0 0
  %6737 = vmatpush1.bf16.msra.mxu0 0
  %6738 = vmatprep.subr.bf16.mxu0 0
  %6739 = vmatpush1.bf16.msra.mxu0 0
  %6740 = vmatprep.subr.bf16.mxu0 0
  %6741 = vmatpush1.bf16.msra.mxu0 0
  %6742 = vmatprep.mubr.bf16.mxu0 0
  %6743 = vmatmul.mubr.bf16.gmra.mrb[0].mxu0 %v6660
  %v6744 = vpop.f32.mrb[0].mxu0
  %v6745 = vadd.f32 0.0, %v6744
  %v6746 = vpop.f32.mrb[0].mxu0
  %v6747 = vpop.f32.mrb[0].mxu0
  %v6748 = vpop.f32.mrb[0].mxu0
  %6749 = vdwg.mxu0
  %v6750 = vadd.f32 %v6640, %v6745
  %v6751 = vld [vmem:[#allocation5] sm:$0x20]
  %v6752 = vld [vmem:[#allocation5 + $0x10] sm:$0x20]
  %s6753 = scalar_lea.vmem %s5, 640
  %v6754 = vld [vmem:[%s6753] sm:$0xf]
  %v6755 = vld [vmem:[%s6753 + $0x4] sm:$0xf]
  %v6756 = vld [vmem:[%s6753 + $0x8] sm:$0xf]
  %v6757 = vld [vmem:[%s6753 + $0xc] sm:$0xf]
  %v6758 = vld [vmem:[%s6753 + $0x10] sm:$0xf]
  %v6759 = vld [vmem:[%s6753 + $0x14] sm:$0xf]
  %v6760 = vld [vmem:[%s6753 + $0x18] sm:$0xf]
  %v6761 = vld [vmem:[%s6753 + $0x1c] sm:$0xf]
  %v6762 = vld [vmem:[%s6753 + $0x20] sm:$0xf]
  %v6763 = vld [vmem:[%s6753 + $0x24] sm:$0xf]
  %v6764 = vld [vmem:[%s6753 + $0x28] sm:$0xf]
  %v6765 = vld [vmem:[%s6753 + $0x2c] sm:$0xf]
  %v6766 = vld [vmem:[%s6753 + $0x30] sm:$0xf]
  %v6767 = vld [vmem:[%s6753 + $0x34] sm:$0xf]
  %v6768 = vld [vmem:[%s6753 + $0x38] sm:$0xf]
  %v6769 = vld [vmem:[%s6753 + $0x3c] sm:$0xf]
  %v6772 = vunpack.c.h.b16 %v6751
  %v6773 = vunpack.c.h.b16 %v6752
  %v6774 = vrot.slane %v6772, 2
  %v6775 = vrot.slane %v6773, 1
  %v6776 = vsel %vm5638, %v6775, %v6774
  %v6777 = vpack.c.b16 %v6776, %v6776
  %v6795 = vunpack.c.l.b16 %v6754
  %v6796 = vunpack.c.l.b16 %v6755
  %v6797 = vunpack.c.l.b16 %v6756
  %v6798 = vunpack.c.l.b16 %v6757
  %v6799 = vunpack.c.l.b16 %v6758
  %v6800 = vunpack.c.l.b16 %v6759
  %v6801 = vunpack.c.l.b16 %v6760
  %v6802 = vunpack.c.l.b16 %v6761
  %v6803 = vunpack.c.l.b16 %v6762
  %v6804 = vunpack.c.l.b16 %v6763
  %v6805 = vunpack.c.l.b16 %v6764
  %v6806 = vunpack.c.l.b16 %v6765
  %v6807 = vunpack.c.l.b16 %v6766
  %v6808 = vunpack.c.l.b16 %v6767
  %v6809 = vunpack.c.l.b16 %v6768
  %v6810 = vunpack.c.l.b16 %v6769
  %v6811 = vpack.c.b16 %v6796, %v6795
  %v6812 = vpack.c.b16 %v6798, %v6797
  %v6813 = vpack.c.b16 %v6800, %v6799
  %v6814 = vpack.c.b16 %v6802, %v6801
  %v6815 = vpack.c.b16 %v6804, %v6803
  %v6816 = vpack.c.b16 %v6806, %v6805
  %v6817 = vpack.c.b16 %v6808, %v6807
  %v6818 = vpack.c.b16 %v6810, %v6809
  %6827 = vmatprep.subr.bf16.mxu0 0
  %6828 = vmatpush1.bf16.msra.mxu0 %v6811
  %6829 = vmatprep.subr.bf16.mxu0 0
  %6830 = vmatpush1.bf16.msra.mxu0 %v6812
  %6831 = vmatprep.subr.bf16.mxu0 0
  %6832 = vmatpush1.bf16.msra.mxu0 %v6813
  %6833 = vmatprep.subr.bf16.mxu0 0
  %6834 = vmatpush1.bf16.msra.mxu0 %v6814
  %6835 = vmatprep.subr.bf16.mxu0 0
  %6836 = vmatpush1.bf16.msra.mxu0 %v6815
  %6837 = vmatprep.subr.bf16.mxu0 0
  %6838 = vmatpush1.bf16.msra.mxu0 %v6816
  %6839 = vmatprep.subr.bf16.mxu0 0
  %6840 = vmatpush1.bf16.msra.mxu0 %v6817
  %6841 = vmatprep.subr.bf16.mxu0 0
  %6842 = vmatpush1.bf16.msra.mxu0 %v6818
  %6843 = vmatprep.subr.bf16.mxu0 0
  %6844 = vmatpush1.bf16.msra.mxu0 0
  %6845 = vmatprep.subr.bf16.mxu0 0
  %6846 = vmatpush1.bf16.msra.mxu0 0
  %6847 = vmatprep.subr.bf16.mxu0 0
  %6848 = vmatpush1.bf16.msra.mxu0 0
  %6849 = vmatprep.subr.bf16.mxu0 0
  %6850 = vmatpush1.bf16.msra.mxu0 0
  %6851 = vmatprep.subr.bf16.mxu0 0
  %6852 = vmatpush1.bf16.msra.mxu0 0
  %6853 = vmatprep.subr.bf16.mxu0 0
  %6854 = vmatpush1.bf16.msra.mxu0 0
  %6855 = vmatprep.subr.bf16.mxu0 0
  %6856 = vmatpush1.bf16.msra.mxu0 0
  %6857 = vmatprep.subr.bf16.mxu0 0
  %6858 = vmatpush1.bf16.msra.mxu0 0
  %6859 = vmatprep.mubr.bf16.mxu0 0
  %6860 = vmatmul.mubr.bf16.gmra.mrb[0].mxu0 %v6777
  %v6861 = vpop.f32.mrb[0].mxu0
  %v6862 = vadd.f32 0.0, %v6861
  %v6863 = vpop.f32.mrb[0].mxu0
  %v6864 = vpop.f32.mrb[0].mxu0
  %v6865 = vpop.f32.mrb[0].mxu0
  %6866 = vdwg.mxu0
  %v6867 = vadd.f32 %v6750, %v6862
  %s6868 = scalar_lea.vmem %s5, 704
  %v6869 = vld [vmem:[%s6868] sm:$0xf]
  %v6870 = vld [vmem:[%s6868 + $0x4] sm:$0xf]
  %v6871 = vld [vmem:[%s6868 + $0x8] sm:$0xf]
  %v6872 = vld [vmem:[%s6868 + $0xc] sm:$0xf]
  %v6873 = vld [vmem:[%s6868 + $0x10] sm:$0xf]
  %v6874 = vld [vmem:[%s6868 + $0x14] sm:$0xf]
  %v6875 = vld [vmem:[%s6868 + $0x18] sm:$0xf]
  %v6876 = vld [vmem:[%s6868 + $0x1c] sm:$0xf]
  %v6877 = vld [vmem:[%s6868 + $0x20] sm:$0xf]
  %v6878 = vld [vmem:[%s6868 + $0x24] sm:$0xf]
  %v6879 = vld [vmem:[%s6868 + $0x28] sm:$0xf]
  %v6880 = vld [vmem:[%s6868 + $0x2c] sm:$0xf]
  %v6881 = vld [vmem:[%s6868 + $0x30] sm:$0xf]
  %v6882 = vld [vmem:[%s6868 + $0x34] sm:$0xf]
  %v6883 = vld [vmem:[%s6868 + $0x38] sm:$0xf]
  %v6884 = vld [vmem:[%s6868 + $0x3c] sm:$0xf]
  %v6885 = vrot.slane %v6772, 3
  %v6886 = vrot.slane %v6773, 2
  %v6887 = vsel %vm5638, %v6886, %v6885
  %v6888 = vpack.c.b16 %v6887, %v6887
  %v6906 = vunpack.c.l.b16 %v6869
  %v6907 = vunpack.c.l.b16 %v6870
  %v6908 = vunpack.c.l.b16 %v6871
  %v6909 = vunpack.c.l.b16 %v6872
  %v6910 = vunpack.c.l.b16 %v6873
  %v6911 = vunpack.c.l.b16 %v6874
  %v6912 = vunpack.c.l.b16 %v6875
  %v6913 = vunpack.c.l.b16 %v6876
  %v6914 = vunpack.c.l.b16 %v6877
  %v6915 = vunpack.c.l.b16 %v6878
  %v6916 = vunpack.c.l.b16 %v6879
  %v6917 = vunpack.c.l.b16 %v6880
  %v6918 = vunpack.c.l.b16 %v6881
  %v6919 = vunpack.c.l.b16 %v6882
  %v6920 = vunpack.c.l.b16 %v6883
  %v6921 = vunpack.c.l.b16 %v6884
  %v6922 = vpack.c.b16 %v6907, %v6906
  %v6923 = vpack.c.b16 %v6909, %v6908
  %v6924 = vpack.c.b16 %v6911, %v6910
  %v6925 = vpack.c.b16 %v6913, %v6912
  %v6926 = vpack.c.b16 %v6915, %v6914
  %v6927 = vpack.c.b16 %v6917, %v6916
  %v6928 = vpack.c.b16 %v6919, %v6918
  %v6929 = vpack.c.b16 %v6921, %v6920
  %6938 = vmatprep.subr.bf16.mxu0 0
  %6939 = vmatpush1.bf16.msra.mxu0 %v6922
  %6940 = vmatprep.subr.bf16.mxu0 0
  %6941 = vmatpush1.bf16.msra.mxu0 %v6923
  %6942 = vmatprep.subr.bf16.mxu0 0
  %6943 = vmatpush1.bf16.msra.mxu0 %v6924
  %6944 = vmatprep.subr.bf16.mxu0 0
  %6945 = vmatpush1.bf16.msra.mxu0 %v6925
  %6946 = vmatprep.subr.bf16.mxu0 0
  %6947 = vmatpush1.bf16.msra.mxu0 %v6926
  %6948 = vmatprep.subr.bf16.mxu0 0
  %6949 = vmatpush1.bf16.msra.mxu0 %v6927
  %6950 = vmatprep.subr.bf16.mxu0 0
  %6951 = vmatpush1.bf16.msra.mxu0 %v6928
  %6952 = vmatprep.subr.bf16.mxu0 0
  %6953 = vmatpush1.bf16.msra.mxu0 %v6929
  %6954 = vmatprep.subr.bf16.mxu0 0
  %6955 = vmatpush1.bf16.msra.mxu0 0
  %6956 = vmatprep.subr.bf16.mxu0 0
  %6957 = vmatpush1.bf16.msra.mxu0 0
  %6958 = vmatprep.subr.bf16.mxu0 0
  %6959 = vmatpush1.bf16.msra.mxu0 0
  %6960 = vmatprep.subr.bf16.mxu0 0
  %6961 = vmatpush1.bf16.msra.mxu0 0
  %6962 = vmatprep.subr.bf16.mxu0 0
  %6963 = vmatpush1.bf16.msra.mxu0 0
  %6964 = vmatprep.subr.bf16.mxu0 0
  %6965 = vmatpush1.bf16.msra.mxu0 0
  %6966 = vmatprep.subr.bf16.mxu0 0
  %6967 = vmatpush1.bf16.msra.mxu0 0
  %6968 = vmatprep.subr.bf16.mxu0 0
  %6969 = vmatpush1.bf16.msra.mxu0 0
  %6970 = vmatprep.mubr.bf16.mxu0 0
  %6971 = vmatmul.mubr.bf16.gmra.mrb[0].mxu0 %v6888
  %v6972 = vpop.f32.mrb[0].mxu0
  %v6973 = vadd.f32 0.0, %v6972
  %v6974 = vpop.f32.mrb[0].mxu0
  %v6975 = vpop.f32.mrb[0].mxu0
  %v6976 = vpop.f32.mrb[0].mxu0
  %6977 = vdwg.mxu0
  %v6978 = vadd.f32 %v6867, %v6973
  %v6979 = vld [vmem:[#allocation5] sm:$0x40]
  %v6980 = vld [vmem:[#allocation5 + $0x10] sm:$0x40]
  %s6981 = scalar_lea.vmem %s5, 768
  %v6982 = vld [vmem:[%s6981] sm:$0xf]
  %v6983 = vld [vmem:[%s6981 + $0x4] sm:$0xf]
  %v6984 = vld [vmem:[%s6981 + $0x8] sm:$0xf]
  %v6985 = vld [vmem:[%s6981 + $0xc] sm:$0xf]
  %v6986 = vld [vmem:[%s6981 + $0x10] sm:$0xf]
  %v6987 = vld [vmem:[%s6981 + $0x14] sm:$0xf]
  %v6988 = vld [vmem:[%s6981 + $0x18] sm:$0xf]
  %v6989 = vld [vmem:[%s6981 + $0x1c] sm:$0xf]
  %v6990 = vld [vmem:[%s6981 + $0x20] sm:$0xf]
  %v6991 = vld [vmem:[%s6981 + $0x24] sm:$0xf]
  %v6992 = vld [vmem:[%s6981 + $0x28] sm:$0xf]
  %v6993 = vld [vmem:[%s6981 + $0x2c] sm:$0xf]
  %v6994 = vld [vmem:[%s6981 + $0x30] sm:$0xf]
  %v6995 = vld [vmem:[%s6981 + $0x34] sm:$0xf]
  %v6996 = vld [vmem:[%s6981 + $0x38] sm:$0xf]
  %v6997 = vld [vmem:[%s6981 + $0x3c] sm:$0xf]
  %v7000 = vunpack.c.h.b16 %v6979
  %v7001 = vunpack.c.h.b16 %v6980
  %v7002 = vrot.slane %v7000, 4
  %v7003 = vrot.slane %v7001, 3
  %v7004 = vsel %vm5638, %v7003, %v7002
  %v7005 = vpack.c.b16 %v7004, %v7004
  %v7023 = vunpack.c.l.b16 %v6982
  %v7024 = vunpack.c.l.b16 %v6983
  %v7025 = vunpack.c.l.b16 %v6984
  %v7026 = vunpack.c.l.b16 %v6985
  %v7027 = vunpack.c.l.b16 %v6986
  %v7028 = vunpack.c.l.b16 %v6987
  %v7029 = vunpack.c.l.b16 %v6988
  %v7030 = vunpack.c.l.b16 %v6989
  %v7031 = vunpack.c.l.b16 %v6990
  %v7032 = vunpack.c.l.b16 %v6991
  %v7033 = vunpack.c.l.b16 %v6992
  %v7034 = vunpack.c.l.b16 %v6993
  %v7035 = vunpack.c.l.b16 %v6994
  %v7036 = vunpack.c.l.b16 %v6995
  %v7037 = vunpack.c.l.b16 %v6996
  %v7038 = vunpack.c.l.b16 %v6997
  %v7039 = vpack.c.b16 %v7024, %v7023
  %v7040 = vpack.c.b16 %v7026, %v7025
  %v7041 = vpack.c.b16 %v7028, %v7027
  %v7042 = vpack.c.b16 %v7030, %v7029
  %v7043 = vpack.c.b16 %v7032, %v7031
  %v7044 = vpack.c.b16 %v7034, %v7033
  %v7045 = vpack.c.b16 %v7036, %v7035
  %v7046 = vpack.c.b16 %v7038, %v7037
  %7055 = vmatprep.subr.bf16.mxu0 0
  %7056 = vmatpush1.bf16.msra.mxu0 %v7039
  %7057 = vmatprep.subr.bf16.mxu0 0
  %7058 = vmatpush1.bf16.msra.mxu0 %v7040
  %7059 = vmatprep.subr.bf16.mxu0 0
  %7060 = vmatpush1.bf16.msra.mxu0 %v7041
  %7061 = vmatprep.subr.bf16.mxu0 0
  %7062 = vmatpush1.bf16.msra.mxu0 %v7042
  %7063 = vmatprep.subr.bf16.mxu0 0
  %7064 = vmatpush1.bf16.msra.mxu0 %v7043
  %7065 = vmatprep.subr.bf16.mxu0 0
  %7066 = vmatpush1.bf16.msra.mxu0 %v7044
  %7067 = vmatprep.subr.bf16.mxu0 0
  %7068 = vmatpush1.bf16.msra.mxu0 %v7045
  %7069 = vmatprep.subr.bf16.mxu0 0
  %7070 = vmatpush1.bf16.msra.mxu0 %v7046
  %7071 = vmatprep.subr.bf16.mxu0 0
  %7072 = vmatpush1.bf16.msra.mxu0 0
  %7073 = vmatprep.subr.bf16.mxu0 0
  %7074 = vmatpush1.bf16.msra.mxu0 0
  %7075 = vmatprep.subr.bf16.mxu0 0
  %7076 = vmatpush1.bf16.msra.mxu0 0
  %7077 = vmatprep.subr.bf16.mxu0 0
  %7078 = vmatpush1.bf16.msra.mxu0 0
  %7079 = vmatprep.subr.bf16.mxu0 0
  %7080 = vmatpush1.bf16.msra.mxu0 0
  %7081 = vmatprep.subr.bf16.mxu0 0
  %7082 = vmatpush1.bf16.msra.mxu0 0
  %7083 = vmatprep.subr.bf16.mxu0 0
  %7084 = vmatpush1.bf16.msra.mxu0 0
  %7085 = vmatprep.subr.bf16.mxu0 0
  %7086 = vmatpush1.bf16.msra.mxu0 0
  %7087 = vmatprep.mubr.bf16.mxu0 0
  %7088 = vmatmul.mubr.bf16.gmra.mrb[0].mxu0 %v7005
  %v7089 = vpop.f32.mrb[0].mxu0
  %v7090 = vadd.f32 0.0, %v7089
  %v7091 = vpop.f32.mrb[0].mxu0
  %v7092 = vpop.f32.mrb[0].mxu0
  %v7093 = vpop.f32.mrb[0].mxu0
  %7094 = vdwg.mxu0
  %v7095 = vadd.f32 %v6978, %v7090
  %s7096 = scalar_lea.vmem %s5, 832
  %v7097 = vld [vmem:[%s7096] sm:$0xf]
  %v7098 = vld [vmem:[%s7096 + $0x4] sm:$0xf]
  %v7099 = vld [vmem:[%s7096 + $0x8] sm:$0xf]
  %v7100 = vld [vmem:[%s7096 + $0xc] sm:$0xf]
  %v7101 = vld [vmem:[%s7096 + $0x10] sm:$0xf]
  %v7102 = vld [vmem:[%s7096 + $0x14] sm:$0xf]
  %v7103 = vld [vmem:[%s7096 + $0x18] sm:$0xf]
  %v7104 = vld [vmem:[%s7096 + $0x1c] sm:$0xf]
  %v7105 = vld [vmem:[%s7096 + $0x20] sm:$0xf]
  %v7106 = vld [vmem:[%s7096 + $0x24] sm:$0xf]
  %v7107 = vld [vmem:[%s7096 + $0x28] sm:$0xf]
  %v7108 = vld [vmem:[%s7096 + $0x2c] sm:$0xf]
  %v7109 = vld [vmem:[%s7096 + $0x30] sm:$0xf]
  %v7110 = vld [vmem:[%s7096 + $0x34] sm:$0xf]
  %v7111 = vld [vmem:[%s7096 + $0x38] sm:$0xf]
  %v7112 = vld [vmem:[%s7096 + $0x3c] sm:$0xf]
  %v7113 = vrot.slane %v7000, 5
  %v7114 = vrot.slane %v7001, 4
  %v7115 = vsel %vm5638, %v7114, %v7113
  %v7116 = vpack.c.b16 %v7115, %v7115
  %v7134 = vunpack.c.l.b16 %v7097
  %v7135 = vunpack.c.l.b16 %v7098
  %v7136 = vunpack.c.l.b16 %v7099
  %v7137 = vunpack.c.l.b16 %v7100
  %v7138 = vunpack.c.l.b16 %v7101
  %v7139 = vunpack.c.l.b16 %v7102
  %v7140 = vunpack.c.l.b16 %v7103
  %v7141 = vunpack.c.l.b16 %v7104
  %v7142 = vunpack.c.l.b16 %v7105
  %v7143 = vunpack.c.l.b16 %v7106
  %v7144 = vunpack.c.l.b16 %v7107
  %v7145 = vunpack.c.l.b16 %v7108
  %v7146 = vunpack.c.l.b16 %v7109
  %v7147 = vunpack.c.l.b16 %v7110
  %v7148 = vunpack.c.l.b16 %v7111
  %v7149 = vunpack.c.l.b16 %v7112
  %v7150 = vpack.c.b16 %v7135, %v7134
  %v7151 = vpack.c.b16 %v7137, %v7136
  %v7152 = vpack.c.b16 %v7139, %v7138
  %v7153 = vpack.c.b16 %v7141, %v7140
  %v7154 = vpack.c.b16 %v7143, %v7142
  %v7155 = vpack.c.b16 %v7145, %v7144
  %v7156 = vpack.c.b16 %v7147, %v7146
  %v7157 = vpack.c.b16 %v7149, %v7148
  %7166 = vmatprep.subr.bf16.mxu0 0
  %7167 = vmatpush1.bf16.msra.mxu0 %v7150
  %7168 = vmatprep.subr.bf16.mxu0 0
  %7169 = vmatpush1.bf16.msra.mxu0 %v7151
  %7170 = vmatprep.subr.bf16.mxu0 0
  %7171 = vmatpush1.bf16.msra.mxu0 %v7152
  %7172 = vmatprep.subr.bf16.mxu0 0
  %7173 = vmatpush1.bf16.msra.mxu0 %v7153
  %7174 = vmatprep.subr.bf16.mxu0 0
  %7175 = vmatpush1.bf16.msra.mxu0 %v7154
  %7176 = vmatprep.subr.bf16.mxu0 0
  %7177 = vmatpush1.bf16.msra.mxu0 %v7155
  %7178 = vmatprep.subr.bf16.mxu0 0
  %7179 = vmatpush1.bf16.msra.mxu0 %v7156
  %7180 = vmatprep.subr.bf16.mxu0 0
  %7181 = vmatpush1.bf16.msra.mxu0 %v7157
  %7182 = vmatprep.subr.bf16.mxu0 0
  %7183 = vmatpush1.bf16.msra.mxu0 0
  %7184 = vmatprep.subr.bf16.mxu0 0
  %7185 = vmatpush1.bf16.msra.mxu0 0
  %7186 = vmatprep.subr.bf16.mxu0 0
  %7187 = vmatpush1.bf16.msra.mxu0 0
  %7188 = vmatprep.subr.bf16.mxu0 0
  %7189 = vmatpush1.bf16.msra.mxu0 0
  %7190 = vmatprep.subr.bf16.mxu0 0
  %7191 = vmatpush1.bf16.msra.mxu0 0
  %7192 = vmatprep.subr.bf16.mxu0 0
  %7193 = vmatpush1.bf16.msra.mxu0 0
  %7194 = vmatprep.subr.bf16.mxu0 0
  %7195 = vmatpush1.bf16.msra.mxu0 0
  %7196 = vmatprep.subr.bf16.mxu0 0
  %7197 = vmatpush1.bf16.msra.mxu0 0
  %7198 = vmatprep.mubr.bf16.mxu0 0
  %7199 = vmatmul.mubr.bf16.gmra.mrb[0].mxu0 %v7116
  %v7200 = vpop.f32.mrb[0].mxu0
  %v7201 = vadd.f32 0.0, %v7200
  %v7202 = vpop.f32.mrb[0].mxu0
  %v7203 = vpop.f32.mrb[0].mxu0
  %v7204 = vpop.f32.mrb[0].mxu0
  %7205 = vdwg.mxu0
  %v7206 = vadd.f32 %v7095, %v7201
  %v7207 = vld [vmem:[#allocation5] sm:$0x80]
  %v7208 = vld [vmem:[#allocation5 + $0x10] sm:$0x80]
  %s7209 = scalar_lea.vmem %s5, 896
  %v7210 = vld [vmem:[%s7209] sm:$0xf]
  %v7211 = vld [vmem:[%s7209 + $0x4] sm:$0xf]
  %v7212 = vld [vmem:[%s7209 + $0x8] sm:$0xf]
  %v7213 = vld [vmem:[%s7209 + $0xc] sm:$0xf]
  %v7214 = vld [vmem:[%s7209 + $0x10] sm:$0xf]
  %v7215 = vld [vmem:[%s7209 + $0x14] sm:$0xf]
  %v7216 = vld [vmem:[%s7209 + $0x18] sm:$0xf]
  %v7217 = vld [vmem:[%s7209 + $0x1c] sm:$0xf]
  %v7218 = vld [vmem:[%s7209 + $0x20] sm:$0xf]
  %v7219 = vld [vmem:[%s7209 + $0x24] sm:$0xf]
  %v7220 = vld [vmem:[%s7209 + $0x28] sm:$0xf]
  %v7221 = vld [vmem:[%s7209 + $0x2c] sm:$0xf]
  %v7222 = vld [vmem:[%s7209 + $0x30] sm:$0xf]
  %v7223 = vld [vmem:[%s7209 + $0x34] sm:$0xf]
  %v7224 = vld [vmem:[%s7209 + $0x38] sm:$0xf]
  %v7225 = vld [vmem:[%s7209 + $0x3c] sm:$0xf]
  %v7228 = vunpack.c.h.b16 %v7207
  %v7229 = vunpack.c.h.b16 %v7208
  %v7230 = vrot.slane %v7228, 6
  %v7231 = vrot.slane %v7229, 5
  %v7232 = vsel %vm5638, %v7231, %v7230
  %v7233 = vpack.c.b16 %v7232, %v7232
  %v7251 = vunpack.c.l.b16 %v7210
  %v7252 = vunpack.c.l.b16 %v7211
  %v7253 = vunpack.c.l.b16 %v7212
  %v7254 = vunpack.c.l.b16 %v7213
  %v7255 = vunpack.c.l.b16 %v7214
  %v7256 = vunpack.c.l.b16 %v7215
  %v7257 = vunpack.c.l.b16 %v7216
  %v7258 = vunpack.c.l.b16 %v7217
  %v7259 = vunpack.c.l.b16 %v7218
  %v7260 = vunpack.c.l.b16 %v7219
  %v7261 = vunpack.c.l.b16 %v7220
  %v7262 = vunpack.c.l.b16 %v7221
  %v7263 = vunpack.c.l.b16 %v7222
  %v7264 = vunpack.c.l.b16 %v7223
  %v7265 = vunpack.c.l.b16 %v7224
  %v7266 = vunpack.c.l.b16 %v7225
  %v7267 = vpack.c.b16 %v7252, %v7251
  %v7268 = vpack.c.b16 %v7254, %v7253
  %v7269 = vpack.c.b16 %v7256, %v7255
  %v7270 = vpack.c.b16 %v7258, %v7257
  %v7271 = vpack.c.b16 %v7260, %v7259
  %v7272 = vpack.c.b16 %v7262, %v7261
  %v7273 = vpack.c.b16 %v7264, %v7263
  %v7274 = vpack.c.b16 %v7266, %v7265
  %7283 = vmatprep.subr.bf16.mxu0 0
  %7284 = vmatpush1.bf16.msra.mxu0 %v7267
  %7285 = vmatprep.subr.bf16.mxu0 0
  %7286 = vmatpush1.bf16.msra.mxu0 %v7268
  %7287 = vmatprep.subr.bf16.mxu0 0
  %7288 = vmatpush1.bf16.msra.mxu0 %v7269
  %7289 = vmatprep.subr.bf16.mxu0 0
  %7290 = vmatpush1.bf16.msra.mxu0 %v7270
  %7291 = vmatprep.subr.bf16.mxu0 0
  %7292 = vmatpush1.bf16.msra.mxu0 %v7271
  %7293 = vmatprep.subr.bf16.mxu0 0
  %7294 = vmatpush1.bf16.msra.mxu0 %v7272
  %7295 = vmatprep.subr.bf16.mxu0 0
  %7296 = vmatpush1.bf16.msra.mxu0 %v7273
  %7297 = vmatprep.subr.bf16.mxu0 0
  %7298 = vmatpush1.bf16.msra.mxu0 %v7274
  %7299 = vmatprep.subr.bf16.mxu0 0
  %7300 = vmatpush1.bf16.msra.mxu0 0
  %7301 = vmatprep.subr.bf16.mxu0 0
  %7302 = vmatpush1.bf16.msra.mxu0 0
  %7303 = vmatprep.subr.bf16.mxu0 0
  %7304 = vmatpush1.bf16.msra.mxu0 0
  %7305 = vmatprep.subr.bf16.mxu0 0
  %7306 = vmatpush1.bf16.msra.mxu0 0
  %7307 = vmatprep.subr.bf16.mxu0 0
  %7308 = vmatpush1.bf16.msra.mxu0 0
  %7309 = vmatprep.subr.bf16.mxu0 0
  %7310 = vmatpush1.bf16.msra.mxu0 0
  %7311 = vmatprep.subr.bf16.mxu0 0
  %7312 = vmatpush1.bf16.msra.mxu0 0
  %7313 = vmatprep.subr.bf16.mxu0 0
  %7314 = vmatpush1.bf16.msra.mxu0 0
  %7315 = vmatprep.mubr.bf16.mxu0 0
  %7316 = vmatmul.mubr.bf16.gmra.mrb[0].mxu0 %v7233
  %v7317 = vpop.f32.mrb[0].mxu0
  %v7318 = vadd.f32 0.0, %v7317
  %v7319 = vpop.f32.mrb[0].mxu0
  %v7320 = vpop.f32.mrb[0].mxu0
  %v7321 = vpop.f32.mrb[0].mxu0
  %7322 = vdwg.mxu0
  %v7323 = vadd.f32 %v7206, %v7318
  %s7324 = scalar_lea.vmem %s5, 960
  %v7325 = vld [vmem:[%s7324] sm:$0xf]
  %v7326 = vld [vmem:[%s7324 + $0x4] sm:$0xf]
  %v7327 = vld [vmem:[%s7324 + $0x8] sm:$0xf]
  %v7328 = vld [vmem:[%s7324 + $0xc] sm:$0xf]
  %v7329 = vld [vmem:[%s7324 + $0x10] sm:$0xf]
  %v7330 = vld [vmem:[%s7324 + $0x14] sm:$0xf]
  %v7331 = vld [vmem:[%s7324 + $0x18] sm:$0xf]
  %v7332 = vld [vmem:[%s7324 + $0x1c] sm:$0xf]
  %v7333 = vld [vmem:[%s7324 + $0x20] sm:$0xf]
  %v7334 = vld [vmem:[%s7324 + $0x24] sm:$0xf]
  %v7335 = vld [vmem:[%s7324 + $0x28] sm:$0xf]
  %v7336 = vld [vmem:[%s7324 + $0x2c] sm:$0xf]
  %v7337 = vld [vmem:[%s7324 + $0x30] sm:$0xf]
  %v7338 = vld [vmem:[%s7324 + $0x34] sm:$0xf]
  %v7339 = vld [vmem:[%s7324 + $0x38] sm:$0xf]
  %v7340 = vld [vmem:[%s7324 + $0x3c] sm:$0xf]
  %v7341 = vrot.slane %v7228, 7
  %v7342 = vrot.slane %v7229, 6
  %v7343 = vsel %vm5638, %v7342, %v7341
  %v7344 = vpack.c.b16 %v7343, %v7343
  %v7362 = vunpack.c.l.b16 %v7325
  %v7363 = vunpack.c.l.b16 %v7326
  %v7364 = vunpack.c.l.b16 %v7327
  %v7365 = vunpack.c.l.b16 %v7328
  %v7366 = vunpack.c.l.b16 %v7329
  %v7367 = vunpack.c.l.b16 %v7330
  %v7368 = vunpack.c.l.b16 %v7331
  %v7369 = vunpack.c.l.b16 %v7332
  %v7370 = vunpack.c.l.b16 %v7333
  %v7371 = vunpack.c.l.b16 %v7334
  %v7372 = vunpack.c.l.b16 %v7335
  %v7373 = vunpack.c.l.b16 %v7336
  %v7374 = vunpack.c.l.b16 %v7337
  %v7375 = vunpack.c.l.b16 %v7338
  %v7376 = vunpack.c.l.b16 %v7339
  %v7377 = vunpack.c.l.b16 %v7340
  %v7378 = vpack.c.b16 %v7363, %v7362
  %v7379 = vpack.c.b16 %v7365, %v7364
  %v7380 = vpack.c.b16 %v7367, %v7366
  %v7381 = vpack.c.b16 %v7369, %v7368
  %v7382 = vpack.c.b16 %v7371, %v7370
  %v7383 = vpack.c.b16 %v7373, %v7372
  %v7384 = vpack.c.b16 %v7375, %v7374
  %v7385 = vpack.c.b16 %v7377, %v7376
  %7394 = vmatprep.subr.bf16.mxu0 0
  %7395 = vmatpush1.bf16.msra.mxu0 %v7378
  %7396 = vmatprep.subr.bf16.mxu0 0
  %7397 = vmatpush1.bf16.msra.mxu0 %v7379
  %7398 = vmatprep.subr.bf16.mxu0 0
  %7399 = vmatpush1.bf16.msra.mxu0 %v7380
  %7400 = vmatprep.subr.bf16.mxu0 0
  %7401 = vmatpush1.bf16.msra.mxu0 %v7381
  %7402 = vmatprep.subr.bf16.mxu0 0
  %7403 = vmatpush1.bf16.msra.mxu0 %v7382
  %7404 = vmatprep.subr.bf16.mxu0 0
  %7405 = vmatpush1.bf16.msra.mxu0 %v7383
  %7406 = vmatprep.subr.bf16.mxu0 0
  %7407 = vmatpush1.bf16.msra.mxu0 %v7384
  %7408 = vmatprep.subr.bf16.mxu0 0
  %7409 = vmatpush1.bf16.msra.mxu0 %v7385
  %7410 = vmatprep.subr.bf16.mxu0 0
  %7411 = vmatpush1.bf16.msra.mxu0 0
  %7412 = vmatprep.subr.bf16.mxu0 0
  %7413 = vmatpush1.bf16.msra.mxu0 0
  %7414 = vmatprep.subr.bf16.mxu0 0
  %7415 = vmatpush1.bf16.msra.mxu0 0
  %7416 = vmatprep.subr.bf16.mxu0 0
  %7417 = vmatpush1.bf16.msra.mxu0 0
  %7418 = vmatprep.subr.bf16.mxu0 0
  %7419 = vmatpush1.bf16.msra.mxu0 0
  %7420 = vmatprep.subr.bf16.mxu0 0
  %7421 = vmatpush1.bf16.msra.mxu0 0
  %7422 = vmatprep.subr.bf16.mxu0 0
  %7423 = vmatpush1.bf16.msra.mxu0 0
  %7424 = vmatprep.subr.bf16.mxu0 0
  %7425 = vmatpush1.bf16.msra.mxu0 0
  %7426 = vmatprep.mubr.bf16.mxu0 0
  %7427 = vmatmul.mubr.bf16.gmra.mrb[0].mxu0 %v7344
  %v7428 = vpop.f32.mrb[0].mxu0
  %v7429 = vadd.f32 0.0, %v7428
  %v7430 = vpop.f32.mrb[0].mxu0
  %v7431 = vpop.f32.mrb[0].mxu0
  %v7432 = vpop.f32.mrb[0].mxu0
  %7433 = vdwg.mxu0
  %v7434 = vadd.f32 %v7323, %v7429
  %v7435 = vld [vmem:[#allocation5 + $0x8] sm:$0x1]
  %v7436 = vld [vmem:[#allocation5 + $0x18] sm:$0x1]
  %s7437 = scalar_lea.vmem %s5, 1024
  %v7438 = vld [vmem:[%s7437] sm:$0xf]
  %v7439 = vld [vmem:[%s7437 + $0x4] sm:$0xf]
  %v7440 = vld [vmem:[%s7437 + $0x8] sm:$0xf]
  %v7441 = vld [vmem:[%s7437 + $0xc] sm:$0xf]
  %v7442 = vld [vmem:[%s7437 + $0x10] sm:$0xf]
  %v7443 = vld [vmem:[%s7437 + $0x14] sm:$0xf]
  %v7444 = vld [vmem:[%s7437 + $0x18] sm:$0xf]
  %v7445 = vld [vmem:[%s7437 + $0x1c] sm:$0xf]
  %v7446 = vld [vmem:[%s7437 + $0x20] sm:$0xf]
  %v7447 = vld [vmem:[%s7437 + $0x24] sm:$0xf]
  %v7448 = vld [vmem:[%s7437 + $0x28] sm:$0xf]
  %v7449 = vld [vmem:[%s7437 + $0x2c] sm:$0xf]
  %v7450 = vld [vmem:[%s7437 + $0x30] sm:$0xf]
  %v7451 = vld [vmem:[%s7437 + $0x34] sm:$0xf]
  %v7452 = vld [vmem:[%s7437 + $0x38] sm:$0xf]
  %v7453 = vld [vmem:[%s7437 + $0x3c] sm:$0xf]
  %v7456 = vunpack.c.l.b16 %v7435
  %v7457 = vunpack.c.l.b16 %v7436
  %v7458 = vrot.slane %v7457, 7
  %v7459 = vsel %vm5638, %v7458, %v7456
  %v7460 = vpack.c.b16 %v7459, %v7459
  %v7478 = vunpack.c.l.b16 %v7438
  %v7479 = vunpack.c.l.b16 %v7439
  %v7480 = vunpack.c.l.b16 %v7440
  %v7481 = vunpack.c.l.b16 %v7441
  %v7482 = vunpack.c.l.b16 %v7442
  %v7483 = vunpack.c.l.b16 %v7443
  %v7484 = vunpack.c.l.b16 %v7444
  %v7485 = vunpack.c.l.b16 %v7445
  %v7486 = vunpack.c.l.b16 %v7446
  %v7487 = vunpack.c.l.b16 %v7447
  %v7488 = vunpack.c.l.b16 %v7448
  %v7489 = vunpack.c.l.b16 %v7449
  %v7490 = vunpack.c.l.b16 %v7450
  %v7491 = vunpack.c.l.b16 %v7451
  %v7492 = vunpack.c.l.b16 %v7452
  %v7493 = vunpack.c.l.b16 %v7453
  %v7494 = vpack.c.b16 %v7479, %v7478
  %v7495 = vpack.c.b16 %v7481, %v7480
  %v7496 = vpack.c.b16 %v7483, %v7482
  %v7497 = vpack.c.b16 %v7485, %v7484
  %v7498 = vpack.c.b16 %v7487, %v7486
  %v7499 = vpack.c.b16 %v7489, %v7488
  %v7500 = vpack.c.b16 %v7491, %v7490
  %v7501 = vpack.c.b16 %v7493, %v7492
  %7510 = vmatprep.subr.bf16.mxu0 0
  %7511 = vmatpush1.bf16.msra.mxu0 %v7494
  %7512 = vmatprep.subr.bf16.mxu0 0
  %7513 = vmatpush1.bf16.msra.mxu0 %v7495
  %7514 = vmatprep.subr.bf16.mxu0 0
  %7515 = vmatpush1.bf16.msra.mxu0 %v7496
  %7516 = vmatprep.subr.bf16.mxu0 0
  %7517 = vmatpush1.bf16.msra.mxu0 %v7497
  %7518 = vmatprep.subr.bf16.mxu0 0
  %7519 = vmatpush1.bf16.msra.mxu0 %v7498
  %7520 = vmatprep.subr.bf16.mxu0 0
  %7521 = vmatpush1.bf16.msra.mxu0 %v7499
  %7522 = vmatprep.subr.bf16.mxu0 0
  %7523 = vmatpush1.bf16.msra.mxu0 %v7500
  %7524 = vmatprep.subr.bf16.mxu0 0
  %7525 = vmatpush1.bf16.msra.mxu0 %v7501
  %7526 = vmatprep.subr.bf16.mxu0 0
  %7527 = vmatpush1.bf16.msra.mxu0 0
  %7528 = vmatprep.subr.bf16.mxu0 0
  %7529 = vmatpush1.bf16.msra.mxu0 0
  %7530 = vmatprep.subr.bf16.mxu0 0
  %7531 = vmatpush1.bf16.msra.mxu0 0
  %7532 = vmatprep.subr.bf16.mxu0 0
  %7533 = vmatpush1.bf16.msra.mxu0 0
  %7534 = vmatprep.subr.bf16.mxu0 0
  %7535 = vmatpush1.bf16.msra.mxu0 0
  %7536 = vmatprep.subr.bf16.mxu0 0
  %7537 = vmatpush1.bf16.msra.mxu0 0
  %7538 = vmatprep.subr.bf16.mxu0 0
  %7539 = vmatpush1.bf16.msra.mxu0 0
  %7540 = vmatprep.subr.bf16.mxu0 0
  %7541 = vmatpush1.bf16.msra.mxu0 0
  %7542 = vmatprep.mubr.bf16.mxu0 0
  %7543 = vmatmul.mubr.bf16.gmra.mrb[0].mxu0 %v7460
  %v7544 = vpop.f32.mrb[0].mxu0
  %v7545 = vadd.f32 0.0, %v7544
  %v7546 = vpop.f32.mrb[0].mxu0
  %v7547 = vpop.f32.mrb[0].mxu0
  %v7548 = vpop.f32.mrb[0].mxu0
  %7549 = vdwg.mxu0
  %v7550 = vadd.f32 %v7434, %v7545
  %s7551 = scalar_lea.vmem %s5, 1088
  %v7552 = vld [vmem:[%s7551] sm:$0xf]
  %v7553 = vld [vmem:[%s7551 + $0x4] sm:$0xf]
  %v7554 = vld [vmem:[%s7551 + $0x8] sm:$0xf]
  %v7555 = vld [vmem:[%s7551 + $0xc] sm:$0xf]
  %v7556 = vld [vmem:[%s7551 + $0x10] sm:$0xf]
  %v7557 = vld [vmem:[%s7551 + $0x14] sm:$0xf]
  %v7558 = vld [vmem:[%s7551 + $0x18] sm:$0xf]
  %v7559 = vld [vmem:[%s7551 + $0x1c] sm:$0xf]
  %v7560 = vld [vmem:[%s7551 + $0x20] sm:$0xf]
  %v7561 = vld [vmem:[%s7551 + $0x24] sm:$0xf]
  %v7562 = vld [vmem:[%s7551 + $0x28] sm:$0xf]
  %v7563 = vld [vmem:[%s7551 + $0x2c] sm:$0xf]
  %v7564 = vld [vmem:[%s7551 + $0x30] sm:$0xf]
  %v7565 = vld [vmem:[%s7551 + $0x34] sm:$0xf]
  %v7566 = vld [vmem:[%s7551 + $0x38] sm:$0xf]
  %v7567 = vld [vmem:[%s7551 + $0x3c] sm:$0xf]
  %v7568 = vrot.slane %v7456, 1
  %v7569 = vsel %vm5638, %v7457, %v7568
  %v7570 = vpack.c.b16 %v7569, %v7569
  %v7588 = vunpack.c.l.b16 %v7552
  %v7589 = vunpack.c.l.b16 %v7553
  %v7590 = vunpack.c.l.b16 %v7554
  %v7591 = vunpack.c.l.b16 %v7555
  %v7592 = vunpack.c.l.b16 %v7556
  %v7593 = vunpack.c.l.b16 %v7557
  %v7594 = vunpack.c.l.b16 %v7558
  %v7595 = vunpack.c.l.b16 %v7559
  %v7596 = vunpack.c.l.b16 %v7560
  %v7597 = vunpack.c.l.b16 %v7561
  %v7598 = vunpack.c.l.b16 %v7562
  %v7599 = vunpack.c.l.b16 %v7563
  %v7600 = vunpack.c.l.b16 %v7564
  %v7601 = vunpack.c.l.b16 %v7565
  %v7602 = vunpack.c.l.b16 %v7566
  %v7603 = vunpack.c.l.b16 %v7567
  %v7604 = vpack.c.b16 %v7589, %v7588
  %v7605 = vpack.c.b16 %v7591, %v7590
  %v7606 = vpack.c.b16 %v7593, %v7592
  %v7607 = vpack.c.b16 %v7595, %v7594
  %v7608 = vpack.c.b16 %v7597, %v7596
  %v7609 = vpack.c.b16 %v7599, %v7598
  %v7610 = vpack.c.b16 %v7601, %v7600
  %v7611 = vpack.c.b16 %v7603, %v7602
  %7620 = vmatprep.subr.bf16.mxu0 0
  %7621 = vmatpush1.bf16.msra.mxu0 %v7604
  %7622 = vmatprep.subr.bf16.mxu0 0
  %7623 = vmatpush1.bf16.msra.mxu0 %v7605
  %7624 = vmatprep.subr.bf16.mxu0 0
  %7625 = vmatpush1.bf16.msra.mxu0 %v7606
  %7626 = vmatprep.subr.bf16.mxu0 0
  %7627 = vmatpush1.bf16.msra.mxu0 %v7607
  %7628 = vmatprep.subr.bf16.mxu0 0
  %7629 = vmatpush1.bf16.msra.mxu0 %v7608
  %7630 = vmatprep.subr.bf16.mxu0 0
  %7631 = vmatpush1.bf16.msra.mxu0 %v7609
  %7632 = vmatprep.subr.bf16.mxu0 0
  %7633 = vmatpush1.bf16.msra.mxu0 %v7610
  %7634 = vmatprep.subr.bf16.mxu0 0
  %7635 = vmatpush1.bf16.msra.mxu0 %v7611
  %7636 = vmatprep.subr.bf16.mxu0 0
  %7637 = vmatpush1.bf16.msra.mxu0 0
  %7638 = vmatprep.subr.bf16.mxu0 0
  %7639 = vmatpush1.bf16.msra.mxu0 0
  %7640 = vmatprep.subr.bf16.mxu0 0
  %7641 = vmatpush1.bf16.msra.mxu0 0
  %7642 = vmatprep.subr.bf16.mxu0 0
  %7643 = vmatpush1.bf16.msra.mxu0 0
  %7644 = vmatprep.subr.bf16.mxu0 0
  %7645 = vmatpush1.bf16.msra.mxu0 0
  %7646 = vmatprep.subr.bf16.mxu0 0
  %7647 = vmatpush1.bf16.msra.mxu0 0
  %7648 = vmatprep.subr.bf16.mxu0 0
  %7649 = vmatpush1.bf16.msra.mxu0 0
  %7650 = vmatprep.subr.bf16.mxu0 0
  %7651 = vmatpush1.bf16.msra.mxu0 0
  %7652 = vmatprep.mubr.bf16.mxu0 0
  %7653 = vmatmul.mubr.bf16.gmra.mrb[0].mxu0 %v7570
  %v7654 = vpop.f32.mrb[0].mxu0
  %v7655 = vadd.f32 0.0, %v7654
  %v7656 = vpop.f32.mrb[0].mxu0
  %v7657 = vpop.f32.mrb[0].mxu0
  %v7658 = vpop.f32.mrb[0].mxu0
  %7659 = vdwg.mxu0
  %v7660 = vadd.f32 %v7550, %v7655
  %v7661 = vld [vmem:[#allocation5 + $0x8] sm:$0x2]
  %v7662 = vld [vmem:[#allocation5 + $0x18] sm:$0x2]
  %s7663 = scalar_lea.vmem %s5, 1152
  %v7664 = vld [vmem:[%s7663] sm:$0xf]
  %v7665 = vld [vmem:[%s7663 + $0x4] sm:$0xf]
  %v7666 = vld [vmem:[%s7663 + $0x8] sm:$0xf]
  %v7667 = vld [vmem:[%s7663 + $0xc] sm:$0xf]
  %v7668 = vld [vmem:[%s7663 + $0x10] sm:$0xf]
  %v7669 = vld [vmem:[%s7663 + $0x14] sm:$0xf]
  %v7670 = vld [vmem:[%s7663 + $0x18] sm:$0xf]
  %v7671 = vld [vmem:[%s7663 + $0x1c] sm:$0xf]
  %v7672 = vld [vmem:[%s7663 + $0x20] sm:$0xf]
  %v7673 = vld [vmem:[%s7663 + $0x24] sm:$0xf]
  %v7674 = vld [vmem:[%s7663 + $0x28] sm:$0xf]
  %v7675 = vld [vmem:[%s7663 + $0x2c] sm:$0xf]
  %v7676 = vld [vmem:[%s7663 + $0x30] sm:$0xf]
  %v7677 = vld [vmem:[%s7663 + $0x34] sm:$0xf]
  %v7678 = vld [vmem:[%s7663 + $0x38] sm:$0xf]
  %v7679 = vld [vmem:[%s7663 + $0x3c] sm:$0xf]
  %v7682 = vunpack.c.l.b16 %v7661
  %v7683 = vunpack.c.l.b16 %v7662
  %v7684 = vrot.slane %v7682, 2
  %v7685 = vrot.slane %v7683, 1
  %v7686 = vsel %vm5638, %v7685, %v7684
  %v7687 = vpack.c.b16 %v7686, %v7686
  %v7705 = vunpack.c.l.b16 %v7664
  %v7706 = vunpack.c.l.b16 %v7665
  %v7707 = vunpack.c.l.b16 %v7666
  %v7708 = vunpack.c.l.b16 %v7667
  %v7709 = vunpack.c.l.b16 %v7668
  %v7710 = vunpack.c.l.b16 %v7669
  %v7711 = vunpack.c.l.b16 %v7670
  %v7712 = vunpack.c.l.b16 %v7671
  %v7713 = vunpack.c.l.b16 %v7672
  %v7714 = vunpack.c.l.b16 %v7673
  %v7715 = vunpack.c.l.b16 %v7674
  %v7716 = vunpack.c.l.b16 %v7675
  %v7717 = vunpack.c.l.b16 %v7676
  %v7718 = vunpack.c.l.b16 %v7677
  %v7719 = vunpack.c.l.b16 %v7678
  %v7720 = vunpack.c.l.b16 %v7679
  %v7721 = vpack.c.b16 %v7706, %v7705
  %v7722 = vpack.c.b16 %v7708, %v7707
  %v7723 = vpack.c.b16 %v7710, %v7709
  %v7724 = vpack.c.b16 %v7712, %v7711
  %v7725 = vpack.c.b16 %v7714, %v7713
  %v7726 = vpack.c.b16 %v7716, %v7715
  %v7727 = vpack.c.b16 %v7718, %v7717
  %v7728 = vpack.c.b16 %v7720, %v7719
  %7737 = vmatprep.subr.bf16.mxu0 0
  %7738 = vmatpush1.bf16.msra.mxu0 %v7721
  %7739 = vmatprep.subr.bf16.mxu0 0
  %7740 = vmatpush1.bf16.msra.mxu0 %v7722
  %7741 = vmatprep.subr.bf16.mxu0 0
  %7742 = vmatpush1.bf16.msra.mxu0 %v7723
  %7743 = vmatprep.subr.bf16.mxu0 0
  %7744 = vmatpush1.bf16.msra.mxu0 %v7724
  %7745 = vmatprep.subr.bf16.mxu0 0
  %7746 = vmatpush1.bf16.msra.mxu0 %v7725
  %7747 = vmatprep.subr.bf16.mxu0 0
  %7748 = vmatpush1.bf16.msra.mxu0 %v7726
  %7749 = vmatprep.subr.bf16.mxu0 0
  %7750 = vmatpush1.bf16.msra.mxu0 %v7727
  %7751 = vmatprep.subr.bf16.mxu0 0
  %7752 = vmatpush1.bf16.msra.mxu0 %v7728
  %7753 = vmatprep.subr.bf16.mxu0 0
  %7754 = vmatpush1.bf16.msra.mxu0 0
  %7755 = vmatprep.subr.bf16.mxu0 0
  %7756 = vmatpush1.bf16.msra.mxu0 0
  %7757 = vmatprep.subr.bf16.mxu0 0
  %7758 = vmatpush1.bf16.msra.mxu0 0
  %7759 = vmatprep.subr.bf16.mxu0 0
  %7760 = vmatpush1.bf16.msra.mxu0 0
  %7761 = vmatprep.subr.bf16.mxu0 0
  %7762 = vmatpush1.bf16.msra.mxu0 0
  %7763 = vmatprep.subr.bf16.mxu0 0
  %7764 = vmatpush1.bf16.msra.mxu0 0
  %7765 = vmatprep.subr.bf16.mxu0 0
  %7766 = vmatpush1.bf16.msra.mxu0 0
  %7767 = vmatprep.subr.bf16.mxu0 0
  %7768 = vmatpush1.bf16.msra.mxu0 0
  %7769 = vmatprep.mubr.bf16.mxu0 0
  %7770 = vmatmul.mubr.bf16.gmra.mrb[0].mxu0 %v7687
  %v7771 = vpop.f32.mrb[0].mxu0
  %v7772 = vadd.f32 0.0, %v7771
  %v7773 = vpop.f32.mrb[0].mxu0
  %v7774 = vpop.f32.mrb[0].mxu0
  %v7775 = vpop.f32.mrb[0].mxu0
  %7776 = vdwg.mxu0
  %v7777 = vadd.f32 %v7660, %v7772
  %s7778 = scalar_lea.vmem %s5, 1216
  %v7779 = vld [vmem:[%s7778] sm:$0xf]
  %v7780 = vld [vmem:[%s7778 + $0x4] sm:$0xf]
  %v7781 = vld [vmem:[%s7778 + $0x8] sm:$0xf]
  %v7782 = vld [vmem:[%s7778 + $0xc] sm:$0xf]
  %v7783 = vld [vmem:[%s7778 + $0x10] sm:$0xf]
  %v7784 = vld [vmem:[%s7778 + $0x14] sm:$0xf]
  %v7785 = vld [vmem:[%s7778 + $0x18] sm:$0xf]
  %v7786 = vld [vmem:[%s7778 + $0x1c] sm:$0xf]
  %v7787 = vld [vmem:[%s7778 + $0x20] sm:$0xf]
  %v7788 = vld [vmem:[%s7778 + $0x24] sm:$0xf]
  %v7789 = vld [vmem:[%s7778 + $0x28] sm:$0xf]
  %v7790 = vld [vmem:[%s7778 + $0x2c] sm:$0xf]
  %v7791 = vld [vmem:[%s7778 + $0x30] sm:$0xf]
  %v7792 = vld [vmem:[%s7778 + $0x34] sm:$0xf]
  %v7793 = vld [vmem:[%s7778 + $0x38] sm:$0xf]
  %v7794 = vld [vmem:[%s7778 + $0x3c] sm:$0xf]
  %v7795 = vrot.slane %v7682, 3
  %v7796 = vrot.slane %v7683, 2
  %v7797 = vsel %vm5638, %v7796, %v7795
  %v7798 = vpack.c.b16 %v7797, %v7797
  %v7816 = vunpack.c.l.b16 %v7779
  %v7817 = vunpack.c.l.b16 %v7780
  %v7818 = vunpack.c.l.b16 %v7781
  %v7819 = vunpack.c.l.b16 %v7782
  %v7820 = vunpack.c.l.b16 %v7783
  %v7821 = vunpack.c.l.b16 %v7784
  %v7822 = vunpack.c.l.b16 %v7785
  %v7823 = vunpack.c.l.b16 %v7786
  %v7824 = vunpack.c.l.b16 %v7787
  %v7825 = vunpack.c.l.b16 %v7788
  %v7826 = vunpack.c.l.b16 %v7789
  %v7827 = vunpack.c.l.b16 %v7790
  %v7828 = vunpack.c.l.b16 %v7791
  %v7829 = vunpack.c.l.b16 %v7792
  %v7830 = vunpack.c.l.b16 %v7793
  %v7831 = vunpack.c.l.b16 %v7794
  %v7832 = vpack.c.b16 %v7817, %v7816
  %v7833 = vpack.c.b16 %v7819, %v7818
  %v7834 = vpack.c.b16 %v7821, %v7820
  %v7835 = vpack.c.b16 %v7823, %v7822
  %v7836 = vpack.c.b16 %v7825, %v7824
  %v7837 = vpack.c.b16 %v7827, %v7826
  %v7838 = vpack.c.b16 %v7829, %v7828
  %v7839 = vpack.c.b16 %v7831, %v7830
  %7848 = vmatprep.subr.bf16.mxu0 0
  %7849 = vmatpush1.bf16.msra.mxu0 %v7832
  %7850 = vmatprep.subr.bf16.mxu0 0
  %7851 = vmatpush1.bf16.msra.mxu0 %v7833
  %7852 = vmatprep.subr.bf16.mxu0 0
  %7853 = vmatpush1.bf16.msra.mxu0 %v7834
  %7854 = vmatprep.subr.bf16.mxu0 0
  %7855 = vmatpush1.bf16.msra.mxu0 %v7835
  %7856 = vmatprep.subr.bf16.mxu0 0
  %7857 = vmatpush1.bf16.msra.mxu0 %v7836
  %7858 = vmatprep.subr.bf16.mxu0 0
  %7859 = vmatpush1.bf16.msra.mxu0 %v7837
  %7860 = vmatprep.subr.bf16.mxu0 0
  %7861 = vmatpush1.bf16.msra.mxu0 %v7838
  %7862 = vmatprep.subr.bf16.mxu0 0
  %7863 = vmatpush1.bf16.msra.mxu0 %v7839
  %7864 = vmatprep.subr.bf16.mxu0 0
  %7865 = vmatpush1.bf16.msra.mxu0 0
  %7866 = vmatprep.subr.bf16.mxu0 0
  %7867 = vmatpush1.bf16.msra.mxu0 0
  %7868 = vmatprep.subr.bf16.mxu0 0
  %7869 = vmatpush1.bf16.msra.mxu0 0
  %7870 = vmatprep.subr.bf16.mxu0 0
  %7871 = vmatpush1.bf16.msra.mxu0 0
  %7872 = vmatprep.subr.bf16.mxu0 0
  %7873 = vmatpush1.bf16.msra.mxu0 0
  %7874 = vmatprep.subr.bf16.mxu0 0
  %7875 = vmatpush1.bf16.msra.mxu0 0
  %7876 = vmatprep.subr.bf16.mxu0 0
  %7877 = vmatpush1.bf16.msra.mxu0 0
  %7878 = vmatprep.subr.bf16.mxu0 0
  %7879 = vmatpush1.bf16.msra.mxu0 0
  %7880 = vmatprep.mubr.bf16.mxu0 0
  %7881 = vmatmul.mubr.bf16.gmra.mrb[0].mxu0 %v7798
  %v7882 = vpop.f32.mrb[0].mxu0
  %v7883 = vadd.f32 0.0, %v7882
  %v7884 = vpop.f32.mrb[0].mxu0
  %v7885 = vpop.f32.mrb[0].mxu0
  %v7886 = vpop.f32.mrb[0].mxu0
  %7887 = vdwg.mxu0
  %v7888 = vadd.f32 %v7777, %v7883
  %v7889 = vld [vmem:[#allocation5 + $0x8] sm:$0x4]
  %v7890 = vld [vmem:[#allocation5 + $0x18] sm:$0x4]
  %s7891 = scalar_lea.vmem %s5, 1280
  %v7892 = vld [vmem:[%s7891] sm:$0xf]
  %v7893 = vld [vmem:[%s7891 + $0x4] sm:$0xf]
  %v7894 = vld [vmem:[%s7891 + $0x8] sm:$0xf]
  %v7895 = vld [vmem:[%s7891 + $0xc] sm:$0xf]
  %v7896 = vld [vmem:[%s7891 + $0x10] sm:$0xf]
  %v7897 = vld [vmem:[%s7891 + $0x14] sm:$0xf]
  %v7898 = vld [vmem:[%s7891 + $0x18] sm:$0xf]
  %v7899 = vld [vmem:[%s7891 + $0x1c] sm:$0xf]
  %v7900 = vld [vmem:[%s7891 + $0x20] sm:$0xf]
  %v7901 = vld [vmem:[%s7891 + $0x24] sm:$0xf]
  %v7902 = vld [vmem:[%s7891 + $0x28] sm:$0xf]
  %v7903 = vld [vmem:[%s7891 + $0x2c] sm:$0xf]
  %v7904 = vld [vmem:[%s7891 + $0x30] sm:$0xf]
  %v7905 = vld [vmem:[%s7891 + $0x34] sm:$0xf]
  %v7906 = vld [vmem:[%s7891 + $0x38] sm:$0xf]
  %v7907 = vld [vmem:[%s7891 + $0x3c] sm:$0xf]
  %v7910 = vunpack.c.l.b16 %v7889
  %v7911 = vunpack.c.l.b16 %v7890
  %v7912 = vrot.slane %v7910, 4
  %v7913 = vrot.slane %v7911, 3
  %v7914 = vsel %vm5638, %v7913, %v7912
  %v7915 = vpack.c.b16 %v7914, %v7914
  %v7933 = vunpack.c.l.b16 %v7892
  %v7934 = vunpack.c.l.b16 %v7893
  %v7935 = vunpack.c.l.b16 %v7894
  %v7936 = vunpack.c.l.b16 %v7895
  %v7937 = vunpack.c.l.b16 %v7896
  %v7938 = vunpack.c.l.b16 %v7897
  %v7939 = vunpack.c.l.b16 %v7898
  %v7940 = vunpack.c.l.b16 %v7899
  %v7941 = vunpack.c.l.b16 %v7900
  %v7942 = vunpack.c.l.b16 %v7901
  %v7943 = vunpack.c.l.b16 %v7902
  %v7944 = vunpack.c.l.b16 %v7903
  %v7945 = vunpack.c.l.b16 %v7904
  %v7946 = vunpack.c.l.b16 %v7905
  %v7947 = vunpack.c.l.b16 %v7906
  %v7948 = vunpack.c.l.b16 %v7907
  %v7949 = vpack.c.b16 %v7934, %v7933
  %v7950 = vpack.c.b16 %v7936, %v7935
  %v7951 = vpack.c.b16 %v7938, %v7937
  %v7952 = vpack.c.b16 %v7940, %v7939
  %v7953 = vpack.c.b16 %v7942, %v7941
  %v7954 = vpack.c.b16 %v7944, %v7943
  %v7955 = vpack.c.b16 %v7946, %v7945
  %v7956 = vpack.c.b16 %v7948, %v7947
  %7965 = vmatprep.subr.bf16.mxu0 0
  %7966 = vmatpush1.bf16.msra.mxu0 %v7949
  %7967 = vmatprep.subr.bf16.mxu0 0
  %7968 = vmatpush1.bf16.msra.mxu0 %v7950
  %7969 = vmatprep.subr.bf16.mxu0 0
  %7970 = vmatpush1.bf16.msra.mxu0 %v7951
  %7971 = vmatprep.subr.bf16.mxu0 0
  %7972 = vmatpush1.bf16.msra.mxu0 %v7952
  %7973 = vmatprep.subr.bf16.mxu0 0
  %7974 = vmatpush1.bf16.msra.mxu0 %v7953
  %7975 = vmatprep.subr.bf16.mxu0 0
  %7976 = vmatpush1.bf16.msra.mxu0 %v7954
  %7977 = vmatprep.subr.bf16.mxu0 0
  %7978 = vmatpush1.bf16.msra.mxu0 %v7955
  %7979 = vmatprep.subr.bf16.mxu0 0
  %7980 = vmatpush1.bf16.msra.mxu0 %v7956
  %7981 = vmatprep.subr.bf16.mxu0 0
  %7982 = vmatpush1.bf16.msra.mxu0 0
  %7983 = vmatprep.subr.bf16.mxu0 0
  %7984 = vmatpush1.bf16.msra.mxu0 0
  %7985 = vmatprep.subr.bf16.mxu0 0
  %7986 = vmatpush1.bf16.msra.mxu0 0
  %7987 = vmatprep.subr.bf16.mxu0 0
  %7988 = vmatpush1.bf16.msra.mxu0 0
  %7989 = vmatprep.subr.bf16.mxu0 0
  %7990 = vmatpush1.bf16.msra.mxu0 0
  %7991 = vmatprep.subr.bf16.mxu0 0
  %7992 = vmatpush1.bf16.msra.mxu0 0
  %7993 = vmatprep.subr.bf16.mxu0 0
  %7994 = vmatpush1.bf16.msra.mxu0 0
  %7995 = vmatprep.subr.bf16.mxu0 0
  %7996 = vmatpush1.bf16.msra.mxu0 0
  %7997 = vmatprep.mubr.bf16.mxu0 0
  %7998 = vmatmul.mubr.bf16.gmra.mrb[0].mxu0 %v7915
  %v7999 = vpop.f32.mrb[0].mxu0
  %v8000 = vadd.f32 0.0, %v7999
  %v8001 = vpop.f32.mrb[0].mxu0
  %v8002 = vpop.f32.mrb[0].mxu0
  %v8003 = vpop.f32.mrb[0].mxu0
  %8004 = vdwg.mxu0
  %v8005 = vadd.f32 %v7888, %v8000
  %s8006 = scalar_lea.vmem %s5, 1344
  %v8007 = vld [vmem:[%s8006] sm:$0xf]
  %v8008 = vld [vmem:[%s8006 + $0x4] sm:$0xf]
  %v8009 = vld [vmem:[%s8006 + $0x8] sm:$0xf]
  %v8010 = vld [vmem:[%s8006 + $0xc] sm:$0xf]
  %v8011 = vld [vmem:[%s8006 + $0x10] sm:$0xf]
  %v8012 = vld [vmem:[%s8006 + $0x14] sm:$0xf]
  %v8013 = vld [vmem:[%s8006 + $0x18] sm:$0xf]
  %v8014 = vld [vmem:[%s8006 + $0x1c] sm:$0xf]
  %v8015 = vld [vmem:[%s8006 + $0x20] sm:$0xf]
  %v8016 = vld [vmem:[%s8006 + $0x24] sm:$0xf]
  %v8017 = vld [vmem:[%s8006 + $0x28] sm:$0xf]
  %v8018 = vld [vmem:[%s8006 + $0x2c] sm:$0xf]
  %v8019 = vld [vmem:[%s8006 + $0x30] sm:$0xf]
  %v8020 = vld [vmem:[%s8006 + $0x34] sm:$0xf]
  %v8021 = vld [vmem:[%s8006 + $0x38] sm:$0xf]
  %v8022 = vld [vmem:[%s8006 + $0x3c] sm:$0xf]
  %v8023 = vrot.slane %v7910, 5
  %v8024 = vrot.slane %v7911, 4
  %v8025 = vsel %vm5638, %v8024, %v8023
  %v8026 = vpack.c.b16 %v8025, %v8025
  %v8044 = vunpack.c.l.b16 %v8007
  %v8045 = vunpack.c.l.b16 %v8008
  %v8046 = vunpack.c.l.b16 %v8009
  %v8047 = vunpack.c.l.b16 %v8010
  %v8048 = vunpack.c.l.b16 %v8011
  %v8049 = vunpack.c.l.b16 %v8012
  %v8050 = vunpack.c.l.b16 %v8013
  %v8051 = vunpack.c.l.b16 %v8014
  %v8052 = vunpack.c.l.b16 %v8015
  %v8053 = vunpack.c.l.b16 %v8016
  %v8054 = vunpack.c.l.b16 %v8017
  %v8055 = vunpack.c.l.b16 %v8018
  %v8056 = vunpack.c.l.b16 %v8019
  %v8057 = vunpack.c.l.b16 %v8020
  %v8058 = vunpack.c.l.b16 %v8021
  %v8059 = vunpack.c.l.b16 %v8022
  %v8060 = vpack.c.b16 %v8045, %v8044
  %v8061 = vpack.c.b16 %v8047, %v8046
  %v8062 = vpack.c.b16 %v8049, %v8048
  %v8063 = vpack.c.b16 %v8051, %v8050
  %v8064 = vpack.c.b16 %v8053, %v8052
  %v8065 = vpack.c.b16 %v8055, %v8054
  %v8066 = vpack.c.b16 %v8057, %v8056
  %v8067 = vpack.c.b16 %v8059, %v8058
  %8076 = vmatprep.subr.bf16.mxu0 0
  %8077 = vmatpush1.bf16.msra.mxu0 %v8060
  %8078 = vmatprep.subr.bf16.mxu0 0
  %8079 = vmatpush1.bf16.msra.mxu0 %v8061
  %8080 = vmatprep.subr.bf16.mxu0 0
  %8081 = vmatpush1.bf16.msra.mxu0 %v8062
  %8082 = vmatprep.subr.bf16.mxu0 0
  %8083 = vmatpush1.bf16.msra.mxu0 %v8063
  %8084 = vmatprep.subr.bf16.mxu0 0
  %8085 = vmatpush1.bf16.msra.mxu0 %v8064
  %8086 = vmatprep.subr.bf16.mxu0 0
  %8087 = vmatpush1.bf16.msra.mxu0 %v8065
  %8088 = vmatprep.subr.bf16.mxu0 0
  %8089 = vmatpush1.bf16.msra.mxu0 %v8066
  %8090 = vmatprep.subr.bf16.mxu0 0
  %8091 = vmatpush1.bf16.msra.mxu0 %v8067
  %8092 = vmatprep.subr.bf16.mxu0 0
  %8093 = vmatpush1.bf16.msra.mxu0 0
  %8094 = vmatprep.subr.bf16.mxu0 0
  %8095 = vmatpush1.bf16.msra.mxu0 0
  %8096 = vmatprep.subr.bf16.mxu0 0
  %8097 = vmatpush1.bf16.msra.mxu0 0
  %8098 = vmatprep.subr.bf16.mxu0 0
  %8099 = vmatpush1.bf16.msra.mxu0 0
  %8100 = vmatprep.subr.bf16.mxu0 0
  %8101 = vmatpush1.bf16.msra.mxu0 0
  %8102 = vmatprep.subr.bf16.mxu0 0
  %8103 = vmatpush1.bf16.msra.mxu0 0
  %8104 = vmatprep.subr.bf16.mxu0 0
  %8105 = vmatpush1.bf16.msra.mxu0 0
  %8106 = vmatprep.subr.bf16.mxu0 0
  %8107 = vmatpush1.bf16.msra.mxu0 0
  %8108 = vmatprep.mubr.bf16.mxu0 0
  %8109 = vmatmul.mubr.bf16.gmra.mrb[0].mxu0 %v8026
  %v8110 = vpop.f32.mrb[0].mxu0
  %v8111 = vadd.f32 0.0, %v8110
  %v8112 = vpop.f32.mrb[0].mxu0
  %v8113 = vpop.f32.mrb[0].mxu0
  %v8114 = vpop.f32.mrb[0].mxu0
  %8115 = vdwg.mxu0
  %v8116 = vadd.f32 %v8005, %v8111
  %v8117 = vld [vmem:[#allocation5 + $0x8] sm:$0x8]
  %v8118 = vld [vmem:[#allocation5 + $0x18] sm:$0x8]
  %s8119 = scalar_lea.vmem %s5, 1408
  %v8120 = vld [vmem:[%s8119] sm:$0xf]
  %v8121 = vld [vmem:[%s8119 + $0x4] sm:$0xf]
  %v8122 = vld [vmem:[%s8119 + $0x8] sm:$0xf]
  %v8123 = vld [vmem:[%s8119 + $0xc] sm:$0xf]
  %v8124 = vld [vmem:[%s8119 + $0x10] sm:$0xf]
  %v8125 = vld [vmem:[%s8119 + $0x14] sm:$0xf]
  %v8126 = vld [vmem:[%s8119 + $0x18] sm:$0xf]
  %v8127 = vld [vmem:[%s8119 + $0x1c] sm:$0xf]
  %v8128 = vld [vmem:[%s8119 + $0x20] sm:$0xf]
  %v8129 = vld [vmem:[%s8119 + $0x24] sm:$0xf]
  %v8130 = vld [vmem:[%s8119 + $0x28] sm:$0xf]
  %v8131 = vld [vmem:[%s8119 + $0x2c] sm:$0xf]
  %v8132 = vld [vmem:[%s8119 + $0x30] sm:$0xf]
  %v8133 = vld [vmem:[%s8119 + $0x34] sm:$0xf]
  %v8134 = vld [vmem:[%s8119 + $0x38] sm:$0xf]
  %v8135 = vld [vmem:[%s8119 + $0x3c] sm:$0xf]
  %v8138 = vunpack.c.l.b16 %v8117
  %v8139 = vunpack.c.l.b16 %v8118
  %v8140 = vrot.slane %v8138, 6
  %v8141 = vrot.slane %v8139, 5
  %v8142 = vsel %vm5638, %v8141, %v8140
  %v8143 = vpack.c.b16 %v8142, %v8142
  %v8161 = vunpack.c.l.b16 %v8120
  %v8162 = vunpack.c.l.b16 %v8121
  %v8163 = vunpack.c.l.b16 %v8122
  %v8164 = vunpack.c.l.b16 %v8123
  %v8165 = vunpack.c.l.b16 %v8124
  %v8166 = vunpack.c.l.b16 %v8125
  %v8167 = vunpack.c.l.b16 %v8126
  %v8168 = vunpack.c.l.b16 %v8127
  %v8169 = vunpack.c.l.b16 %v8128
  %v8170 = vunpack.c.l.b16 %v8129
  %v8171 = vunpack.c.l.b16 %v8130
  %v8172 = vunpack.c.l.b16 %v8131
  %v8173 = vunpack.c.l.b16 %v8132
  %v8174 = vunpack.c.l.b16 %v8133
  %v8175 = vunpack.c.l.b16 %v8134
  %v8176 = vunpack.c.l.b16 %v8135
  %v8177 = vpack.c.b16 %v8162, %v8161
  %v8178 = vpack.c.b16 %v8164, %v8163
  %v8179 = vpack.c.b16 %v8166, %v8165
  %v8180 = vpack.c.b16 %v8168, %v8167
  %v8181 = vpack.c.b16 %v8170, %v8169
  %v8182 = vpack.c.b16 %v8172, %v8171
  %v8183 = vpack.c.b16 %v8174, %v8173
  %v8184 = vpack.c.b16 %v8176, %v8175
  %8193 = vmatprep.subr.bf16.mxu0 0
  %8194 = vmatpush1.bf16.msra.mxu0 %v8177
  %8195 = vmatprep.subr.bf16.mxu0 0
  %8196 = vmatpush1.bf16.msra.mxu0 %v8178
  %8197 = vmatprep.subr.bf16.mxu0 0
  %8198 = vmatpush1.bf16.msra.mxu0 %v8179
  %8199 = vmatprep.subr.bf16.mxu0 0
  %8200 = vmatpush1.bf16.msra.mxu0 %v8180
  %8201 = vmatprep.subr.bf16.mxu0 0
  %8202 = vmatpush1.bf16.msra.mxu0 %v8181
  %8203 = vmatprep.subr.bf16.mxu0 0
  %8204 = vmatpush1.bf16.msra.mxu0 %v8182
  %8205 = vmatprep.subr.bf16.mxu0 0
  %8206 = vmatpush1.bf16.msra.mxu0 %v8183
  %8207 = vmatprep.subr.bf16.mxu0 0
  %8208 = vmatpush1.bf16.msra.mxu0 %v8184
  %8209 = vmatprep.subr.bf16.mxu0 0
  %8210 = vmatpush1.bf16.msra.mxu0 0
  %8211 = vmatprep.subr.bf16.mxu0 0
  %8212 = vmatpush1.bf16.msra.mxu0 0
  %8213 = vmatprep.subr.bf16.mxu0 0
  %8214 = vmatpush1.bf16.msra.mxu0 0
  %8215 = vmatprep.subr.bf16.mxu0 0
  %8216 = vmatpush1.bf16.msra.mxu0 0
  %8217 = vmatprep.subr.bf16.mxu0 0
  %8218 = vmatpush1.bf16.msra.mxu0 0
  %8219 = vmatprep.subr.bf16.mxu0 0
  %8220 = vmatpush1.bf16.msra.mxu0 0
  %8221 = vmatprep.subr.bf16.mxu0 0
  %8222 = vmatpush1.bf16.msra.mxu0 0
  %8223 = vmatprep.subr.bf16.mxu0 0
  %8224 = vmatpush1.bf16.msra.mxu0 0
  %8225 = vmatprep.mubr.bf16.mxu0 0
  %8226 = vmatmul.mubr.bf16.gmra.mrb[0].mxu0 %v8143
  %v8227 = vpop.f32.mrb[0].mxu0
  %v8228 = vadd.f32 0.0, %v8227
  %v8229 = vpop.f32.mrb[0].mxu0
  %v8230 = vpop.f32.mrb[0].mxu0
  %v8231 = vpop.f32.mrb[0].mxu0
  %8232 = vdwg.mxu0
  %v8233 = vadd.f32 %v8116, %v8228
  %s8234 = scalar_lea.vmem %s5, 1472
  %v8235 = vld [vmem:[%s8234] sm:$0xf]
  %v8236 = vld [vmem:[%s8234 + $0x4] sm:$0xf]
  %v8237 = vld [vmem:[%s8234 + $0x8] sm:$0xf]
  %v8238 = vld [vmem:[%s8234 + $0xc] sm:$0xf]
  %v8239 = vld [vmem:[%s8234 + $0x10] sm:$0xf]
  %v8240 = vld [vmem:[%s8234 + $0x14] sm:$0xf]
  %v8241 = vld [vmem:[%s8234 + $0x18] sm:$0xf]
  %v8242 = vld [vmem:[%s8234 + $0x1c] sm:$0xf]
  %v8243 = vld [vmem:[%s8234 + $0x20] sm:$0xf]
  %v8244 = vld [vmem:[%s8234 + $0x24] sm:$0xf]
  %v8245 = vld [vmem:[%s8234 + $0x28] sm:$0xf]
  %v8246 = vld [vmem:[%s8234 + $0x2c] sm:$0xf]
  %v8247 = vld [vmem:[%s8234 + $0x30] sm:$0xf]
  %v8248 = vld [vmem:[%s8234 + $0x34] sm:$0xf]
  %v8249 = vld [vmem:[%s8234 + $0x38] sm:$0xf]
  %v8250 = vld [vmem:[%s8234 + $0x3c] sm:$0xf]
  %v8251 = vrot.slane %v8138, 7
  %v8252 = vrot.slane %v8139, 6
  %v8253 = vsel %vm5638, %v8252, %v8251
  %v8254 = vpack.c.b16 %v8253, %v8253
  %v8272 = vunpack.c.l.b16 %v8235
  %v8273 = vunpack.c.l.b16 %v8236
  %v8274 = vunpack.c.l.b16 %v8237
  %v8275 = vunpack.c.l.b16 %v8238
  %v8276 = vunpack.c.l.b16 %v8239
  %v8277 = vunpack.c.l.b16 %v8240
  %v8278 = vunpack.c.l.b16 %v8241
  %v8279 = vunpack.c.l.b16 %v8242
  %v8280 = vunpack.c.l.b16 %v8243
  %v8281 = vunpack.c.l.b16 %v8244
  %v8282 = vunpack.c.l.b16 %v8245
  %v8283 = vunpack.c.l.b16 %v8246
  %v8284 = vunpack.c.l.b16 %v8247
  %v8285 = vunpack.c.l.b16 %v8248
  %v8286 = vunpack.c.l.b16 %v8249
  %v8287 = vunpack.c.l.b16 %v8250
  %v8288 = vpack.c.b16 %v8273, %v8272
  %v8289 = vpack.c.b16 %v8275, %v8274
  %v8290 = vpack.c.b16 %v8277, %v8276
  %v8291 = vpack.c.b16 %v8279, %v8278
  %v8292 = vpack.c.b16 %v8281, %v8280
  %v8293 = vpack.c.b16 %v8283, %v8282
  %v8294 = vpack.c.b16 %v8285, %v8284
  %v8295 = vpack.c.b16 %v8287, %v8286
  %8304 = vmatprep.subr.bf16.mxu0 0
  %8305 = vmatpush1.bf16.msra.mxu0 %v8288
  %8306 = vmatprep.subr.bf16.mxu0 0
  %8307 = vmatpush1.bf16.msra.mxu0 %v8289
  %8308 = vmatprep.subr.bf16.mxu0 0
  %8309 = vmatpush1.bf16.msra.mxu0 %v8290
  %8310 = vmatprep.subr.bf16.mxu0 0
  %8311 = vmatpush1.bf16.msra.mxu0 %v8291
  %8312 = vmatprep.subr.bf16.mxu0 0
  %8313 = vmatpush1.bf16.msra.mxu0 %v8292
  %8314 = vmatprep.subr.bf16.mxu0 0
  %8315 = vmatpush1.bf16.msra.mxu0 %v8293
  %8316 = vmatprep.subr.bf16.mxu0 0
  %8317 = vmatpush1.bf16.msra.mxu0 %v8294
  %8318 = vmatprep.subr.bf16.mxu0 0
  %8319 = vmatpush1.bf16.msra.mxu0 %v8295
  %8320 = vmatprep.subr.bf16.mxu0 0
  %8321 = vmatpush1.bf16.msra.mxu0 0
  %8322 = vmatprep.subr.bf16.mxu0 0
  %8323 = vmatpush1.bf16.msra.mxu0 0
  %8324 = vmatprep.subr.bf16.mxu0 0
  %8325 = vmatpush1.bf16.msra.mxu0 0
  %8326 = vmatprep.subr.bf16.mxu0 0
  %8327 = vmatpush1.bf16.msra.mxu0 0
  %8328 = vmatprep.subr.bf16.mxu0 0
  %8329 = vmatpush1.bf16.msra.mxu0 0
  %8330 = vmatprep.subr.bf16.mxu0 0
  %8331 = vmatpush1.bf16.msra.mxu0 0
  %8332 = vmatprep.subr.bf16.mxu0 0
  %8333 = vmatpush1.bf16.msra.mxu0 0
  %8334 = vmatprep.subr.bf16.mxu0 0
  %8335 = vmatpush1.bf16.msra.mxu0 0
  %8336 = vmatprep.mubr.bf16.mxu0 0
  %8337 = vmatmul.mubr.bf16.gmra.mrb[0].mxu0 %v8254
  %v8338 = vpop.f32.mrb[0].mxu0
  %v8339 = vadd.f32 0.0, %v8338
  %v8340 = vpop.f32.mrb[0].mxu0
  %v8341 = vpop.f32.mrb[0].mxu0
  %v8342 = vpop.f32.mrb[0].mxu0
  %8343 = vdwg.mxu0
  %v8344 = vadd.f32 %v8233, %v8339
  %v8345 = vld [vmem:[#allocation5 + $0x8] sm:$0x10]
  %v8346 = vld [vmem:[#allocation5 + $0x18] sm:$0x10]
  %s8347 = scalar_lea.vmem %s5, 1536
  %v8348 = vld [vmem:[%s8347] sm:$0xf]
  %v8349 = vld [vmem:[%s8347 + $0x4] sm:$0xf]
  %v8350 = vld [vmem:[%s8347 + $0x8] sm:$0xf]
  %v8351 = vld [vmem:[%s8347 + $0xc] sm:$0xf]
  %v8352 = vld [vmem:[%s8347 + $0x10] sm:$0xf]
  %v8353 = vld [vmem:[%s8347 + $0x14] sm:$0xf]
  %v8354 = vld [vmem:[%s8347 + $0x18] sm:$0xf]
  %v8355 = vld [vmem:[%s8347 + $0x1c] sm:$0xf]
  %v8356 = vld [vmem:[%s8347 + $0x20] sm:$0xf]
  %v8357 = vld [vmem:[%s8347 + $0x24] sm:$0xf]
  %v8358 = vld [vmem:[%s8347 + $0x28] sm:$0xf]
  %v8359 = vld [vmem:[%s8347 + $0x2c] sm:$0xf]
  %v8360 = vld [vmem:[%s8347 + $0x30] sm:$0xf]
  %v8361 = vld [vmem:[%s8347 + $0x34] sm:$0xf]
  %v8362 = vld [vmem:[%s8347 + $0x38] sm:$0xf]
  %v8363 = vld [vmem:[%s8347 + $0x3c] sm:$0xf]
  %v8366 = vunpack.c.h.b16 %v8345
  %v8367 = vunpack.c.h.b16 %v8346
  %v8368 = vrot.slane %v8367, 7
  %v8369 = vsel %vm5638, %v8368, %v8366
  %v8370 = vpack.c.b16 %v8369, %v8369
  %v8388 = vunpack.c.l.b16 %v8348
  %v8389 = vunpack.c.l.b16 %v8349
  %v8390 = vunpack.c.l.b16 %v8350
  %v8391 = vunpack.c.l.b16 %v8351
  %v8392 = vunpack.c.l.b16 %v8352
  %v8393 = vunpack.c.l.b16 %v8353
  %v8394 = vunpack.c.l.b16 %v8354
  %v8395 = vunpack.c.l.b16 %v8355
  %v8396 = vunpack.c.l.b16 %v8356
  %v8397 = vunpack.c.l.b16 %v8357
  %v8398 = vunpack.c.l.b16 %v8358
  %v8399 = vunpack.c.l.b16 %v8359
  %v8400 = vunpack.c.l.b16 %v8360
  %v8401 = vunpack.c.l.b16 %v8361
  %v8402 = vunpack.c.l.b16 %v8362
  %v8403 = vunpack.c.l.b16 %v8363
  %v8404 = vpack.c.b16 %v8389, %v8388
  %v8405 = vpack.c.b16 %v8391, %v8390
  %v8406 = vpack.c.b16 %v8393, %v8392
  %v8407 = vpack.c.b16 %v8395, %v8394
  %v8408 = vpack.c.b16 %v8397, %v8396
  %v8409 = vpack.c.b16 %v8399, %v8398
  %v8410 = vpack.c.b16 %v8401, %v8400
  %v8411 = vpack.c.b16 %v8403, %v8402
  %8420 = vmatprep.subr.bf16.mxu0 0
  %8421 = vmatpush1.bf16.msra.mxu0 %v8404
  %8422 = vmatprep.subr.bf16.mxu0 0
  %8423 = vmatpush1.bf16.msra.mxu0 %v8405
  %8424 = vmatprep.subr.bf16.mxu0 0
  %8425 = vmatpush1.bf16.msra.mxu0 %v8406
  %8426 = vmatprep.subr.bf16.mxu0 0
  %8427 = vmatpush1.bf16.msra.mxu0 %v8407
  %8428 = vmatprep.subr.bf16.mxu0 0
  %8429 = vmatpush1.bf16.msra.mxu0 %v8408
  %8430 = vmatprep.subr.bf16.mxu0 0
  %8431 = vmatpush1.bf16.msra.mxu0 %v8409
  %8432 = vmatprep.subr.bf16.mxu0 0
  %8433 = vmatpush1.bf16.msra.mxu0 %v8410
  %8434 = vmatprep.subr.bf16.mxu0 0
  %8435 = vmatpush1.bf16.msra.mxu0 %v8411
  %8436 = vmatprep.subr.bf16.mxu0 0
  %8437 = vmatpush1.bf16.msra.mxu0 0
  %8438 = vmatprep.subr.bf16.mxu0 0
  %8439 = vmatpush1.bf16.msra.mxu0 0
  %8440 = vmatprep.subr.bf16.mxu0 0
  %8441 = vmatpush1.bf16.msra.mxu0 0
  %8442 = vmatprep.subr.bf16.mxu0 0
  %8443 = vmatpush1.bf16.msra.mxu0 0
  %8444 = vmatprep.subr.bf16.mxu0 0
  %8445 = vmatpush1.bf16.msra.mxu0 0
  %8446 = vmatprep.subr.bf16.mxu0 0
  %8447 = vmatpush1.bf16.msra.mxu0 0
  %8448 = vmatprep.subr.bf16.mxu0 0
  %8449 = vmatpush1.bf16.msra.mxu0 0
  %8450 = vmatprep.subr.bf16.mxu0 0
  %8451 = vmatpush1.bf16.msra.mxu0 0
  %8452 = vmatprep.mubr.bf16.mxu0 0
  %8453 = vmatmul.mubr.bf16.gmra.mrb[0].mxu0 %v8370
  %v8454 = vpop.f32.mrb[0].mxu0
  %v8455 = vadd.f32 0.0, %v8454
  %v8456 = vpop.f32.mrb[0].mxu0
  %v8457 = vpop.f32.mrb[0].mxu0
  %v8458 = vpop.f32.mrb[0].mxu0
  %8459 = vdwg.mxu0
  %v8460 = vadd.f32 %v8344, %v8455
  %s8461 = scalar_lea.vmem %s5, 1600
  %v8462 = vld [vmem:[%s8461] sm:$0xf]
  %v8463 = vld [vmem:[%s8461 + $0x4] sm:$0xf]
  %v8464 = vld [vmem:[%s8461 + $0x8] sm:$0xf]
  %v8465 = vld [vmem:[%s8461 + $0xc] sm:$0xf]
  %v8466 = vld [vmem:[%s8461 + $0x10] sm:$0xf]
  %v8467 = vld [vmem:[%s8461 + $0x14] sm:$0xf]
  %v8468 = vld [vmem:[%s8461 + $0x18] sm:$0xf]
  %v8469 = vld [vmem:[%s8461 + $0x1c] sm:$0xf]
  %v8470 = vld [vmem:[%s8461 + $0x20] sm:$0xf]
  %v8471 = vld [vmem:[%s8461 + $0x24] sm:$0xf]
  %v8472 = vld [vmem:[%s8461 + $0x28] sm:$0xf]
  %v8473 = vld [vmem:[%s8461 + $0x2c] sm:$0xf]
  %v8474 = vld [vmem:[%s8461 + $0x30] sm:$0xf]
  %v8475 = vld [vmem:[%s8461 + $0x34] sm:$0xf]
  %v8476 = vld [vmem:[%s8461 + $0x38] sm:$0xf]
  %v8477 = vld [vmem:[%s8461 + $0x3c] sm:$0xf]
  %v8478 = vrot.slane %v8366, 1
  %v8479 = vsel %vm5638, %v8367, %v8478
  %v8480 = vpack.c.b16 %v8479, %v8479
  %v8498 = vunpack.c.l.b16 %v8462
  %v8499 = vunpack.c.l.b16 %v8463
  %v8500 = vunpack.c.l.b16 %v8464
  %v8501 = vunpack.c.l.b16 %v8465
  %v8502 = vunpack.c.l.b16 %v8466
  %v8503 = vunpack.c.l.b16 %v8467
  %v8504 = vunpack.c.l.b16 %v8468
  %v8505 = vunpack.c.l.b16 %v8469
  %v8506 = vunpack.c.l.b16 %v8470
  %v8507 = vunpack.c.l.b16 %v8471
  %v8508 = vunpack.c.l.b16 %v8472
  %v8509 = vunpack.c.l.b16 %v8473
  %v8510 = vunpack.c.l.b16 %v8474
  %v8511 = vunpack.c.l.b16 %v8475
  %v8512 = vunpack.c.l.b16 %v8476
  %v8513 = vunpack.c.l.b16 %v8477
  %v8514 = vpack.c.b16 %v8499, %v8498
  %v8515 = vpack.c.b16 %v8501, %v8500
  %v8516 = vpack.c.b16 %v8503, %v8502
  %v8517 = vpack.c.b16 %v8505, %v8504
  %v8518 = vpack.c.b16 %v8507, %v8506
  %v8519 = vpack.c.b16 %v8509, %v8508
  %v8520 = vpack.c.b16 %v8511, %v8510
  %v8521 = vpack.c.b16 %v8513, %v8512
  %8530 = vmatprep.subr.bf16.mxu0 0
  %8531 = vmatpush1.bf16.msra.mxu0 %v8514
  %8532 = vmatprep.subr.bf16.mxu0 0
  %8533 = vmatpush1.bf16.msra.mxu0 %v8515
  %8534 = vmatprep.subr.bf16.mxu0 0
  %8535 = vmatpush1.bf16.msra.mxu0 %v8516
  %8536 = vmatprep.subr.bf16.mxu0 0
  %8537 = vmatpush1.bf16.msra.mxu0 %v8517
  %8538 = vmatprep.subr.bf16.mxu0 0
  %8539 = vmatpush1.bf16.msra.mxu0 %v8518
  %8540 = vmatprep.subr.bf16.mxu0 0
  %8541 = vmatpush1.bf16.msra.mxu0 %v8519
  %8542 = vmatprep.subr.bf16.mxu0 0
  %8543 = vmatpush1.bf16.msra.mxu0 %v8520
  %8544 = vmatprep.subr.bf16.mxu0 0
  %8545 = vmatpush1.bf16.msra.mxu0 %v8521
  %8546 = vmatprep.subr.bf16.mxu0 0
  %8547 = vmatpush1.bf16.msra.mxu0 0
  %8548 = vmatprep.subr.bf16.mxu0 0
  %8549 = vmatpush1.bf16.msra.mxu0 0
  %8550 = vmatprep.subr.bf16.mxu0 0
  %8551 = vmatpush1.bf16.msra.mxu0 0
  %8552 = vmatprep.subr.bf16.mxu0 0
  %8553 = vmatpush1.bf16.msra.mxu0 0
  %8554 = vmatprep.subr.bf16.mxu0 0
  %8555 = vmatpush1.bf16.msra.mxu0 0
  %8556 = vmatprep.subr.bf16.mxu0 0
  %8557 = vmatpush1.bf16.msra.mxu0 0
  %8558 = vmatprep.subr.bf16.mxu0 0
  %8559 = vmatpush1.bf16.msra.mxu0 0
  %8560 = vmatprep.subr.bf16.mxu0 0
  %8561 = vmatpush1.bf16.msra.mxu0 0
  %8562 = vmatprep.mubr.bf16.mxu0 0
  %8563 = vmatmul.mubr.bf16.gmra.mrb[0].mxu0 %v8480
  %v8564 = vpop.f32.mrb[0].mxu0
  %v8565 = vadd.f32 0.0, %v8564
  %v8566 = vpop.f32.mrb[0].mxu0
  %v8567 = vpop.f32.mrb[0].mxu0
  %v8568 = vpop.f32.mrb[0].mxu0
  %8569 = vdwg.mxu0
  %v8570 = vadd.f32 %v8460, %v8565
  %v8571 = vld [vmem:[#allocation5 + $0x8] sm:$0x20]
  %v8572 = vld [vmem:[#allocation5 + $0x18] sm:$0x20]
  %s8573 = scalar_lea.vmem %s5, 1664
  %v8574 = vld [vmem:[%s8573] sm:$0xf]
  %v8575 = vld [vmem:[%s8573 + $0x4] sm:$0xf]
  %v8576 = vld [vmem:[%s8573 + $0x8] sm:$0xf]
  %v8577 = vld [vmem:[%s8573 + $0xc] sm:$0xf]
  %v8578 = vld [vmem:[%s8573 + $0x10] sm:$0xf]
  %v8579 = vld [vmem:[%s8573 + $0x14] sm:$0xf]
  %v8580 = vld [vmem:[%s8573 + $0x18] sm:$0xf]
  %v8581 = vld [vmem:[%s8573 + $0x1c] sm:$0xf]
  %v8582 = vld [vmem:[%s8573 + $0x20] sm:$0xf]
  %v8583 = vld [vmem:[%s8573 + $0x24] sm:$0xf]
  %v8584 = vld [vmem:[%s8573 + $0x28] sm:$0xf]
  %v8585 = vld [vmem:[%s8573 + $0x2c] sm:$0xf]
  %v8586 = vld [vmem:[%s8573 + $0x30] sm:$0xf]
  %v8587 = vld [vmem:[%s8573 + $0x34] sm:$0xf]
  %v8588 = vld [vmem:[%s8573 + $0x38] sm:$0xf]
  %v8589 = vld [vmem:[%s8573 + $0x3c] sm:$0xf]
  %v8592 = vunpack.c.h.b16 %v8571
  %v8593 = vunpack.c.h.b16 %v8572
  %v8594 = vrot.slane %v8592, 2
  %v8595 = vrot.slane %v8593, 1
  %v8596 = vsel %vm5638, %v8595, %v8594
  %v8597 = vpack.c.b16 %v8596, %v8596
  %v8615 = vunpack.c.l.b16 %v8574
  %v8616 = vunpack.c.l.b16 %v8575
  %v8617 = vunpack.c.l.b16 %v8576
  %v8618 = vunpack.c.l.b16 %v8577
  %v8619 = vunpack.c.l.b16 %v8578
  %v8620 = vunpack.c.l.b16 %v8579
  %v8621 = vunpack.c.l.b16 %v8580
  %v8622 = vunpack.c.l.b16 %v8581
  %v8623 = vunpack.c.l.b16 %v8582
  %v8624 = vunpack.c.l.b16 %v8583
  %v8625 = vunpack.c.l.b16 %v8584
  %v8626 = vunpack.c.l.b16 %v8585
  %v8627 = vunpack.c.l.b16 %v8586
  %v8628 = vunpack.c.l.b16 %v8587
  %v8629 = vunpack.c.l.b16 %v8588
  %v8630 = vunpack.c.l.b16 %v8589
  %v8631 = vpack.c.b16 %v8616, %v8615
  %v8632 = vpack.c.b16 %v8618, %v8617
  %v8633 = vpack.c.b16 %v8620, %v8619
  %v8634 = vpack.c.b16 %v8622, %v8621
  %v8635 = vpack.c.b16 %v8624, %v8623
  %v8636 = vpack.c.b16 %v8626, %v8625
  %v8637 = vpack.c.b16 %v8628, %v8627
  %v8638 = vpack.c.b16 %v8630, %v8629
  %8647 = vmatprep.subr.bf16.mxu0 0
  %8648 = vmatpush1.bf16.msra.mxu0 %v8631
  %8649 = vmatprep.subr.bf16.mxu0 0
  %8650 = vmatpush1.bf16.msra.mxu0 %v8632
  %8651 = vmatprep.subr.bf16.mxu0 0
  %8652 = vmatpush1.bf16.msra.mxu0 %v8633
  %8653 = vmatprep.subr.bf16.mxu0 0
  %8654 = vmatpush1.bf16.msra.mxu0 %v8634
  %8655 = vmatprep.subr.bf16.mxu0 0
  %8656 = vmatpush1.bf16.msra.mxu0 %v8635
  %8657 = vmatprep.subr.bf16.mxu0 0
  %8658 = vmatpush1.bf16.msra.mxu0 %v8636
  %8659 = vmatprep.subr.bf16.mxu0 0
  %8660 = vmatpush1.bf16.msra.mxu0 %v8637
  %8661 = vmatprep.subr.bf16.mxu0 0
  %8662 = vmatpush1.bf16.msra.mxu0 %v8638
  %8663 = vmatprep.subr.bf16.mxu0 0
  %8664 = vmatpush1.bf16.msra.mxu0 0
  %8665 = vmatprep.subr.bf16.mxu0 0
  %8666 = vmatpush1.bf16.msra.mxu0 0
  %8667 = vmatprep.subr.bf16.mxu0 0
  %8668 = vmatpush1.bf16.msra.mxu0 0
  %8669 = vmatprep.subr.bf16.mxu0 0
  %8670 = vmatpush1.bf16.msra.mxu0 0
  %8671 = vmatprep.subr.bf16.mxu0 0
  %8672 = vmatpush1.bf16.msra.mxu0 0
  %8673 = vmatprep.subr.bf16.mxu0 0
  %8674 = vmatpush1.bf16.msra.mxu0 0
  %8675 = vmatprep.subr.bf16.mxu0 0
  %8676 = vmatpush1.bf16.msra.mxu0 0
  %8677 = vmatprep.subr.bf16.mxu0 0
  %8678 = vmatpush1.bf16.msra.mxu0 0
  %8679 = vmatprep.mubr.bf16.mxu0 0
  %8680 = vmatmul.mubr.bf16.gmra.mrb[0].mxu0 %v8597
  %v8681 = vpop.f32.mrb[0].mxu0
  %v8682 = vadd.f32 0.0, %v8681
  %v8683 = vpop.f32.mrb[0].mxu0
  %v8684 = vpop.f32.mrb[0].mxu0
  %v8685 = vpop.f32.mrb[0].mxu0
  %8686 = vdwg.mxu0
  %v8687 = vadd.f32 %v8570, %v8682
  %s8688 = scalar_lea.vmem %s5, 1728
  %v8689 = vld [vmem:[%s8688] sm:$0xf]
  %v8690 = vld [vmem:[%s8688 + $0x4] sm:$0xf]
  %v8691 = vld [vmem:[%s8688 + $0x8] sm:$0xf]
  %v8692 = vld [vmem:[%s8688 + $0xc] sm:$0xf]
  %v8693 = vld [vmem:[%s8688 + $0x10] sm:$0xf]
  %v8694 = vld [vmem:[%s8688 + $0x14] sm:$0xf]
  %v8695 = vld [vmem:[%s8688 + $0x18] sm:$0xf]
  %v8696 = vld [vmem:[%s8688 + $0x1c] sm:$0xf]
  %v8697 = vld [vmem:[%s8688 + $0x20] sm:$0xf]
  %v8698 = vld [vmem:[%s8688 + $0x24] sm:$0xf]
  %v8699 = vld [vmem:[%s8688 + $0x28] sm:$0xf]
  %v8700 = vld [vmem:[%s8688 + $0x2c] sm:$0xf]
  %v8701 = vld [vmem:[%s8688 + $0x30] sm:$0xf]
  %v8702 = vld [vmem:[%s8688 + $0x34] sm:$0xf]
  %v8703 = vld [vmem:[%s8688 + $0x38] sm:$0xf]
  %v8704 = vld [vmem:[%s8688 + $0x3c] sm:$0xf]
  %v8705 = vrot.slane %v8592, 3
  %v8706 = vrot.slane %v8593, 2
  %v8707 = vsel %vm5638, %v8706, %v8705
  %v8708 = vpack.c.b16 %v8707, %v8707
  %v8726 = vunpack.c.l.b16 %v8689
  %v8727 = vunpack.c.l.b16 %v8690
  %v8728 = vunpack.c.l.b16 %v8691
  %v8729 = vunpack.c.l.b16 %v8692
  %v8730 = vunpack.c.l.b16 %v8693
  %v8731 = vunpack.c.l.b16 %v8694
  %v8732 = vunpack.c.l.b16 %v8695
  %v8733 = vunpack.c.l.b16 %v8696
  %v8734 = vunpack.c.l.b16 %v8697
  %v8735 = vunpack.c.l.b16 %v8698
  %v8736 = vunpack.c.l.b16 %v8699
  %v8737 = vunpack.c.l.b16 %v8700
  %v8738 = vunpack.c.l.b16 %v8701
  %v8739 = vunpack.c.l.b16 %v8702
  %v8740 = vunpack.c.l.b16 %v8703
  %v8741 = vunpack.c.l.b16 %v8704
  %v8742 = vpack.c.b16 %v8727, %v8726
  %v8743 = vpack.c.b16 %v8729, %v8728
  %v8744 = vpack.c.b16 %v8731, %v8730
  %v8745 = vpack.c.b16 %v8733, %v8732
  %v8746 = vpack.c.b16 %v8735, %v8734
  %v8747 = vpack.c.b16 %v8737, %v8736
  %v8748 = vpack.c.b16 %v8739, %v8738
  %v8749 = vpack.c.b16 %v8741, %v8740
  %8758 = vmatprep.subr.bf16.mxu0 0
  %8759 = vmatpush1.bf16.msra.mxu0 %v8742
  %8760 = vmatprep.subr.bf16.mxu0 0
  %8761 = vmatpush1.bf16.msra.mxu0 %v8743
  %8762 = vmatprep.subr.bf16.mxu0 0
  %8763 = vmatpush1.bf16.msra.mxu0 %v8744
  %8764 = vmatprep.subr.bf16.mxu0 0
  %8765 = vmatpush1.bf16.msra.mxu0 %v8745
  %8766 = vmatprep.subr.bf16.mxu0 0
  %8767 = vmatpush1.bf16.msra.mxu0 %v8746
  %8768 = vmatprep.subr.bf16.mxu0 0
  %8769 = vmatpush1.bf16.msra.mxu0 %v8747
  %8770 = vmatprep.subr.bf16.mxu0 0
  %8771 = vmatpush1.bf16.msra.mxu0 %v8748
  %8772 = vmatprep.subr.bf16.mxu0 0
  %8773 = vmatpush1.bf16.msra.mxu0 %v8749
  %8774 = vmatprep.subr.bf16.mxu0 0
  %8775 = vmatpush1.bf16.msra.mxu0 0
  %8776 = vmatprep.subr.bf16.mxu0 0
  %8777 = vmatpush1.bf16.msra.mxu0 0
  %8778 = vmatprep.subr.bf16.mxu0 0
  %8779 = vmatpush1.bf16.msra.mxu0 0
  %8780 = vmatprep.subr.bf16.mxu0 0
  %8781 = vmatpush1.bf16.msra.mxu0 0
  %8782 = vmatprep.subr.bf16.mxu0 0
  %8783 = vmatpush1.bf16.msra.mxu0 0
  %8784 = vmatprep.subr.bf16.mxu0 0
  %8785 = vmatpush1.bf16.msra.mxu0 0
  %8786 = vmatprep.subr.bf16.mxu0 0
  %8787 = vmatpush1.bf16.msra.mxu0 0
  %8788 = vmatprep.subr.bf16.mxu0 0
  %8789 = vmatpush1.bf16.msra.mxu0 0
  %8790 = vmatprep.mubr.bf16.mxu0 0
  %8791 = vmatmul.mubr.bf16.gmra.mrb[0].mxu0 %v8708
  %v8792 = vpop.f32.mrb[0].mxu0
  %v8793 = vadd.f32 0.0, %v8792
  %v8794 = vpop.f32.mrb[0].mxu0
  %v8795 = vpop.f32.mrb[0].mxu0
  %v8796 = vpop.f32.mrb[0].mxu0
  %8797 = vdwg.mxu0
  %v8798 = vadd.f32 %v8687, %v8793
  %v8799 = vld [vmem:[#allocation5 + $0x8] sm:$0x40]
  %v8800 = vld [vmem:[#allocation5 + $0x18] sm:$0x40]
  %s8801 = scalar_lea.vmem %s5, 1792
  %v8802 = vld [vmem:[%s8801] sm:$0xf]
  %v8803 = vld [vmem:[%s8801 + $0x4] sm:$0xf]
  %v8804 = vld [vmem:[%s8801 + $0x8] sm:$0xf]
  %v8805 = vld [vmem:[%s8801 + $0xc] sm:$0xf]
  %v8806 = vld [vmem:[%s8801 + $0x10] sm:$0xf]
  %v8807 = vld [vmem:[%s8801 + $0x14] sm:$0xf]
  %v8808 = vld [vmem:[%s8801 + $0x18] sm:$0xf]
  %v8809 = vld [vmem:[%s8801 + $0x1c] sm:$0xf]
  %v8810 = vld [vmem:[%s8801 + $0x20] sm:$0xf]
  %v8811 = vld [vmem:[%s8801 + $0x24] sm:$0xf]
  %v8812 = vld [vmem:[%s8801 + $0x28] sm:$0xf]
  %v8813 = vld [vmem:[%s8801 + $0x2c] sm:$0xf]
  %v8814 = vld [vmem:[%s8801 + $0x30] sm:$0xf]
  %v8815 = vld [vmem:[%s8801 + $0x34] sm:$0xf]
  %v8816 = vld [vmem:[%s8801 + $0x38] sm:$0xf]
  %v8817 = vld [vmem:[%s8801 + $0x3c] sm:$0xf]
  %v8820 = vunpack.c.h.b16 %v8799
  %v8821 = vunpack.c.h.b16 %v8800
  %v8822 = vrot.slane %v8820, 4
  %v8823 = vrot.slane %v8821, 3
  %v8824 = vsel %vm5638, %v8823, %v8822
  %v8825 = vpack.c.b16 %v8824, %v8824
  %v8843 = vunpack.c.l.b16 %v8802
  %v8844 = vunpack.c.l.b16 %v8803
  %v8845 = vunpack.c.l.b16 %v8804
  %v8846 = vunpack.c.l.b16 %v8805
  %v8847 = vunpack.c.l.b16 %v8806
  %v8848 = vunpack.c.l.b16 %v8807
  %v8849 = vunpack.c.l.b16 %v8808
  %v8850 = vunpack.c.l.b16 %v8809
  %v8851 = vunpack.c.l.b16 %v8810
  %v8852 = vunpack.c.l.b16 %v8811
  %v8853 = vunpack.c.l.b16 %v8812
  %v8854 = vunpack.c.l.b16 %v8813
  %v8855 = vunpack.c.l.b16 %v8814
  %v8856 = vunpack.c.l.b16 %v8815
  %v8857 = vunpack.c.l.b16 %v8816
  %v8858 = vunpack.c.l.b16 %v8817
  %v8859 = vpack.c.b16 %v8844, %v8843
  %v8860 = vpack.c.b16 %v8846, %v8845
  %v8861 = vpack.c.b16 %v8848, %v8847
  %v8862 = vpack.c.b16 %v8850, %v8849
  %v8863 = vpack.c.b16 %v8852, %v8851
  %v8864 = vpack.c.b16 %v8854, %v8853
  %v8865 = vpack.c.b16 %v8856, %v8855
  %v8866 = vpack.c.b16 %v8858, %v8857
  %8875 = vmatprep.subr.bf16.mxu0 0
  %8876 = vmatpush1.bf16.msra.mxu0 %v8859
  %8877 = vmatprep.subr.bf16.mxu0 0
  %8878 = vmatpush1.bf16.msra.mxu0 %v8860
  %8879 = vmatprep.subr.bf16.mxu0 0
  %8880 = vmatpush1.bf16.msra.mxu0 %v8861
  %8881 = vmatprep.subr.bf16.mxu0 0
  %8882 = vmatpush1.bf16.msra.mxu0 %v8862
  %8883 = vmatprep.subr.bf16.mxu0 0
  %8884 = vmatpush1.bf16.msra.mxu0 %v8863
  %8885 = vmatprep.subr.bf16.mxu0 0
  %8886 = vmatpush1.bf16.msra.mxu0 %v8864
  %8887 = vmatprep.subr.bf16.mxu0 0
  %8888 = vmatpush1.bf16.msra.mxu0 %v8865
  %8889 = vmatprep.subr.bf16.mxu0 0
  %8890 = vmatpush1.bf16.msra.mxu0 %v8866
  %8891 = vmatprep.subr.bf16.mxu0 0
  %8892 = vmatpush1.bf16.msra.mxu0 0
  %8893 = vmatprep.subr.bf16.mxu0 0
  %8894 = vmatpush1.bf16.msra.mxu0 0
  %8895 = vmatprep.subr.bf16.mxu0 0
  %8896 = vmatpush1.bf16.msra.mxu0 0
  %8897 = vmatprep.subr.bf16.mxu0 0
  %8898 = vmatpush1.bf16.msra.mxu0 0
  %8899 = vmatprep.subr.bf16.mxu0 0
  %8900 = vmatpush1.bf16.msra.mxu0 0
  %8901 = vmatprep.subr.bf16.mxu0 0
  %8902 = vmatpush1.bf16.msra.mxu0 0
  %8903 = vmatprep.subr.bf16.mxu0 0
  %8904 = vmatpush1.bf16.msra.mxu0 0
  %8905 = vmatprep.subr.bf16.mxu0 0
  %8906 = vmatpush1.bf16.msra.mxu0 0
  %8907 = vmatprep.mubr.bf16.mxu0 0
  %8908 = vmatmul.mubr.bf16.gmra.mrb[0].mxu0 %v8825
  %v8909 = vpop.f32.mrb[0].mxu0
  %v8910 = vadd.f32 0.0, %v8909
  %v8911 = vpop.f32.mrb[0].mxu0
  %v8912 = vpop.f32.mrb[0].mxu0
  %v8913 = vpop.f32.mrb[0].mxu0
  %8914 = vdwg.mxu0
  %v8915 = vadd.f32 %v8798, %v8910
  %s8916 = scalar_lea.vmem %s5, 1856
  %v8917 = vld [vmem:[%s8916] sm:$0xf]
  %v8918 = vld [vmem:[%s8916 + $0x4] sm:$0xf]
  %v8919 = vld [vmem:[%s8916 + $0x8] sm:$0xf]
  %v8920 = vld [vmem:[%s8916 + $0xc] sm:$0xf]
  %v8921 = vld [vmem:[%s8916 + $0x10] sm:$0xf]
  %v8922 = vld [vmem:[%s8916 + $0x14] sm:$0xf]
  %v8923 = vld [vmem:[%s8916 + $0x18] sm:$0xf]
  %v8924 = vld [vmem:[%s8916 + $0x1c] sm:$0xf]
  %v8925 = vld [vmem:[%s8916 + $0x20] sm:$0xf]
  %v8926 = vld [vmem:[%s8916 + $0x24] sm:$0xf]
  %v8927 = vld [vmem:[%s8916 + $0x28] sm:$0xf]
  %v8928 = vld [vmem:[%s8916 + $0x2c] sm:$0xf]
  %v8929 = vld [vmem:[%s8916 + $0x30] sm:$0xf]
  %v8930 = vld [vmem:[%s8916 + $0x34] sm:$0xf]
  %v8931 = vld [vmem:[%s8916 + $0x38] sm:$0xf]
  %v8932 = vld [vmem:[%s8916 + $0x3c] sm:$0xf]
  %v8933 = vrot.slane %v8820, 5
  %v8934 = vrot.slane %v8821, 4
  %v8935 = vsel %vm5638, %v8934, %v8933
  %v8936 = vpack.c.b16 %v8935, %v8935
  %v8954 = vunpack.c.l.b16 %v8917
  %v8955 = vunpack.c.l.b16 %v8918
  %v8956 = vunpack.c.l.b16 %v8919
  %v8957 = vunpack.c.l.b16 %v8920
  %v8958 = vunpack.c.l.b16 %v8921
  %v8959 = vunpack.c.l.b16 %v8922
  %v8960 = vunpack.c.l.b16 %v8923
  %v8961 = vunpack.c.l.b16 %v8924
  %v8962 = vunpack.c.l.b16 %v8925
  %v8963 = vunpack.c.l.b16 %v8926
  %v8964 = vunpack.c.l.b16 %v8927
  %v8965 = vunpack.c.l.b16 %v8928
  %v8966 = vunpack.c.l.b16 %v8929
  %v8967 = vunpack.c.l.b16 %v8930
  %v8968 = vunpack.c.l.b16 %v8931
  %v8969 = vunpack.c.l.b16 %v8932
  %v8970 = vpack.c.b16 %v8955, %v8954
  %v8971 = vpack.c.b16 %v8957, %v8956
  %v8972 = vpack.c.b16 %v8959, %v8958
  %v8973 = vpack.c.b16 %v8961, %v8960
  %v8974 = vpack.c.b16 %v8963, %v8962
  %v8975 = vpack.c.b16 %v8965, %v8964
  %v8976 = vpack.c.b16 %v8967, %v8966
  %v8977 = vpack.c.b16 %v8969, %v8968
  %8986 = vmatprep.subr.bf16.mxu0 0
  %8987 = vmatpush1.bf16.msra.mxu0 %v8970
  %8988 = vmatprep.subr.bf16.mxu0 0
  %8989 = vmatpush1.bf16.msra.mxu0 %v8971
  %8990 = vmatprep.subr.bf16.mxu0 0
  %8991 = vmatpush1.bf16.msra.mxu0 %v8972
  %8992 = vmatprep.subr.bf16.mxu0 0
  %8993 = vmatpush1.bf16.msra.mxu0 %v8973
  %8994 = vmatprep.subr.bf16.mxu0 0
  %8995 = vmatpush1.bf16.msra.mxu0 %v8974
  %8996 = vmatprep.subr.bf16.mxu0 0
  %8997 = vmatpush1.bf16.msra.mxu0 %v8975
  %8998 = vmatprep.subr.bf16.mxu0 0
  %8999 = vmatpush1.bf16.msra.mxu0 %v8976
  %9000 = vmatprep.subr.bf16.mxu0 0
  %9001 = vmatpush1.bf16.msra.mxu0 %v8977
  %9002 = vmatprep.subr.bf16.mxu0 0
  %9003 = vmatpush1.bf16.msra.mxu0 0
  %9004 = vmatprep.subr.bf16.mxu0 0
  %9005 = vmatpush1.bf16.msra.mxu0 0
  %9006 = vmatprep.subr.bf16.mxu0 0
  %9007 = vmatpush1.bf16.msra.mxu0 0
  %9008 = vmatprep.subr.bf16.mxu0 0
  %9009 = vmatpush1.bf16.msra.mxu0 0
  %9010 = vmatprep.subr.bf16.mxu0 0
  %9011 = vmatpush1.bf16.msra.mxu0 0
  %9012 = vmatprep.subr.bf16.mxu0 0
  %9013 = vmatpush1.bf16.msra.mxu0 0
  %9014 = vmatprep.subr.bf16.mxu0 0
  %9015 = vmatpush1.bf16.msra.mxu0 0
  %9016 = vmatprep.subr.bf16.mxu0 0
  %9017 = vmatpush1.bf16.msra.mxu0 0
  %9018 = vmatprep.mubr.bf16.mxu0 0
  %9019 = vmatmul.mubr.bf16.gmra.mrb[0].mxu0 %v8936
  %v9020 = vpop.f32.mrb[0].mxu0
  %v9021 = vadd.f32 0.0, %v9020
  %v9022 = vpop.f32.mrb[0].mxu0
  %v9023 = vpop.f32.mrb[0].mxu0
  %v9024 = vpop.f32.mrb[0].mxu0
  %9025 = vdwg.mxu0
  %v9026 = vadd.f32 %v8915, %v9021
  %v9027 = vld [vmem:[#allocation5 + $0x8] sm:$0x80]
  %v9028 = vld [vmem:[#allocation5 + $0x18] sm:$0x80]
  %s9029 = scalar_lea.vmem %s5, 1920
  %v9030 = vld [vmem:[%s9029] sm:$0xf]
  %v9031 = vld [vmem:[%s9029 + $0x4] sm:$0xf]
  %v9032 = vld [vmem:[%s9029 + $0x8] sm:$0xf]
  %v9033 = vld [vmem:[%s9029 + $0xc] sm:$0xf]
  %v9034 = vld [vmem:[%s9029 + $0x10] sm:$0xf]
  %v9035 = vld [vmem:[%s9029 + $0x14] sm:$0xf]
  %v9036 = vld [vmem:[%s9029 + $0x18] sm:$0xf]
  %v9037 = vld [vmem:[%s9029 + $0x1c] sm:$0xf]
  %v9038 = vld [vmem:[%s9029 + $0x20] sm:$0xf]
  %v9039 = vld [vmem:[%s9029 + $0x24] sm:$0xf]
  %v9040 = vld [vmem:[%s9029 + $0x28] sm:$0xf]
  %v9041 = vld [vmem:[%s9029 + $0x2c] sm:$0xf]
  %v9042 = vld [vmem:[%s9029 + $0x30] sm:$0xf]
  %v9043 = vld [vmem:[%s9029 + $0x34] sm:$0xf]
  %v9044 = vld [vmem:[%s9029 + $0x38] sm:$0xf]
  %v9045 = vld [vmem:[%s9029 + $0x3c] sm:$0xf]
  %v9048 = vunpack.c.h.b16 %v9027
  %v9049 = vunpack.c.h.b16 %v9028
  %v9050 = vrot.slane %v9048, 6
  %v9051 = vrot.slane %v9049, 5
  %v9052 = vsel %vm5638, %v9051, %v9050
  %v9053 = vpack.c.b16 %v9052, %v9052
  %v9071 = vunpack.c.l.b16 %v9030
  %v9072 = vunpack.c.l.b16 %v9031
  %v9073 = vunpack.c.l.b16 %v9032
  %v9074 = vunpack.c.l.b16 %v9033
  %v9075 = vunpack.c.l.b16 %v9034
  %v9076 = vunpack.c.l.b16 %v9035
  %v9077 = vunpack.c.l.b16 %v9036
  %v9078 = vunpack.c.l.b16 %v9037
  %v9079 = vunpack.c.l.b16 %v9038
  %v9080 = vunpack.c.l.b16 %v9039
  %v9081 = vunpack.c.l.b16 %v9040
  %v9082 = vunpack.c.l.b16 %v9041
  %v9083 = vunpack.c.l.b16 %v9042
  %v9084 = vunpack.c.l.b16 %v9043
  %v9085 = vunpack.c.l.b16 %v9044
  %v9086 = vunpack.c.l.b16 %v9045
  %v9087 = vpack.c.b16 %v9072, %v9071
  %v9088 = vpack.c.b16 %v9074, %v9073
  %v9089 = vpack.c.b16 %v9076, %v9075
  %v9090 = vpack.c.b16 %v9078, %v9077
  %v9091 = vpack.c.b16 %v9080, %v9079
  %v9092 = vpack.c.b16 %v9082, %v9081
  %v9093 = vpack.c.b16 %v9084, %v9083
  %v9094 = vpack.c.b16 %v9086, %v9085
  %9103 = vmatprep.subr.bf16.mxu0 0
  %9104 = vmatpush1.bf16.msra.mxu0 %v9087
  %9105 = vmatprep.subr.bf16.mxu0 0
  %9106 = vmatpush1.bf16.msra.mxu0 %v9088
  %9107 = vmatprep.subr.bf16.mxu0 0
  %9108 = vmatpush1.bf16.msra.mxu0 %v9089
  %9109 = vmatprep.subr.bf16.mxu0 0
  %9110 = vmatpush1.bf16.msra.mxu0 %v9090
  %9111 = vmatprep.subr.bf16.mxu0 0
  %9112 = vmatpush1.bf16.msra.mxu0 %v9091
  %9113 = vmatprep.subr.bf16.mxu0 0
  %9114 = vmatpush1.bf16.msra.mxu0 %v9092
  %9115 = vmatprep.subr.bf16.mxu0 0
  %9116 = vmatpush1.bf16.msra.mxu0 %v9093
  %9117 = vmatprep.subr.bf16.mxu0 0
  %9118 = vmatpush1.bf16.msra.mxu0 %v9094
  %9119 = vmatprep.subr.bf16.mxu0 0
  %9120 = vmatpush1.bf16.msra.mxu0 0
  %9121 = vmatprep.subr.bf16.mxu0 0
  %9122 = vmatpush1.bf16.msra.mxu0 0
  %9123 = vmatprep.subr.bf16.mxu0 0
  %9124 = vmatpush1.bf16.msra.mxu0 0
  %9125 = vmatprep.subr.bf16.mxu0 0
  %9126 = vmatpush1.bf16.msra.mxu0 0
  %9127 = vmatprep.subr.bf16.mxu0 0
  %9128 = vmatpush1.bf16.msra.mxu0 0
  %9129 = vmatprep.subr.bf16.mxu0 0
  %9130 = vmatpush1.bf16.msra.mxu0 0
  %9131 = vmatprep.subr.bf16.mxu0 0
  %9132 = vmatpush1.bf16.msra.mxu0 0
  %9133 = vmatprep.subr.bf16.mxu0 0
  %9134 = vmatpush1.bf16.msra.mxu0 0
  %9135 = vmatprep.mubr.bf16.mxu0 0
  %9136 = vmatmul.mubr.bf16.gmra.mrb[0].mxu0 %v9053
  %v9137 = vpop.f32.mrb[0].mxu0
  %v9138 = vadd.f32 0.0, %v9137
  %v9139 = vpop.f32.mrb[0].mxu0
  %v9140 = vpop.f32.mrb[0].mxu0
  %v9141 = vpop.f32.mrb[0].mxu0
  %9142 = vdwg.mxu0
  %v9143 = vadd.f32 %v9026, %v9138
  %s9144 = scalar_lea.vmem %s5, 1984
  %v9145 = vld [vmem:[%s9144] sm:$0xf]
  %v9146 = vld [vmem:[%s9144 + $0x4] sm:$0xf]
  %v9147 = vld [vmem:[%s9144 + $0x8] sm:$0xf]
  %v9148 = vld [vmem:[%s9144 + $0xc] sm:$0xf]
  %v9149 = vld [vmem:[%s9144 + $0x10] sm:$0xf]
  %v9150 = vld [vmem:[%s9144 + $0x14] sm:$0xf]
  %v9151 = vld [vmem:[%s9144 + $0x18] sm:$0xf]
  %v9152 = vld [vmem:[%s9144 + $0x1c] sm:$0xf]
  %v9153 = vld [vmem:[%s9144 + $0x20] sm:$0xf]
  %v9154 = vld [vmem:[%s9144 + $0x24] sm:$0xf]
  %v9155 = vld [vmem:[%s9144 + $0x28] sm:$0xf]
  %v9156 = vld [vmem:[%s9144 + $0x2c] sm:$0xf]
  %v9157 = vld [vmem:[%s9144 + $0x30] sm:$0xf]
  %v9158 = vld [vmem:[%s9144 + $0x34] sm:$0xf]
  %v9159 = vld [vmem:[%s9144 + $0x38] sm:$0xf]
  %v9160 = vld [vmem:[%s9144 + $0x3c] sm:$0xf]
  %v9161 = vrot.slane %v9048, 7
  %v9162 = vrot.slane %v9049, 6
  %v9163 = vsel %vm5638, %v9162, %v9161
  %v9164 = vpack.c.b16 %v9163, %v9163
  %v9182 = vunpack.c.l.b16 %v9145
  %v9183 = vunpack.c.l.b16 %v9146
  %v9184 = vunpack.c.l.b16 %v9147
  %v9185 = vunpack.c.l.b16 %v9148
  %v9186 = vunpack.c.l.b16 %v9149
  %v9187 = vunpack.c.l.b16 %v9150
  %v9188 = vunpack.c.l.b16 %v9151
  %v9189 = vunpack.c.l.b16 %v9152
  %v9190 = vunpack.c.l.b16 %v9153
  %v9191 = vunpack.c.l.b16 %v9154
  %v9192 = vunpack.c.l.b16 %v9155
  %v9193 = vunpack.c.l.b16 %v9156
  %v9194 = vunpack.c.l.b16 %v9157
  %v9195 = vunpack.c.l.b16 %v9158
  %v9196 = vunpack.c.l.b16 %v9159
  %v9197 = vunpack.c.l.b16 %v9160
  %v9198 = vpack.c.b16 %v9183, %v9182
  %v9199 = vpack.c.b16 %v9185, %v9184
  %v9200 = vpack.c.b16 %v9187, %v9186
  %v9201 = vpack.c.b16 %v9189, %v9188
  %v9202 = vpack.c.b16 %v9191, %v9190
  %v9203 = vpack.c.b16 %v9193, %v9192
  %v9204 = vpack.c.b16 %v9195, %v9194
  %v9205 = vpack.c.b16 %v9197, %v9196
  %9214 = vmatprep.subr.bf16.mxu0 0
  %9215 = vmatpush1.bf16.msra.mxu0 %v9198
  %9216 = vmatprep.subr.bf16.mxu0 0
  %9217 = vmatpush1.bf16.msra.mxu0 %v9199
  %9218 = vmatprep.subr.bf16.mxu0 0
  %9219 = vmatpush1.bf16.msra.mxu0 %v9200
  %9220 = vmatprep.subr.bf16.mxu0 0
  %9221 = vmatpush1.bf16.msra.mxu0 %v9201
  %9222 = vmatprep.subr.bf16.mxu0 0
  %9223 = vmatpush1.bf16.msra.mxu0 %v9202
  %9224 = vmatprep.subr.bf16.mxu0 0
  %9225 = vmatpush1.bf16.msra.mxu0 %v9203
  %9226 = vmatprep.subr.bf16.mxu0 0
  %9227 = vmatpush1.bf16.msra.mxu0 %v9204
  %9228 = vmatprep.subr.bf16.mxu0 0
  %9229 = vmatpush1.bf16.msra.mxu0 %v9205
  %9230 = vmatprep.subr.bf16.mxu0 0
  %9231 = vmatpush1.bf16.msra.mxu0 0
  %9232 = vmatprep.subr.bf16.mxu0 0
  %9233 = vmatpush1.bf16.msra.mxu0 0
  %9234 = vmatprep.subr.bf16.mxu0 0
  %9235 = vmatpush1.bf16.msra.mxu0 0
  %9236 = vmatprep.subr.bf16.mxu0 0
  %9237 = vmatpush1.bf16.msra.mxu0 0
  %9238 = vmatprep.subr.bf16.mxu0 0
  %9239 = vmatpush1.bf16.msra.mxu0 0
  %9240 = vmatprep.subr.bf16.mxu0 0
  %9241 = vmatpush1.bf16.msra.mxu0 0
  %9242 = vmatprep.subr.bf16.mxu0 0
  %9243 = vmatpush1.bf16.msra.mxu0 0
  %9244 = vmatprep.subr.bf16.mxu0 0
  %9245 = vmatpush1.bf16.msra.mxu0 0
  %9246 = vmatprep.mubr.bf16.mxu0 0
  %9247 = vmatmul.mubr.bf16.gmra.mrb[0].mxu0 %v9164
  %v9248 = vpop.f32.mrb[0].mxu0
  %v9249 = vadd.f32 0.0, %v9248
  %v9250 = vpop.f32.mrb[0].mxu0
  %v9251 = vpop.f32.mrb[0].mxu0
  %v9252 = vpop.f32.mrb[0].mxu0
  %9253 = vdwg.mxu0
  %v9254 = vadd.f32 %v9143, %v9249
  %vm9255 = vcmp.gt.f32.partialorder %v9254, 0.0
  %v9256 = vmul.f32 %v9254, 0.01
  %v9257 = vsel %vm9255, %v9254, %v9256
  %v9258 = vpack.c.bf16 %v9257, %v9257
  %v9259 = vld [vmem:[%s7] sm:$0xf]
  %v9260 = vld [vmem:[%s7 + $0x4] sm:$0xf]
  %v9261 = vld [vmem:[%s7 + $0x8] sm:$0xf]
  %v9262 = vld [vmem:[%s7 + $0xc] sm:$0xf]
  %v9263 = vld [vmem:[%s7 + $0x10] sm:$0xf]
  %v9264 = vld [vmem:[%s7 + $0x14] sm:$0xf]
  %v9265 = vld [vmem:[%s7 + $0x18] sm:$0xf]
  %v9266 = vld [vmem:[%s7 + $0x1c] sm:$0xf]
  %v9267 = vld [vmem:[%s8] sm:$0x1]
  %v9269 = vlaneseq
  %v9270 = vshrl.u32 %v9269, 7
  %v9271 = vsub.s32 0, %v9270
  %v9272 = vrot.slane %v9267, %v9271
  %v9282 = vunpack.c.l.b16 %v9259
  %v9283 = vunpack.c.l.b16 %v9260
  %v9284 = vunpack.c.l.b16 %v9261
  %v9285 = vunpack.c.l.b16 %v9262
  %v9286 = vunpack.c.l.b16 %v9263
  %v9287 = vunpack.c.l.b16 %v9264
  %v9288 = vunpack.c.l.b16 %v9265
  %v9289 = vunpack.c.l.b16 %v9266
  %v9290 = vpack.c.b16 %v9283, %v9282
  %v9291 = vpack.c.b16 %v9285, %v9284
  %v9292 = vpack.c.b16 %v9287, %v9286
  %v9293 = vpack.c.b16 %v9289, %v9288
  %v9299 = vsel %vm2478, %v9258, 0
  %9301 = vmatprep.subr.bf16.mxu0 0
  %9302 = vmatpush1.bf16.msra.mxu0 %v9290
  %9303 = vmatprep.subr.bf16.mxu0 0
  %9304 = vmatpush1.bf16.msra.mxu0 %v9291
  %9305 = vmatprep.subr.bf16.mxu0 0
  %9306 = vmatpush1.bf16.msra.mxu0 %v9292
  %9307 = vmatprep.subr.bf16.mxu0 0
  %9308 = vmatpush1.bf16.msra.mxu0 %v9293
  %9309 = vmatprep.subr.bf16.mxu0 0
  %9310 = vmatpush1.bf16.msra.mxu0 0
  %9311 = vmatprep.subr.bf16.mxu0 0
  %9312 = vmatpush1.bf16.msra.mxu0 0
  %9313 = vmatprep.subr.bf16.mxu0 0
  %9314 = vmatpush1.bf16.msra.mxu0 0
  %9315 = vmatprep.subr.bf16.mxu0 0
  %9316 = vmatpush1.bf16.msra.mxu0 0
  %9317 = vmatprep.subr.bf16.mxu0 0
  %9318 = vmatpush1.bf16.msra.mxu0 0
  %9319 = vmatprep.subr.bf16.mxu0 0
  %9320 = vmatpush1.bf16.msra.mxu0 0
  %9321 = vmatprep.subr.bf16.mxu0 0
  %9322 = vmatpush1.bf16.msra.mxu0 0
  %9323 = vmatprep.subr.bf16.mxu0 0
  %9324 = vmatpush1.bf16.msra.mxu0 0
  %9325 = vmatprep.subr.bf16.mxu0 0
  %9326 = vmatpush1.bf16.msra.mxu0 0
  %9327 = vmatprep.subr.bf16.mxu0 0
  %9328 = vmatpush1.bf16.msra.mxu0 0
  %9329 = vmatprep.subr.bf16.mxu0 0
  %9330 = vmatpush1.bf16.msra.mxu0 0
  %9331 = vmatprep.subr.bf16.mxu0 0
  %9332 = vmatpush1.bf16.msra.mxu0 0
  %9333 = vmatprep.mubr.bf16.mxu0 0
  %9334 = vmatmul.mubr.bf16.gmra.mrb[0].mxu0 %v9299
  %v9335 = vpop.f32.mrb[0].mxu0
  %v9336 = vadd.f32 %v9272, %v9335
  %v9337 = vpop.f32.mrb[0].mxu0
  %v9338 = vpop.f32.mrb[0].mxu0
  %v9339 = vpop.f32.mrb[0].mxu0
  %9340 = vdwg.mxu0
  %9341 = vst [vmem:[%s9] sm:$0x3] %v9336
  // Predicated region
  $region38: #{ppo_image_critic_forward.1} parent=0 // pred_check
    _
  $region39: #{ppo_image_critic_forward.1} parent=0 // pred_check_branch
    %9343 = sbr.rel (0) target = $region41
  $region40: #{ppo_image_critic_forward.1} parent=0 // pred_region
    _
  $region41: #{ppo_image_critic_forward.1} parent=0 // pred_fallthru
    _
  // Predicated region
  $region42: #{ppo_image_critic_forward.1} parent=0 // pred_check
    _
  $region43: #{ppo_image_critic_forward.1} parent=0 // pred_check_branch
    %9345 = sbr.rel (0) target = $region45
  $region44: #{ppo_image_critic_forward.1} parent=0 // pred_region
    _
  $region45: #{ppo_image_critic_forward.1} parent=0 // pred_fallthru
    _

</llo_original>
